<compile_context>
chip_gen: v6e
topology: v6e:2x2x1
jax: 0.10.0
libtpu: 0.0.40
codegen_flags: <defaults>
</compile_context>

<pallas_src>
import math
from functools import partial

import jax
import jax.numpy as jnp
from jax.experimental import pallas as pl
from jax.experimental.pallas import tpu as pltpu


# ---------------------------------------------------------------------------
# Constants / small helpers
# ---------------------------------------------------------------------------
C_PAD = 128                      # lane-dense channel width carried end-to-end
TILE_M_MAX = 1024                # M-tile cap (sized for v7x's 64 MiB VMEM)
VMEM_LIMIT_BYTES = 48 * 1024 * 1024


def _round_up(x, m):
    return ((x + m - 1) // m) * m


def _choose_tile_m(m):
    """Largest (multiple-of-8) M tile <= TILE_M_MAX with minimal padding."""
    n_tiles = -(-m // TILE_M_MAX)
    return _round_up(-(-m // n_tiles), 8)


# ---------------------------------------------------------------------------
# Pallas kernels
# ---------------------------------------------------------------------------
def _matmul_bn_act_kernel(x_ref, w_ref, scale_ref, bias_ref, o_ref, *, relu):
    """(TILE_M,K)bf16 @ (K,C)bf16 -> f32, fused per-channel affine (+ReLU)."""
    acc = jnp.dot(x_ref[...], w_ref[...], preferred_element_type=jnp.float32)
    y = acc * scale_ref[...] + bias_ref[...]
    if relu:
        y = jnp.maximum(y, 0.0)
    o_ref[...] = y


def _matmul_bn_add_relu_kernel(x_ref, w_ref, scale_ref, bias_ref, res_ref, o_ref):
    """Matmul + folded BN + residual add + ReLU (tail of a basic block)."""
    acc = jnp.dot(x_ref[...], w_ref[...], preferred_element_type=jnp.float32)
    y = acc * scale_ref[...] + bias_ref[...] + res_ref[...]
    o_ref[...] = jnp.maximum(y, 0.0)


def _matmul_bn_add_relu_gap_kernel(x_ref, w_ref, scale_ref, bias_ref, res_ref,
                                   pool_ref, *, rows_per_image, tile_m,
                                   mask_rows):
    """Final block-2 conv fused with residual add, ReLU and global-avg-pool.

    Grid = (batch, m_tiles); the pooled output block stays resident across the
    (arbitrary) m axis and is accumulated in VMEM, so the final activation is
    never written to HBM at all.
    """
    m = pl.program_id(1)

    @pl.when(m == 0)
    def _init():
        pool_ref[...] = jnp.zeros_like(pool_ref)

    acc = jnp.dot(x_ref[0], w_ref[...], preferred_element_type=jnp.float32)
    y = acc * scale_ref[...] + bias_ref[...] + res_ref[0]
    y = jnp.maximum(y, 0.0)

    if mask_rows:  # zero out padded rows so they don't pollute the mean
        row = m * tile_m + jax.lax.broadcasted_iota(jnp.int32, (tile_m, 1), 0)
        y = jnp.where(row < rows_per_image, y, 0.0)

    tile_sum = jnp.sum(y, axis=0, keepdims=True)            # (1, C_PAD)
    pool_ref[...] = pool_ref[...] + jnp.broadcast_to(
        tile_sum.reshape(1, 1, -1), pool_ref.shape)

    @pl.when(m == pl.num_programs(1) - 1)
    def _finalize():
        pool_ref[...] = pool_ref[...] * (1.0 / rows_per_image)


# ---------------------------------------------------------------------------
# Glue: im2col + gridded kernel wrappers
# ---------------------------------------------------------------------------
def _im2col(x_nhwc, kh, kw, stride, pad):
    n, h, w, c = x_nhwc.shape
    xp = jnp.pad(x_nhwc, ((0, 0), (pad, pad), (pad, pad), (0, 0)))
    out_h = (h + 2 * pad - kh) // stride + 1
    out_w = (w + 2 * pad - kw) // stride + 1
    cols = []
    for i in range(kh):
        for j in range(kw):
            cols.append(
                xp[:, i:i + out_h * stride:stride, j:j + out_w * stride:stride, :]
            )
    patches = jnp.concatenate(cols, axis=-1)   # (N, oh, ow, kh*kw*C)
    return patches, out_h, out_w


def conv_bn(x_nhwc, w, scale, bias, *, stride=1, pad=1, relu=True,
            residual=None):
    """Conv2d + folded BN [+ residual add] [+ ReLU] as a gridded Pallas matmul.

    w is (kh, kw, C_in, C_PAD) -- already channel-padded; scale/bias are
    (1, C_PAD) f32.  Output is an f32 NHWC activation with C_PAD channels.
    """
    kh, kw, cin, cout = w.shape
    k = kh * kw * cin
    n = x_nhwc.shape[0]

    patches, oh, ow = _im2col(x_nhwc.astype(jnp.bfloat16), kh, kw, stride, pad)
    m = n * oh * ow
    tile_m = _choose_tile_m(m)
    m_pad = _round_up(m, tile_m)

    patches = patches.reshape(m, k)
    if m_pad != m:
        patches = jnp.pad(patches, ((0, m_pad - m), (0, 0)))
    w2 = w.reshape(k, cout).astype(jnp.bfloat16)

    in_specs = [
        pl.BlockSpec((tile_m, k), lambda i: (i, 0)),     # patch tile (pipelined)
        pl.BlockSpec((k, cout), lambda i: (0, 0)),       # weights resident
        pl.BlockSpec((1, cout), lambda i: (0, 0)),       # BN scale resident
        pl.BlockSpec((1, cout), lambda i: (0, 0)),       # BN bias resident
    ]
    args = [patches, w2, scale, bias]
    io_aliases = {}
    bytes_accessed = (patches.size * 2 + w2.size * 2
                      + (scale.size + bias.size) * 4 + m_pad * cout * 4)

    if residual is not None:
        res2 = residual.reshape(m, cout)
        if m_pad != m:
            res2 = jnp.pad(res2, ((0, m_pad - m), (0, 0)))
        in_specs.append(pl.BlockSpec((tile_m, cout), lambda i: (i, 0)))
        args.append(res2)
        io_aliases = {4: 0}                   # reuse the residual HBM buffer
        bytes_accessed += m_pad * cout * 4
        kernel = _matmul_bn_add_relu_kernel
    else:
        kernel = partial(_matmul_bn_act_kernel, relu=relu)

    out = pl.pallas_call(
        kernel,
        out_shape=jax.ShapeDtypeStruct((m_pad, cout), jnp.float32),
        grid=(m_pad // tile_m,),
        in_specs=in_specs,
        out_specs=pl.BlockSpec((tile_m, cout), lambda i: (i, 0)),
        compiler_params=pltpu.CompilerParams(
            dimension_semantics=("parallel",),
            vmem_limit_bytes=VMEM_LIMIT_BYTES),
        cost_estimate=pl.CostEstimate(
            flops=2 * m_pad * k * cout,
            transcendentals=0,
            bytes_accessed=bytes_accessed),
        input_output_aliases=io_aliases,
    )(*args)

    return out[:m].reshape(n, oh, ow, cout)


def conv_bn_add_relu_gap(x_nhwc, w, scale, bias, residual_nhwc, *, stride=1,
                         pad=1):
    """Last conv of block 2 fused with residual add + ReLU + global avg pool."""
    kh, kw, cin, cout = w.shape
    k = kh * kw * cin
    n = x_nhwc.shape[0]

    patches, oh, ow = _im2col(x_nhwc.astype(jnp.bfloat16), kh, kw, stride, pad)
    p = oh * ow
    tile_m = _choose_tile_m(p)
    p_pad = _round_up(p, tile_m)

    patches = patches.reshape(n, p, k)
    res = residual_nhwc.reshape(n, p, cout)
    if p_pad != p:
        patches = jnp.pad(patches, ((0, 0), (0, p_pad - p), (0, 0)))
        res = jnp.pad(res, ((0, 0), (0, p_pad - p), (0, 0)))
    w2 = w.reshape(k, cout).astype(jnp.bfloat16)

    kernel = partial(_matmul_bn_add_relu_gap_kernel,
                     rows_per_image=p, tile_m=tile_m, mask_rows=(p_pad != p))

    pooled = pl.pallas_call(
        kernel,
        out_shape=jax.ShapeDtypeStruct((n, 8, cout), jnp.float32),
        grid=(n, p_pad // tile_m),
        in_specs=[
            pl.BlockSpec((1, tile_m, k), lambda b, m_: (b, m_, 0)),
            pl.BlockSpec((k, cout), lambda b, m_: (0, 0)),
            pl.BlockSpec((1, cout), lambda b, m_: (0, 0)),
            pl.BlockSpec((1, cout), lambda b, m_: (0, 0)),
            pl.BlockSpec((1, tile_m, cout), lambda b, m_: (b, m_, 0)),
        ],
        out_specs=pl.BlockSpec((1, 8, cout), lambda b, m_: (b, 0, 0)),
        compiler_params=pltpu.CompilerParams(
            dimension_semantics=("parallel", "arbitrary"),
            vmem_limit_bytes=VMEM_LIMIT_BYTES),
        cost_estimate=pl.CostEstimate(
            flops=2 * n * p_pad * k * cout,
            transcendentals=0,
            bytes_accessed=(patches.size * 2 + w2.size * 2 + res.size * 4
                            + (scale.size + bias.size) * 4 + n * 8 * cout * 4)),
    )(patches, w2, scale, bias, res)

    return pooled[:, 0, :]                    # (N, C_PAD)


# ---------------------------------------------------------------------------
# Deterministic synthetic parameters (checkpoint load is not reproducible here)
# ---------------------------------------------------------------------------
def _conv_w(key, kh, kw, cin, cout):
    fan_in = kh * kw * cin
    std = math.sqrt(2.0 / fan_in)
    return jax.random.normal(key, (kh, kw, cin, cout), jnp.float32) * std


def _bn_fold(cout, idx):
    i = jnp.arange(cout, dtype=jnp.float32)
    gamma = 1.0 + 0.01 * (i + idx) / cout
    beta = 0.01 * jnp.cos(i + idx)
    mean = 0.01 * jnp.sin(i + idx)
    var = 1.0 + 0.05 * i / cout
    eps = 1e-5
    scale = gamma / jnp.sqrt(var + eps)
    bias = beta - mean * scale
    return scale, bias


def _pad_w(w, cin_pad, cout_pad):
    kh, kw, cin, cout = w.shape
    return jnp.pad(w, ((0, 0), (0, 0), (0, cin_pad - cin), (0, cout_pad - cout)))


def _pad_affine(v, cout_pad):
    return jnp.pad(v, (0, cout_pad - v.shape[0])).reshape(1, cout_pad)


def make_params(key, n_channels=3, c1=16, c2=32):
    """All weights/BN params are pre-padded to the lane-dense C_PAD width.

    Padded input-channel rows and output-channel columns are zero, and padded
    BN scale/bias entries are zero, so padded channels carry exact zeros
    through the whole network and are sliced off after the final pool.
    """
    keys = jax.random.split(key, 6)
    p = {}
    # stem: 3x3 conv n_channels -> c1
    p["stem_w"] = _pad_w(_conv_w(keys[0], 3, 3, n_channels, c1), n_channels, C_PAD)
    s, b = _bn_fold(c1, 0)
    p["stem_s"], p["stem_b"] = _pad_affine(s, C_PAD), _pad_affine(b, C_PAD)
    # block1 (identity shortcut): c1 -> c1
    p["b1_w1"] = _pad_w(_conv_w(keys[1], 3, 3, c1, c1), C_PAD, C_PAD)
    s, b = _bn_fold(c1, 1)
    p["b1_s1"], p["b1_b1"] = _pad_affine(s, C_PAD), _pad_affine(b, C_PAD)
    p["b1_w2"] = _pad_w(_conv_w(keys[2], 3, 3, c1, c1), C_PAD, C_PAD)
    s, b = _bn_fold(c1, 2)
    p["b1_s2"], p["b1_b2"] = _pad_affine(s, C_PAD), _pad_affine(b, C_PAD)
    # block2 (downsample shortcut): c1 -> c2, stride 2
    p["b2_w1"] = _pad_w(_conv_w(keys[3], 3, 3, c1, c2), C_PAD, C_PAD)
    s, b = _bn_fold(c2, 3)
    p["b2_s1"], p["b2_b1"] = _pad_affine(s, C_PAD), _pad_affine(b, C_PAD)
    p["b2_w2"] = _pad_w(_conv_w(keys[4], 3, 3, c2, c2), C_PAD, C_PAD)
    s, b = _bn_fold(c2, 4)
    p["b2_s2"], p["b2_b2"] = _pad_affine(s, C_PAD), _pad_affine(b, C_PAD)
    p["b2_wd"] = _pad_w(_conv_w(keys[5], 1, 1, c1, c2), C_PAD, C_PAD)
    s, b = _bn_fold(c2, 5)
    p["b2_sd"], p["b2_bd"] = _pad_affine(s, C_PAD), _pad_affine(b, C_PAD)
    return p


# ---------------------------------------------------------------------------
# SSLEncoder.forward
# ---------------------------------------------------------------------------
@partial(jax.jit, static_argnames=("num_encoding",))
def ssl_encoder_forward(params, images_nchw, num_encoding=32):
    """Equivalent of SSLEncoder.forward: preprocessing (identity Compose([])),
    then the CNN feature extractor; output is the pooled feature vector
    (the torch version returns x[-1] if the extractor returns a list)."""
    # layout: input NCHW (PyTorch); convert to NHWC for the im2col/matmul path.
    x = jnp.transpose(images_nchw.astype(jnp.float32), (0, 2, 3, 1))

    # stem
    x = conv_bn(x, params["stem_w"], params["stem_s"], params["stem_b"],
                stride=1, pad=1, relu=True)

    # basic block 1 (identity residual)
    y = conv_bn(x, params["b1_w1"], params["b1_s1"], params["b1_b1"],
                stride=1, pad=1, relu=True)
    x = conv_bn(y, params["b1_w2"], params["b1_s2"], params["b1_b2"],
                stride=1, pad=1, residual=x)

    # basic block 2 (strided, 1x1-conv downsample residual)
    shortcut = conv_bn(x, params["b2_wd"], params["b2_sd"], params["b2_bd"],
                       stride=2, pad=0, relu=False)
    y = conv_bn(x, params["b2_w1"], params["b2_s1"], params["b2_b1"],
                stride=2, pad=1, relu=True)
    # conv2 + BN + residual + ReLU + global average pool, fused in one kernel
    feats = conv_bn_add_relu_gap(y, params["b2_w2"], params["b2_s2"],
                                 params["b2_b2"], shortcut, stride=1, pad=1)

    # drop lane padding -> (N, num_encoding)
    return feats[:, :num_encoding]


if __name__ == "__main__":
    key = jax.random.PRNGKey(0)
    batch, n_channels, tile_size = 2, 3, 16
    num_encoding = 32

    params = make_params(jax.random.fold_in(key, 1), n_channels=n_channels,
                         c1=16, c2=num_encoding)
    images = jax.random.normal(jax.random.fold_in(key, 2),
                               (batch, n_channels, tile_size, tile_size),
                               jnp.float32)

    feats = ssl_encoder_forward(params, images, num_encoding=num_encoding)
    feats = jax.block_until_ready(feats)
    assert feats.shape == (batch, num_encoding), feats.shape
    assert feats.dtype == jnp.float32
    assert bool(jnp.all(jnp.isfinite(feats)))
    print("KERNEL_OK")
</pallas_src>

<mosaic_0001>
module attributes {stable_mosaic.version = 11 : i64} {
  func.func @_matmul_bn_act_kernel(%arg0: i32, %arg1: memref<512x27xbf16, #tpu.memory_space<vmem>>, %arg2: memref<27x128xbf16, #tpu.memory_space<vmem>>, %arg3: memref<1x128xf32, #tpu.memory_space<vmem>>, %arg4: memref<1x128xf32, #tpu.memory_space<vmem>>, %arg5: memref<512x128xf32, #tpu.memory_space<vmem>>) attributes {dimension_semantics = [#tpu.dimension_semantics<parallel>], iteration_bounds = array<i64: 1>, scalar_prefetch = 0 : i64, scratch_operands = 0 : i64, tpu.core_type = #tpu.core_type<tc>, window_params = [{transform_indices = @transform_0, window_bounds = array<i64: 512, 27>}, {pipeline_mode = #tpu.pipeline_mode<synchronous>, transform_indices = @transform_1, window_bounds = array<i64: 27, 128>}, {pipeline_mode = #tpu.pipeline_mode<synchronous>, transform_indices = @transform_2, window_bounds = array<i64: 1, 128>}, {pipeline_mode = #tpu.pipeline_mode<synchronous>, transform_indices = @transform_3, window_bounds = array<i64: 1, 128>}, {transform_indices = @transform_4, window_bounds = array<i64: 512, 128>}]} {
    %c0 = arith.constant 0 : index
    %c0_0 = arith.constant 0 : index
    %0 = vector.load %arg1[%c0, %c0_0] : memref<512x27xbf16, #tpu.memory_space<vmem>>, vector<512x27xbf16>
    %c0_1 = arith.constant 0 : index
    %c0_2 = arith.constant 0 : index
    %1 = vector.load %arg2[%c0_1, %c0_2] : memref<27x128xbf16, #tpu.memory_space<vmem>>, vector<27x128xbf16>
    %cst = arith.constant dense<0.000000e+00> : vector<512x128xf32>
    %2 = tpu.matmul %0, %1, %cst {dimension_numbers = #tpu.dot_dimension_numbers<[1], [0], [0], [1], [0, 0, 1, 1], [], []>} : vector<512x27xbf16>, vector<27x128xbf16>, vector<512x128xf32> -> vector<512x128xf32>
    %c0_3 = arith.constant 0 : index
    %c0_4 = arith.constant 0 : index
    %3 = vector.load %arg3[%c0_3, %c0_4] : memref<1x128xf32, #tpu.memory_space<vmem>>, vector<1x128xf32>
    %4 = vector.broadcast %3 : vector<1x128xf32> to vector<512x128xf32>
    %5 = arith.mulf %2, %4 : vector<512x128xf32>
    %c0_5 = arith.constant 0 : index
    %c0_6 = arith.constant 0 : index
    %6 = vector.load %arg4[%c0_5, %c0_6] : memref<1x128xf32, #tpu.memory_space<vmem>>, vector<1x128xf32>
    %7 = vector.broadcast %6 : vector<1x128xf32> to vector<512x128xf32>
    %8 = arith.addf %5, %7 : vector<512x128xf32>
    %cst_7 = arith.constant 0.000000e+00 : f32
    %9 = vector.broadcast %cst_7 : f32 to vector<512x128xf32>
    %10 = arith.maximumf %8, %9 : vector<512x128xf32>
    %c0_8 = arith.constant 0 : index
    %c0_9 = arith.constant 0 : index
    %11 = vector.load %arg5[%c0_8, %c0_9] : memref<512x128xf32, #tpu.memory_space<vmem>>, vector<512x128xf32>
    tpu.vector_store %arg5[%c0_8, %c0_9], %10 {strides = array<i32>} : memref<512x128xf32, #tpu.memory_space<vmem>>, vector<512x128xf32>,
    return
  }
  func.func @transform_0(%arg0: i32) -> (i32, i32) {
    %c0_i32 = arith.constant 0 : i32
    %c0_i32_0 = arith.constant 0 : i32
    return %arg0, %c0_i32 : i32, i32
  }
  func.func @transform_1(%arg0: i32) -> (i32, i32) {
    %c0_i32 = arith.constant 0 : i32
    %c0_i32_0 = arith.constant 0 : i32
    %c0_i32_1 = arith.constant 0 : i32
    return %c0_i32, %c0_i32_0 : i32, i32
  }
  func.func @transform_2(%arg0: i32) -> (i32, i32) {
    %c0_i32 = arith.constant 0 : i32
    %c0_i32_0 = arith.constant 0 : i32
    %c0_i32_1 = arith.constant 0 : i32
    return %c0_i32, %c0_i32_0 : i32, i32
  }
  func.func @transform_3(%arg0: i32) -> (i32, i32) {
    %c0_i32 = arith.constant 0 : i32
    %c0_i32_0 = arith.constant 0 : i32
    %c0_i32_1 = arith.constant 0 : i32
    return %c0_i32, %c0_i32_0 : i32, i32
  }
  func.func @transform_4(%arg0: i32) -> (i32, i32) {
    %c0_i32 = arith.constant 0 : i32
    %c0_i32_0 = arith.constant 0 : i32
    return %arg0, %c0_i32 : i32, i32
  }
}

module attributes {stable_mosaic.version = 11 : i64} {
  func.func @_matmul_bn_act_kernel(%arg0: i32, %arg1: memref<512x1152xbf16, #tpu.memory_space<vmem>>, %arg2: memref<1152x128xbf16, #tpu.memory_space<vmem>>, %arg3: memref<1x128xf32, #tpu.memory_space<vmem>>, %arg4: memref<1x128xf32, #tpu.memory_space<vmem>>, %arg5: memref<512x128xf32, #tpu.memory_space<vmem>>) attributes {dimension_semantics = [#tpu.dimension_semantics<parallel>], iteration_bounds = array<i64: 1>, scalar_prefetch = 0 : i64, scratch_operands = 0 : i64, tpu.core_type = #tpu.core_type<tc>, window_params = [{transform_indices = @transform_0, window_bounds = array<i64: 512, 1152>}, {pipeline_mode = #tpu.pipeline_mode<synchronous>, transform_indices = @transform_1, window_bounds = array<i64: 1152, 128>}, {pipeline_mode = #tpu.pipeline_mode<synchronous>, transform_indices = @transform_2, window_bounds = array<i64: 1, 128>}, {pipeline_mode = #tpu.pipeline_mode<synchronous>, transform_indices = @transform_3, window_bounds = array<i64: 1, 128>}, {transform_indices = @transform_4, window_bounds = array<i64: 512, 128>}]} {
    %c0 = arith.constant 0 : index
    %c0_0 = arith.constant 0 : index
    %0 = vector.load %arg1[%c0, %c0_0] : memref<512x1152xbf16, #tpu.memory_space<vmem>>, vector<512x1152xbf16>
    %c0_1 = arith.constant 0 : index
    %c0_2 = arith.constant 0 : index
    %1 = vector.load %arg2[%c0_1, %c0_2] : memref<1152x128xbf16, #tpu.memory_space<vmem>>, vector<1152x128xbf16>
    %cst = arith.constant dense<0.000000e+00> : vector<512x128xf32>
    %2 = tpu.matmul %0, %1, %cst {dimension_numbers = #tpu.dot_dimension_numbers<[1], [0], [0], [1], [0, 0, 1, 1], [], []>} : vector<512x1152xbf16>, vector<1152x128xbf16>, vector<512x128xf32> -> vector<512x128xf32>
    %c0_3 = arith.constant 0 : index
    %c0_4 = arith.constant 0 : index
    %3 = vector.load %arg3[%c0_3, %c0_4] : memref<1x128xf32, #tpu.memory_space<vmem>>, vector<1x128xf32>
    %4 = vector.broadcast %3 : vector<1x128xf32> to vector<512x128xf32>
    %5 = arith.mulf %2, %4 : vector<512x128xf32>
    %c0_5 = arith.constant 0 : index
    %c0_6 = arith.constant 0 : index
    %6 = vector.load %arg4[%c0_5, %c0_6] : memref<1x128xf32, #tpu.memory_space<vmem>>, vector<1x128xf32>
    %7 = vector.broadcast %6 : vector<1x128xf32> to vector<512x128xf32>
    %8 = arith.addf %5, %7 : vector<512x128xf32>
    %cst_7 = arith.constant 0.000000e+00 : f32
    %9 = vector.broadcast %cst_7 : f32 to vector<512x128xf32>
    %10 = arith.maximumf %8, %9 : vector<512x128xf32>
    %c0_8 = arith.constant 0 : index
    %c0_9 = arith.constant 0 : index
    %11 = vector.load %arg5[%c0_8, %c0_9] : memref<512x128xf32, #tpu.memory_space<vmem>>, vector<512x128xf32>
    tpu.vector_store %arg5[%c0_8, %c0_9], %10 {strides = array<i32>} : memref<512x128xf32, #tpu.memory_space<vmem>>, vector<512x128xf32>,
    return
  }
  func.func @transform_0(%arg0: i32) -> (i32, i32) {
    %c0_i32 = arith.constant 0 : i32
    %c0_i32_0 = arith.constant 0 : i32
    return %arg0, %c0_i32 : i32, i32
  }
  func.func @transform_1(%arg0: i32) -> (i32, i32) {
    %c0_i32 = arith.constant 0 : i32
    %c0_i32_0 = arith.constant 0 : i32
    %c0_i32_1 = arith.constant 0 : i32
    return %c0_i32, %c0_i32_0 : i32, i32
  }
  func.func @transform_2(%arg0: i32) -> (i32, i32) {
    %c0_i32 = arith.constant 0 : i32
    %c0_i32_0 = arith.constant 0 : i32
    %c0_i32_1 = arith.constant 0 : i32
    return %c0_i32, %c0_i32_0 : i32, i32
  }
  func.func @transform_3(%arg0: i32) -> (i32, i32) {
    %c0_i32 = arith.constant 0 : i32
    %c0_i32_0 = arith.constant 0 : i32
    %c0_i32_1 = arith.constant 0 : i32
    return %c0_i32, %c0_i32_0 : i32, i32
  }
  func.func @transform_4(%arg0: i32) -> (i32, i32) {
    %c0_i32 = arith.constant 0 : i32
    %c0_i32_0 = arith.constant 0 : i32
    return %arg0, %c0_i32 : i32, i32
  }
}

module attributes {stable_mosaic.version = 11 : i64} {
  func.func @_matmul_bn_add_relu_kernel(%arg0: i32, %arg1: memref<512x1152xbf16, #tpu.memory_space<vmem>>, %arg2: memref<1152x128xbf16, #tpu.memory_space<vmem>>, %arg3: memref<1x128xf32, #tpu.memory_space<vmem>>, %arg4: memref<1x128xf32, #tpu.memory_space<vmem>>, %arg5: memref<512x128xf32, #tpu.memory_space<vmem>>, %arg6: memref<512x128xf32, #tpu.memory_space<vmem>>) attributes {dimension_semantics = [#tpu.dimension_semantics<parallel>], iteration_bounds = array<i64: 1>, scalar_prefetch = 0 : i64, scratch_operands = 0 : i64, tpu.core_type = #tpu.core_type<tc>, window_params = [{transform_indices = @transform_0, window_bounds = array<i64: 512, 1152>}, {pipeline_mode = #tpu.pipeline_mode<synchronous>, transform_indices = @transform_1, window_bounds = array<i64: 1152, 128>}, {pipeline_mode = #tpu.pipeline_mode<synchronous>, transform_indices = @transform_2, window_bounds = array<i64: 1, 128>}, {pipeline_mode = #tpu.pipeline_mode<synchronous>, transform_indices = @transform_3, window_bounds = array<i64: 1, 128>}, {transform_indices = @transform_4, window_bounds = array<i64: 512, 128>}, {transform_indices = @transform_5, window_bounds = array<i64: 512, 128>}]} {
    %c0 = arith.constant 0 : index
    %c0_0 = arith.constant 0 : index
    %0 = vector.load %arg1[%c0, %c0_0] : memref<512x1152xbf16, #tpu.memory_space<vmem>>, vector<512x1152xbf16>
    %c0_1 = arith.constant 0 : index
    %c0_2 = arith.constant 0 : index
    %1 = vector.load %arg2[%c0_1, %c0_2] : memref<1152x128xbf16, #tpu.memory_space<vmem>>, vector<1152x128xbf16>
    %cst = arith.constant dense<0.000000e+00> : vector<512x128xf32>
    %2 = tpu.matmul %0, %1, %cst {dimension_numbers = #tpu.dot_dimension_numbers<[1], [0], [0], [1], [0, 0, 1, 1], [], []>} : vector<512x1152xbf16>, vector<1152x128xbf16>, vector<512x128xf32> -> vector<512x128xf32>
    %c0_3 = arith.constant 0 : index
    %c0_4 = arith.constant 0 : index
    %3 = vector.load %arg3[%c0_3, %c0_4] : memref<1x128xf32, #tpu.memory_space<vmem>>, vector<1x128xf32>
    %4 = vector.broadcast %3 : vector<1x128xf32> to vector<512x128xf32>
    %5 = arith.mulf %2, %4 : vector<512x128xf32>
    %c0_5 = arith.constant 0 : index
    %c0_6 = arith.constant 0 : index
    %6 = vector.load %arg4[%c0_5, %c0_6] : memref<1x128xf32, #tpu.memory_space<vmem>>, vector<1x128xf32>
    %7 = vector.broadcast %6 : vector<1x128xf32> to vector<512x128xf32>
    %8 = arith.addf %5, %7 : vector<512x128xf32>
    %c0_7 = arith.constant 0 : index
    %c0_8 = arith.constant 0 : index
    %9 = vector.load %arg5[%c0_7, %c0_8] : memref<512x128xf32, #tpu.memory_space<vmem>>, vector<512x128xf32>
    %10 = arith.addf %8, %9 : vector<512x128xf32>
    %cst_9 = arith.constant 0.000000e+00 : f32
    %11 = vector.broadcast %cst_9 : f32 to vector<512x128xf32>
    %12 = arith.maximumf %10, %11 : vector<512x128xf32>
    %c0_10 = arith.constant 0 : index
    %c0_11 = arith.constant 0 : index
    %13 = vector.load %arg6[%c0_10, %c0_11] : memref<512x128xf32, #tpu.memory_space<vmem>>, vector<512x128xf32>
    tpu.vector_store %arg6[%c0_10, %c0_11], %12 {strides = array<i32>} : memref<512x128xf32, #tpu.memory_space<vmem>>, vector<512x128xf32>,
    return
  }
  func.func @transform_0(%arg0: i32) -> (i32, i32) {
    %c0_i32 = arith.constant 0 : i32
    %c0_i32_0 = arith.constant 0 : i32
    return %arg0, %c0_i32 : i32, i32
  }
  func.func @transform_1(%arg0: i32) -> (i32, i32) {
    %c0_i32 = arith.constant 0 : i32
    %c0_i32_0 = arith.constant 0 : i32
    %c0_i32_1 = arith.constant 0 : i32
    return %c0_i32, %c0_i32_0 : i32, i32
  }
  func.func @transform_2(%arg0: i32) -> (i32, i32) {
    %c0_i32 = arith.constant 0 : i32
    %c0_i32_0 = arith.constant 0 : i32
    %c0_i32_1 = arith.constant 0 : i32
    return %c0_i32, %c0_i32_0 : i32, i32
  }
  func.func @transform_3(%arg0: i32) -> (i32, i32) {
    %c0_i32 = arith.constant 0 : i32
    %c0_i32_0 = arith.constant 0 : i32
    %c0_i32_1 = arith.constant 0 : i32
    return %c0_i32, %c0_i32_0 : i32, i32
  }
  func.func @transform_4(%arg0: i32) -> (i32, i32) {
    %c0_i32 = arith.constant 0 : i32
    %c0_i32_0 = arith.constant 0 : i32
    return %arg0, %c0_i32 : i32, i32
  }
  func.func @transform_5(%arg0: i32) -> (i32, i32) {
    %c0_i32 = arith.constant 0 : i32
    %c0_i32_0 = arith.constant 0 : i32
    return %arg0, %c0_i32 : i32, i32
  }
}

module attributes {stable_mosaic.version = 11 : i64} {
  func.func @_matmul_bn_act_kernel(%arg0: i32, %arg1: memref<128x1152xbf16, #tpu.memory_space<vmem>>, %arg2: memref<1152x128xbf16, #tpu.memory_space<vmem>>, %arg3: memref<1x128xf32, #tpu.memory_space<vmem>>, %arg4: memref<1x128xf32, #tpu.memory_space<vmem>>, %arg5: memref<128x128xf32, #tpu.memory_space<vmem>>) attributes {dimension_semantics = [#tpu.dimension_semantics<parallel>], iteration_bounds = array<i64: 1>, scalar_prefetch = 0 : i64, scratch_operands = 0 : i64, tpu.core_type = #tpu.core_type<tc>, window_params = [{transform_indices = @transform_0, window_bounds = array<i64: 128, 1152>}, {pipeline_mode = #tpu.pipeline_mode<synchronous>, transform_indices = @transform_1, window_bounds = array<i64: 1152, 128>}, {pipeline_mode = #tpu.pipeline_mode<synchronous>, transform_indices = @transform_2, window_bounds = array<i64: 1, 128>}, {pipeline_mode = #tpu.pipeline_mode<synchronous>, transform_indices = @transform_3, window_bounds = array<i64: 1, 128>}, {transform_indices = @transform_4, window_bounds = array<i64: 128, 128>}]} {
    %c0 = arith.constant 0 : index
    %c0_0 = arith.constant 0 : index
    %0 = vector.load %arg1[%c0, %c0_0] : memref<128x1152xbf16, #tpu.memory_space<vmem>>, vector<128x1152xbf16>
    %c0_1 = arith.constant 0 : index
    %c0_2 = arith.constant 0 : index
    %1 = vector.load %arg2[%c0_1, %c0_2] : memref<1152x128xbf16, #tpu.memory_space<vmem>>, vector<1152x128xbf16>
    %cst = arith.constant dense<0.000000e+00> : vector<128x128xf32>
    %2 = tpu.matmul %0, %1, %cst {dimension_numbers = #tpu.dot_dimension_numbers<[1], [0], [0], [1], [0, 0, 1, 1], [], []>} : vector<128x1152xbf16>, vector<1152x128xbf16>, vector<128x128xf32> -> vector<128x128xf32>
    %c0_3 = arith.constant 0 : index
    %c0_4 = arith.constant 0 : index
    %3 = vector.load %arg3[%c0_3, %c0_4] : memref<1x128xf32, #tpu.memory_space<vmem>>, vector<1x128xf32>
    %4 = vector.broadcast %3 : vector<1x128xf32> to vector<128x128xf32>
    %5 = arith.mulf %2, %4 : vector<128x128xf32>
    %c0_5 = arith.constant 0 : index
    %c0_6 = arith.constant 0 : index
    %6 = vector.load %arg4[%c0_5, %c0_6] : memref<1x128xf32, #tpu.memory_space<vmem>>, vector<1x128xf32>
    %7 = vector.broadcast %6 : vector<1x128xf32> to vector<128x128xf32>
    %8 = arith.addf %5, %7 : vector<128x128xf32>
    %cst_7 = arith.constant 0.000000e+00 : f32
    %9 = vector.broadcast %cst_7 : f32 to vector<128x128xf32>
    %10 = arith.maximumf %8, %9 : vector<128x128xf32>
    %c0_8 = arith.constant 0 : index
    %c0_9 = arith.constant 0 : index
    %11 = vector.load %arg5[%c0_8, %c0_9] : memref<128x128xf32, #tpu.memory_space<vmem>>, vector<128x128xf32>
    tpu.vector_store %arg5[%c0_8, %c0_9], %10 {strides = array<i32>} : memref<128x128xf32, #tpu.memory_space<vmem>>, vector<128x128xf32>,
    return
  }
  func.func @transform_0(%arg0: i32) -> (i32, i32) {
    %c0_i32 = arith.constant 0 : i32
    %c0_i32_0 = arith.constant 0 : i32
    return %arg0, %c0_i32 : i32, i32
  }
  func.func @transform_1(%arg0: i32) -> (i32, i32) {
    %c0_i32 = arith.constant 0 : i32
    %c0_i32_0 = arith.constant 0 : i32
    %c0_i32_1 = arith.constant 0 : i32
    return %c0_i32, %c0_i32_0 : i32, i32
  }
  func.func @transform_2(%arg0: i32) -> (i32, i32) {
    %c0_i32 = arith.constant 0 : i32
    %c0_i32_0 = arith.constant 0 : i32
    %c0_i32_1 = arith.constant 0 : i32
    return %c0_i32, %c0_i32_0 : i32, i32
  }
  func.func @transform_3(%arg0: i32) -> (i32, i32) {
    %c0_i32 = arith.constant 0 : i32
    %c0_i32_0 = arith.constant 0 : i32
    %c0_i32_1 = arith.constant 0 : i32
    return %c0_i32, %c0_i32_0 : i32, i32
  }
  func.func @transform_4(%arg0: i32) -> (i32, i32) {
    %c0_i32 = arith.constant 0 : i32
    %c0_i32_0 = arith.constant 0 : i32
    return %arg0, %c0_i32 : i32, i32
  }
}

module attributes {stable_mosaic.version = 11 : i64} {
  func.func @_matmul_bn_act_kernel(%arg0: i32, %arg1: memref<128x128xbf16, #tpu.memory_space<vmem>>, %arg2: memref<128x128xbf16, #tpu.memory_space<vmem>>, %arg3: memref<1x128xf32, #tpu.memory_space<vmem>>, %arg4: memref<1x128xf32, #tpu.memory_space<vmem>>, %arg5: memref<128x128xf32, #tpu.memory_space<vmem>>) attributes {dimension_semantics = [#tpu.dimension_semantics<parallel>], iteration_bounds = array<i64: 1>, scalar_prefetch = 0 : i64, scratch_operands = 0 : i64, tpu.core_type = #tpu.core_type<tc>, window_params = [{transform_indices = @transform_0, window_bounds = array<i64: 128, 128>}, {pipeline_mode = #tpu.pipeline_mode<synchronous>, transform_indices = @transform_1, window_bounds = array<i64: 128, 128>}, {pipeline_mode = #tpu.pipeline_mode<synchronous>, transform_indices = @transform_2, window_bounds = array<i64: 1, 128>}, {pipeline_mode = #tpu.pipeline_mode<synchronous>, transform_indices = @transform_3, window_bounds = array<i64: 1, 128>}, {transform_indices = @transform_4, window_bounds = array<i64: 128, 128>}]} {
    %c0 = arith.constant 0 : index
    %c0_0 = arith.constant 0 : index
    %0 = vector.load %arg1[%c0, %c0_0] : memref<128x128xbf16, #tpu.memory_space<vmem>>, vector<128x128xbf16>
    %c0_1 = arith.constant 0 : index
    %c0_2 = arith.constant 0 : index
    %1 = vector.load %arg2[%c0_1, %c0_2] : memref<128x128xbf16, #tpu.memory_space<vmem>>, vector<128x128xbf16>
    %cst = arith.constant dense<0.000000e+00> : vector<128x128xf32>
    %2 = tpu.matmul %0, %1, %cst {dimension_numbers = #tpu.dot_dimension_numbers<[1], [0], [0], [1], [0, 0, 1, 1], [], []>} : vector<128x128xbf16>, vector<128x128xbf16>, vector<128x128xf32> -> vector<128x128xf32>
    %c0_3 = arith.constant 0 : index
    %c0_4 = arith.constant 0 : index
    %3 = vector.load %arg3[%c0_3, %c0_4] : memref<1x128xf32, #tpu.memory_space<vmem>>, vector<1x128xf32>
    %4 = vector.broadcast %3 : vector<1x128xf32> to vector<128x128xf32>
    %5 = arith.mulf %2, %4 : vector<128x128xf32>
    %c0_5 = arith.constant 0 : index
    %c0_6 = arith.constant 0 : index
    %6 = vector.load %arg4[%c0_5, %c0_6] : memref<1x128xf32, #tpu.memory_space<vmem>>, vector<1x128xf32>
    %7 = vector.broadcast %6 : vector<1x128xf32> to vector<128x128xf32>
    %8 = arith.addf %5, %7 : vector<128x128xf32>
    %c0_7 = arith.constant 0 : index
    %c0_8 = arith.constant 0 : index
    %9 = vector.load %arg5[%c0_7, %c0_8] : memref<128x128xf32, #tpu.memory_space<vmem>>, vector<128x128xf32>
    tpu.vector_store %arg5[%c0_7, %c0_8], %8 {strides = array<i32>} : memref<128x128xf32, #tpu.memory_space<vmem>>, vector<128x128xf32>,
    return
  }
  func.func @transform_0(%arg0: i32) -> (i32, i32) {
    %c0_i32 = arith.constant 0 : i32
    %c0_i32_0 = arith.constant 0 : i32
    return %arg0, %c0_i32 : i32, i32
  }
  func.func @transform_1(%arg0: i32) -> (i32, i32) {
    %c0_i32 = arith.constant 0 : i32
    %c0_i32_0 = arith.constant 0 : i32
    %c0_i32_1 = arith.constant 0 : i32
    return %c0_i32, %c0_i32_0 : i32, i32
  }
  func.func @transform_2(%arg0: i32) -> (i32, i32) {
    %c0_i32 = arith.constant 0 : i32
    %c0_i32_0 = arith.constant 0 : i32
    %c0_i32_1 = arith.constant 0 : i32
    return %c0_i32, %c0_i32_0 : i32, i32
  }
  func.func @transform_3(%arg0: i32) -> (i32, i32) {
    %c0_i32 = arith.constant 0 : i32
    %c0_i32_0 = arith.constant 0 : i32
    %c0_i32_1 = arith.constant 0 : i32
    return %c0_i32, %c0_i32_0 : i32, i32
  }
  func.func @transform_4(%arg0: i32) -> (i32, i32) {
    %c0_i32 = arith.constant 0 : i32
    %c0_i32_0 = arith.constant 0 : i32
    return %arg0, %c0_i32 : i32, i32
  }
}

module attributes {stable_mosaic.version = 11 : i64} {
  func.func @_matmul_bn_add_relu_gap_kernel(%arg0: i32, %arg1: i32, %arg2: memref<1x64x1152xbf16, #tpu.memory_space<vmem>>, %arg3: memref<1152x128xbf16, #tpu.memory_space<vmem>>, %arg4: memref<1x128xf32, #tpu.memory_space<vmem>>, %arg5: memref<1x128xf32, #tpu.memory_space<vmem>>, %arg6: memref<1x64x128xf32, #tpu.memory_space<vmem>>, %arg7: memref<1x8x128xf32, #tpu.memory_space<vmem>>) attributes {dimension_semantics = [#tpu.dimension_semantics<parallel>, #tpu.dimension_semantics<arbitrary>], iteration_bounds = array<i64: 2, 1>, scalar_prefetch = 0 : i64, scratch_operands = 0 : i64, tpu.core_type = #tpu.core_type<tc>, window_params = [{transform_indices = @transform_0, window_bounds = array<i64: 1, 64, 1152>}, {pipeline_mode = #tpu.pipeline_mode<synchronous>, transform_indices = @transform_1, window_bounds = array<i64: 1152, 128>}, {pipeline_mode = #tpu.pipeline_mode<synchronous>, transform_indices = @transform_2, window_bounds = array<i64: 1, 128>}, {pipeline_mode = #tpu.pipeline_mode<synchronous>, transform_indices = @transform_3, window_bounds = array<i64: 1, 128>}, {transform_indices = @transform_4, window_bounds = array<i64: 1, 64, 128>}, {transform_indices = @transform_5, window_bounds = array<i64: 1, 8, 128>}]} {
    %c0_i32 = arith.constant 0 : i32
    %0 = arith.cmpi eq, %arg1, %c0_i32 : i32
    %1 = arith.extui %0 : i1 to i32
    %c0_i32_0 = arith.constant 0 : i32
    %2 = arith.cmpi ne, %1, %c0_i32_0 : i32
    scf.if %2 {
      %cst_22 = arith.constant 0.000000e+00 : f32
      %29 = vector.broadcast %cst_22 : f32 to vector<1x8x128xf32>
      %c0_23 = arith.constant 0 : index
      %c0_24 = arith.constant 0 : index
      %c0_25 = arith.constant 0 : index
      %30 = vector.load %arg7[%c0_23, %c0_24, %c0_25] : memref<1x8x128xf32, #tpu.memory_space<vmem>>, vector<1x8x128xf32>
      tpu.vector_store %arg7[%c0_23, %c0_24, %c0_25], %29 {strides = array<i32>} : memref<1x8x128xf32, #tpu.memory_space<vmem>>, vector<1x8x128xf32>,
    } else {
    }
    %c0 = arith.constant 0 : index
    %c0_1 = arith.constant 0 : index
    %c0_2 = arith.constant 0 : index
    %3 = vector.load %arg2[%c0, %c0_1, %c0_2] : memref<1x64x1152xbf16, #tpu.memory_space<vmem>>, vector<1x64x1152xbf16>
    %4 = vector.shape_cast %3 : vector<1x64x1152xbf16> to vector<64x1152xbf16>
    %c0_3 = arith.constant 0 : index
    %c0_4 = arith.constant 0 : index
    %5 = vector.load %arg3[%c0_3, %c0_4] : memref<1152x128xbf16, #tpu.memory_space<vmem>>, vector<1152x128xbf16>
    %cst = arith.constant dense<0.000000e+00> : vector<64x128xf32>
    %6 = tpu.matmul %4, %5, %cst {dimension_numbers = #tpu.dot_dimension_numbers<[1], [0], [0], [1], [0, 0, 1, 1], [], []>} : vector<64x1152xbf16>, vector<1152x128xbf16>, vector<64x128xf32> -> vector<64x128xf32>
    %c0_5 = arith.constant 0 : index
    %c0_6 = arith.constant 0 : index
    %7 = vector.load %arg4[%c0_5, %c0_6] : memref<1x128xf32, #tpu.memory_space<vmem>>, vector<1x128xf32>
    %8 = vector.broadcast %7 : vector<1x128xf32> to vector<64x128xf32>
    %9 = arith.mulf %6, %8 : vector<64x128xf32>
    %c0_7 = arith.constant 0 : index
    %c0_8 = arith.constant 0 : index
    %10 = vector.load %arg5[%c0_7, %c0_8] : memref<1x128xf32, #tpu.memory_space<vmem>>, vector<1x128xf32>
    %11 = vector.broadcast %10 : vector<1x128xf32> to vector<64x128xf32>
    %12 = arith.addf %9, %11 : vector<64x128xf32>
    %c0_9 = arith.constant 0 : index
    %c0_10 = arith.constant 0 : index
    %c0_11 = arith.constant 0 : index
    %13 = vector.load %arg6[%c0_9, %c0_10, %c0_11] : memref<1x64x128xf32, #tpu.memory_space<vmem>>, vector<1x64x128xf32>
    %14 = vector.shape_cast %13 : vector<1x64x128xf32> to vector<64x128xf32>
    %15 = arith.addf %12, %14 : vector<64x128xf32>
    %cst_12 = arith.constant 0.000000e+00 : f32
    %16 = vector.broadcast %cst_12 : f32 to vector<64x128xf32>
    %17 = arith.maximumf %15, %16 : vector<64x128xf32>
    %cst_13 = arith.constant dense<0.000000e+00> : vector<128xf32>
    %18 = vector.multi_reduction <add>, %17, %cst_13 [0] : vector<64x128xf32> to vector<128xf32>
    %19 = vector.shape_cast %18 : vector<128xf32> to vector<1x128xf32>
    %c0_14 = arith.constant 0 : index
    %c0_15 = arith.constant 0 : index
    %c0_16 = arith.constant 0 : index
    %20 = vector.load %arg7[%c0_14, %c0_15, %c0_16] : memref<1x8x128xf32, #tpu.memory_space<vmem>>, vector<1x8x128xf32>
    %21 = vector.shape_cast %19 : vector<1x128xf32> to vector<1x1x128xf32>
    %22 = vector.shape_cast %21 : vector<1x1x128xf32> to vector<1x1x128xf32>
    %23 = vector.broadcast %22 : vector<1x1x128xf32> to vector<1x8x128xf32>
    %24 = arith.addf %20, %23 : vector<1x8x128xf32>
    %c0_17 = arith.constant 0 : index
    %c0_18 = arith.constant 0 : index
    %c0_19 = arith.constant 0 : index
    %25 = vector.load %arg7[%c0_17, %c0_18, %c0_19] : memref<1x8x128xf32, #tpu.memory_space<vmem>>, vector<1x8x128xf32>
    tpu.vector_store %arg7[%c0_17, %c0_18, %c0_19], %24 {strides = array<i32>} : memref<1x8x128xf32, #tpu.memory_space<vmem>>, vector<1x8x128xf32>,
    %c0_i32_20 = arith.constant 0 : i32
    %26 = arith.cmpi eq, %arg1, %c0_i32_20 : i32
    %27 = arith.extui %26 : i1 to i32
    %c0_i32_21 = arith.constant 0 : i32
    %28 = arith.cmpi ne, %27, %c0_i32_21 : i32
    scf.if %28 {
      %c0_22 = arith.constant 0 : index
      %c0_23 = arith.constant 0 : index
      %c0_24 = arith.constant 0 : index
      %29 = vector.load %arg7[%c0_22, %c0_23, %c0_24] : memref<1x8x128xf32, #tpu.memory_space<vmem>>, vector<1x8x128xf32>
      %cst_25 = arith.constant 1.562500e-02 : f32
      %30 = vector.broadcast %cst_25 : f32 to vector<1x8x128xf32>
      %31 = arith.mulf %29, %30 : vector<1x8x128xf32>
      %c0_26 = arith.constant 0 : index
      %c0_27 = arith.constant 0 : index
      %c0_28 = arith.constant 0 : index
      %32 = vector.load %arg7[%c0_26, %c0_27, %c0_28] : memref<1x8x128xf32, #tpu.memory_space<vmem>>, vector<1x8x128xf32>
      tpu.vector_store %arg7[%c0_26, %c0_27, %c0_28], %31 {strides = array<i32>} : memref<1x8x128xf32, #tpu.memory_space<vmem>>, vector<1x8x128xf32>,
    } else {
    }
    return
  }
  func.func @transform_0(%arg0: i32, %arg1: i32) -> (i32, i32, i32) {
    %c0_i32 = arith.constant 0 : i32
    %c0_i32_0 = arith.constant 0 : i32
    return %arg0, %arg1, %c0_i32 : i32, i32, i32
  }
  func.func @transform_1(%arg0: i32, %arg1: i32) -> (i32, i32) {
    %c0_i32 = arith.constant 0 : i32
    %c0_i32_0 = arith.constant 0 : i32
    %c0_i32_1 = arith.constant 0 : i32
    return %c0_i32, %c0_i32_0 : i32, i32
  }
  func.func @transform_2(%arg0: i32, %arg1: i32) -> (i32, i32) {
    %c0_i32 = arith.constant 0 : i32
    %c0_i32_0 = arith.constant 0 : i32
    %c0_i32_1 = arith.constant 0 : i32
    return %c0_i32, %c0_i32_0 : i32, i32
  }
  func.func @transform_3(%arg0: i32, %arg1: i32) -> (i32, i32) {
    %c0_i32 = arith.constant 0 : i32
    %c0_i32_0 = arith.constant 0 : i32
    %c0_i32_1 = arith.constant 0 : i32
    return %c0_i32, %c0_i32_0 : i32, i32
  }
  func.func @transform_4(%arg0: i32, %arg1: i32) -> (i32, i32, i32) {
    %c0_i32 = arith.constant 0 : i32
    %c0_i32_0 = arith.constant 0 : i32
    return %arg0, %arg1, %c0_i32 : i32, i32, i32
  }
  func.func @transform_5(%arg0: i32, %arg1: i32) -> (i32, i32, i32) {
    %c0_i32 = arith.constant 0 : i32
    %c0_i32_0 = arith.constant 0 : i32
    %c0_i32_1 = arith.constant 0 : i32
    return %arg0, %c0_i32, %c0_i32_0 : i32, i32, i32
  }
}

</mosaic_0001>

<llo_original>
// kernel: ssl_encoder_forward.6
$region0: #{ssl_encoder_forward.6}
  #allocation0 [shape = 'u32[]', space=smem, size = 0x4, offset = 0x4, fixed_abs, tag = 'smem constant byte address 0x4 - core index']
  #allocation1 [shape = 'u32[144,128]{1,0:T(1,128)}', space=vmem, size = 0x12000, scoped, tag = 'internal scratch']
  %s0 = inlined_call_operand.vmem [shape: bf16[512,27], index: 0, kind: input, shape index: {}]
  %s1 = inlined_call_operand.vmem [shape: bf16[27,128], index: 1, kind: input, shape index: {}]
  %s2 = inlined_call_operand.hbm [shape: f32[1,128], index: 2, kind: input, shape index: {}]
  %s3 = inlined_call_operand.hbm [shape: f32[1,128], index: 3, kind: input, shape index: {}]
  %s4 = inlined_call_operand.vmem [shape: f32[512,128], index: 4, kind: output, shape index: {}]
  %s5 = sld [smem:[#allocation0]]
  $region34: #{ssl_encoder_forward.6} parent=0
    _
  %s7 = ssub.s32 1, %s5
  %s8 = scalar_select 0, %s7, %s5
  $region1: #{ssl_encoder_forward.6} parent=0
    #allocation2 [shape = 'u8[512]{0}', space=vmem, size = 0x400, scoped, tag = 'input window, operand 2, single buffered']
    #allocation3 [shape = 's32[1]{0}', space=sflag, size = 0x4, scoped, tag = 'scoped memory for ssl_encoder_forward.6']
    #allocation4 [shape = 'u8[512]{0}', space=vmem, size = 0x400, scoped, tag = 'input window, operand 3, single buffered']
    #allocation5 [shape = 's32[1]{0}', space=sflag, size = 0x4, scoped, tag = 'scoped memory for ssl_encoder_forward.6']
    %9 = vsyncpa [#allocation3], 0
    %10 = vsyncpa [#allocation5], 0
    // Predicated region
    $region2: #{ssl_encoder_forward.6} parent=1 // pred_check
      _
    $region3: #{ssl_encoder_forward.6} parent=1 // pred_check_branch
      %12 = sbr.rel (0) target = $region5
    $region4: #{ssl_encoder_forward.6} parent=1 // pred_region
      _
    $region5: #{ssl_encoder_forward.6} parent=1 // pred_fallthru
      _
    // Predicated region
    $region6: #{ssl_encoder_forward.6} parent=1 // pred_check
      _
    $region7: #{ssl_encoder_forward.6} parent=1 // pred_check_branch
      %14 = sbr.rel (0) target = $region9
    $region8: #{ssl_encoder_forward.6} parent=1 // pred_region
      _
    $region9: #{ssl_encoder_forward.6} parent=1 // pred_fallthru
      _
    // Predicated region
    $region10: #{ssl_encoder_forward.6} parent=1 // pred_check
      _
    $region11: #{ssl_encoder_forward.6} parent=1 // pred_check_branch
      %16 = sbr.rel (0) target = $region13
    $region12: #{ssl_encoder_forward.6} parent=1 // pred_region
      %s18 = ssub.s32 16, 16
      %19 = vsyncadd [#allocation3], %s18
      %s21 = sshll.u32 [#allocation2], 4
      %s22 = int_to_ptr.vmem [resolvable:$true] %s21
      %24 = dma.hbm_to_vmem [thread:$0]  %s2, 16, %s22, [#allocation3]
    $region13: #{ssl_encoder_forward.6} parent=1 // pred_fallthru
      _
    // Predicated region
    $region14: #{ssl_encoder_forward.6} parent=1 // pred_check
      _
    $region15: #{ssl_encoder_forward.6} parent=1 // pred_check_branch
      %26 = sbr.rel (0) target = $region17
    $region16: #{ssl_encoder_forward.6} parent=1 // pred_region
      %s28 = ssub.s32 16, 16
      %29 = vsyncadd [#allocation5], %s28
      %s31 = sshll.u32 [#allocation4], 4
      %s32 = int_to_ptr.vmem [resolvable:$true] %s31
      %34 = dma.hbm_to_vmem [thread:$0]  %s3, 16, %s32, [#allocation5]
    $region17: #{ssl_encoder_forward.6} parent=1 // pred_fallthru
      _
    // Predicated region
    $region18: #{ssl_encoder_forward.6} parent=1 // pred_check
      _
    $region19: #{ssl_encoder_forward.6} parent=1 // pred_check_branch
      %36 = sbr.rel (0) target = $region21
    $region20: #{ssl_encoder_forward.6} parent=1 // pred_region
      %37 = dma.done [#allocation3], 16
    $region21: #{ssl_encoder_forward.6} parent=1 // pred_fallthru
      _
    // Predicated region
    $region22: #{ssl_encoder_forward.6} parent=1 // pred_check
      _
    $region23: #{ssl_encoder_forward.6} parent=1 // pred_check_branch
      %39 = sbr.rel (0) target = $region25
    $region24: #{ssl_encoder_forward.6} parent=1 // pred_region
      %40 = dma.done [#allocation5], 16
    $region25: #{ssl_encoder_forward.6} parent=1 // pred_fallthru
      _
    %v42 = vld [vmem:[%s0] sm:$0xf]
    %v43 = vld [vmem:[%s0 + $0x4] sm:$0xf]
    %v44 = vld [vmem:[%s0 + $0x8] sm:$0xf]
    %v45 = vld [vmem:[%s0 + $0xc] sm:$0xf]
    %v46 = vld [vmem:[%s0 + $0x10] sm:$0xf]
    %v47 = vld [vmem:[%s0 + $0x14] sm:$0xf]
    %v48 = vld [vmem:[%s0 + $0x18] sm:$0xf]
    %v49 = vld [vmem:[%s0 + $0x1c] sm:$0xf]
    %v50 = vld [vmem:[%s0 + $0x20] sm:$0xf]
    %v51 = vld [vmem:[%s0 + $0x24] sm:$0xf]
    %v52 = vld [vmem:[%s0 + $0x28] sm:$0xf]
    %v53 = vld [vmem:[%s0 + $0x2c] sm:$0xf]
    %v54 = vld [vmem:[%s0 + $0x30] sm:$0xf]
    %v55 = vld [vmem:[%s0 + $0x34] sm:$0xf]
    %v56 = vld [vmem:[%s0 + $0x38] sm:$0xf]
    %v57 = vld [vmem:[%s0 + $0x3c] sm:$0xf]
    %v58 = vld [vmem:[%s0 + $0x40] sm:$0xf]
    %v59 = vld [vmem:[%s0 + $0x44] sm:$0xf]
    %v60 = vld [vmem:[%s0 + $0x48] sm:$0xf]
    %v61 = vld [vmem:[%s0 + $0x4c] sm:$0xf]
    %v62 = vld [vmem:[%s0 + $0x50] sm:$0xf]
    %v63 = vld [vmem:[%s0 + $0x54] sm:$0xf]
    %v64 = vld [vmem:[%s0 + $0x58] sm:$0xf]
    %v65 = vld [vmem:[%s0 + $0x5c] sm:$0xf]
    %v66 = vld [vmem:[%s0 + $0x60] sm:$0xf]
    %v67 = vld [vmem:[%s0 + $0x64] sm:$0xf]
    %v68 = vld [vmem:[%s0 + $0x68] sm:$0xf]
    %v69 = vld [vmem:[%s0 + $0x6c] sm:$0xf]
    %v70 = vld [vmem:[%s0 + $0x70] sm:$0xf]
    %v71 = vld [vmem:[%s0 + $0x74] sm:$0xf]
    %v72 = vld [vmem:[%s0 + $0x78] sm:$0xf]
    %v73 = vld [vmem:[%s0 + $0x7c] sm:$0xf]
    %v74 = vld [vmem:[%s0 + $0x80] sm:$0xf]
    %v75 = vld [vmem:[%s0 + $0x84] sm:$0xf]
    %v76 = vld [vmem:[%s0 + $0x88] sm:$0xf]
    %v77 = vld [vmem:[%s0 + $0x8c] sm:$0xf]
    %v78 = vld [vmem:[%s0 + $0x90] sm:$0xf]
    %v79 = vld [vmem:[%s0 + $0x94] sm:$0xf]
    %v80 = vld [vmem:[%s0 + $0x98] sm:$0xf]
    %v81 = vld [vmem:[%s0 + $0x9c] sm:$0xf]
    %v82 = vld [vmem:[%s0 + $0xa0] sm:$0xf]
    %v83 = vld [vmem:[%s0 + $0xa4] sm:$0xf]
    %v84 = vld [vmem:[%s0 + $0xa8] sm:$0xf]
    %v85 = vld [vmem:[%s0 + $0xac] sm:$0xf]
    %v86 = vld [vmem:[%s0 + $0xb0] sm:$0xf]
    %v87 = vld [vmem:[%s0 + $0xb4] sm:$0xf]
    %v88 = vld [vmem:[%s0 + $0xb8] sm:$0xf]
    %v89 = vld [vmem:[%s0 + $0xbc] sm:$0xf]
    %v90 = vld [vmem:[%s0 + $0xc0] sm:$0xf]
    %v91 = vld [vmem:[%s0 + $0xc4] sm:$0xf]
    %v92 = vld [vmem:[%s0 + $0xc8] sm:$0xf]
    %v93 = vld [vmem:[%s0 + $0xcc] sm:$0xf]
    %v94 = vld [vmem:[%s0 + $0xd0] sm:$0xf]
    %v95 = vld [vmem:[%s0 + $0xd4] sm:$0xf]
    %v96 = vld [vmem:[%s0 + $0xd8] sm:$0xf]
    %v97 = vld [vmem:[%s0 + $0xdc] sm:$0xf]
    %v98 = vld [vmem:[%s0 + $0xe0] sm:$0xf]
    %v99 = vld [vmem:[%s0 + $0xe4] sm:$0xf]
    %v100 = vld [vmem:[%s0 + $0xe8] sm:$0xf]
    %v101 = vld [vmem:[%s0 + $0xec] sm:$0xf]
    %v102 = vld [vmem:[%s0 + $0xf0] sm:$0xf]
    %v103 = vld [vmem:[%s0 + $0xf4] sm:$0xf]
    %v104 = vld [vmem:[%s0 + $0xf8] sm:$0xf]
    %v105 = vld [vmem:[%s0 + $0xfc] sm:$0xf]
    %v106 = vld [vmem:[%s1] sm:$0xf]
    %v107 = vld [vmem:[%s1 + $0x4] sm:$0xf]
    %v108 = vld [vmem:[%s1 + $0x8] sm:$0xf]
    %v109 = vld [vmem:[%s1 + $0xc] sm:$0x3]
    %v174 = vunpack.c.l.b16 %v42
    %v175 = vunpack.c.l.b16 %v43
    %v176 = vunpack.c.l.b16 %v44
    %v177 = vunpack.c.l.b16 %v45
    %v178 = vunpack.c.l.b16 %v46
    %v179 = vunpack.c.l.b16 %v47
    %v180 = vunpack.c.l.b16 %v48
    %v181 = vunpack.c.l.b16 %v49
    %v182 = vunpack.c.l.b16 %v50
    %v183 = vunpack.c.l.b16 %v51
    %v184 = vunpack.c.l.b16 %v52
    %v185 = vunpack.c.l.b16 %v53
    %v186 = vunpack.c.l.b16 %v54
    %v187 = vunpack.c.l.b16 %v55
    %v188 = vunpack.c.l.b16 %v56
    %v189 = vunpack.c.l.b16 %v57
    %v190 = vunpack.c.l.b16 %v58
    %v191 = vunpack.c.l.b16 %v59
    %v192 = vunpack.c.l.b16 %v60
    %v193 = vunpack.c.l.b16 %v61
    %v194 = vunpack.c.l.b16 %v62
    %v195 = vunpack.c.l.b16 %v63
    %v196 = vunpack.c.l.b16 %v64
    %v197 = vunpack.c.l.b16 %v65
    %v198 = vunpack.c.l.b16 %v66
    %v199 = vunpack.c.l.b16 %v67
    %v200 = vunpack.c.l.b16 %v68
    %v201 = vunpack.c.l.b16 %v69
    %v202 = vunpack.c.l.b16 %v70
    %v203 = vunpack.c.l.b16 %v71
    %v204 = vunpack.c.l.b16 %v72
    %v205 = vunpack.c.l.b16 %v73
    %v206 = vunpack.c.l.b16 %v74
    %v207 = vunpack.c.l.b16 %v75
    %v208 = vunpack.c.l.b16 %v76
    %v209 = vunpack.c.l.b16 %v77
    %v210 = vunpack.c.l.b16 %v78
    %v211 = vunpack.c.l.b16 %v79
    %v212 = vunpack.c.l.b16 %v80
    %v213 = vunpack.c.l.b16 %v81
    %v214 = vunpack.c.l.b16 %v82
    %v215 = vunpack.c.l.b16 %v83
    %v216 = vunpack.c.l.b16 %v84
    %v217 = vunpack.c.l.b16 %v85
    %v218 = vunpack.c.l.b16 %v86
    %v219 = vunpack.c.l.b16 %v87
    %v220 = vunpack.c.l.b16 %v88
    %v221 = vunpack.c.l.b16 %v89
    %v222 = vunpack.c.l.b16 %v90
    %v223 = vunpack.c.l.b16 %v91
    %v224 = vunpack.c.l.b16 %v92
    %v225 = vunpack.c.l.b16 %v93
    %v226 = vunpack.c.l.b16 %v94
    %v227 = vunpack.c.l.b16 %v95
    %v228 = vunpack.c.l.b16 %v96
    %v229 = vunpack.c.l.b16 %v97
    %v230 = vunpack.c.l.b16 %v98
    %v231 = vunpack.c.l.b16 %v99
    %v232 = vunpack.c.l.b16 %v100
    %v233 = vunpack.c.l.b16 %v101
    %v234 = vunpack.c.l.b16 %v102
    %v235 = vunpack.c.l.b16 %v103
    %v236 = vunpack.c.l.b16 %v104
    %v237 = vunpack.c.l.b16 %v105
    %v238 = vpack.c.b16 %v175, %v174
    %v239 = vpack.c.b16 %v177, %v176
    %v240 = vpack.c.b16 %v179, %v178
    %v241 = vpack.c.b16 %v181, %v180
    %v242 = vpack.c.b16 %v183, %v182
    %v243 = vpack.c.b16 %v185, %v184
    %v244 = vpack.c.b16 %v187, %v186
    %v245 = vpack.c.b16 %v189, %v188
    %v246 = vpack.c.b16 %v191, %v190
    %v247 = vpack.c.b16 %v193, %v192
    %v248 = vpack.c.b16 %v195, %v194
    %v249 = vpack.c.b16 %v197, %v196
    %v250 = vpack.c.b16 %v199, %v198
    %v251 = vpack.c.b16 %v201, %v200
    %v252 = vpack.c.b16 %v203, %v202
    %v253 = vpack.c.b16 %v205, %v204
    %v254 = vpack.c.b16 %v207, %v206
    %v255 = vpack.c.b16 %v209, %v208
    %v256 = vpack.c.b16 %v211, %v210
    %v257 = vpack.c.b16 %v213, %v212
    %v258 = vpack.c.b16 %v215, %v214
    %v259 = vpack.c.b16 %v217, %v216
    %v260 = vpack.c.b16 %v219, %v218
    %v261 = vpack.c.b16 %v221, %v220
    %v262 = vpack.c.b16 %v223, %v222
    %v263 = vpack.c.b16 %v225, %v224
    %v264 = vpack.c.b16 %v227, %v226
    %v265 = vpack.c.b16 %v229, %v228
    %v266 = vpack.c.b16 %v231, %v230
    %v267 = vpack.c.b16 %v233, %v232
    %v268 = vpack.c.b16 %v235, %v234
    %v269 = vpack.c.b16 %v237, %v236
    %v274 = vunpack.c.l.b16 %v106
    %v275 = vunpack.c.l.b16 %v107
    %v276 = vunpack.c.l.b16 %v108
    %v277 = vunpack.c.l.b16 %v109
    %v278 = vpack.c.b16 %v275, %v274
    %v279 = vpack.c.b16 %v277, %v276
    %vm281 = vcmask 220160
    %v283 = vsel %vm281, %v238, 0
    %v286 = vsel %vm281, %v239, 0
    %v289 = vsel %vm281, %v240, 0
    %v292 = vsel %vm281, %v241, 0
    %v295 = vsel %vm281, %v242, 0
    %v298 = vsel %vm281, %v243, 0
    %v301 = vsel %vm281, %v244, 0
    %v304 = vsel %vm281, %v245, 0
    %v307 = vsel %vm281, %v246, 0
    %v310 = vsel %vm281, %v247, 0
    %v313 = vsel %vm281, %v248, 0
    %v316 = vsel %vm281, %v249, 0
    %v319 = vsel %vm281, %v250, 0
    %v322 = vsel %vm281, %v251, 0
    %v325 = vsel %vm281, %v252, 0
    %v328 = vsel %vm281, %v253, 0
    %v331 = vsel %vm281, %v254, 0
    %v334 = vsel %vm281, %v255, 0
    %v337 = vsel %vm281, %v256, 0
    %v340 = vsel %vm281, %v257, 0
    %v343 = vsel %vm281, %v258, 0
    %v346 = vsel %vm281, %v259, 0
    %v349 = vsel %vm281, %v260, 0
    %v352 = vsel %vm281, %v261, 0
    %v355 = vsel %vm281, %v262, 0
    %v358 = vsel %vm281, %v263, 0
    %v361 = vsel %vm281, %v264, 0
    %v364 = vsel %vm281, %v265, 0
    %v367 = vsel %vm281, %v266, 0
    %v370 = vsel %vm281, %v267, 0
    %v373 = vsel %vm281, %v268, 0
    %v376 = vsel %vm281, %v269, 0
    %vm378 = vcmask 1044480
    %vm379 = vcmask 1045504
    %v380 = vsel %vm378, 4294967295, 65535
    %v381 = vsel %vm379, %v380, 0
    %v383 = vand.u32 %v279, %v381
    %385 = vmatprep.subr.bf16.mxu0 0
    %386 = vmatpush1.bf16.msra.mxu0 0
    %387 = vmatprep.subr.bf16.mxu0 0
    %388 = vmatpush1.bf16.msra.mxu0 0
    %389 = vmatprep.subr.bf16.mxu0 0
    %390 = vmatpush1.bf16.msra.mxu0 0
    %391 = vmatprep.subr.bf16.mxu0 0
    %392 = vmatpush1.bf16.msra.mxu0 0
    %393 = vmatprep.subr.bf16.mxu0 0
    %394 = vmatpush1.bf16.msra.mxu0 0
    %395 = vmatprep.subr.bf16.mxu0 0
    %396 = vmatpush1.bf16.msra.mxu0 0
    %397 = vmatprep.subr.bf16.mxu0 0
    %398 = vmatpush1.bf16.msra.mxu0 %v383
    %399 = vmatprep.subr.bf16.mxu0 0
    %400 = vmatpush1.bf16.msra.mxu0 %v278
    %401 = vmatprep.subr.bf16.mxu0 0
    %402 = vmatpush2.bf16.msra.mxu0 0
    %403 = vmatprep.subr.bf16.mxu0 0
    %404 = vmatpush2.bf16.msra.mxu0 0
    %405 = vmatprep.subr.bf16.mxu0 0
    %406 = vmatpush2.bf16.msra.mxu0 0
    %407 = vmatprep.subr.bf16.mxu0 0
    %408 = vmatpush2.bf16.msra.mxu0 0
    %409 = vmatprep.subr.bf16.mxu0 0
    %410 = vmatpush2.bf16.msra.mxu0 0
    %411 = vmatprep.subr.bf16.mxu0 0
    %412 = vmatpush2.bf16.msra.mxu0 0
    %413 = vmatprep.subr.bf16.mxu0 0
    %414 = vmatpush2.bf16.msra.mxu0 0
    %415 = vmatprep.subr.bf16.mxu0 0
    %416 = vmatpush2.bf16.msra.mxu0 0
    %417 = vmatprep.mubr.bf16.mxu0 0
    %418 = vmatmul.mubr.bf16.gmra.mxu0 %v283
    %v419 = vpop.f32.mrf.mxu0
    %v420 = vadd.f32 0.0, %v419
    %v421 = vpop.f32.mrf.mxu0
    %v422 = vpop.f32.mrf.mxu0
    %v423 = vadd.f32 0.0, %v422
    %v424 = vpop.f32.mrf.mxu0
    %425 = vmatprep.mubr.bf16.mxu0 0
    %426 = vmatmul.mubr.bf16.gmra.mxu0 %v286
    %v427 = vpop.f32.mrf.mxu0
    %v428 = vadd.f32 0.0, %v427
    %v429 = vpop.f32.mrf.mxu0
    %v430 = vpop.f32.mrf.mxu0
    %v431 = vadd.f32 0.0, %v430
    %v432 = vpop.f32.mrf.mxu0
    %433 = vmatprep.mubr.bf16.mxu0 0
    %434 = vmatmul.mubr.bf16.gmra.mxu0 %v289
    %v435 = vpop.f32.mrf.mxu0
    %v436 = vadd.f32 0.0, %v435
    %v437 = vpop.f32.mrf.mxu0
    %v438 = vpop.f32.mrf.mxu0
    %v439 = vadd.f32 0.0, %v438
    %v440 = vpop.f32.mrf.mxu0
    %441 = vmatprep.mubr.bf16.mxu0 0
    %442 = vmatmul.mubr.bf16.gmra.mxu0 %v292
    %v443 = vpop.f32.mrf.mxu0
    %v444 = vadd.f32 0.0, %v443
    %v445 = vpop.f32.mrf.mxu0
    %v446 = vpop.f32.mrf.mxu0
    %v447 = vadd.f32 0.0, %v446
    %v448 = vpop.f32.mrf.mxu0
    %449 = vmatprep.mubr.bf16.mxu0 0
    %450 = vmatmul.mubr.bf16.gmra.mxu0 %v295
    %v451 = vpop.f32.mrf.mxu0
    %v452 = vadd.f32 0.0, %v451
    %v453 = vpop.f32.mrf.mxu0
    %v454 = vpop.f32.mrf.mxu0
    %v455 = vadd.f32 0.0, %v454
    %v456 = vpop.f32.mrf.mxu0
    %457 = vmatprep.mubr.bf16.mxu0 0
    %458 = vmatmul.mubr.bf16.gmra.mxu0 %v298
    %v459 = vpop.f32.mrf.mxu0
    %v460 = vadd.f32 0.0, %v459
    %v461 = vpop.f32.mrf.mxu0
    %v462 = vpop.f32.mrf.mxu0
    %v463 = vadd.f32 0.0, %v462
    %v464 = vpop.f32.mrf.mxu0
    %465 = vmatprep.mubr.bf16.mxu0 0
    %466 = vmatmul.mubr.bf16.gmra.mxu0 %v301
    %v467 = vpop.f32.mrf.mxu0
    %v468 = vadd.f32 0.0, %v467
    %v469 = vpop.f32.mrf.mxu0
    %v470 = vpop.f32.mrf.mxu0
    %v471 = vadd.f32 0.0, %v470
    %v472 = vpop.f32.mrf.mxu0
    %473 = vmatprep.mubr.bf16.mxu0 0
    %474 = vmatmul.mubr.bf16.gmra.mxu0 %v304
    %v475 = vpop.f32.mrf.mxu0
    %v476 = vadd.f32 0.0, %v475
    %v477 = vpop.f32.mrf.mxu0
    %v478 = vpop.f32.mrf.mxu0
    %v479 = vadd.f32 0.0, %v478
    %v480 = vpop.f32.mrf.mxu0
    %481 = vmatprep.mubr.bf16.mxu0 0
    %482 = vmatmul.mubr.bf16.gmra.mxu0 %v307
    %v483 = vpop.f32.mrf.mxu0
    %v484 = vadd.f32 0.0, %v483
    %v485 = vpop.f32.mrf.mxu0
    %v486 = vpop.f32.mrf.mxu0
    %v487 = vadd.f32 0.0, %v486
    %v488 = vpop.f32.mrf.mxu0
    %489 = vmatprep.mubr.bf16.mxu0 0
    %490 = vmatmul.mubr.bf16.gmra.mxu0 %v310
    %v491 = vpop.f32.mrf.mxu0
    %v492 = vadd.f32 0.0, %v491
    %v493 = vpop.f32.mrf.mxu0
    %v494 = vpop.f32.mrf.mxu0
    %v495 = vadd.f32 0.0, %v494
    %v496 = vpop.f32.mrf.mxu0
    %497 = vmatprep.mubr.bf16.mxu0 0
    %498 = vmatmul.mubr.bf16.gmra.mxu0 %v313
    %v499 = vpop.f32.mrf.mxu0
    %v500 = vadd.f32 0.0, %v499
    %v501 = vpop.f32.mrf.mxu0
    %v502 = vpop.f32.mrf.mxu0
    %v503 = vadd.f32 0.0, %v502
    %v504 = vpop.f32.mrf.mxu0
    %505 = vmatprep.mubr.bf16.mxu0 0
    %506 = vmatmul.mubr.bf16.gmra.mxu0 %v316
    %v507 = vpop.f32.mrf.mxu0
    %v508 = vadd.f32 0.0, %v507
    %v509 = vpop.f32.mrf.mxu0
    %v510 = vpop.f32.mrf.mxu0
    %v511 = vadd.f32 0.0, %v510
    %v512 = vpop.f32.mrf.mxu0
    %513 = vmatprep.mubr.bf16.mxu0 0
    %514 = vmatmul.mubr.bf16.gmra.mxu0 %v319
    %v515 = vpop.f32.mrf.mxu0
    %v516 = vadd.f32 0.0, %v515
    %v517 = vpop.f32.mrf.mxu0
    %v518 = vpop.f32.mrf.mxu0
    %v519 = vadd.f32 0.0, %v518
    %v520 = vpop.f32.mrf.mxu0
    %521 = vmatprep.mubr.bf16.mxu0 0
    %522 = vmatmul.mubr.bf16.gmra.mxu0 %v322
    %v523 = vpop.f32.mrf.mxu0
    %v524 = vadd.f32 0.0, %v523
    %v525 = vpop.f32.mrf.mxu0
    %v526 = vpop.f32.mrf.mxu0
    %v527 = vadd.f32 0.0, %v526
    %v528 = vpop.f32.mrf.mxu0
    %529 = vmatprep.mubr.bf16.mxu0 0
    %530 = vmatmul.mubr.bf16.gmra.mxu0 %v325
    %v531 = vpop.f32.mrf.mxu0
    %v532 = vadd.f32 0.0, %v531
    %v533 = vpop.f32.mrf.mxu0
    %v534 = vpop.f32.mrf.mxu0
    %v535 = vadd.f32 0.0, %v534
    %v536 = vpop.f32.mrf.mxu0
    %537 = vmatprep.mubr.bf16.mxu0 0
    %538 = vmatmul.mubr.bf16.gmra.mxu0 %v328
    %v539 = vpop.f32.mrf.mxu0
    %v540 = vadd.f32 0.0, %v539
    %v541 = vpop.f32.mrf.mxu0
    %v542 = vpop.f32.mrf.mxu0
    %v543 = vadd.f32 0.0, %v542
    %v544 = vpop.f32.mrf.mxu0
    %545 = vmatprep.mubr.bf16.mxu0 0
    %546 = vmatmul.mubr.bf16.gmra.mxu0 %v331
    %v547 = vpop.f32.mrf.mxu0
    %v548 = vadd.f32 0.0, %v547
    %v549 = vpop.f32.mrf.mxu0
    %v550 = vpop.f32.mrf.mxu0
    %v551 = vadd.f32 0.0, %v550
    %v552 = vpop.f32.mrf.mxu0
    %553 = vmatprep.mubr.bf16.mxu0 0
    %554 = vmatmul.mubr.bf16.gmra.mxu0 %v334
    %v555 = vpop.f32.mrf.mxu0
    %v556 = vadd.f32 0.0, %v555
    %v557 = vpop.f32.mrf.mxu0
    %v558 = vpop.f32.mrf.mxu0
    %v559 = vadd.f32 0.0, %v558
    %v560 = vpop.f32.mrf.mxu0
    %561 = vmatprep.mubr.bf16.mxu0 0
    %562 = vmatmul.mubr.bf16.gmra.mxu0 %v337
    %v563 = vpop.f32.mrf.mxu0
    %v564 = vadd.f32 0.0, %v563
    %v565 = vpop.f32.mrf.mxu0
    %v566 = vpop.f32.mrf.mxu0
    %v567 = vadd.f32 0.0, %v566
    %v568 = vpop.f32.mrf.mxu0
    %569 = vmatprep.mubr.bf16.mxu0 0
    %570 = vmatmul.mubr.bf16.gmra.mxu0 %v340
    %v571 = vpop.f32.mrf.mxu0
    %v572 = vadd.f32 0.0, %v571
    %v573 = vpop.f32.mrf.mxu0
    %v574 = vpop.f32.mrf.mxu0
    %v575 = vadd.f32 0.0, %v574
    %v576 = vpop.f32.mrf.mxu0
    %577 = vmatprep.mubr.bf16.mxu0 0
    %578 = vmatmul.mubr.bf16.gmra.mxu0 %v343
    %v579 = vpop.f32.mrf.mxu0
    %v580 = vadd.f32 0.0, %v579
    %v581 = vpop.f32.mrf.mxu0
    %v582 = vpop.f32.mrf.mxu0
    %v583 = vadd.f32 0.0, %v582
    %v584 = vpop.f32.mrf.mxu0
    %585 = vmatprep.mubr.bf16.mxu0 0
    %586 = vmatmul.mubr.bf16.gmra.mxu0 %v346
    %v587 = vpop.f32.mrf.mxu0
    %v588 = vadd.f32 0.0, %v587
    %v589 = vpop.f32.mrf.mxu0
    %v590 = vpop.f32.mrf.mxu0
    %v591 = vadd.f32 0.0, %v590
    %v592 = vpop.f32.mrf.mxu0
    %593 = vmatprep.mubr.bf16.mxu0 0
    %594 = vmatmul.mubr.bf16.gmra.mxu0 %v349
    %v595 = vpop.f32.mrf.mxu0
    %v596 = vadd.f32 0.0, %v595
    %v597 = vpop.f32.mrf.mxu0
    %v598 = vpop.f32.mrf.mxu0
    %v599 = vadd.f32 0.0, %v598
    %v600 = vpop.f32.mrf.mxu0
    %601 = vmatprep.mubr.bf16.mxu0 0
    %602 = vmatmul.mubr.bf16.gmra.mxu0 %v352
    %v603 = vpop.f32.mrf.mxu0
    %v604 = vadd.f32 0.0, %v603
    %v605 = vpop.f32.mrf.mxu0
    %v606 = vpop.f32.mrf.mxu0
    %v607 = vadd.f32 0.0, %v606
    %v608 = vpop.f32.mrf.mxu0
    %609 = vmatprep.mubr.bf16.mxu0 0
    %610 = vmatmul.mubr.bf16.gmra.mxu0 %v355
    %v611 = vpop.f32.mrf.mxu0
    %v612 = vadd.f32 0.0, %v611
    %v613 = vpop.f32.mrf.mxu0
    %v614 = vpop.f32.mrf.mxu0
    %v615 = vadd.f32 0.0, %v614
    %v616 = vpop.f32.mrf.mxu0
    %617 = vmatprep.mubr.bf16.mxu0 0
    %618 = vmatmul.mubr.bf16.gmra.mxu0 %v358
    %v619 = vpop.f32.mrf.mxu0
    %v620 = vadd.f32 0.0, %v619
    %v621 = vpop.f32.mrf.mxu0
    %v622 = vpop.f32.mrf.mxu0
    %v623 = vadd.f32 0.0, %v622
    %v624 = vpop.f32.mrf.mxu0
    %625 = vmatprep.mubr.bf16.mxu0 0
    %626 = vmatmul.mubr.bf16.gmra.mxu0 %v361
    %v627 = vpop.f32.mrf.mxu0
    %v628 = vadd.f32 0.0, %v627
    %v629 = vpop.f32.mrf.mxu0
    %v630 = vpop.f32.mrf.mxu0
    %v631 = vadd.f32 0.0, %v630
    %v632 = vpop.f32.mrf.mxu0
    %633 = vmatprep.mubr.bf16.mxu0 0
    %634 = vmatmul.mubr.bf16.gmra.mxu0 %v364
    %v635 = vpop.f32.mrf.mxu0
    %v636 = vadd.f32 0.0, %v635
    %v637 = vpop.f32.mrf.mxu0
    %v638 = vpop.f32.mrf.mxu0
    %v639 = vadd.f32 0.0, %v638
    %v640 = vpop.f32.mrf.mxu0
    %641 = vmatprep.mubr.bf16.mxu0 0
    %642 = vmatmul.mubr.bf16.gmra.mxu0 %v367
    %v643 = vpop.f32.mrf.mxu0
    %v644 = vadd.f32 0.0, %v643
    %v645 = vpop.f32.mrf.mxu0
    %v646 = vpop.f32.mrf.mxu0
    %v647 = vadd.f32 0.0, %v646
    %v648 = vpop.f32.mrf.mxu0
    %649 = vmatprep.mubr.bf16.mxu0 0
    %650 = vmatmul.mubr.bf16.gmra.mxu0 %v370
    %v651 = vpop.f32.mrf.mxu0
    %v652 = vadd.f32 0.0, %v651
    %v653 = vpop.f32.mrf.mxu0
    %v654 = vpop.f32.mrf.mxu0
    %v655 = vadd.f32 0.0, %v654
    %v656 = vpop.f32.mrf.mxu0
    %657 = vmatprep.mubr.bf16.mxu0 0
    %658 = vmatmul.mubr.bf16.gmra.mxu0 %v373
    %v659 = vpop.f32.mrf.mxu0
    %v660 = vadd.f32 0.0, %v659
    %v661 = vpop.f32.mrf.mxu0
    %v662 = vpop.f32.mrf.mxu0
    %v663 = vadd.f32 0.0, %v662
    %v664 = vpop.f32.mrf.mxu0
    %665 = vmatprep.mubr.bf16.mxu0 0
    %666 = vmatmul.mubr.bf16.gmra.mxu0 %v376
    %v667 = vpop.f32.mrf.mxu0
    %v668 = vadd.f32 0.0, %v667
    %v669 = vpop.f32.mrf.mxu0
    %v670 = vpop.f32.mrf.mxu0
    %v671 = vadd.f32 0.0, %v670
    %v672 = vpop.f32.mrf.mxu0
    %673 = vdwg.mxu0
    %v674 = vld [vmem:[#allocation2] sm:$0x1]
    %v676 = vlaneseq
    %v677 = vshrl.u32 %v676, 7
    %v678 = vsub.s32 0, %v677
    %v679 = vrot.slane %v674, %v678
    %v681 = vmul.f32 %v420, %v679
    %v682 = vmul.f32 %v423, %v679
    %v683 = vmul.f32 %v428, %v679
    %v684 = vmul.f32 %v431, %v679
    %v685 = vmul.f32 %v436, %v679
    %v686 = vmul.f32 %v439, %v679
    %v687 = vmul.f32 %v444, %v679
    %v688 = vmul.f32 %v447, %v679
    %v689 = vmul.f32 %v452, %v679
    %v690 = vmul.f32 %v455, %v679
    %v691 = vmul.f32 %v460, %v679
    %v692 = vmul.f32 %v463, %v679
    %v693 = vmul.f32 %v468, %v679
    %v694 = vmul.f32 %v471, %v679
    %v695 = vmul.f32 %v476, %v679
    %v696 = vmul.f32 %v479, %v679
    %v697 = vmul.f32 %v484, %v679
    %v698 = vmul.f32 %v487, %v679
    %v699 = vmul.f32 %v492, %v679
    %v700 = vmul.f32 %v495, %v679
    %v701 = vmul.f32 %v500, %v679
    %v702 = vmul.f32 %v503, %v679
    %v703 = vmul.f32 %v508, %v679
    %v704 = vmul.f32 %v511, %v679
    %v705 = vmul.f32 %v516, %v679
    %v706 = vmul.f32 %v519, %v679
    %v707 = vmul.f32 %v524, %v679
    %v708 = vmul.f32 %v527, %v679
    %v709 = vmul.f32 %v532, %v679
    %v710 = vmul.f32 %v535, %v679
    %v711 = vmul.f32 %v540, %v679
    %v712 = vmul.f32 %v543, %v679
    %v713 = vmul.f32 %v548, %v679
    %v714 = vmul.f32 %v551, %v679
    %v715 = vmul.f32 %v556, %v679
    %v716 = vmul.f32 %v559, %v679
    %v717 = vmul.f32 %v564, %v679
    %v718 = vmul.f32 %v567, %v679
    %v719 = vmul.f32 %v572, %v679
    %v720 = vmul.f32 %v575, %v679
    %v721 = vmul.f32 %v580, %v679
    %v722 = vmul.f32 %v583, %v679
    %v723 = vmul.f32 %v588, %v679
    %v724 = vmul.f32 %v591, %v679
    %v725 = vmul.f32 %v596, %v679
    %v726 = vmul.f32 %v599, %v679
    %v727 = vmul.f32 %v604, %v679
    %v728 = vmul.f32 %v607, %v679
    %v729 = vmul.f32 %v612, %v679
    %v730 = vmul.f32 %v615, %v679
    %v731 = vmul.f32 %v620, %v679
    %v732 = vmul.f32 %v623, %v679
    %v733 = vmul.f32 %v628, %v679
    %v734 = vmul.f32 %v631, %v679
    %v735 = vmul.f32 %v636, %v679
    %v736 = vmul.f32 %v639, %v679
    %v737 = vmul.f32 %v644, %v679
    %v738 = vmul.f32 %v647, %v679
    %v739 = vmul.f32 %v652, %v679
    %v740 = vmul.f32 %v655, %v679
    %v741 = vmul.f32 %v660, %v679
    %v742 = vmul.f32 %v663, %v679
    %v743 = vmul.f32 %v668, %v679
    %v744 = vmul.f32 %v671, %v679
    %v745 = vld [vmem:[#allocation4] sm:$0x1]
    %v747 = vlaneseq
    %v748 = vshrl.u32 %v747, 7
    %v749 = vsub.s32 0, %v748
    %v750 = vrot.slane %v745, %v749
    %v752 = vadd.f32 %v681, %v750
    %v753 = vadd.f32 %v682, %v750
    %v754 = vadd.f32 %v683, %v750
    %v755 = vadd.f32 %v684, %v750
    %v756 = vadd.f32 %v685, %v750
    %v757 = vadd.f32 %v686, %v750
    %v758 = vadd.f32 %v687, %v750
    %v759 = vadd.f32 %v688, %v750
    %v760 = vadd.f32 %v689, %v750
    %v761 = vadd.f32 %v690, %v750
    %v762 = vadd.f32 %v691, %v750
    %v763 = vadd.f32 %v692, %v750
    %v764 = vadd.f32 %v693, %v750
    %v765 = vadd.f32 %v694, %v750
    %v766 = vadd.f32 %v695, %v750
    %v767 = vadd.f32 %v696, %v750
    %v768 = vadd.f32 %v697, %v750
    %v769 = vadd.f32 %v698, %v750
    %v770 = vadd.f32 %v699, %v750
    %v771 = vadd.f32 %v700, %v750
    %v772 = vadd.f32 %v701, %v750
    %v773 = vadd.f32 %v702, %v750
    %v774 = vadd.f32 %v703, %v750
    %v775 = vadd.f32 %v704, %v750
    %v776 = vadd.f32 %v705, %v750
    %v777 = vadd.f32 %v706, %v750
    %v778 = vadd.f32 %v707, %v750
    %v779 = vadd.f32 %v708, %v750
    %v780 = vadd.f32 %v709, %v750
    %v781 = vadd.f32 %v710, %v750
    %v782 = vadd.f32 %v711, %v750
    %v783 = vadd.f32 %v712, %v750
    %v784 = vadd.f32 %v713, %v750
    %v785 = vadd.f32 %v714, %v750
    %v786 = vadd.f32 %v715, %v750
    %v787 = vadd.f32 %v716, %v750
    %v788 = vadd.f32 %v717, %v750
    %v789 = vadd.f32 %v718, %v750
    %v790 = vadd.f32 %v719, %v750
    %v791 = vadd.f32 %v720, %v750
    %v792 = vadd.f32 %v721, %v750
    %v793 = vadd.f32 %v722, %v750
    %v794 = vadd.f32 %v723, %v750
    %v795 = vadd.f32 %v724, %v750
    %v796 = vadd.f32 %v725, %v750
    %v797 = vadd.f32 %v726, %v750
    %v798 = vadd.f32 %v727, %v750
    %v799 = vadd.f32 %v728, %v750
    %v800 = vadd.f32 %v729, %v750
    %v801 = vadd.f32 %v730, %v750
    %v802 = vadd.f32 %v731, %v750
    %v803 = vadd.f32 %v732, %v750
    %v804 = vadd.f32 %v733, %v750
    %v805 = vadd.f32 %v734, %v750
    %v806 = vadd.f32 %v735, %v750
    %v807 = vadd.f32 %v736, %v750
    %v808 = vadd.f32 %v737, %v750
    %v809 = vadd.f32 %v738, %v750
    %v810 = vadd.f32 %v739, %v750
    %v811 = vadd.f32 %v740, %v750
    %v812 = vadd.f32 %v741, %v750
    %v813 = vadd.f32 %v742, %v750
    %v814 = vadd.f32 %v743, %v750
    %v815 = vadd.f32 %v744, %v750
    %v816 = vmax.f32 %v752, 0.0
    %v817 = vmax.f32 %v753, 0.0
    %v818 = vmax.f32 %v754, 0.0
    %v819 = vmax.f32 %v755, 0.0
    %v820 = vmax.f32 %v756, 0.0
    %v821 = vmax.f32 %v757, 0.0
    %v822 = vmax.f32 %v758, 0.0
    %v823 = vmax.f32 %v759, 0.0
    %v824 = vmax.f32 %v760, 0.0
    %v825 = vmax.f32 %v761, 0.0
    %v826 = vmax.f32 %v762, 0.0
    %v827 = vmax.f32 %v763, 0.0
    %v828 = vmax.f32 %v764, 0.0
    %v829 = vmax.f32 %v765, 0.0
    %v830 = vmax.f32 %v766, 0.0
    %v831 = vmax.f32 %v767, 0.0
    %v832 = vmax.f32 %v768, 0.0
    %v833 = vmax.f32 %v769, 0.0
    %v834 = vmax.f32 %v770, 0.0
    %v835 = vmax.f32 %v771, 0.0
    %v836 = vmax.f32 %v772, 0.0
    %v837 = vmax.f32 %v773, 0.0
    %v838 = vmax.f32 %v774, 0.0
    %v839 = vmax.f32 %v775, 0.0
    %v840 = vmax.f32 %v776, 0.0
    %v841 = vmax.f32 %v777, 0.0
    %v842 = vmax.f32 %v778, 0.0
    %v843 = vmax.f32 %v779, 0.0
    %v844 = vmax.f32 %v780, 0.0
    %v845 = vmax.f32 %v781, 0.0
    %v846 = vmax.f32 %v782, 0.0
    %v847 = vmax.f32 %v783, 0.0
    %v848 = vmax.f32 %v784, 0.0
    %v849 = vmax.f32 %v785, 0.0
    %v850 = vmax.f32 %v786, 0.0
    %v851 = vmax.f32 %v787, 0.0
    %v852 = vmax.f32 %v788, 0.0
    %v853 = vmax.f32 %v789, 0.0
    %v854 = vmax.f32 %v790, 0.0
    %v855 = vmax.f32 %v791, 0.0
    %v856 = vmax.f32 %v792, 0.0
    %v857 = vmax.f32 %v793, 0.0
    %v858 = vmax.f32 %v794, 0.0
    %v859 = vmax.f32 %v795, 0.0
    %v860 = vmax.f32 %v796, 0.0
    %v861 = vmax.f32 %v797, 0.0
    %v862 = vmax.f32 %v798, 0.0
    %v863 = vmax.f32 %v799, 0.0
    %v864 = vmax.f32 %v800, 0.0
    %v865 = vmax.f32 %v801, 0.0
    %v866 = vmax.f32 %v802, 0.0
    %v867 = vmax.f32 %v803, 0.0
    %v868 = vmax.f32 %v804, 0.0
    %v869 = vmax.f32 %v805, 0.0
    %v870 = vmax.f32 %v806, 0.0
    %v871 = vmax.f32 %v807, 0.0
    %v872 = vmax.f32 %v808, 0.0
    %v873 = vmax.f32 %v809, 0.0
    %v874 = vmax.f32 %v810, 0.0
    %v875 = vmax.f32 %v811, 0.0
    %v876 = vmax.f32 %v812, 0.0
    %v877 = vmax.f32 %v813, 0.0
    %v878 = vmax.f32 %v814, 0.0
    %v879 = vmax.f32 %v815, 0.0
    %880 = vst [vmem:[%s4] sm:$0xff] %v816
    %881 = vst [vmem:[%s4 + $0x8] sm:$0xff] %v817
    %882 = vst [vmem:[%s4 + $0x10] sm:$0xff] %v818
    %883 = vst [vmem:[%s4 + $0x18] sm:$0xff] %v819
    %884 = vst [vmem:[%s4 + $0x20] sm:$0xff] %v820
    %885 = vst [vmem:[%s4 + $0x28] sm:$0xff] %v821
    %886 = vst [vmem:[%s4 + $0x30] sm:$0xff] %v822
    %887 = vst [vmem:[%s4 + $0x38] sm:$0xff] %v823
    %888 = vst [vmem:[%s4 + $0x40] sm:$0xff] %v824
    %889 = vst [vmem:[%s4 + $0x48] sm:$0xff] %v825
    %890 = vst [vmem:[%s4 + $0x50] sm:$0xff] %v826
    %891 = vst [vmem:[%s4 + $0x58] sm:$0xff] %v827
    %892 = vst [vmem:[%s4 + $0x60] sm:$0xff] %v828
    %893 = vst [vmem:[%s4 + $0x68] sm:$0xff] %v829
    %894 = vst [vmem:[%s4 + $0x70] sm:$0xff] %v830
    %895 = vst [vmem:[%s4 + $0x78] sm:$0xff] %v831
    %896 = vst [vmem:[%s4 + $0x80] sm:$0xff] %v832
    %897 = vst [vmem:[%s4 + $0x88] sm:$0xff] %v833
    %898 = vst [vmem:[%s4 + $0x90] sm:$0xff] %v834
    %899 = vst [vmem:[%s4 + $0x98] sm:$0xff] %v835
    %900 = vst [vmem:[%s4 + $0xa0] sm:$0xff] %v836
    %901 = vst [vmem:[%s4 + $0xa8] sm:$0xff] %v837
    %902 = vst [vmem:[%s4 + $0xb0] sm:$0xff] %v838
    %903 = vst [vmem:[%s4 + $0xb8] sm:$0xff] %v839
    %904 = vst [vmem:[%s4 + $0xc0] sm:$0xff] %v840
    %905 = vst [vmem:[%s4 + $0xc8] sm:$0xff] %v841
    %906 = vst [vmem:[%s4 + $0xd0] sm:$0xff] %v842
    %907 = vst [vmem:[%s4 + $0xd8] sm:$0xff] %v843
    %908 = vst [vmem:[%s4 + $0xe0] sm:$0xff] %v844
    %909 = vst [vmem:[%s4 + $0xe8] sm:$0xff] %v845
    %910 = vst [vmem:[%s4 + $0xf0] sm:$0xff] %v846
    %911 = vst [vmem:[%s4 + $0xf8] sm:$0xff] %v847
    %912 = vst [vmem:[%s4 + $0x100] sm:$0xff] %v848
    %913 = vst [vmem:[%s4 + $0x108] sm:$0xff] %v849
    %914 = vst [vmem:[%s4 + $0x110] sm:$0xff] %v850
    %915 = vst [vmem:[%s4 + $0x118] sm:$0xff] %v851
    %916 = vst [vmem:[%s4 + $0x120] sm:$0xff] %v852
    %917 = vst [vmem:[%s4 + $0x128] sm:$0xff] %v853
    %918 = vst [vmem:[%s4 + $0x130] sm:$0xff] %v854
    %919 = vst [vmem:[%s4 + $0x138] sm:$0xff] %v855
    %920 = vst [vmem:[%s4 + $0x140] sm:$0xff] %v856
    %921 = vst [vmem:[%s4 + $0x148] sm:$0xff] %v857
    %922 = vst [vmem:[%s4 + $0x150] sm:$0xff] %v858
    %923 = vst [vmem:[%s4 + $0x158] sm:$0xff] %v859
    %924 = vst [vmem:[%s4 + $0x160] sm:$0xff] %v860
    %925 = vst [vmem:[%s4 + $0x168] sm:$0xff] %v861
    %926 = vst [vmem:[%s4 + $0x170] sm:$0xff] %v862
    %927 = vst [vmem:[%s4 + $0x178] sm:$0xff] %v863
    %928 = vst [vmem:[%s4 + $0x180] sm:$0xff] %v864
    %929 = vst [vmem:[%s4 + $0x188] sm:$0xff] %v865
    %930 = vst [vmem:[%s4 + $0x190] sm:$0xff] %v866
    %931 = vst [vmem:[%s4 + $0x198] sm:$0xff] %v867
    %932 = vst [vmem:[%s4 + $0x1a0] sm:$0xff] %v868
    %933 = vst [vmem:[%s4 + $0x1a8] sm:$0xff] %v869
    %934 = vst [vmem:[%s4 + $0x1b0] sm:$0xff] %v870
    %935 = vst [vmem:[%s4 + $0x1b8] sm:$0xff] %v871
    %936 = vst [vmem:[%s4 + $0x1c0] sm:$0xff] %v872
    %937 = vst [vmem:[%s4 + $0x1c8] sm:$0xff] %v873
    %938 = vst [vmem:[%s4 + $0x1d0] sm:$0xff] %v874
    %939 = vst [vmem:[%s4 + $0x1d8] sm:$0xff] %v875
    %940 = vst [vmem:[%s4 + $0x1e0] sm:$0xff] %v876
    %941 = vst [vmem:[%s4 + $0x1e8] sm:$0xff] %v877
    %942 = vst [vmem:[%s4 + $0x1f0] sm:$0xff] %v878
    %943 = vst [vmem:[%s4 + $0x1f8] sm:$0xff] %v879
    // Predicated region
    $region26: #{ssl_encoder_forward.6} parent=1 // pred_check
      _
    $region27: #{ssl_encoder_forward.6} parent=1 // pred_check_branch
      %945 = sbr.rel (0) target = $region29
    $region28: #{ssl_encoder_forward.6} parent=1 // pred_region
      _
    $region29: #{ssl_encoder_forward.6} parent=1 // pred_fallthru
      _
    // Predicated region
    $region30: #{ssl_encoder_forward.6} parent=1 // pred_check
      _
    $region31: #{ssl_encoder_forward.6} parent=1 // pred_check_branch
      %947 = sbr.rel (0) target = $region33
    $region32: #{ssl_encoder_forward.6} parent=1 // pred_region
      _
    $region33: #{ssl_encoder_forward.6} parent=1 // pred_fallthru
      _
    %948 = vsyncpa [#allocation3], 1
    %949 = vsyncpa [#allocation5], 1

// kernel: ssl_encoder_forward.7
$region0: #{ssl_encoder_forward.7}
  #allocation0 [shape = 'u32[]', space=smem, size = 0x4, offset = 0x4, fixed_abs, tag = 'smem constant byte address 0x4 - core index']
  #allocation1 [shape = 'u32[144,128]{1,0:T(1,128)}', space=vmem, size = 0x12000, scoped, tag = 'internal scratch']
  %s0 = inlined_call_operand.vmem [shape: bf16[512,1152], index: 0, kind: input, shape index: {}]
  %s1 = inlined_call_operand.vmem [shape: bf16[1152,128], index: 1, kind: input, shape index: {}]
  %s2 = inlined_call_operand.vmem [shape: f32[1,128], index: 2, kind: input, shape index: {}]
  %s3 = inlined_call_operand.vmem [shape: f32[1,128], index: 3, kind: input, shape index: {}]
  %s4 = inlined_call_operand.vmem [shape: f32[512,128], index: 4, kind: output, shape index: {}]
  %s5 = sld [smem:[#allocation0]]
  $region26: #{ssl_encoder_forward.7} parent=0
    _
  %s7 = ssub.s32 1, %s5
  %s8 = scalar_select 0, %s7, %s5
  // Predicated region
  $region2: #{ssl_encoder_forward.7} parent=0 // pred_check
    _
  $region3: #{ssl_encoder_forward.7} parent=0 // pred_check_branch
    %10 = sbr.rel (0) target = $region5
  $region4: #{ssl_encoder_forward.7} parent=0 // pred_region
    _
  $region5: #{ssl_encoder_forward.7} parent=0 // pred_fallthru
    _
  // Predicated region
  $region6: #{ssl_encoder_forward.7} parent=0 // pred_check
    _
  $region7: #{ssl_encoder_forward.7} parent=0 // pred_check_branch
    %12 = sbr.rel (0) target = $region9
  $region8: #{ssl_encoder_forward.7} parent=0 // pred_region
    _
  $region9: #{ssl_encoder_forward.7} parent=0 // pred_fallthru
    _
  // Predicated region
  $region10: #{ssl_encoder_forward.7} parent=0 // pred_check
    _
  $region11: #{ssl_encoder_forward.7} parent=0 // pred_check_branch
    %14 = sbr.rel (0) target = $region13
  $region12: #{ssl_encoder_forward.7} parent=0 // pred_region
    _
  $region13: #{ssl_encoder_forward.7} parent=0 // pred_fallthru
    _
  // Predicated region
  $region14: #{ssl_encoder_forward.7} parent=0 // pred_check
    _
  $region15: #{ssl_encoder_forward.7} parent=0 // pred_check_branch
    %16 = sbr.rel (0) target = $region17
  $region16: #{ssl_encoder_forward.7} parent=0 // pred_region
    _
  $region17: #{ssl_encoder_forward.7} parent=0 // pred_fallthru
    _
  %v18 = vld [vmem:[%s0] sm:$0xff]
  %v19 = vld [vmem:[%s0 + $0x8] sm:$0xff]
  %v20 = vld [vmem:[%s0 + $0x10] sm:$0xff]
  %v21 = vld [vmem:[%s0 + $0x18] sm:$0xff]
  %v22 = vld [vmem:[%s0 + $0x20] sm:$0xf]
  %v23 = vld [vmem:[%s0 + $0x24] sm:$0xff]
  %v24 = vld [vmem:[%s0 + $0x2c] sm:$0xff]
  %v25 = vld [vmem:[%s0 + $0x34] sm:$0xff]
  %v26 = vld [vmem:[%s0 + $0x3c] sm:$0xff]
  %v27 = vld [vmem:[%s0 + $0x44] sm:$0xf]
  %v28 = vld [vmem:[%s0 + $0x48] sm:$0xff]
  %v29 = vld [vmem:[%s0 + $0x50] sm:$0xff]
  %v30 = vld [vmem:[%s0 + $0x58] sm:$0xff]
  %v31 = vld [vmem:[%s0 + $0x60] sm:$0xff]
  %v32 = vld [vmem:[%s0 + $0x68] sm:$0xf]
  %v33 = vld [vmem:[%s0 + $0x6c] sm:$0xff]
  %v34 = vld [vmem:[%s0 + $0x74] sm:$0xff]
  %v35 = vld [vmem:[%s0 + $0x7c] sm:$0xff]
  %v36 = vld [vmem:[%s0 + $0x84] sm:$0xff]
  %v37 = vld [vmem:[%s0 + $0x8c] sm:$0xf]
  %v38 = vld [vmem:[%s0 + $0x90] sm:$0xff]
  %v39 = vld [vmem:[%s0 + $0x98] sm:$0xff]
  %v40 = vld [vmem:[%s0 + $0xa0] sm:$0xff]
  %v41 = vld [vmem:[%s0 + $0xa8] sm:$0xff]
  %v42 = vld [vmem:[%s0 + $0xb0] sm:$0xf]
  %v43 = vld [vmem:[%s0 + $0xb4] sm:$0xff]
  %v44 = vld [vmem:[%s0 + $0xbc] sm:$0xff]
  %v45 = vld [vmem:[%s0 + $0xc4] sm:$0xff]
  %v46 = vld [vmem:[%s0 + $0xcc] sm:$0xff]
  %v47 = vld [vmem:[%s0 + $0xd4] sm:$0xf]
  %v48 = vld [vmem:[%s0 + $0xd8] sm:$0xff]
  %v49 = vld [vmem:[%s0 + $0xe0] sm:$0xff]
  %v50 = vld [vmem:[%s0 + $0xe8] sm:$0xff]
  %v51 = vld [vmem:[%s0 + $0xf0] sm:$0xff]
  %v52 = vld [vmem:[%s0 + $0xf8] sm:$0xf]
  %v53 = vld [vmem:[%s0 + $0xfc] sm:$0xff]
  %v54 = vld [vmem:[%s0 + $0x104] sm:$0xff]
  %v55 = vld [vmem:[%s0 + $0x10c] sm:$0xff]
  %v56 = vld [vmem:[%s0 + $0x114] sm:$0xff]
  %v57 = vld [vmem:[%s0 + $0x11c] sm:$0xf]
  %v58 = vld [vmem:[%s0 + $0x120] sm:$0xff]
  %v59 = vld [vmem:[%s0 + $0x128] sm:$0xff]
  %v60 = vld [vmem:[%s0 + $0x130] sm:$0xff]
  %v61 = vld [vmem:[%s0 + $0x138] sm:$0xff]
  %v62 = vld [vmem:[%s0 + $0x140] sm:$0xf]
  %v63 = vld [vmem:[%s0 + $0x144] sm:$0xff]
  %v64 = vld [vmem:[%s0 + $0x14c] sm:$0xff]
  %v65 = vld [vmem:[%s0 + $0x154] sm:$0xff]
  %v66 = vld [vmem:[%s0 + $0x15c] sm:$0xff]
  %v67 = vld [vmem:[%s0 + $0x164] sm:$0xf]
  %v68 = vld [vmem:[%s0 + $0x168] sm:$0xff]
  %v69 = vld [vmem:[%s0 + $0x170] sm:$0xff]
  %v70 = vld [vmem:[%s0 + $0x178] sm:$0xff]
  %v71 = vld [vmem:[%s0 + $0x180] sm:$0xff]
  %v72 = vld [vmem:[%s0 + $0x188] sm:$0xf]
  %v73 = vld [vmem:[%s0 + $0x18c] sm:$0xff]
  %v74 = vld [vmem:[%s0 + $0x194] sm:$0xff]
  %v75 = vld [vmem:[%s0 + $0x19c] sm:$0xff]
  %v76 = vld [vmem:[%s0 + $0x1a4] sm:$0xff]
  %v77 = vld [vmem:[%s0 + $0x1ac] sm:$0xf]
  %v78 = vld [vmem:[%s0 + $0x1b0] sm:$0xff]
  %v79 = vld [vmem:[%s0 + $0x1b8] sm:$0xff]
  %v80 = vld [vmem:[%s0 + $0x1c0] sm:$0xff]
  %v81 = vld [vmem:[%s0 + $0x1c8] sm:$0xff]
  %v82 = vld [vmem:[%s0 + $0x1d0] sm:$0xf]
  %v83 = vld [vmem:[%s0 + $0x1d4] sm:$0xff]
  %v84 = vld [vmem:[%s0 + $0x1dc] sm:$0xff]
  %v85 = vld [vmem:[%s0 + $0x1e4] sm:$0xff]
  %v86 = vld [vmem:[%s0 + $0x1ec] sm:$0xff]
  %v87 = vld [vmem:[%s0 + $0x1f4] sm:$0xf]
  %v88 = vld [vmem:[%s0 + $0x1f8] sm:$0xff]
  %v89 = vld [vmem:[%s0 + $0x200] sm:$0xff]
  %v90 = vld [vmem:[%s0 + $0x208] sm:$0xff]
  %v91 = vld [vmem:[%s0 + $0x210] sm:$0xff]
  %v92 = vld [vmem:[%s0 + $0x218] sm:$0xf]
  %v93 = vld [vmem:[%s0 + $0x21c] sm:$0xff]
  %v94 = vld [vmem:[%s0 + $0x224] sm:$0xff]
  %v95 = vld [vmem:[%s0 + $0x22c] sm:$0xff]
  %v96 = vld [vmem:[%s0 + $0x234] sm:$0xff]
  %v97 = vld [vmem:[%s0 + $0x23c] sm:$0xf]
  %v98 = vld [vmem:[%s0 + $0x240] sm:$0xff]
  %v99 = vld [vmem:[%s0 + $0x248] sm:$0xff]
  %v100 = vld [vmem:[%s0 + $0x250] sm:$0xff]
  %v101 = vld [vmem:[%s0 + $0x258] sm:$0xff]
  %v102 = vld [vmem:[%s0 + $0x260] sm:$0xf]
  %v103 = vld [vmem:[%s0 + $0x264] sm:$0xff]
  %v104 = vld [vmem:[%s0 + $0x26c] sm:$0xff]
  %v105 = vld [vmem:[%s0 + $0x274] sm:$0xff]
  %v106 = vld [vmem:[%s0 + $0x27c] sm:$0xff]
  %v107 = vld [vmem:[%s0 + $0x284] sm:$0xf]
  %v108 = vld [vmem:[%s0 + $0x288] sm:$0xff]
  %v109 = vld [vmem:[%s0 + $0x290] sm:$0xff]
  %v110 = vld [vmem:[%s0 + $0x298] sm:$0xff]
  %v111 = vld [vmem:[%s0 + $0x2a0] sm:$0xff]
  %v112 = vld [vmem:[%s0 + $0x2a8] sm:$0xf]
  %v113 = vld [vmem:[%s0 + $0x2ac] sm:$0xff]
  %v114 = vld [vmem:[%s0 + $0x2b4] sm:$0xff]
  %v115 = vld [vmem:[%s0 + $0x2bc] sm:$0xff]
  %v116 = vld [vmem:[%s0 + $0x2c4] sm:$0xff]
  %v117 = vld [vmem:[%s0 + $0x2cc] sm:$0xf]
  %v118 = vld [vmem:[%s0 + $0x2d0] sm:$0xff]
  %v119 = vld [vmem:[%s0 + $0x2d8] sm:$0xff]
  %v120 = vld [vmem:[%s0 + $0x2e0] sm:$0xff]
  %v121 = vld [vmem:[%s0 + $0x2e8] sm:$0xff]
  %v122 = vld [vmem:[%s0 + $0x2f0] sm:$0xf]
  %v123 = vld [vmem:[%s0 + $0x2f4] sm:$0xff]
  %v124 = vld [vmem:[%s0 + $0x2fc] sm:$0xff]
  %v125 = vld [vmem:[%s0 + $0x304] sm:$0xff]
  %v126 = vld [vmem:[%s0 + $0x30c] sm:$0xff]
  %v127 = vld [vmem:[%s0 + $0x314] sm:$0xf]
  %v128 = vld [vmem:[%s0 + $0x318] sm:$0xff]
  %v129 = vld [vmem:[%s0 + $0x320] sm:$0xff]
  %v130 = vld [vmem:[%s0 + $0x328] sm:$0xff]
  %v131 = vld [vmem:[%s0 + $0x330] sm:$0xff]
  %v132 = vld [vmem:[%s0 + $0x338] sm:$0xf]
  %v133 = vld [vmem:[%s0 + $0x33c] sm:$0xff]
  %v134 = vld [vmem:[%s0 + $0x344] sm:$0xff]
  %v135 = vld [vmem:[%s0 + $0x34c] sm:$0xff]
  %v136 = vld [vmem:[%s0 + $0x354] sm:$0xff]
  %v137 = vld [vmem:[%s0 + $0x35c] sm:$0xf]
  %v138 = vld [vmem:[%s0 + $0x360] sm:$0xff]
  %v139 = vld [vmem:[%s0 + $0x368] sm:$0xff]
  %v140 = vld [vmem:[%s0 + $0x370] sm:$0xff]
  %v141 = vld [vmem:[%s0 + $0x378] sm:$0xff]
  %v142 = vld [vmem:[%s0 + $0x380] sm:$0xf]
  %v143 = vld [vmem:[%s0 + $0x384] sm:$0xff]
  %v144 = vld [vmem:[%s0 + $0x38c] sm:$0xff]
  %v145 = vld [vmem:[%s0 + $0x394] sm:$0xff]
  %v146 = vld [vmem:[%s0 + $0x39c] sm:$0xff]
  %v147 = vld [vmem:[%s0 + $0x3a4] sm:$0xf]
  %v148 = vld [vmem:[%s0 + $0x3a8] sm:$0xff]
  %v149 = vld [vmem:[%s0 + $0x3b0] sm:$0xff]
  %v150 = vld [vmem:[%s0 + $0x3b8] sm:$0xff]
  %v151 = vld [vmem:[%s0 + $0x3c0] sm:$0xff]
  %v152 = vld [vmem:[%s0 + $0x3c8] sm:$0xf]
  %v153 = vld [vmem:[%s0 + $0x3cc] sm:$0xff]
  %v154 = vld [vmem:[%s0 + $0x3d4] sm:$0xff]
  %v155 = vld [vmem:[%s0 + $0x3dc] sm:$0xff]
  %v156 = vld [vmem:[%s0 + $0x3e4] sm:$0xff]
  %v157 = vld [vmem:[%s0 + $0x3ec] sm:$0xf]
  %v158 = vld [vmem:[%s0 + $0x3f0] sm:$0xff]
  %v159 = vld [vmem:[%s0 + $0x3f8] sm:$0xff]
  %v160 = vld [vmem:[%s0 + $0x400] sm:$0xff]
  %v161 = vld [vmem:[%s0 + $0x408] sm:$0xff]
  %v162 = vld [vmem:[%s0 + $0x410] sm:$0xf]
  %v163 = vld [vmem:[%s0 + $0x414] sm:$0xff]
  %v164 = vld [vmem:[%s0 + $0x41c] sm:$0xff]
  %v165 = vld [vmem:[%s0 + $0x424] sm:$0xff]
  %v166 = vld [vmem:[%s0 + $0x42c] sm:$0xff]
  %v167 = vld [vmem:[%s0 + $0x434] sm:$0xf]
  %v168 = vld [vmem:[%s0 + $0x438] sm:$0xff]
  %v169 = vld [vmem:[%s0 + $0x440] sm:$0xff]
  %v170 = vld [vmem:[%s0 + $0x448] sm:$0xff]
  %v171 = vld [vmem:[%s0 + $0x450] sm:$0xff]
  %v172 = vld [vmem:[%s0 + $0x458] sm:$0xf]
  %v173 = vld [vmem:[%s0 + $0x45c] sm:$0xff]
  %v174 = vld [vmem:[%s0 + $0x464] sm:$0xff]
  %v175 = vld [vmem:[%s0 + $0x46c] sm:$0xff]
  %v176 = vld [vmem:[%s0 + $0x474] sm:$0xff]
  %v177 = vld [vmem:[%s0 + $0x47c] sm:$0xf]
  %v178 = vld [vmem:[%s0 + $0x480] sm:$0xff]
  %v179 = vld [vmem:[%s0 + $0x488] sm:$0xff]
  %v180 = vld [vmem:[%s0 + $0x490] sm:$0xff]
  %v181 = vld [vmem:[%s0 + $0x498] sm:$0xff]
  %v182 = vld [vmem:[%s0 + $0x4a0] sm:$0xf]
  %v183 = vld [vmem:[%s0 + $0x4a4] sm:$0xff]
  %v184 = vld [vmem:[%s0 + $0x4ac] sm:$0xff]
  %v185 = vld [vmem:[%s0 + $0x4b4] sm:$0xff]
  %v186 = vld [vmem:[%s0 + $0x4bc] sm:$0xff]
  %v187 = vld [vmem:[%s0 + $0x4c4] sm:$0xf]
  %v188 = vld [vmem:[%s0 + $0x4c8] sm:$0xff]
  %v189 = vld [vmem:[%s0 + $0x4d0] sm:$0xff]
  %v190 = vld [vmem:[%s0 + $0x4d8] sm:$0xff]
  %v191 = vld [vmem:[%s0 + $0x4e0] sm:$0xff]
  %v192 = vld [vmem:[%s0 + $0x4e8] sm:$0xf]
  %v193 = vld [vmem:[%s0 + $0x4ec] sm:$0xff]
  %v194 = vld [vmem:[%s0 + $0x4f4] sm:$0xff]
  %v195 = vld [vmem:[%s0 + $0x4fc] sm:$0xff]
  %v196 = vld [vmem:[%s0 + $0x504] sm:$0xff]
  %v197 = vld [vmem:[%s0 + $0x50c] sm:$0xf]
  %v198 = vld [vmem:[%s0 + $0x510] sm:$0xff]
  %v199 = vld [vmem:[%s0 + $0x518] sm:$0xff]
  %v200 = vld [vmem:[%s0 + $0x520] sm:$0xff]
  %v201 = vld [vmem:[%s0 + $0x528] sm:$0xff]
  %v202 = vld [vmem:[%s0 + $0x530] sm:$0xf]
  %v203 = vld [vmem:[%s0 + $0x534] sm:$0xff]
  %v204 = vld [vmem:[%s0 + $0x53c] sm:$0xff]
  %v205 = vld [vmem:[%s0 + $0x544] sm:$0xff]
  %v206 = vld [vmem:[%s0 + $0x54c] sm:$0xff]
  %v207 = vld [vmem:[%s0 + $0x554] sm:$0xf]
  %v208 = vld [vmem:[%s0 + $0x558] sm:$0xff]
  %v209 = vld [vmem:[%s0 + $0x560] sm:$0xff]
  %v210 = vld [vmem:[%s0 + $0x568] sm:$0xff]
  %v211 = vld [vmem:[%s0 + $0x570] sm:$0xff]
  %v212 = vld [vmem:[%s0 + $0x578] sm:$0xf]
  %v213 = vld [vmem:[%s0 + $0x57c] sm:$0xff]
  %v214 = vld [vmem:[%s0 + $0x584] sm:$0xff]
  %v215 = vld [vmem:[%s0 + $0x58c] sm:$0xff]
  %v216 = vld [vmem:[%s0 + $0x594] sm:$0xff]
  %v217 = vld [vmem:[%s0 + $0x59c] sm:$0xf]
  %v218 = vld [vmem:[%s0 + $0x5a0] sm:$0xff]
  %v219 = vld [vmem:[%s0 + $0x5a8] sm:$0xff]
  %v220 = vld [vmem:[%s0 + $0x5b0] sm:$0xff]
  %v221 = vld [vmem:[%s0 + $0x5b8] sm:$0xff]
  %v222 = vld [vmem:[%s0 + $0x5c0] sm:$0xf]
  %v223 = vld [vmem:[%s0 + $0x5c4] sm:$0xff]
  %v224 = vld [vmem:[%s0 + $0x5cc] sm:$0xff]
  %v225 = vld [vmem:[%s0 + $0x5d4] sm:$0xff]
  %v226 = vld [vmem:[%s0 + $0x5dc] sm:$0xff]
  %v227 = vld [vmem:[%s0 + $0x5e4] sm:$0xf]
  %v228 = vld [vmem:[%s0 + $0x5e8] sm:$0xff]
  %v229 = vld [vmem:[%s0 + $0x5f0] sm:$0xff]
  %v230 = vld [vmem:[%s0 + $0x5f8] sm:$0xff]
  %v231 = vld [vmem:[%s0 + $0x600] sm:$0xff]
  %v232 = vld [vmem:[%s0 + $0x608] sm:$0xf]
  %v233 = vld [vmem:[%s0 + $0x60c] sm:$0xff]
  %v234 = vld [vmem:[%s0 + $0x614] sm:$0xff]
  %v235 = vld [vmem:[%s0 + $0x61c] sm:$0xff]
  %v236 = vld [vmem:[%s0 + $0x624] sm:$0xff]
  %v237 = vld [vmem:[%s0 + $0x62c] sm:$0xf]
  %v238 = vld [vmem:[%s0 + $0x630] sm:$0xff]
  %v239 = vld [vmem:[%s0 + $0x638] sm:$0xff]
  %v240 = vld [vmem:[%s0 + $0x640] sm:$0xff]
  %v241 = vld [vmem:[%s0 + $0x648] sm:$0xff]
  %v242 = vld [vmem:[%s0 + $0x650] sm:$0xf]
  %v243 = vld [vmem:[%s0 + $0x654] sm:$0xff]
  %v244 = vld [vmem:[%s0 + $0x65c] sm:$0xff]
  %v245 = vld [vmem:[%s0 + $0x664] sm:$0xff]
  %v246 = vld [vmem:[%s0 + $0x66c] sm:$0xff]
  %v247 = vld [vmem:[%s0 + $0x674] sm:$0xf]
  %v248 = vld [vmem:[%s0 + $0x678] sm:$0xff]
  %v249 = vld [vmem:[%s0 + $0x680] sm:$0xff]
  %v250 = vld [vmem:[%s0 + $0x688] sm:$0xff]
  %v251 = vld [vmem:[%s0 + $0x690] sm:$0xff]
  %v252 = vld [vmem:[%s0 + $0x698] sm:$0xf]
  %v253 = vld [vmem:[%s0 + $0x69c] sm:$0xff]
  %v254 = vld [vmem:[%s0 + $0x6a4] sm:$0xff]
  %v255 = vld [vmem:[%s0 + $0x6ac] sm:$0xff]
  %v256 = vld [vmem:[%s0 + $0x6b4] sm:$0xff]
  %v257 = vld [vmem:[%s0 + $0x6bc] sm:$0xf]
  %v258 = vld [vmem:[%s0 + $0x6c0] sm:$0xff]
  %v259 = vld [vmem:[%s0 + $0x6c8] sm:$0xff]
  %v260 = vld [vmem:[%s0 + $0x6d0] sm:$0xff]
  %v261 = vld [vmem:[%s0 + $0x6d8] sm:$0xff]
  %v262 = vld [vmem:[%s0 + $0x6e0] sm:$0xf]
  %v263 = vld [vmem:[%s0 + $0x6e4] sm:$0xff]
  %v264 = vld [vmem:[%s0 + $0x6ec] sm:$0xff]
  %v265 = vld [vmem:[%s0 + $0x6f4] sm:$0xff]
  %v266 = vld [vmem:[%s0 + $0x6fc] sm:$0xff]
  %v267 = vld [vmem:[%s0 + $0x704] sm:$0xf]
  %v268 = vld [vmem:[%s0 + $0x708] sm:$0xff]
  %v269 = vld [vmem:[%s0 + $0x710] sm:$0xff]
  %v270 = vld [vmem:[%s0 + $0x718] sm:$0xff]
  %v271 = vld [vmem:[%s0 + $0x720] sm:$0xff]
  %v272 = vld [vmem:[%s0 + $0x728] sm:$0xf]
  %v273 = vld [vmem:[%s0 + $0x72c] sm:$0xff]
  %v274 = vld [vmem:[%s0 + $0x734] sm:$0xff]
  %v275 = vld [vmem:[%s0 + $0x73c] sm:$0xff]
  %v276 = vld [vmem:[%s0 + $0x744] sm:$0xff]
  %v277 = vld [vmem:[%s0 + $0x74c] sm:$0xf]
  %v278 = vld [vmem:[%s0 + $0x750] sm:$0xff]
  %v279 = vld [vmem:[%s0 + $0x758] sm:$0xff]
  %v280 = vld [vmem:[%s0 + $0x760] sm:$0xff]
  %v281 = vld [vmem:[%s0 + $0x768] sm:$0xff]
  %v282 = vld [vmem:[%s0 + $0x770] sm:$0xf]
  %v283 = vld [vmem:[%s0 + $0x774] sm:$0xff]
  %v284 = vld [vmem:[%s0 + $0x77c] sm:$0xff]
  %v285 = vld [vmem:[%s0 + $0x784] sm:$0xff]
  %v286 = vld [vmem:[%s0 + $0x78c] sm:$0xff]
  %v287 = vld [vmem:[%s0 + $0x794] sm:$0xf]
  %v288 = vld [vmem:[%s0 + $0x798] sm:$0xff]
  %v289 = vld [vmem:[%s0 + $0x7a0] sm:$0xff]
  %v290 = vld [vmem:[%s0 + $0x7a8] sm:$0xff]
  %v291 = vld [vmem:[%s0 + $0x7b0] sm:$0xff]
  %v292 = vld [vmem:[%s0 + $0x7b8] sm:$0xf]
  %v293 = vld [vmem:[%s0 + $0x7bc] sm:$0xff]
  %v294 = vld [vmem:[%s0 + $0x7c4] sm:$0xff]
  %v295 = vld [vmem:[%s0 + $0x7cc] sm:$0xff]
  %v296 = vld [vmem:[%s0 + $0x7d4] sm:$0xff]
  %v297 = vld [vmem:[%s0 + $0x7dc] sm:$0xf]
  %v298 = vld [vmem:[%s0 + $0x7e0] sm:$0xff]
  %v299 = vld [vmem:[%s0 + $0x7e8] sm:$0xff]
  %v300 = vld [vmem:[%s0 + $0x7f0] sm:$0xff]
  %v301 = vld [vmem:[%s0 + $0x7f8] sm:$0xff]
  %v302 = vld [vmem:[%s0 + $0x800] sm:$0xf]
  %v303 = vld [vmem:[%s0 + $0x804] sm:$0xff]
  %v304 = vld [vmem:[%s0 + $0x80c] sm:$0xff]
  %v305 = vld [vmem:[%s0 + $0x814] sm:$0xff]
  %v306 = vld [vmem:[%s0 + $0x81c] sm:$0xff]
  %v307 = vld [vmem:[%s0 + $0x824] sm:$0xf]
  %v308 = vld [vmem:[%s0 + $0x828] sm:$0xff]
  %v309 = vld [vmem:[%s0 + $0x830] sm:$0xff]
  %v310 = vld [vmem:[%s0 + $0x838] sm:$0xff]
  %v311 = vld [vmem:[%s0 + $0x840] sm:$0xff]
  %v312 = vld [vmem:[%s0 + $0x848] sm:$0xf]
  %v313 = vld [vmem:[%s0 + $0x84c] sm:$0xff]
  %v314 = vld [vmem:[%s0 + $0x854] sm:$0xff]
  %v315 = vld [vmem:[%s0 + $0x85c] sm:$0xff]
  %v316 = vld [vmem:[%s0 + $0x864] sm:$0xff]
  %v317 = vld [vmem:[%s0 + $0x86c] sm:$0xf]
  %v318 = vld [vmem:[%s0 + $0x870] sm:$0xff]
  %v319 = vld [vmem:[%s0 + $0x878] sm:$0xff]
  %v320 = vld [vmem:[%s0 + $0x880] sm:$0xff]
  %v321 = vld [vmem:[%s0 + $0x888] sm:$0xff]
  %v322 = vld [vmem:[%s0 + $0x890] sm:$0xf]
  %v323 = vld [vmem:[%s0 + $0x894] sm:$0xff]
  %v324 = vld [vmem:[%s0 + $0x89c] sm:$0xff]
  %v325 = vld [vmem:[%s0 + $0x8a4] sm:$0xff]
  %v326 = vld [vmem:[%s0 + $0x8ac] sm:$0xff]
  %v327 = vld [vmem:[%s0 + $0x8b4] sm:$0xf]
  %v328 = vld [vmem:[%s0 + $0x8b8] sm:$0xff]
  %v329 = vld [vmem:[%s0 + $0x8c0] sm:$0xff]
  %v330 = vld [vmem:[%s0 + $0x8c8] sm:$0xff]
  %v331 = vld [vmem:[%s0 + $0x8d0] sm:$0xff]
  %v332 = vld [vmem:[%s0 + $0x8d8] sm:$0xf]
  %v333 = vld [vmem:[%s0 + $0x8dc] sm:$0xff]
  %v334 = vld [vmem:[%s0 + $0x8e4] sm:$0xff]
  %v335 = vld [vmem:[%s0 + $0x8ec] sm:$0xff]
  %v336 = vld [vmem:[%s0 + $0x8f4] sm:$0xff]
  %v337 = vld [vmem:[%s0 + $0x8fc] sm:$0xf]
  %v338 = vld [vmem:[%s1] sm:$0xf]
  %v339 = vld [vmem:[%s1 + $0x4] sm:$0xf]
  %v340 = vld [vmem:[%s1 + $0x8] sm:$0xf]
  %v341 = vld [vmem:[%s1 + $0xc] sm:$0xf]
  %v342 = vld [vmem:[%s1 + $0x10] sm:$0xf]
  %v343 = vld [vmem:[%s1 + $0x14] sm:$0xf]
  %v344 = vld [vmem:[%s1 + $0x18] sm:$0xf]
  %v345 = vld [vmem:[%s1 + $0x1c] sm:$0xf]
  %v346 = vld [vmem:[%s1 + $0x20] sm:$0xf]
  %v347 = vld [vmem:[%s1 + $0x24] sm:$0xf]
  %v348 = vld [vmem:[%s1 + $0x28] sm:$0xf]
  %v349 = vld [vmem:[%s1 + $0x2c] sm:$0xf]
  %v350 = vld [vmem:[%s1 + $0x30] sm:$0xf]
  %v351 = vld [vmem:[%s1 + $0x34] sm:$0xf]
  %v352 = vld [vmem:[%s1 + $0x38] sm:$0xf]
  %v353 = vld [vmem:[%s1 + $0x3c] sm:$0xf]
  %v354 = vld [vmem:[%s1 + $0x40] sm:$0xf]
  %v355 = vld [vmem:[%s1 + $0x44] sm:$0xf]
  %v356 = vld [vmem:[%s1 + $0x48] sm:$0xf]
  %v357 = vld [vmem:[%s1 + $0x4c] sm:$0xf]
  %v358 = vld [vmem:[%s1 + $0x50] sm:$0xf]
  %v359 = vld [vmem:[%s1 + $0x54] sm:$0xf]
  %v360 = vld [vmem:[%s1 + $0x58] sm:$0xf]
  %v361 = vld [vmem:[%s1 + $0x5c] sm:$0xf]
  %v362 = vld [vmem:[%s1 + $0x60] sm:$0xf]
  %v363 = vld [vmem:[%s1 + $0x64] sm:$0xf]
  %v364 = vld [vmem:[%s1 + $0x68] sm:$0xf]
  %v365 = vld [vmem:[%s1 + $0x6c] sm:$0xf]
  %v366 = vld [vmem:[%s1 + $0x70] sm:$0xf]
  %v367 = vld [vmem:[%s1 + $0x74] sm:$0xf]
  %v368 = vld [vmem:[%s1 + $0x78] sm:$0xf]
  %v369 = vld [vmem:[%s1 + $0x7c] sm:$0xf]
  %v370 = vld [vmem:[%s1 + $0x80] sm:$0xf]
  %v371 = vld [vmem:[%s1 + $0x84] sm:$0xf]
  %v372 = vld [vmem:[%s1 + $0x88] sm:$0xf]
  %v373 = vld [vmem:[%s1 + $0x8c] sm:$0xf]
  %v374 = vld [vmem:[%s1 + $0x90] sm:$0xf]
  %v375 = vld [vmem:[%s1 + $0x94] sm:$0xf]
  %v376 = vld [vmem:[%s1 + $0x98] sm:$0xf]
  %v377 = vld [vmem:[%s1 + $0x9c] sm:$0xf]
  %v378 = vld [vmem:[%s1 + $0xa0] sm:$0xf]
  %v379 = vld [vmem:[%s1 + $0xa4] sm:$0xf]
  %v380 = vld [vmem:[%s1 + $0xa8] sm:$0xf]
  %v381 = vld [vmem:[%s1 + $0xac] sm:$0xf]
  %v382 = vld [vmem:[%s1 + $0xb0] sm:$0xf]
  %v383 = vld [vmem:[%s1 + $0xb4] sm:$0xf]
  %v384 = vld [vmem:[%s1 + $0xb8] sm:$0xf]
  %v385 = vld [vmem:[%s1 + $0xbc] sm:$0xf]
  %v386 = vld [vmem:[%s1 + $0xc0] sm:$0xf]
  %v387 = vld [vmem:[%s1 + $0xc4] sm:$0xf]
  %v388 = vld [vmem:[%s1 + $0xc8] sm:$0xf]
  %v389 = vld [vmem:[%s1 + $0xcc] sm:$0xf]
  %v390 = vld [vmem:[%s1 + $0xd0] sm:$0xf]
  %v391 = vld [vmem:[%s1 + $0xd4] sm:$0xf]
  %v392 = vld [vmem:[%s1 + $0xd8] sm:$0xf]
  %v393 = vld [vmem:[%s1 + $0xdc] sm:$0xf]
  %v394 = vld [vmem:[%s1 + $0xe0] sm:$0xf]
  %v395 = vld [vmem:[%s1 + $0xe4] sm:$0xf]
  %v396 = vld [vmem:[%s1 + $0xe8] sm:$0xf]
  %v397 = vld [vmem:[%s1 + $0xec] sm:$0xf]
  %v398 = vld [vmem:[%s1 + $0xf0] sm:$0xf]
  %v399 = vld [vmem:[%s1 + $0xf4] sm:$0xf]
  %v400 = vld [vmem:[%s1 + $0xf8] sm:$0xf]
  %v401 = vld [vmem:[%s1 + $0xfc] sm:$0xf]
  %v402 = vld [vmem:[%s1 + $0x100] sm:$0xf]
  %v403 = vld [vmem:[%s1 + $0x104] sm:$0xf]
  %v404 = vld [vmem:[%s1 + $0x108] sm:$0xf]
  %v405 = vld [vmem:[%s1 + $0x10c] sm:$0xf]
  %v406 = vld [vmem:[%s1 + $0x110] sm:$0xf]
  %v407 = vld [vmem:[%s1 + $0x114] sm:$0xf]
  %v408 = vld [vmem:[%s1 + $0x118] sm:$0xf]
  %v409 = vld [vmem:[%s1 + $0x11c] sm:$0xf]
  %v410 = vld [vmem:[%s1 + $0x120] sm:$0xf]
  %v411 = vld [vmem:[%s1 + $0x124] sm:$0xf]
  %v412 = vld [vmem:[%s1 + $0x128] sm:$0xf]
  %v413 = vld [vmem:[%s1 + $0x12c] sm:$0xf]
  %v414 = vld [vmem:[%s1 + $0x130] sm:$0xf]
  %v415 = vld [vmem:[%s1 + $0x134] sm:$0xf]
  %v416 = vld [vmem:[%s1 + $0x138] sm:$0xf]
  %v417 = vld [vmem:[%s1 + $0x13c] sm:$0xf]
  %v418 = vld [vmem:[%s1 + $0x140] sm:$0xf]
  %v419 = vld [vmem:[%s1 + $0x144] sm:$0xf]
  %v420 = vld [vmem:[%s1 + $0x148] sm:$0xf]
  %v421 = vld [vmem:[%s1 + $0x14c] sm:$0xf]
  %v422 = vld [vmem:[%s1 + $0x150] sm:$0xf]
  %v423 = vld [vmem:[%s1 + $0x154] sm:$0xf]
  %v424 = vld [vmem:[%s1 + $0x158] sm:$0xf]
  %v425 = vld [vmem:[%s1 + $0x15c] sm:$0xf]
  %v426 = vld [vmem:[%s1 + $0x160] sm:$0xf]
  %v427 = vld [vmem:[%s1 + $0x164] sm:$0xf]
  %v428 = vld [vmem:[%s1 + $0x168] sm:$0xf]
  %v429 = vld [vmem:[%s1 + $0x16c] sm:$0xf]
  %v430 = vld [vmem:[%s1 + $0x170] sm:$0xf]
  %v431 = vld [vmem:[%s1 + $0x174] sm:$0xf]
  %v432 = vld [vmem:[%s1 + $0x178] sm:$0xf]
  %v433 = vld [vmem:[%s1 + $0x17c] sm:$0xf]
  %v434 = vld [vmem:[%s1 + $0x180] sm:$0xf]
  %v435 = vld [vmem:[%s1 + $0x184] sm:$0xf]
  %v436 = vld [vmem:[%s1 + $0x188] sm:$0xf]
  %v437 = vld [vmem:[%s1 + $0x18c] sm:$0xf]
  %v438 = vld [vmem:[%s1 + $0x190] sm:$0xf]
  %v439 = vld [vmem:[%s1 + $0x194] sm:$0xf]
  %v440 = vld [vmem:[%s1 + $0x198] sm:$0xf]
  %v441 = vld [vmem:[%s1 + $0x19c] sm:$0xf]
  %v442 = vld [vmem:[%s1 + $0x1a0] sm:$0xf]
  %v443 = vld [vmem:[%s1 + $0x1a4] sm:$0xf]
  %v444 = vld [vmem:[%s1 + $0x1a8] sm:$0xf]
  %v445 = vld [vmem:[%s1 + $0x1ac] sm:$0xf]
  %v446 = vld [vmem:[%s1 + $0x1b0] sm:$0xf]
  %v447 = vld [vmem:[%s1 + $0x1b4] sm:$0xf]
  %v448 = vld [vmem:[%s1 + $0x1b8] sm:$0xf]
  %v449 = vld [vmem:[%s1 + $0x1bc] sm:$0xf]
  %v450 = vld [vmem:[%s1 + $0x1c0] sm:$0xf]
  %v451 = vld [vmem:[%s1 + $0x1c4] sm:$0xf]
  %v452 = vld [vmem:[%s1 + $0x1c8] sm:$0xf]
  %v453 = vld [vmem:[%s1 + $0x1cc] sm:$0xf]
  %v454 = vld [vmem:[%s1 + $0x1d0] sm:$0xf]
  %v455 = vld [vmem:[%s1 + $0x1d4] sm:$0xf]
  %v456 = vld [vmem:[%s1 + $0x1d8] sm:$0xf]
  %v457 = vld [vmem:[%s1 + $0x1dc] sm:$0xf]
  %v458 = vld [vmem:[%s1 + $0x1e0] sm:$0xf]
  %v459 = vld [vmem:[%s1 + $0x1e4] sm:$0xf]
  %v460 = vld [vmem:[%s1 + $0x1e8] sm:$0xf]
  %v461 = vld [vmem:[%s1 + $0x1ec] sm:$0xf]
  %v462 = vld [vmem:[%s1 + $0x1f0] sm:$0xf]
  %v463 = vld [vmem:[%s1 + $0x1f4] sm:$0xf]
  %v464 = vld [vmem:[%s1 + $0x1f8] sm:$0xf]
  %v465 = vld [vmem:[%s1 + $0x1fc] sm:$0xf]
  %v466 = vld [vmem:[%s1 + $0x200] sm:$0xf]
  %v467 = vld [vmem:[%s1 + $0x204] sm:$0xf]
  %v468 = vld [vmem:[%s1 + $0x208] sm:$0xf]
  %v469 = vld [vmem:[%s1 + $0x20c] sm:$0xf]
  %v470 = vld [vmem:[%s1 + $0x210] sm:$0xf]
  %v471 = vld [vmem:[%s1 + $0x214] sm:$0xf]
  %v472 = vld [vmem:[%s1 + $0x218] sm:$0xf]
  %v473 = vld [vmem:[%s1 + $0x21c] sm:$0xf]
  %v474 = vld [vmem:[%s1 + $0x220] sm:$0xf]
  %v475 = vld [vmem:[%s1 + $0x224] sm:$0xf]
  %v476 = vld [vmem:[%s1 + $0x228] sm:$0xf]
  %v477 = vld [vmem:[%s1 + $0x22c] sm:$0xf]
  %v478 = vld [vmem:[%s1 + $0x230] sm:$0xf]
  %v479 = vld [vmem:[%s1 + $0x234] sm:$0xf]
  %v480 = vld [vmem:[%s1 + $0x238] sm:$0xf]
  %v481 = vld [vmem:[%s1 + $0x23c] sm:$0xf]
  %v802 = vunpack.c.l.b16 %v18
  %v803 = vunpack.c.h.b16 %v18
  %v804 = vunpack.c.l.b16 %v19
  %v805 = vunpack.c.h.b16 %v19
  %v806 = vunpack.c.l.b16 %v20
  %v807 = vunpack.c.h.b16 %v20
  %v808 = vunpack.c.l.b16 %v21
  %v809 = vunpack.c.h.b16 %v21
  %v810 = vunpack.c.l.b16 %v22
  %v811 = vunpack.c.l.b16 %v23
  %v812 = vunpack.c.h.b16 %v23
  %v813 = vunpack.c.l.b16 %v24
  %v814 = vunpack.c.h.b16 %v24
  %v815 = vunpack.c.l.b16 %v25
  %v816 = vunpack.c.h.b16 %v25
  %v817 = vunpack.c.l.b16 %v26
  %v818 = vunpack.c.h.b16 %v26
  %v819 = vunpack.c.l.b16 %v27
  %v820 = vunpack.c.l.b16 %v28
  %v821 = vunpack.c.h.b16 %v28
  %v822 = vunpack.c.l.b16 %v29
  %v823 = vunpack.c.h.b16 %v29
  %v824 = vunpack.c.l.b16 %v30
  %v825 = vunpack.c.h.b16 %v30
  %v826 = vunpack.c.l.b16 %v31
  %v827 = vunpack.c.h.b16 %v31
  %v828 = vunpack.c.l.b16 %v32
  %v829 = vunpack.c.l.b16 %v33
  %v830 = vunpack.c.h.b16 %v33
  %v831 = vunpack.c.l.b16 %v34
  %v832 = vunpack.c.h.b16 %v34
  %v833 = vunpack.c.l.b16 %v35
  %v834 = vunpack.c.h.b16 %v35
  %v835 = vunpack.c.l.b16 %v36
  %v836 = vunpack.c.h.b16 %v36
  %v837 = vunpack.c.l.b16 %v37
  %v838 = vunpack.c.l.b16 %v38
  %v839 = vunpack.c.h.b16 %v38
  %v840 = vunpack.c.l.b16 %v39
  %v841 = vunpack.c.h.b16 %v39
  %v842 = vunpack.c.l.b16 %v40
  %v843 = vunpack.c.h.b16 %v40
  %v844 = vunpack.c.l.b16 %v41
  %v845 = vunpack.c.h.b16 %v41
  %v846 = vunpack.c.l.b16 %v42
  %v847 = vunpack.c.l.b16 %v43
  %v848 = vunpack.c.h.b16 %v43
  %v849 = vunpack.c.l.b16 %v44
  %v850 = vunpack.c.h.b16 %v44
  %v851 = vunpack.c.l.b16 %v45
  %v852 = vunpack.c.h.b16 %v45
  %v853 = vunpack.c.l.b16 %v46
  %v854 = vunpack.c.h.b16 %v46
  %v855 = vunpack.c.l.b16 %v47
  %v856 = vunpack.c.l.b16 %v48
  %v857 = vunpack.c.h.b16 %v48
  %v858 = vunpack.c.l.b16 %v49
  %v859 = vunpack.c.h.b16 %v49
  %v860 = vunpack.c.l.b16 %v50
  %v861 = vunpack.c.h.b16 %v50
  %v862 = vunpack.c.l.b16 %v51
  %v863 = vunpack.c.h.b16 %v51
  %v864 = vunpack.c.l.b16 %v52
  %v865 = vunpack.c.l.b16 %v53
  %v866 = vunpack.c.h.b16 %v53
  %v867 = vunpack.c.l.b16 %v54
  %v868 = vunpack.c.h.b16 %v54
  %v869 = vunpack.c.l.b16 %v55
  %v870 = vunpack.c.h.b16 %v55
  %v871 = vunpack.c.l.b16 %v56
  %v872 = vunpack.c.h.b16 %v56
  %v873 = vunpack.c.l.b16 %v57
  %v874 = vunpack.c.l.b16 %v58
  %v875 = vunpack.c.h.b16 %v58
  %v876 = vunpack.c.l.b16 %v59
  %v877 = vunpack.c.h.b16 %v59
  %v878 = vunpack.c.l.b16 %v60
  %v879 = vunpack.c.h.b16 %v60
  %v880 = vunpack.c.l.b16 %v61
  %v881 = vunpack.c.h.b16 %v61
  %v882 = vunpack.c.l.b16 %v62
  %v883 = vunpack.c.l.b16 %v63
  %v884 = vunpack.c.h.b16 %v63
  %v885 = vunpack.c.l.b16 %v64
  %v886 = vunpack.c.h.b16 %v64
  %v887 = vunpack.c.l.b16 %v65
  %v888 = vunpack.c.h.b16 %v65
  %v889 = vunpack.c.l.b16 %v66
  %v890 = vunpack.c.h.b16 %v66
  %v891 = vunpack.c.l.b16 %v67
  %v892 = vunpack.c.l.b16 %v68
  %v893 = vunpack.c.h.b16 %v68
  %v894 = vunpack.c.l.b16 %v69
  %v895 = vunpack.c.h.b16 %v69
  %v896 = vunpack.c.l.b16 %v70
  %v897 = vunpack.c.h.b16 %v70
  %v898 = vunpack.c.l.b16 %v71
  %v899 = vunpack.c.h.b16 %v71
  %v900 = vunpack.c.l.b16 %v72
  %v901 = vunpack.c.l.b16 %v73
  %v902 = vunpack.c.h.b16 %v73
  %v903 = vunpack.c.l.b16 %v74
  %v904 = vunpack.c.h.b16 %v74
  %v905 = vunpack.c.l.b16 %v75
  %v906 = vunpack.c.h.b16 %v75
  %v907 = vunpack.c.l.b16 %v76
  %v908 = vunpack.c.h.b16 %v76
  %v909 = vunpack.c.l.b16 %v77
  %v910 = vunpack.c.l.b16 %v78
  %v911 = vunpack.c.h.b16 %v78
  %v912 = vunpack.c.l.b16 %v79
  %v913 = vunpack.c.h.b16 %v79
  %v914 = vunpack.c.l.b16 %v80
  %v915 = vunpack.c.h.b16 %v80
  %v916 = vunpack.c.l.b16 %v81
  %v917 = vunpack.c.h.b16 %v81
  %v918 = vunpack.c.l.b16 %v82
  %v919 = vunpack.c.l.b16 %v83
  %v920 = vunpack.c.h.b16 %v83
  %v921 = vunpack.c.l.b16 %v84
  %v922 = vunpack.c.h.b16 %v84
  %v923 = vunpack.c.l.b16 %v85
  %v924 = vunpack.c.h.b16 %v85
  %v925 = vunpack.c.l.b16 %v86
  %v926 = vunpack.c.h.b16 %v86
  %v927 = vunpack.c.l.b16 %v87
  %v928 = vunpack.c.l.b16 %v88
  %v929 = vunpack.c.h.b16 %v88
  %v930 = vunpack.c.l.b16 %v89
  %v931 = vunpack.c.h.b16 %v89
  %v932 = vunpack.c.l.b16 %v90
  %v933 = vunpack.c.h.b16 %v90
  %v934 = vunpack.c.l.b16 %v91
  %v935 = vunpack.c.h.b16 %v91
  %v936 = vunpack.c.l.b16 %v92
  %v937 = vunpack.c.l.b16 %v93
  %v938 = vunpack.c.h.b16 %v93
  %v939 = vunpack.c.l.b16 %v94
  %v940 = vunpack.c.h.b16 %v94
  %v941 = vunpack.c.l.b16 %v95
  %v942 = vunpack.c.h.b16 %v95
  %v943 = vunpack.c.l.b16 %v96
  %v944 = vunpack.c.h.b16 %v96
  %v945 = vunpack.c.l.b16 %v97
  %v946 = vunpack.c.l.b16 %v98
  %v947 = vunpack.c.h.b16 %v98
  %v948 = vunpack.c.l.b16 %v99
  %v949 = vunpack.c.h.b16 %v99
  %v950 = vunpack.c.l.b16 %v100
  %v951 = vunpack.c.h.b16 %v100
  %v952 = vunpack.c.l.b16 %v101
  %v953 = vunpack.c.h.b16 %v101
  %v954 = vunpack.c.l.b16 %v102
  %v955 = vunpack.c.l.b16 %v103
  %v956 = vunpack.c.h.b16 %v103
  %v957 = vunpack.c.l.b16 %v104
  %v958 = vunpack.c.h.b16 %v104
  %v959 = vunpack.c.l.b16 %v105
  %v960 = vunpack.c.h.b16 %v105
  %v961 = vunpack.c.l.b16 %v106
  %v962 = vunpack.c.h.b16 %v106
  %v963 = vunpack.c.l.b16 %v107
  %v964 = vunpack.c.l.b16 %v108
  %v965 = vunpack.c.h.b16 %v108
  %v966 = vunpack.c.l.b16 %v109
  %v967 = vunpack.c.h.b16 %v109
  %v968 = vunpack.c.l.b16 %v110
  %v969 = vunpack.c.h.b16 %v110
  %v970 = vunpack.c.l.b16 %v111
  %v971 = vunpack.c.h.b16 %v111
  %v972 = vunpack.c.l.b16 %v112
  %v973 = vunpack.c.l.b16 %v113
  %v974 = vunpack.c.h.b16 %v113
  %v975 = vunpack.c.l.b16 %v114
  %v976 = vunpack.c.h.b16 %v114
  %v977 = vunpack.c.l.b16 %v115
  %v978 = vunpack.c.h.b16 %v115
  %v979 = vunpack.c.l.b16 %v116
  %v980 = vunpack.c.h.b16 %v116
  %v981 = vunpack.c.l.b16 %v117
  %v982 = vunpack.c.l.b16 %v118
  %v983 = vunpack.c.h.b16 %v118
  %v984 = vunpack.c.l.b16 %v119
  %v985 = vunpack.c.h.b16 %v119
  %v986 = vunpack.c.l.b16 %v120
  %v987 = vunpack.c.h.b16 %v120
  %v988 = vunpack.c.l.b16 %v121
  %v989 = vunpack.c.h.b16 %v121
  %v990 = vunpack.c.l.b16 %v122
  %v991 = vunpack.c.l.b16 %v123
  %v992 = vunpack.c.h.b16 %v123
  %v993 = vunpack.c.l.b16 %v124
  %v994 = vunpack.c.h.b16 %v124
  %v995 = vunpack.c.l.b16 %v125
  %v996 = vunpack.c.h.b16 %v125
  %v997 = vunpack.c.l.b16 %v126
  %v998 = vunpack.c.h.b16 %v126
  %v999 = vunpack.c.l.b16 %v127
  %v1000 = vunpack.c.l.b16 %v128
  %v1001 = vunpack.c.h.b16 %v128
  %v1002 = vunpack.c.l.b16 %v129
  %v1003 = vunpack.c.h.b16 %v129
  %v1004 = vunpack.c.l.b16 %v130
  %v1005 = vunpack.c.h.b16 %v130
  %v1006 = vunpack.c.l.b16 %v131
  %v1007 = vunpack.c.h.b16 %v131
  %v1008 = vunpack.c.l.b16 %v132
  %v1009 = vunpack.c.l.b16 %v133
  %v1010 = vunpack.c.h.b16 %v133
  %v1011 = vunpack.c.l.b16 %v134
  %v1012 = vunpack.c.h.b16 %v134
  %v1013 = vunpack.c.l.b16 %v135
  %v1014 = vunpack.c.h.b16 %v135
  %v1015 = vunpack.c.l.b16 %v136
  %v1016 = vunpack.c.h.b16 %v136
  %v1017 = vunpack.c.l.b16 %v137
  %v1018 = vunpack.c.l.b16 %v138
  %v1019 = vunpack.c.h.b16 %v138
  %v1020 = vunpack.c.l.b16 %v139
  %v1021 = vunpack.c.h.b16 %v139
  %v1022 = vunpack.c.l.b16 %v140
  %v1023 = vunpack.c.h.b16 %v140
  %v1024 = vunpack.c.l.b16 %v141
  %v1025 = vunpack.c.h.b16 %v141
  %v1026 = vunpack.c.l.b16 %v142
  %v1027 = vunpack.c.l.b16 %v143
  %v1028 = vunpack.c.h.b16 %v143
  %v1029 = vunpack.c.l.b16 %v144
  %v1030 = vunpack.c.h.b16 %v144
  %v1031 = vunpack.c.l.b16 %v145
  %v1032 = vunpack.c.h.b16 %v145
  %v1033 = vunpack.c.l.b16 %v146
  %v1034 = vunpack.c.h.b16 %v146
  %v1035 = vunpack.c.l.b16 %v147
  %v1036 = vunpack.c.l.b16 %v148
  %v1037 = vunpack.c.h.b16 %v148
  %v1038 = vunpack.c.l.b16 %v149
  %v1039 = vunpack.c.h.b16 %v149
  %v1040 = vunpack.c.l.b16 %v150
  %v1041 = vunpack.c.h.b16 %v150
  %v1042 = vunpack.c.l.b16 %v151
  %v1043 = vunpack.c.h.b16 %v151
  %v1044 = vunpack.c.l.b16 %v152
  %v1045 = vunpack.c.l.b16 %v153
  %v1046 = vunpack.c.h.b16 %v153
  %v1047 = vunpack.c.l.b16 %v154
  %v1048 = vunpack.c.h.b16 %v154
  %v1049 = vunpack.c.l.b16 %v155
  %v1050 = vunpack.c.h.b16 %v155
  %v1051 = vunpack.c.l.b16 %v156
  %v1052 = vunpack.c.h.b16 %v156
  %v1053 = vunpack.c.l.b16 %v157
  %v1054 = vunpack.c.l.b16 %v158
  %v1055 = vunpack.c.h.b16 %v158
  %v1056 = vunpack.c.l.b16 %v159
  %v1057 = vunpack.c.h.b16 %v159
  %v1058 = vunpack.c.l.b16 %v160
  %v1059 = vunpack.c.h.b16 %v160
  %v1060 = vunpack.c.l.b16 %v161
  %v1061 = vunpack.c.h.b16 %v161
  %v1062 = vunpack.c.l.b16 %v162
  %v1063 = vunpack.c.l.b16 %v163
  %v1064 = vunpack.c.h.b16 %v163
  %v1065 = vunpack.c.l.b16 %v164
  %v1066 = vunpack.c.h.b16 %v164
  %v1067 = vunpack.c.l.b16 %v165
  %v1068 = vunpack.c.h.b16 %v165
  %v1069 = vunpack.c.l.b16 %v166
  %v1070 = vunpack.c.h.b16 %v166
  %v1071 = vunpack.c.l.b16 %v167
  %v1072 = vunpack.c.l.b16 %v168
  %v1073 = vunpack.c.h.b16 %v168
  %v1074 = vunpack.c.l.b16 %v169
  %v1075 = vunpack.c.h.b16 %v169
  %v1076 = vunpack.c.l.b16 %v170
  %v1077 = vunpack.c.h.b16 %v170
  %v1078 = vunpack.c.l.b16 %v171
  %v1079 = vunpack.c.h.b16 %v171
  %v1080 = vunpack.c.l.b16 %v172
  %v1081 = vunpack.c.l.b16 %v173
  %v1082 = vunpack.c.h.b16 %v173
  %v1083 = vunpack.c.l.b16 %v174
  %v1084 = vunpack.c.h.b16 %v174
  %v1085 = vunpack.c.l.b16 %v175
  %v1086 = vunpack.c.h.b16 %v175
  %v1087 = vunpack.c.l.b16 %v176
  %v1088 = vunpack.c.h.b16 %v176
  %v1089 = vunpack.c.l.b16 %v177
  %v1090 = vunpack.c.l.b16 %v178
  %v1091 = vunpack.c.h.b16 %v178
  %v1092 = vunpack.c.l.b16 %v179
  %v1093 = vunpack.c.h.b16 %v179
  %v1094 = vunpack.c.l.b16 %v180
  %v1095 = vunpack.c.h.b16 %v180
  %v1096 = vunpack.c.l.b16 %v181
  %v1097 = vunpack.c.h.b16 %v181
  %v1098 = vunpack.c.l.b16 %v182
  %v1099 = vunpack.c.l.b16 %v183
  %v1100 = vunpack.c.h.b16 %v183
  %v1101 = vunpack.c.l.b16 %v184
  %v1102 = vunpack.c.h.b16 %v184
  %v1103 = vunpack.c.l.b16 %v185
  %v1104 = vunpack.c.h.b16 %v185
  %v1105 = vunpack.c.l.b16 %v186
  %v1106 = vunpack.c.h.b16 %v186
  %v1107 = vunpack.c.l.b16 %v187
  %v1108 = vunpack.c.l.b16 %v188
  %v1109 = vunpack.c.h.b16 %v188
  %v1110 = vunpack.c.l.b16 %v189
  %v1111 = vunpack.c.h.b16 %v189
  %v1112 = vunpack.c.l.b16 %v190
  %v1113 = vunpack.c.h.b16 %v190
  %v1114 = vunpack.c.l.b16 %v191
  %v1115 = vunpack.c.h.b16 %v191
  %v1116 = vunpack.c.l.b16 %v192
  %v1117 = vunpack.c.l.b16 %v193
  %v1118 = vunpack.c.h.b16 %v193
  %v1119 = vunpack.c.l.b16 %v194
  %v1120 = vunpack.c.h.b16 %v194
  %v1121 = vunpack.c.l.b16 %v195
  %v1122 = vunpack.c.h.b16 %v195
  %v1123 = vunpack.c.l.b16 %v196
  %v1124 = vunpack.c.h.b16 %v196
  %v1125 = vunpack.c.l.b16 %v197
  %v1126 = vunpack.c.l.b16 %v198
  %v1127 = vunpack.c.h.b16 %v198
  %v1128 = vunpack.c.l.b16 %v199
  %v1129 = vunpack.c.h.b16 %v199
  %v1130 = vunpack.c.l.b16 %v200
  %v1131 = vunpack.c.h.b16 %v200
  %v1132 = vunpack.c.l.b16 %v201
  %v1133 = vunpack.c.h.b16 %v201
  %v1134 = vunpack.c.l.b16 %v202
  %v1135 = vunpack.c.l.b16 %v203
  %v1136 = vunpack.c.h.b16 %v203
  %v1137 = vunpack.c.l.b16 %v204
  %v1138 = vunpack.c.h.b16 %v204
  %v1139 = vunpack.c.l.b16 %v205
  %v1140 = vunpack.c.h.b16 %v205
  %v1141 = vunpack.c.l.b16 %v206
  %v1142 = vunpack.c.h.b16 %v206
  %v1143 = vunpack.c.l.b16 %v207
  %v1144 = vunpack.c.l.b16 %v208
  %v1145 = vunpack.c.h.b16 %v208
  %v1146 = vunpack.c.l.b16 %v209
  %v1147 = vunpack.c.h.b16 %v209
  %v1148 = vunpack.c.l.b16 %v210
  %v1149 = vunpack.c.h.b16 %v210
  %v1150 = vunpack.c.l.b16 %v211
  %v1151 = vunpack.c.h.b16 %v211
  %v1152 = vunpack.c.l.b16 %v212
  %v1153 = vunpack.c.l.b16 %v213
  %v1154 = vunpack.c.h.b16 %v213
  %v1155 = vunpack.c.l.b16 %v214
  %v1156 = vunpack.c.h.b16 %v214
  %v1157 = vunpack.c.l.b16 %v215
  %v1158 = vunpack.c.h.b16 %v215
  %v1159 = vunpack.c.l.b16 %v216
  %v1160 = vunpack.c.h.b16 %v216
  %v1161 = vunpack.c.l.b16 %v217
  %v1162 = vunpack.c.l.b16 %v218
  %v1163 = vunpack.c.h.b16 %v218
  %v1164 = vunpack.c.l.b16 %v219
  %v1165 = vunpack.c.h.b16 %v219
  %v1166 = vunpack.c.l.b16 %v220
  %v1167 = vunpack.c.h.b16 %v220
  %v1168 = vunpack.c.l.b16 %v221
  %v1169 = vunpack.c.h.b16 %v221
  %v1170 = vunpack.c.l.b16 %v222
  %v1171 = vunpack.c.l.b16 %v223
  %v1172 = vunpack.c.h.b16 %v223
  %v1173 = vunpack.c.l.b16 %v224
  %v1174 = vunpack.c.h.b16 %v224
  %v1175 = vunpack.c.l.b16 %v225
  %v1176 = vunpack.c.h.b16 %v225
  %v1177 = vunpack.c.l.b16 %v226
  %v1178 = vunpack.c.h.b16 %v226
  %v1179 = vunpack.c.l.b16 %v227
  %v1180 = vunpack.c.l.b16 %v228
  %v1181 = vunpack.c.h.b16 %v228
  %v1182 = vunpack.c.l.b16 %v229
  %v1183 = vunpack.c.h.b16 %v229
  %v1184 = vunpack.c.l.b16 %v230
  %v1185 = vunpack.c.h.b16 %v230
  %v1186 = vunpack.c.l.b16 %v231
  %v1187 = vunpack.c.h.b16 %v231
  %v1188 = vunpack.c.l.b16 %v232
  %v1189 = vunpack.c.l.b16 %v233
  %v1190 = vunpack.c.h.b16 %v233
  %v1191 = vunpack.c.l.b16 %v234
  %v1192 = vunpack.c.h.b16 %v234
  %v1193 = vunpack.c.l.b16 %v235
  %v1194 = vunpack.c.h.b16 %v235
  %v1195 = vunpack.c.l.b16 %v236
  %v1196 = vunpack.c.h.b16 %v236
  %v1197 = vunpack.c.l.b16 %v237
  %v1198 = vunpack.c.l.b16 %v238
  %v1199 = vunpack.c.h.b16 %v238
  %v1200 = vunpack.c.l.b16 %v239
  %v1201 = vunpack.c.h.b16 %v239
  %v1202 = vunpack.c.l.b16 %v240
  %v1203 = vunpack.c.h.b16 %v240
  %v1204 = vunpack.c.l.b16 %v241
  %v1205 = vunpack.c.h.b16 %v241
  %v1206 = vunpack.c.l.b16 %v242
  %v1207 = vunpack.c.l.b16 %v243
  %v1208 = vunpack.c.h.b16 %v243
  %v1209 = vunpack.c.l.b16 %v244
  %v1210 = vunpack.c.h.b16 %v244
  %v1211 = vunpack.c.l.b16 %v245
  %v1212 = vunpack.c.h.b16 %v245
  %v1213 = vunpack.c.l.b16 %v246
  %v1214 = vunpack.c.h.b16 %v246
  %v1215 = vunpack.c.l.b16 %v247
  %v1216 = vunpack.c.l.b16 %v248
  %v1217 = vunpack.c.h.b16 %v248
  %v1218 = vunpack.c.l.b16 %v249
  %v1219 = vunpack.c.h.b16 %v249
  %v1220 = vunpack.c.l.b16 %v250
  %v1221 = vunpack.c.h.b16 %v250
  %v1222 = vunpack.c.l.b16 %v251
  %v1223 = vunpack.c.h.b16 %v251
  %v1224 = vunpack.c.l.b16 %v252
  %v1225 = vunpack.c.l.b16 %v253
  %v1226 = vunpack.c.h.b16 %v253
  %v1227 = vunpack.c.l.b16 %v254
  %v1228 = vunpack.c.h.b16 %v254
  %v1229 = vunpack.c.l.b16 %v255
  %v1230 = vunpack.c.h.b16 %v255
  %v1231 = vunpack.c.l.b16 %v256
  %v1232 = vunpack.c.h.b16 %v256
  %v1233 = vunpack.c.l.b16 %v257
  %v1234 = vunpack.c.l.b16 %v258
  %v1235 = vunpack.c.h.b16 %v258
  %v1236 = vunpack.c.l.b16 %v259
  %v1237 = vunpack.c.h.b16 %v259
  %v1238 = vunpack.c.l.b16 %v260
  %v1239 = vunpack.c.h.b16 %v260
  %v1240 = vunpack.c.l.b16 %v261
  %v1241 = vunpack.c.h.b16 %v261
  %v1242 = vunpack.c.l.b16 %v262
  %v1243 = vunpack.c.l.b16 %v263
  %v1244 = vunpack.c.h.b16 %v263
  %v1245 = vunpack.c.l.b16 %v264
  %v1246 = vunpack.c.h.b16 %v264
  %v1247 = vunpack.c.l.b16 %v265
  %v1248 = vunpack.c.h.b16 %v265
  %v1249 = vunpack.c.l.b16 %v266
  %v1250 = vunpack.c.h.b16 %v266
  %v1251 = vunpack.c.l.b16 %v267
  %v1252 = vunpack.c.l.b16 %v268
  %v1253 = vunpack.c.h.b16 %v268
  %v1254 = vunpack.c.l.b16 %v269
  %v1255 = vunpack.c.h.b16 %v269
  %v1256 = vunpack.c.l.b16 %v270
  %v1257 = vunpack.c.h.b16 %v270
  %v1258 = vunpack.c.l.b16 %v271
  %v1259 = vunpack.c.h.b16 %v271
  %v1260 = vunpack.c.l.b16 %v272
  %v1261 = vunpack.c.l.b16 %v273
  %v1262 = vunpack.c.h.b16 %v273
  %v1263 = vunpack.c.l.b16 %v274
  %v1264 = vunpack.c.h.b16 %v274
  %v1265 = vunpack.c.l.b16 %v275
  %v1266 = vunpack.c.h.b16 %v275
  %v1267 = vunpack.c.l.b16 %v276
  %v1268 = vunpack.c.h.b16 %v276
  %v1269 = vunpack.c.l.b16 %v277
  %v1270 = vunpack.c.l.b16 %v278
  %v1271 = vunpack.c.h.b16 %v278
  %v1272 = vunpack.c.l.b16 %v279
  %v1273 = vunpack.c.h.b16 %v279
  %v1274 = vunpack.c.l.b16 %v280
  %v1275 = vunpack.c.h.b16 %v280
  %v1276 = vunpack.c.l.b16 %v281
  %v1277 = vunpack.c.h.b16 %v281
  %v1278 = vunpack.c.l.b16 %v282
  %v1279 = vunpack.c.l.b16 %v283
  %v1280 = vunpack.c.h.b16 %v283
  %v1281 = vunpack.c.l.b16 %v284
  %v1282 = vunpack.c.h.b16 %v284
  %v1283 = vunpack.c.l.b16 %v285
  %v1284 = vunpack.c.h.b16 %v285
  %v1285 = vunpack.c.l.b16 %v286
  %v1286 = vunpack.c.h.b16 %v286
  %v1287 = vunpack.c.l.b16 %v287
  %v1288 = vunpack.c.l.b16 %v288
  %v1289 = vunpack.c.h.b16 %v288
  %v1290 = vunpack.c.l.b16 %v289
  %v1291 = vunpack.c.h.b16 %v289
  %v1292 = vunpack.c.l.b16 %v290
  %v1293 = vunpack.c.h.b16 %v290
  %v1294 = vunpack.c.l.b16 %v291
  %v1295 = vunpack.c.h.b16 %v291
  %v1296 = vunpack.c.l.b16 %v292
  %v1297 = vunpack.c.l.b16 %v293
  %v1298 = vunpack.c.h.b16 %v293
  %v1299 = vunpack.c.l.b16 %v294
  %v1300 = vunpack.c.h.b16 %v294
  %v1301 = vunpack.c.l.b16 %v295
  %v1302 = vunpack.c.h.b16 %v295
  %v1303 = vunpack.c.l.b16 %v296
  %v1304 = vunpack.c.h.b16 %v296
  %v1305 = vunpack.c.l.b16 %v297
  %v1306 = vunpack.c.l.b16 %v298
  %v1307 = vunpack.c.h.b16 %v298
  %v1308 = vunpack.c.l.b16 %v299
  %v1309 = vunpack.c.h.b16 %v299
  %v1310 = vunpack.c.l.b16 %v300
  %v1311 = vunpack.c.h.b16 %v300
  %v1312 = vunpack.c.l.b16 %v301
  %v1313 = vunpack.c.h.b16 %v301
  %v1314 = vunpack.c.l.b16 %v302
  %v1315 = vunpack.c.l.b16 %v303
  %v1316 = vunpack.c.h.b16 %v303
  %v1317 = vunpack.c.l.b16 %v304
  %v1318 = vunpack.c.h.b16 %v304
  %v1319 = vunpack.c.l.b16 %v305
  %v1320 = vunpack.c.h.b16 %v305
  %v1321 = vunpack.c.l.b16 %v306
  %v1322 = vunpack.c.h.b16 %v306
  %v1323 = vunpack.c.l.b16 %v307
  %v1324 = vunpack.c.l.b16 %v308
  %v1325 = vunpack.c.h.b16 %v308
  %v1326 = vunpack.c.l.b16 %v309
  %v1327 = vunpack.c.h.b16 %v309
  %v1328 = vunpack.c.l.b16 %v310
  %v1329 = vunpack.c.h.b16 %v310
  %v1330 = vunpack.c.l.b16 %v311
  %v1331 = vunpack.c.h.b16 %v311
  %v1332 = vunpack.c.l.b16 %v312
  %v1333 = vunpack.c.l.b16 %v313
  %v1334 = vunpack.c.h.b16 %v313
  %v1335 = vunpack.c.l.b16 %v314
  %v1336 = vunpack.c.h.b16 %v314
  %v1337 = vunpack.c.l.b16 %v315
  %v1338 = vunpack.c.h.b16 %v315
  %v1339 = vunpack.c.l.b16 %v316
  %v1340 = vunpack.c.h.b16 %v316
  %v1341 = vunpack.c.l.b16 %v317
  %v1342 = vunpack.c.l.b16 %v318
  %v1343 = vunpack.c.h.b16 %v318
  %v1344 = vunpack.c.l.b16 %v319
  %v1345 = vunpack.c.h.b16 %v319
  %v1346 = vunpack.c.l.b16 %v320
  %v1347 = vunpack.c.h.b16 %v320
  %v1348 = vunpack.c.l.b16 %v321
  %v1349 = vunpack.c.h.b16 %v321
  %v1350 = vunpack.c.l.b16 %v322
  %v1351 = vunpack.c.l.b16 %v323
  %v1352 = vunpack.c.h.b16 %v323
  %v1353 = vunpack.c.l.b16 %v324
  %v1354 = vunpack.c.h.b16 %v324
  %v1355 = vunpack.c.l.b16 %v325
  %v1356 = vunpack.c.h.b16 %v325
  %v1357 = vunpack.c.l.b16 %v326
  %v1358 = vunpack.c.h.b16 %v326
  %v1359 = vunpack.c.l.b16 %v327
  %v1360 = vunpack.c.l.b16 %v328
  %v1361 = vunpack.c.h.b16 %v328
  %v1362 = vunpack.c.l.b16 %v329
  %v1363 = vunpack.c.h.b16 %v329
  %v1364 = vunpack.c.l.b16 %v330
  %v1365 = vunpack.c.h.b16 %v330
  %v1366 = vunpack.c.l.b16 %v331
  %v1367 = vunpack.c.h.b16 %v331
  %v1368 = vunpack.c.l.b16 %v332
  %v1369 = vunpack.c.l.b16 %v333
  %v1370 = vunpack.c.h.b16 %v333
  %v1371 = vunpack.c.l.b16 %v334
  %v1372 = vunpack.c.h.b16 %v334
  %v1373 = vunpack.c.l.b16 %v335
  %v1374 = vunpack.c.h.b16 %v335
  %v1375 = vunpack.c.l.b16 %v336
  %v1376 = vunpack.c.h.b16 %v336
  %v1377 = vunpack.c.l.b16 %v337
  %v1378 = vpack.c.b16 %v811, %v802
  %v1379 = vpack.c.b16 %v812, %v803
  %v1380 = vpack.c.b16 %v813, %v804
  %v1381 = vpack.c.b16 %v814, %v805
  %v1382 = vpack.c.b16 %v815, %v806
  %v1383 = vpack.c.b16 %v816, %v807
  %v1384 = vpack.c.b16 %v817, %v808
  %v1385 = vpack.c.b16 %v818, %v809
  %v1386 = vpack.c.b16 %v819, %v810
  %v1387 = vpack.c.b16 %v829, %v820
  %v1388 = vpack.c.b16 %v830, %v821
  %v1389 = vpack.c.b16 %v831, %v822
  %v1390 = vpack.c.b16 %v832, %v823
  %v1391 = vpack.c.b16 %v833, %v824
  %v1392 = vpack.c.b16 %v834, %v825
  %v1393 = vpack.c.b16 %v835, %v826
  %v1394 = vpack.c.b16 %v836, %v827
  %v1395 = vpack.c.b16 %v837, %v828
  %v1396 = vpack.c.b16 %v847, %v838
  %v1397 = vpack.c.b16 %v848, %v839
  %v1398 = vpack.c.b16 %v849, %v840
  %v1399 = vpack.c.b16 %v850, %v841
  %v1400 = vpack.c.b16 %v851, %v842
  %v1401 = vpack.c.b16 %v852, %v843
  %v1402 = vpack.c.b16 %v853, %v844
  %v1403 = vpack.c.b16 %v854, %v845
  %v1404 = vpack.c.b16 %v855, %v846
  %v1405 = vpack.c.b16 %v865, %v856
  %v1406 = vpack.c.b16 %v866, %v857
  %v1407 = vpack.c.b16 %v867, %v858
  %v1408 = vpack.c.b16 %v868, %v859
  %v1409 = vpack.c.b16 %v869, %v860
  %v1410 = vpack.c.b16 %v870, %v861
  %v1411 = vpack.c.b16 %v871, %v862
  %v1412 = vpack.c.b16 %v872, %v863
  %v1413 = vpack.c.b16 %v873, %v864
  %v1414 = vpack.c.b16 %v883, %v874
  %v1415 = vpack.c.b16 %v884, %v875
  %v1416 = vpack.c.b16 %v885, %v876
  %v1417 = vpack.c.b16 %v886, %v877
  %v1418 = vpack.c.b16 %v887, %v878
  %v1419 = vpack.c.b16 %v888, %v879
  %v1420 = vpack.c.b16 %v889, %v880
  %v1421 = vpack.c.b16 %v890, %v881
  %v1422 = vpack.c.b16 %v891, %v882
  %v1423 = vpack.c.b16 %v901, %v892
  %v1424 = vpack.c.b16 %v902, %v893
  %v1425 = vpack.c.b16 %v903, %v894
  %v1426 = vpack.c.b16 %v904, %v895
  %v1427 = vpack.c.b16 %v905, %v896
  %v1428 = vpack.c.b16 %v906, %v897
  %v1429 = vpack.c.b16 %v907, %v898
  %v1430 = vpack.c.b16 %v908, %v899
  %v1431 = vpack.c.b16 %v909, %v900
  %v1432 = vpack.c.b16 %v919, %v910
  %v1433 = vpack.c.b16 %v920, %v911
  %v1434 = vpack.c.b16 %v921, %v912
  %v1435 = vpack.c.b16 %v922, %v913
  %v1436 = vpack.c.b16 %v923, %v914
  %v1437 = vpack.c.b16 %v924, %v915
  %v1438 = vpack.c.b16 %v925, %v916
  %v1439 = vpack.c.b16 %v926, %v917
  %v1440 = vpack.c.b16 %v927, %v918
  %v1441 = vpack.c.b16 %v937, %v928
  %v1442 = vpack.c.b16 %v938, %v929
  %v1443 = vpack.c.b16 %v939, %v930
  %v1444 = vpack.c.b16 %v940, %v931
  %v1445 = vpack.c.b16 %v941, %v932
  %v1446 = vpack.c.b16 %v942, %v933
  %v1447 = vpack.c.b16 %v943, %v934
  %v1448 = vpack.c.b16 %v944, %v935
  %v1449 = vpack.c.b16 %v945, %v936
  %v1450 = vpack.c.b16 %v955, %v946
  %v1451 = vpack.c.b16 %v956, %v947
  %v1452 = vpack.c.b16 %v957, %v948
  %v1453 = vpack.c.b16 %v958, %v949
  %v1454 = vpack.c.b16 %v959, %v950
  %v1455 = vpack.c.b16 %v960, %v951
  %v1456 = vpack.c.b16 %v961, %v952
  %v1457 = vpack.c.b16 %v962, %v953
  %v1458 = vpack.c.b16 %v963, %v954
  %v1459 = vpack.c.b16 %v973, %v964
  %v1460 = vpack.c.b16 %v974, %v965
  %v1461 = vpack.c.b16 %v975, %v966
  %v1462 = vpack.c.b16 %v976, %v967
  %v1463 = vpack.c.b16 %v977, %v968
  %v1464 = vpack.c.b16 %v978, %v969
  %v1465 = vpack.c.b16 %v979, %v970
  %v1466 = vpack.c.b16 %v980, %v971
  %v1467 = vpack.c.b16 %v981, %v972
  %v1468 = vpack.c.b16 %v991, %v982
  %v1469 = vpack.c.b16 %v992, %v983
  %v1470 = vpack.c.b16 %v993, %v984
  %v1471 = vpack.c.b16 %v994, %v985
  %v1472 = vpack.c.b16 %v995, %v986
  %v1473 = vpack.c.b16 %v996, %v987
  %v1474 = vpack.c.b16 %v997, %v988
  %v1475 = vpack.c.b16 %v998, %v989
  %v1476 = vpack.c.b16 %v999, %v990
  %v1477 = vpack.c.b16 %v1009, %v1000
  %v1478 = vpack.c.b16 %v1010, %v1001
  %v1479 = vpack.c.b16 %v1011, %v1002
  %v1480 = vpack.c.b16 %v1012, %v1003
  %v1481 = vpack.c.b16 %v1013, %v1004
  %v1482 = vpack.c.b16 %v1014, %v1005
  %v1483 = vpack.c.b16 %v1015, %v1006
  %v1484 = vpack.c.b16 %v1016, %v1007
  %v1485 = vpack.c.b16 %v1017, %v1008
  %v1486 = vpack.c.b16 %v1027, %v1018
  %v1487 = vpack.c.b16 %v1028, %v1019
  %v1488 = vpack.c.b16 %v1029, %v1020
  %v1489 = vpack.c.b16 %v1030, %v1021
  %v1490 = vpack.c.b16 %v1031, %v1022
  %v1491 = vpack.c.b16 %v1032, %v1023
  %v1492 = vpack.c.b16 %v1033, %v1024
  %v1493 = vpack.c.b16 %v1034, %v1025
  %v1494 = vpack.c.b16 %v1035, %v1026
  %v1495 = vpack.c.b16 %v1045, %v1036
  %v1496 = vpack.c.b16 %v1046, %v1037
  %v1497 = vpack.c.b16 %v1047, %v1038
  %v1498 = vpack.c.b16 %v1048, %v1039
  %v1499 = vpack.c.b16 %v1049, %v1040
  %v1500 = vpack.c.b16 %v1050, %v1041
  %v1501 = vpack.c.b16 %v1051, %v1042
  %v1502 = vpack.c.b16 %v1052, %v1043
  %v1503 = vpack.c.b16 %v1053, %v1044
  %v1504 = vpack.c.b16 %v1063, %v1054
  %v1505 = vpack.c.b16 %v1064, %v1055
  %v1506 = vpack.c.b16 %v1065, %v1056
  %v1507 = vpack.c.b16 %v1066, %v1057
  %v1508 = vpack.c.b16 %v1067, %v1058
  %v1509 = vpack.c.b16 %v1068, %v1059
  %v1510 = vpack.c.b16 %v1069, %v1060
  %v1511 = vpack.c.b16 %v1070, %v1061
  %v1512 = vpack.c.b16 %v1071, %v1062
  %v1513 = vpack.c.b16 %v1081, %v1072
  %v1514 = vpack.c.b16 %v1082, %v1073
  %v1515 = vpack.c.b16 %v1083, %v1074
  %v1516 = vpack.c.b16 %v1084, %v1075
  %v1517 = vpack.c.b16 %v1085, %v1076
  %v1518 = vpack.c.b16 %v1086, %v1077
  %v1519 = vpack.c.b16 %v1087, %v1078
  %v1520 = vpack.c.b16 %v1088, %v1079
  %v1521 = vpack.c.b16 %v1089, %v1080
  %v1522 = vpack.c.b16 %v1099, %v1090
  %v1523 = vpack.c.b16 %v1100, %v1091
  %v1524 = vpack.c.b16 %v1101, %v1092
  %v1525 = vpack.c.b16 %v1102, %v1093
  %v1526 = vpack.c.b16 %v1103, %v1094
  %v1527 = vpack.c.b16 %v1104, %v1095
  %v1528 = vpack.c.b16 %v1105, %v1096
  %v1529 = vpack.c.b16 %v1106, %v1097
  %v1530 = vpack.c.b16 %v1107, %v1098
  %v1531 = vpack.c.b16 %v1117, %v1108
  %v1532 = vpack.c.b16 %v1118, %v1109
  %v1533 = vpack.c.b16 %v1119, %v1110
  %v1534 = vpack.c.b16 %v1120, %v1111
  %v1535 = vpack.c.b16 %v1121, %v1112
  %v1536 = vpack.c.b16 %v1122, %v1113
  %v1537 = vpack.c.b16 %v1123, %v1114
  %v1538 = vpack.c.b16 %v1124, %v1115
  %v1539 = vpack.c.b16 %v1125, %v1116
  %v1540 = vpack.c.b16 %v1135, %v1126
  %v1541 = vpack.c.b16 %v1136, %v1127
  %v1542 = vpack.c.b16 %v1137, %v1128
  %v1543 = vpack.c.b16 %v1138, %v1129
  %v1544 = vpack.c.b16 %v1139, %v1130
  %v1545 = vpack.c.b16 %v1140, %v1131
  %v1546 = vpack.c.b16 %v1141, %v1132
  %v1547 = vpack.c.b16 %v1142, %v1133
  %v1548 = vpack.c.b16 %v1143, %v1134
  %v1549 = vpack.c.b16 %v1153, %v1144
  %v1550 = vpack.c.b16 %v1154, %v1145
  %v1551 = vpack.c.b16 %v1155, %v1146
  %v1552 = vpack.c.b16 %v1156, %v1147
  %v1553 = vpack.c.b16 %v1157, %v1148
  %v1554 = vpack.c.b16 %v1158, %v1149
  %v1555 = vpack.c.b16 %v1159, %v1150
  %v1556 = vpack.c.b16 %v1160, %v1151
  %v1557 = vpack.c.b16 %v1161, %v1152
  %v1558 = vpack.c.b16 %v1171, %v1162
  %v1559 = vpack.c.b16 %v1172, %v1163
  %v1560 = vpack.c.b16 %v1173, %v1164
  %v1561 = vpack.c.b16 %v1174, %v1165
  %v1562 = vpack.c.b16 %v1175, %v1166
  %v1563 = vpack.c.b16 %v1176, %v1167
  %v1564 = vpack.c.b16 %v1177, %v1168
  %v1565 = vpack.c.b16 %v1178, %v1169
  %v1566 = vpack.c.b16 %v1179, %v1170
  %v1567 = vpack.c.b16 %v1189, %v1180
  %v1568 = vpack.c.b16 %v1190, %v1181
  %v1569 = vpack.c.b16 %v1191, %v1182
  %v1570 = vpack.c.b16 %v1192, %v1183
  %v1571 = vpack.c.b16 %v1193, %v1184
  %v1572 = vpack.c.b16 %v1194, %v1185
  %v1573 = vpack.c.b16 %v1195, %v1186
  %v1574 = vpack.c.b16 %v1196, %v1187
  %v1575 = vpack.c.b16 %v1197, %v1188
  %v1576 = vpack.c.b16 %v1207, %v1198
  %v1577 = vpack.c.b16 %v1208, %v1199
  %v1578 = vpack.c.b16 %v1209, %v1200
  %v1579 = vpack.c.b16 %v1210, %v1201
  %v1580 = vpack.c.b16 %v1211, %v1202
  %v1581 = vpack.c.b16 %v1212, %v1203
  %v1582 = vpack.c.b16 %v1213, %v1204
  %v1583 = vpack.c.b16 %v1214, %v1205
  %v1584 = vpack.c.b16 %v1215, %v1206
  %v1585 = vpack.c.b16 %v1225, %v1216
  %v1586 = vpack.c.b16 %v1226, %v1217
  %v1587 = vpack.c.b16 %v1227, %v1218
  %v1588 = vpack.c.b16 %v1228, %v1219
  %v1589 = vpack.c.b16 %v1229, %v1220
  %v1590 = vpack.c.b16 %v1230, %v1221
  %v1591 = vpack.c.b16 %v1231, %v1222
  %v1592 = vpack.c.b16 %v1232, %v1223
  %v1593 = vpack.c.b16 %v1233, %v1224
  %v1594 = vpack.c.b16 %v1243, %v1234
  %v1595 = vpack.c.b16 %v1244, %v1235
  %v1596 = vpack.c.b16 %v1245, %v1236
  %v1597 = vpack.c.b16 %v1246, %v1237
  %v1598 = vpack.c.b16 %v1247, %v1238
  %v1599 = vpack.c.b16 %v1248, %v1239
  %v1600 = vpack.c.b16 %v1249, %v1240
  %v1601 = vpack.c.b16 %v1250, %v1241
  %v1602 = vpack.c.b16 %v1251, %v1242
  %v1603 = vpack.c.b16 %v1261, %v1252
  %v1604 = vpack.c.b16 %v1262, %v1253
  %v1605 = vpack.c.b16 %v1263, %v1254
  %v1606 = vpack.c.b16 %v1264, %v1255
  %v1607 = vpack.c.b16 %v1265, %v1256
  %v1608 = vpack.c.b16 %v1266, %v1257
  %v1609 = vpack.c.b16 %v1267, %v1258
  %v1610 = vpack.c.b16 %v1268, %v1259
  %v1611 = vpack.c.b16 %v1269, %v1260
  %v1612 = vpack.c.b16 %v1279, %v1270
  %v1613 = vpack.c.b16 %v1280, %v1271
  %v1614 = vpack.c.b16 %v1281, %v1272
  %v1615 = vpack.c.b16 %v1282, %v1273
  %v1616 = vpack.c.b16 %v1283, %v1274
  %v1617 = vpack.c.b16 %v1284, %v1275
  %v1618 = vpack.c.b16 %v1285, %v1276
  %v1619 = vpack.c.b16 %v1286, %v1277
  %v1620 = vpack.c.b16 %v1287, %v1278
  %v1621 = vpack.c.b16 %v1297, %v1288
  %v1622 = vpack.c.b16 %v1298, %v1289
  %v1623 = vpack.c.b16 %v1299, %v1290
  %v1624 = vpack.c.b16 %v1300, %v1291
  %v1625 = vpack.c.b16 %v1301, %v1292
  %v1626 = vpack.c.b16 %v1302, %v1293
  %v1627 = vpack.c.b16 %v1303, %v1294
  %v1628 = vpack.c.b16 %v1304, %v1295
  %v1629 = vpack.c.b16 %v1305, %v1296
  %v1630 = vpack.c.b16 %v1315, %v1306
  %v1631 = vpack.c.b16 %v1316, %v1307
  %v1632 = vpack.c.b16 %v1317, %v1308
  %v1633 = vpack.c.b16 %v1318, %v1309
  %v1634 = vpack.c.b16 %v1319, %v1310
  %v1635 = vpack.c.b16 %v1320, %v1311
  %v1636 = vpack.c.b16 %v1321, %v1312
  %v1637 = vpack.c.b16 %v1322, %v1313
  %v1638 = vpack.c.b16 %v1323, %v1314
  %v1639 = vpack.c.b16 %v1333, %v1324
  %v1640 = vpack.c.b16 %v1334, %v1325
  %v1641 = vpack.c.b16 %v1335, %v1326
  %v1642 = vpack.c.b16 %v1336, %v1327
  %v1643 = vpack.c.b16 %v1337, %v1328
  %v1644 = vpack.c.b16 %v1338, %v1329
  %v1645 = vpack.c.b16 %v1339, %v1330
  %v1646 = vpack.c.b16 %v1340, %v1331
  %v1647 = vpack.c.b16 %v1341, %v1332
  %v1648 = vpack.c.b16 %v1351, %v1342
  %v1649 = vpack.c.b16 %v1352, %v1343
  %v1650 = vpack.c.b16 %v1353, %v1344
  %v1651 = vpack.c.b16 %v1354, %v1345
  %v1652 = vpack.c.b16 %v1355, %v1346
  %v1653 = vpack.c.b16 %v1356, %v1347
  %v1654 = vpack.c.b16 %v1357, %v1348
  %v1655 = vpack.c.b16 %v1358, %v1349
  %v1656 = vpack.c.b16 %v1359, %v1350
  %v1657 = vpack.c.b16 %v1369, %v1360
  %v1658 = vpack.c.b16 %v1370, %v1361
  %v1659 = vpack.c.b16 %v1371, %v1362
  %v1660 = vpack.c.b16 %v1372, %v1363
  %v1661 = vpack.c.b16 %v1373, %v1364
  %v1662 = vpack.c.b16 %v1374, %v1365
  %v1663 = vpack.c.b16 %v1375, %v1366
  %v1664 = vpack.c.b16 %v1376, %v1367
  %v1665 = vpack.c.b16 %v1377, %v1368
  %v2098 = vunpack.c.l.b16 %v338
  %v2099 = vunpack.c.l.b16 %v339
  %v2100 = vunpack.c.l.b16 %v340
  %v2101 = vunpack.c.l.b16 %v341
  %v2102 = vunpack.c.l.b16 %v342
  %v2103 = vunpack.c.l.b16 %v343
  %v2104 = vunpack.c.l.b16 %v344
  %v2105 = vunpack.c.l.b16 %v345
  %v2106 = vunpack.c.l.b16 %v346
  %v2107 = vunpack.c.l.b16 %v347
  %v2108 = vunpack.c.l.b16 %v348
  %v2109 = vunpack.c.l.b16 %v349
  %v2110 = vunpack.c.l.b16 %v350
  %v2111 = vunpack.c.l.b16 %v351
  %v2112 = vunpack.c.l.b16 %v352
  %v2113 = vunpack.c.l.b16 %v353
  %v2114 = vunpack.c.l.b16 %v354
  %v2115 = vunpack.c.l.b16 %v355
  %v2116 = vunpack.c.l.b16 %v356
  %v2117 = vunpack.c.l.b16 %v357
  %v2118 = vunpack.c.l.b16 %v358
  %v2119 = vunpack.c.l.b16 %v359
  %v2120 = vunpack.c.l.b16 %v360
  %v2121 = vunpack.c.l.b16 %v361
  %v2122 = vunpack.c.l.b16 %v362
  %v2123 = vunpack.c.l.b16 %v363
  %v2124 = vunpack.c.l.b16 %v364
  %v2125 = vunpack.c.l.b16 %v365
  %v2126 = vunpack.c.l.b16 %v366
  %v2127 = vunpack.c.l.b16 %v367
  %v2128 = vunpack.c.l.b16 %v368
  %v2129 = vunpack.c.l.b16 %v369
  %v2130 = vunpack.c.l.b16 %v370
  %v2131 = vunpack.c.l.b16 %v371
  %v2132 = vunpack.c.l.b16 %v372
  %v2133 = vunpack.c.l.b16 %v373
  %v2134 = vunpack.c.l.b16 %v374
  %v2135 = vunpack.c.l.b16 %v375
  %v2136 = vunpack.c.l.b16 %v376
  %v2137 = vunpack.c.l.b16 %v377
  %v2138 = vunpack.c.l.b16 %v378
  %v2139 = vunpack.c.l.b16 %v379
  %v2140 = vunpack.c.l.b16 %v380
  %v2141 = vunpack.c.l.b16 %v381
  %v2142 = vunpack.c.l.b16 %v382
  %v2143 = vunpack.c.l.b16 %v383
  %v2144 = vunpack.c.l.b16 %v384
  %v2145 = vunpack.c.l.b16 %v385
  %v2146 = vunpack.c.l.b16 %v386
  %v2147 = vunpack.c.l.b16 %v387
  %v2148 = vunpack.c.l.b16 %v388
  %v2149 = vunpack.c.l.b16 %v389
  %v2150 = vunpack.c.l.b16 %v390
  %v2151 = vunpack.c.l.b16 %v391
  %v2152 = vunpack.c.l.b16 %v392
  %v2153 = vunpack.c.l.b16 %v393
  %v2154 = vunpack.c.l.b16 %v394
  %v2155 = vunpack.c.l.b16 %v395
  %v2156 = vunpack.c.l.b16 %v396
  %v2157 = vunpack.c.l.b16 %v397
  %v2158 = vunpack.c.l.b16 %v398
  %v2159 = vunpack.c.l.b16 %v399
  %v2160 = vunpack.c.l.b16 %v400
  %v2161 = vunpack.c.l.b16 %v401
  %v2162 = vunpack.c.l.b16 %v402
  %v2163 = vunpack.c.l.b16 %v403
  %v2164 = vunpack.c.l.b16 %v404
  %v2165 = vunpack.c.l.b16 %v405
  %v2166 = vunpack.c.l.b16 %v406
  %v2167 = vunpack.c.l.b16 %v407
  %v2168 = vunpack.c.l.b16 %v408
  %v2169 = vunpack.c.l.b16 %v409
  %v2170 = vunpack.c.l.b16 %v410
  %v2171 = vunpack.c.l.b16 %v411
  %v2172 = vunpack.c.l.b16 %v412
  %v2173 = vunpack.c.l.b16 %v413
  %v2174 = vunpack.c.l.b16 %v414
  %v2175 = vunpack.c.l.b16 %v415
  %v2176 = vunpack.c.l.b16 %v416
  %v2177 = vunpack.c.l.b16 %v417
  %v2178 = vunpack.c.l.b16 %v418
  %v2179 = vunpack.c.l.b16 %v419
  %v2180 = vunpack.c.l.b16 %v420
  %v2181 = vunpack.c.l.b16 %v421
  %v2182 = vunpack.c.l.b16 %v422
  %v2183 = vunpack.c.l.b16 %v423
  %v2184 = vunpack.c.l.b16 %v424
  %v2185 = vunpack.c.l.b16 %v425
  %v2186 = vunpack.c.l.b16 %v426
  %v2187 = vunpack.c.l.b16 %v427
  %v2188 = vunpack.c.l.b16 %v428
  %v2189 = vunpack.c.l.b16 %v429
  %v2190 = vunpack.c.l.b16 %v430
  %v2191 = vunpack.c.l.b16 %v431
  %v2192 = vunpack.c.l.b16 %v432
  %v2193 = vunpack.c.l.b16 %v433
  %v2194 = vunpack.c.l.b16 %v434
  %v2195 = vunpack.c.l.b16 %v435
  %v2196 = vunpack.c.l.b16 %v436
  %v2197 = vunpack.c.l.b16 %v437
  %v2198 = vunpack.c.l.b16 %v438
  %v2199 = vunpack.c.l.b16 %v439
  %v2200 = vunpack.c.l.b16 %v440
  %v2201 = vunpack.c.l.b16 %v441
  %v2202 = vunpack.c.l.b16 %v442
  %v2203 = vunpack.c.l.b16 %v443
  %v2204 = vunpack.c.l.b16 %v444
  %v2205 = vunpack.c.l.b16 %v445
  %v2206 = vunpack.c.l.b16 %v446
  %v2207 = vunpack.c.l.b16 %v447
  %v2208 = vunpack.c.l.b16 %v448
  %v2209 = vunpack.c.l.b16 %v449
  %v2210 = vunpack.c.l.b16 %v450
  %v2211 = vunpack.c.l.b16 %v451
  %v2212 = vunpack.c.l.b16 %v452
  %v2213 = vunpack.c.l.b16 %v453
  %v2214 = vunpack.c.l.b16 %v454
  %v2215 = vunpack.c.l.b16 %v455
  %v2216 = vunpack.c.l.b16 %v456
  %v2217 = vunpack.c.l.b16 %v457
  %v2218 = vunpack.c.l.b16 %v458
  %v2219 = vunpack.c.l.b16 %v459
  %v2220 = vunpack.c.l.b16 %v460
  %v2221 = vunpack.c.l.b16 %v461
  %v2222 = vunpack.c.l.b16 %v462
  %v2223 = vunpack.c.l.b16 %v463
  %v2224 = vunpack.c.l.b16 %v464
  %v2225 = vunpack.c.l.b16 %v465
  %v2226 = vunpack.c.l.b16 %v466
  %v2227 = vunpack.c.l.b16 %v467
  %v2228 = vunpack.c.l.b16 %v468
  %v2229 = vunpack.c.l.b16 %v469
  %v2230 = vunpack.c.l.b16 %v470
  %v2231 = vunpack.c.l.b16 %v471
  %v2232 = vunpack.c.l.b16 %v472
  %v2233 = vunpack.c.l.b16 %v473
  %v2234 = vunpack.c.l.b16 %v474
  %v2235 = vunpack.c.l.b16 %v475
  %v2236 = vunpack.c.l.b16 %v476
  %v2237 = vunpack.c.l.b16 %v477
  %v2238 = vunpack.c.l.b16 %v478
  %v2239 = vunpack.c.l.b16 %v479
  %v2240 = vunpack.c.l.b16 %v480
  %v2241 = vunpack.c.l.b16 %v481
  %v2242 = vpack.c.b16 %v2099, %v2098
  %v2243 = vpack.c.b16 %v2101, %v2100
  %v2244 = vpack.c.b16 %v2103, %v2102
  %v2245 = vpack.c.b16 %v2105, %v2104
  %v2246 = vpack.c.b16 %v2107, %v2106
  %v2247 = vpack.c.b16 %v2109, %v2108
  %v2248 = vpack.c.b16 %v2111, %v2110
  %v2249 = vpack.c.b16 %v2113, %v2112
  %v2250 = vpack.c.b16 %v2115, %v2114
  %v2251 = vpack.c.b16 %v2117, %v2116
  %v2252 = vpack.c.b16 %v2119, %v2118
  %v2253 = vpack.c.b16 %v2121, %v2120
  %v2254 = vpack.c.b16 %v2123, %v2122
  %v2255 = vpack.c.b16 %v2125, %v2124
  %v2256 = vpack.c.b16 %v2127, %v2126
  %v2257 = vpack.c.b16 %v2129, %v2128
  %v2258 = vpack.c.b16 %v2131, %v2130
  %v2259 = vpack.c.b16 %v2133, %v2132
  %v2260 = vpack.c.b16 %v2135, %v2134
  %v2261 = vpack.c.b16 %v2137, %v2136
  %v2262 = vpack.c.b16 %v2139, %v2138
  %v2263 = vpack.c.b16 %v2141, %v2140
  %v2264 = vpack.c.b16 %v2143, %v2142
  %v2265 = vpack.c.b16 %v2145, %v2144
  %v2266 = vpack.c.b16 %v2147, %v2146
  %v2267 = vpack.c.b16 %v2149, %v2148
  %v2268 = vpack.c.b16 %v2151, %v2150
  %v2269 = vpack.c.b16 %v2153, %v2152
  %v2270 = vpack.c.b16 %v2155, %v2154
  %v2271 = vpack.c.b16 %v2157, %v2156
  %v2272 = vpack.c.b16 %v2159, %v2158
  %v2273 = vpack.c.b16 %v2161, %v2160
  %v2274 = vpack.c.b16 %v2163, %v2162
  %v2275 = vpack.c.b16 %v2165, %v2164
  %v2276 = vpack.c.b16 %v2167, %v2166
  %v2277 = vpack.c.b16 %v2169, %v2168
  %v2278 = vpack.c.b16 %v2171, %v2170
  %v2279 = vpack.c.b16 %v2173, %v2172
  %v2280 = vpack.c.b16 %v2175, %v2174
  %v2281 = vpack.c.b16 %v2177, %v2176
  %v2282 = vpack.c.b16 %v2179, %v2178
  %v2283 = vpack.c.b16 %v2181, %v2180
  %v2284 = vpack.c.b16 %v2183, %v2182
  %v2285 = vpack.c.b16 %v2185, %v2184
  %v2286 = vpack.c.b16 %v2187, %v2186
  %v2287 = vpack.c.b16 %v2189, %v2188
  %v2288 = vpack.c.b16 %v2191, %v2190
  %v2289 = vpack.c.b16 %v2193, %v2192
  %v2290 = vpack.c.b16 %v2195, %v2194
  %v2291 = vpack.c.b16 %v2197, %v2196
  %v2292 = vpack.c.b16 %v2199, %v2198
  %v2293 = vpack.c.b16 %v2201, %v2200
  %v2294 = vpack.c.b16 %v2203, %v2202
  %v2295 = vpack.c.b16 %v2205, %v2204
  %v2296 = vpack.c.b16 %v2207, %v2206
  %v2297 = vpack.c.b16 %v2209, %v2208
  %v2298 = vpack.c.b16 %v2211, %v2210
  %v2299 = vpack.c.b16 %v2213, %v2212
  %v2300 = vpack.c.b16 %v2215, %v2214
  %v2301 = vpack.c.b16 %v2217, %v2216
  %v2302 = vpack.c.b16 %v2219, %v2218
  %v2303 = vpack.c.b16 %v2221, %v2220
  %v2304 = vpack.c.b16 %v2223, %v2222
  %v2305 = vpack.c.b16 %v2225, %v2224
  %v2306 = vpack.c.b16 %v2227, %v2226
  %v2307 = vpack.c.b16 %v2229, %v2228
  %v2308 = vpack.c.b16 %v2231, %v2230
  %v2309 = vpack.c.b16 %v2233, %v2232
  %v2310 = vpack.c.b16 %v2235, %v2234
  %v2311 = vpack.c.b16 %v2237, %v2236
  %v2312 = vpack.c.b16 %v2239, %v2238
  %v2313 = vpack.c.b16 %v2241, %v2240
  %2386 = vmatprep.subr.bf16.mxu0 0
  %2387 = vmatpush1.bf16.msra.mxu0 %v2249
  %2388 = vmatprep.subr.bf16.mxu0 0
  %2389 = vmatpush1.bf16.msra.mxu0 %v2248
  %2390 = vmatprep.subr.bf16.mxu0 0
  %2391 = vmatpush1.bf16.msra.mxu0 %v2247
  %2392 = vmatprep.subr.bf16.mxu0 0
  %2393 = vmatpush1.bf16.msra.mxu0 %v2246
  %2394 = vmatprep.subr.bf16.mxu0 0
  %2395 = vmatpush1.bf16.msra.mxu0 %v2245
  %2396 = vmatprep.subr.bf16.mxu0 0
  %2397 = vmatpush1.bf16.msra.mxu0 %v2244
  %2398 = vmatprep.subr.bf16.mxu0 0
  %2399 = vmatpush1.bf16.msra.mxu0 %v2243
  %2400 = vmatprep.subr.bf16.mxu0 0
  %2401 = vmatpush1.bf16.msra.mxu0 %v2242
  %2402 = vmatprep.subr.bf16.mxu0 0
  %2403 = vmatpush2.bf16.msra.mxu0 %v2257
  %2404 = vmatprep.subr.bf16.mxu0 0
  %2405 = vmatpush2.bf16.msra.mxu0 %v2256
  %2406 = vmatprep.subr.bf16.mxu0 0
  %2407 = vmatpush2.bf16.msra.mxu0 %v2255
  %2408 = vmatprep.subr.bf16.mxu0 0
  %2409 = vmatpush2.bf16.msra.mxu0 %v2254
  %2410 = vmatprep.subr.bf16.mxu0 0
  %2411 = vmatpush2.bf16.msra.mxu0 %v2253
  %2412 = vmatprep.subr.bf16.mxu0 0
  %2413 = vmatpush2.bf16.msra.mxu0 %v2252
  %2414 = vmatprep.subr.bf16.mxu0 0
  %2415 = vmatpush2.bf16.msra.mxu0 %v2251
  %2416 = vmatprep.subr.bf16.mxu0 0
  %2417 = vmatpush2.bf16.msra.mxu0 %v2250
  %2418 = vmatprep.mubr.bf16.mxu0 %v1379
  %2419 = vmatmul.mubr.bf16.gmra.mxu0 %v1378
  %v2420 = vpop.f32.mrf.mxu0
  %v2421 = vadd.f32 0.0, %v2420
  %v2422 = vpop.f32.mrf.mxu0
  %v2423 = vpop.f32.mrf.mxu0
  %v2424 = vadd.f32 0.0, %v2423
  %v2425 = vpop.f32.mrf.mxu0
  %2426 = vmatprep.mubr.bf16.mxu0 %v1388
  %2427 = vmatmul.mubr.bf16.gmra.mxu0 %v1387
  %v2428 = vpop.f32.mrf.mxu0
  %v2429 = vadd.f32 0.0, %v2428
  %v2430 = vpop.f32.mrf.mxu0
  %v2431 = vpop.f32.mrf.mxu0
  %v2432 = vadd.f32 0.0, %v2431
  %v2433 = vpop.f32.mrf.mxu0
  %2434 = vmatprep.mubr.bf16.mxu0 %v1397
  %2435 = vmatmul.mubr.bf16.gmra.mxu0 %v1396
  %v2436 = vpop.f32.mrf.mxu0
  %v2437 = vadd.f32 0.0, %v2436
  %v2438 = vpop.f32.mrf.mxu0
  %v2439 = vpop.f32.mrf.mxu0
  %v2440 = vadd.f32 0.0, %v2439
  %v2441 = vpop.f32.mrf.mxu0
  %2442 = vmatprep.mubr.bf16.mxu0 %v1406
  %2443 = vmatmul.mubr.bf16.gmra.mxu0 %v1405
  %v2444 = vpop.f32.mrf.mxu0
  %v2445 = vadd.f32 0.0, %v2444
  %v2446 = vpop.f32.mrf.mxu0
  %v2447 = vpop.f32.mrf.mxu0
  %v2448 = vadd.f32 0.0, %v2447
  %v2449 = vpop.f32.mrf.mxu0
  %2450 = vmatprep.mubr.bf16.mxu0 %v1415
  %2451 = vmatmul.mubr.bf16.gmra.mxu0 %v1414
  %v2452 = vpop.f32.mrf.mxu0
  %v2453 = vadd.f32 0.0, %v2452
  %v2454 = vpop.f32.mrf.mxu0
  %v2455 = vpop.f32.mrf.mxu0
  %v2456 = vadd.f32 0.0, %v2455
  %v2457 = vpop.f32.mrf.mxu0
  %2458 = vmatprep.mubr.bf16.mxu0 %v1424
  %2459 = vmatmul.mubr.bf16.gmra.mxu0 %v1423
  %v2460 = vpop.f32.mrf.mxu0
  %v2461 = vadd.f32 0.0, %v2460
  %v2462 = vpop.f32.mrf.mxu0
  %v2463 = vpop.f32.mrf.mxu0
  %v2464 = vadd.f32 0.0, %v2463
  %v2465 = vpop.f32.mrf.mxu0
  %2466 = vmatprep.mubr.bf16.mxu0 %v1433
  %2467 = vmatmul.mubr.bf16.gmra.mxu0 %v1432
  %v2468 = vpop.f32.mrf.mxu0
  %v2469 = vadd.f32 0.0, %v2468
  %v2470 = vpop.f32.mrf.mxu0
  %v2471 = vpop.f32.mrf.mxu0
  %v2472 = vadd.f32 0.0, %v2471
  %v2473 = vpop.f32.mrf.mxu0
  %2474 = vmatprep.mubr.bf16.mxu0 %v1442
  %2475 = vmatmul.mubr.bf16.gmra.mxu0 %v1441
  %v2476 = vpop.f32.mrf.mxu0
  %v2477 = vadd.f32 0.0, %v2476
  %v2478 = vpop.f32.mrf.mxu0
  %v2479 = vpop.f32.mrf.mxu0
  %v2480 = vadd.f32 0.0, %v2479
  %v2481 = vpop.f32.mrf.mxu0
  %2482 = vmatprep.mubr.bf16.mxu0 %v1451
  %2483 = vmatmul.mubr.bf16.gmra.mxu0 %v1450
  %v2484 = vpop.f32.mrf.mxu0
  %v2485 = vadd.f32 0.0, %v2484
  %v2486 = vpop.f32.mrf.mxu0
  %v2487 = vpop.f32.mrf.mxu0
  %v2488 = vadd.f32 0.0, %v2487
  %v2489 = vpop.f32.mrf.mxu0
  %2490 = vmatprep.mubr.bf16.mxu0 %v1460
  %2491 = vmatmul.mubr.bf16.gmra.mxu0 %v1459
  %v2492 = vpop.f32.mrf.mxu0
  %v2493 = vadd.f32 0.0, %v2492
  %v2494 = vpop.f32.mrf.mxu0
  %v2495 = vpop.f32.mrf.mxu0
  %v2496 = vadd.f32 0.0, %v2495
  %v2497 = vpop.f32.mrf.mxu0
  %2498 = vmatprep.mubr.bf16.mxu0 %v1469
  %2499 = vmatmul.mubr.bf16.gmra.mxu0 %v1468
  %v2500 = vpop.f32.mrf.mxu0
  %v2501 = vadd.f32 0.0, %v2500
  %v2502 = vpop.f32.mrf.mxu0
  %v2503 = vpop.f32.mrf.mxu0
  %v2504 = vadd.f32 0.0, %v2503
  %v2505 = vpop.f32.mrf.mxu0
  %2506 = vmatprep.mubr.bf16.mxu0 %v1478
  %2507 = vmatmul.mubr.bf16.gmra.mxu0 %v1477
  %v2508 = vpop.f32.mrf.mxu0
  %v2509 = vadd.f32 0.0, %v2508
  %v2510 = vpop.f32.mrf.mxu0
  %v2511 = vpop.f32.mrf.mxu0
  %v2512 = vadd.f32 0.0, %v2511
  %v2513 = vpop.f32.mrf.mxu0
  %2514 = vmatprep.mubr.bf16.mxu0 %v1487
  %2515 = vmatmul.mubr.bf16.gmra.mxu0 %v1486
  %v2516 = vpop.f32.mrf.mxu0
  %v2517 = vadd.f32 0.0, %v2516
  %v2518 = vpop.f32.mrf.mxu0
  %v2519 = vpop.f32.mrf.mxu0
  %v2520 = vadd.f32 0.0, %v2519
  %v2521 = vpop.f32.mrf.mxu0
  %2522 = vmatprep.mubr.bf16.mxu0 %v1496
  %2523 = vmatmul.mubr.bf16.gmra.mxu0 %v1495
  %v2524 = vpop.f32.mrf.mxu0
  %v2525 = vadd.f32 0.0, %v2524
  %v2526 = vpop.f32.mrf.mxu0
  %v2527 = vpop.f32.mrf.mxu0
  %v2528 = vadd.f32 0.0, %v2527
  %v2529 = vpop.f32.mrf.mxu0
  %2530 = vmatprep.mubr.bf16.mxu0 %v1505
  %2531 = vmatmul.mubr.bf16.gmra.mxu0 %v1504
  %v2532 = vpop.f32.mrf.mxu0
  %v2533 = vadd.f32 0.0, %v2532
  %v2534 = vpop.f32.mrf.mxu0
  %v2535 = vpop.f32.mrf.mxu0
  %v2536 = vadd.f32 0.0, %v2535
  %v2537 = vpop.f32.mrf.mxu0
  %2538 = vmatprep.mubr.bf16.mxu0 %v1514
  %2539 = vmatmul.mubr.bf16.gmra.mxu0 %v1513
  %v2540 = vpop.f32.mrf.mxu0
  %v2541 = vadd.f32 0.0, %v2540
  %v2542 = vpop.f32.mrf.mxu0
  %v2543 = vpop.f32.mrf.mxu0
  %v2544 = vadd.f32 0.0, %v2543
  %v2545 = vpop.f32.mrf.mxu0
  %2546 = vmatprep.mubr.bf16.mxu0 %v1523
  %2547 = vmatmul.mubr.bf16.gmra.mxu0 %v1522
  %v2548 = vpop.f32.mrf.mxu0
  %v2549 = vadd.f32 0.0, %v2548
  %v2550 = vpop.f32.mrf.mxu0
  %v2551 = vpop.f32.mrf.mxu0
  %v2552 = vadd.f32 0.0, %v2551
  %v2553 = vpop.f32.mrf.mxu0
  %2554 = vmatprep.mubr.bf16.mxu0 %v1532
  %2555 = vmatmul.mubr.bf16.gmra.mxu0 %v1531
  %v2556 = vpop.f32.mrf.mxu0
  %v2557 = vadd.f32 0.0, %v2556
  %v2558 = vpop.f32.mrf.mxu0
  %v2559 = vpop.f32.mrf.mxu0
  %v2560 = vadd.f32 0.0, %v2559
  %v2561 = vpop.f32.mrf.mxu0
  %2562 = vmatprep.mubr.bf16.mxu0 %v1541
  %2563 = vmatmul.mubr.bf16.gmra.mxu0 %v1540
  %v2564 = vpop.f32.mrf.mxu0
  %v2565 = vadd.f32 0.0, %v2564
  %v2566 = vpop.f32.mrf.mxu0
  %v2567 = vpop.f32.mrf.mxu0
  %v2568 = vadd.f32 0.0, %v2567
  %v2569 = vpop.f32.mrf.mxu0
  %2570 = vmatprep.mubr.bf16.mxu0 %v1550
  %2571 = vmatmul.mubr.bf16.gmra.mxu0 %v1549
  %v2572 = vpop.f32.mrf.mxu0
  %v2573 = vadd.f32 0.0, %v2572
  %v2574 = vpop.f32.mrf.mxu0
  %v2575 = vpop.f32.mrf.mxu0
  %v2576 = vadd.f32 0.0, %v2575
  %v2577 = vpop.f32.mrf.mxu0
  %2578 = vmatprep.mubr.bf16.mxu0 %v1559
  %2579 = vmatmul.mubr.bf16.gmra.mxu0 %v1558
  %v2580 = vpop.f32.mrf.mxu0
  %v2581 = vadd.f32 0.0, %v2580
  %v2582 = vpop.f32.mrf.mxu0
  %v2583 = vpop.f32.mrf.mxu0
  %v2584 = vadd.f32 0.0, %v2583
  %v2585 = vpop.f32.mrf.mxu0
  %2586 = vmatprep.mubr.bf16.mxu0 %v1568
  %2587 = vmatmul.mubr.bf16.gmra.mxu0 %v1567
  %v2588 = vpop.f32.mrf.mxu0
  %v2589 = vadd.f32 0.0, %v2588
  %v2590 = vpop.f32.mrf.mxu0
  %v2591 = vpop.f32.mrf.mxu0
  %v2592 = vadd.f32 0.0, %v2591
  %v2593 = vpop.f32.mrf.mxu0
  %2594 = vmatprep.mubr.bf16.mxu0 %v1577
  %2595 = vmatmul.mubr.bf16.gmra.mxu0 %v1576
  %v2596 = vpop.f32.mrf.mxu0
  %v2597 = vadd.f32 0.0, %v2596
  %v2598 = vpop.f32.mrf.mxu0
  %v2599 = vpop.f32.mrf.mxu0
  %v2600 = vadd.f32 0.0, %v2599
  %v2601 = vpop.f32.mrf.mxu0
  %2602 = vmatprep.mubr.bf16.mxu0 %v1586
  %2603 = vmatmul.mubr.bf16.gmra.mxu0 %v1585
  %v2604 = vpop.f32.mrf.mxu0
  %v2605 = vadd.f32 0.0, %v2604
  %v2606 = vpop.f32.mrf.mxu0
  %v2607 = vpop.f32.mrf.mxu0
  %v2608 = vadd.f32 0.0, %v2607
  %v2609 = vpop.f32.mrf.mxu0
  %2610 = vmatprep.mubr.bf16.mxu0 %v1595
  %2611 = vmatmul.mubr.bf16.gmra.mxu0 %v1594
  %v2612 = vpop.f32.mrf.mxu0
  %v2613 = vadd.f32 0.0, %v2612
  %v2614 = vpop.f32.mrf.mxu0
  %v2615 = vpop.f32.mrf.mxu0
  %v2616 = vadd.f32 0.0, %v2615
  %v2617 = vpop.f32.mrf.mxu0
  %2618 = vmatprep.mubr.bf16.mxu0 %v1604
  %2619 = vmatmul.mubr.bf16.gmra.mxu0 %v1603
  %v2620 = vpop.f32.mrf.mxu0
  %v2621 = vadd.f32 0.0, %v2620
  %v2622 = vpop.f32.mrf.mxu0
  %v2623 = vpop.f32.mrf.mxu0
  %v2624 = vadd.f32 0.0, %v2623
  %v2625 = vpop.f32.mrf.mxu0
  %2626 = vmatprep.mubr.bf16.mxu0 %v1613
  %2627 = vmatmul.mubr.bf16.gmra.mxu0 %v1612
  %v2628 = vpop.f32.mrf.mxu0
  %v2629 = vadd.f32 0.0, %v2628
  %v2630 = vpop.f32.mrf.mxu0
  %v2631 = vpop.f32.mrf.mxu0
  %v2632 = vadd.f32 0.0, %v2631
  %v2633 = vpop.f32.mrf.mxu0
  %2634 = vmatprep.mubr.bf16.mxu0 %v1622
  %2635 = vmatmul.mubr.bf16.gmra.mxu0 %v1621
  %v2636 = vpop.f32.mrf.mxu0
  %v2637 = vadd.f32 0.0, %v2636
  %v2638 = vpop.f32.mrf.mxu0
  %v2639 = vpop.f32.mrf.mxu0
  %v2640 = vadd.f32 0.0, %v2639
  %v2641 = vpop.f32.mrf.mxu0
  %2642 = vmatprep.mubr.bf16.mxu0 %v1631
  %2643 = vmatmul.mubr.bf16.gmra.mxu0 %v1630
  %v2644 = vpop.f32.mrf.mxu0
  %v2645 = vadd.f32 0.0, %v2644
  %v2646 = vpop.f32.mrf.mxu0
  %v2647 = vpop.f32.mrf.mxu0
  %v2648 = vadd.f32 0.0, %v2647
  %v2649 = vpop.f32.mrf.mxu0
  %2650 = vmatprep.mubr.bf16.mxu0 %v1640
  %2651 = vmatmul.mubr.bf16.gmra.mxu0 %v1639
  %v2652 = vpop.f32.mrf.mxu0
  %v2653 = vadd.f32 0.0, %v2652
  %v2654 = vpop.f32.mrf.mxu0
  %v2655 = vpop.f32.mrf.mxu0
  %v2656 = vadd.f32 0.0, %v2655
  %v2657 = vpop.f32.mrf.mxu0
  %2658 = vmatprep.mubr.bf16.mxu0 %v1649
  %2659 = vmatmul.mubr.bf16.gmra.mxu0 %v1648
  %v2660 = vpop.f32.mrf.mxu0
  %v2661 = vadd.f32 0.0, %v2660
  %v2662 = vpop.f32.mrf.mxu0
  %v2663 = vpop.f32.mrf.mxu0
  %v2664 = vadd.f32 0.0, %v2663
  %v2665 = vpop.f32.mrf.mxu0
  %2666 = vmatprep.mubr.bf16.mxu0 %v1658
  %2667 = vmatmul.mubr.bf16.gmra.mxu0 %v1657
  %v2668 = vpop.f32.mrf.mxu0
  %v2669 = vadd.f32 0.0, %v2668
  %v2670 = vpop.f32.mrf.mxu0
  %v2671 = vpop.f32.mrf.mxu0
  %v2672 = vadd.f32 0.0, %v2671
  %v2673 = vpop.f32.mrf.mxu0
  %2674 = vdwg.mxu0
  %2675 = vmatprep.subr.bf16.mxu0 0
  %2676 = vmatpush1.bf16.msra.mxu0 %v2265
  %2677 = vmatprep.subr.bf16.mxu0 0
  %2678 = vmatpush1.bf16.msra.mxu0 %v2264
  %2679 = vmatprep.subr.bf16.mxu0 0
  %2680 = vmatpush1.bf16.msra.mxu0 %v2263
  %2681 = vmatprep.subr.bf16.mxu0 0
  %2682 = vmatpush1.bf16.msra.mxu0 %v2262
  %2683 = vmatprep.subr.bf16.mxu0 0
  %2684 = vmatpush1.bf16.msra.mxu0 %v2261
  %2685 = vmatprep.subr.bf16.mxu0 0
  %2686 = vmatpush1.bf16.msra.mxu0 %v2260
  %2687 = vmatprep.subr.bf16.mxu0 0
  %2688 = vmatpush1.bf16.msra.mxu0 %v2259
  %2689 = vmatprep.subr.bf16.mxu0 0
  %2690 = vmatpush1.bf16.msra.mxu0 %v2258
  %2691 = vmatprep.subr.bf16.mxu0 0
  %2692 = vmatpush2.bf16.msra.mxu0 %v2273
  %2693 = vmatprep.subr.bf16.mxu0 0
  %2694 = vmatpush2.bf16.msra.mxu0 %v2272
  %2695 = vmatprep.subr.bf16.mxu0 0
  %2696 = vmatpush2.bf16.msra.mxu0 %v2271
  %2697 = vmatprep.subr.bf16.mxu0 0
  %2698 = vmatpush2.bf16.msra.mxu0 %v2270
  %2699 = vmatprep.subr.bf16.mxu0 0
  %2700 = vmatpush2.bf16.msra.mxu0 %v2269
  %2701 = vmatprep.subr.bf16.mxu0 0
  %2702 = vmatpush2.bf16.msra.mxu0 %v2268
  %2703 = vmatprep.subr.bf16.mxu0 0
  %2704 = vmatpush2.bf16.msra.mxu0 %v2267
  %2705 = vmatprep.subr.bf16.mxu0 0
  %2706 = vmatpush2.bf16.msra.mxu0 %v2266
  %2707 = vmatprep.mubr.bf16.mxu0 %v1381
  %2708 = vmatmul.mubr.bf16.gmra.mxu0 %v1380
  %v2709 = vpop.f32.mrf.mxu0
  %v2710 = vadd.f32 %v2421, %v2709
  %v2711 = vpop.f32.mrf.mxu0
  %v2712 = vpop.f32.mrf.mxu0
  %v2713 = vadd.f32 %v2424, %v2712
  %v2714 = vpop.f32.mrf.mxu0
  %2715 = vmatprep.mubr.bf16.mxu0 %v1390
  %2716 = vmatmul.mubr.bf16.gmra.mxu0 %v1389
  %v2717 = vpop.f32.mrf.mxu0
  %v2718 = vadd.f32 %v2429, %v2717
  %v2719 = vpop.f32.mrf.mxu0
  %v2720 = vpop.f32.mrf.mxu0
  %v2721 = vadd.f32 %v2432, %v2720
  %v2722 = vpop.f32.mrf.mxu0
  %2723 = vmatprep.mubr.bf16.mxu0 %v1399
  %2724 = vmatmul.mubr.bf16.gmra.mxu0 %v1398
  %v2725 = vpop.f32.mrf.mxu0
  %v2726 = vadd.f32 %v2437, %v2725
  %v2727 = vpop.f32.mrf.mxu0
  %v2728 = vpop.f32.mrf.mxu0
  %v2729 = vadd.f32 %v2440, %v2728
  %v2730 = vpop.f32.mrf.mxu0
  %2731 = vmatprep.mubr.bf16.mxu0 %v1408
  %2732 = vmatmul.mubr.bf16.gmra.mxu0 %v1407
  %v2733 = vpop.f32.mrf.mxu0
  %v2734 = vadd.f32 %v2445, %v2733
  %v2735 = vpop.f32.mrf.mxu0
  %v2736 = vpop.f32.mrf.mxu0
  %v2737 = vadd.f32 %v2448, %v2736
  %v2738 = vpop.f32.mrf.mxu0
  %2739 = vmatprep.mubr.bf16.mxu0 %v1417
  %2740 = vmatmul.mubr.bf16.gmra.mxu0 %v1416
  %v2741 = vpop.f32.mrf.mxu0
  %v2742 = vadd.f32 %v2453, %v2741
  %v2743 = vpop.f32.mrf.mxu0
  %v2744 = vpop.f32.mrf.mxu0
  %v2745 = vadd.f32 %v2456, %v2744
  %v2746 = vpop.f32.mrf.mxu0
  %2747 = vmatprep.mubr.bf16.mxu0 %v1426
  %2748 = vmatmul.mubr.bf16.gmra.mxu0 %v1425
  %v2749 = vpop.f32.mrf.mxu0
  %v2750 = vadd.f32 %v2461, %v2749
  %v2751 = vpop.f32.mrf.mxu0
  %v2752 = vpop.f32.mrf.mxu0
  %v2753 = vadd.f32 %v2464, %v2752
  %v2754 = vpop.f32.mrf.mxu0
  %2755 = vmatprep.mubr.bf16.mxu0 %v1435
  %2756 = vmatmul.mubr.bf16.gmra.mxu0 %v1434
  %v2757 = vpop.f32.mrf.mxu0
  %v2758 = vadd.f32 %v2469, %v2757
  %v2759 = vpop.f32.mrf.mxu0
  %v2760 = vpop.f32.mrf.mxu0
  %v2761 = vadd.f32 %v2472, %v2760
  %v2762 = vpop.f32.mrf.mxu0
  %2763 = vmatprep.mubr.bf16.mxu0 %v1444
  %2764 = vmatmul.mubr.bf16.gmra.mxu0 %v1443
  %v2765 = vpop.f32.mrf.mxu0
  %v2766 = vadd.f32 %v2477, %v2765
  %v2767 = vpop.f32.mrf.mxu0
  %v2768 = vpop.f32.mrf.mxu0
  %v2769 = vadd.f32 %v2480, %v2768
  %v2770 = vpop.f32.mrf.mxu0
  %2771 = vmatprep.mubr.bf16.mxu0 %v1453
  %2772 = vmatmul.mubr.bf16.gmra.mxu0 %v1452
  %v2773 = vpop.f32.mrf.mxu0
  %v2774 = vadd.f32 %v2485, %v2773
  %v2775 = vpop.f32.mrf.mxu0
  %v2776 = vpop.f32.mrf.mxu0
  %v2777 = vadd.f32 %v2488, %v2776
  %v2778 = vpop.f32.mrf.mxu0
  %2779 = vmatprep.mubr.bf16.mxu0 %v1462
  %2780 = vmatmul.mubr.bf16.gmra.mxu0 %v1461
  %v2781 = vpop.f32.mrf.mxu0
  %v2782 = vadd.f32 %v2493, %v2781
  %v2783 = vpop.f32.mrf.mxu0
  %v2784 = vpop.f32.mrf.mxu0
  %v2785 = vadd.f32 %v2496, %v2784
  %v2786 = vpop.f32.mrf.mxu0
  %2787 = vmatprep.mubr.bf16.mxu0 %v1471
  %2788 = vmatmul.mubr.bf16.gmra.mxu0 %v1470
  %v2789 = vpop.f32.mrf.mxu0
  %v2790 = vadd.f32 %v2501, %v2789
  %v2791 = vpop.f32.mrf.mxu0
  %v2792 = vpop.f32.mrf.mxu0
  %v2793 = vadd.f32 %v2504, %v2792
  %v2794 = vpop.f32.mrf.mxu0
  %2795 = vmatprep.mubr.bf16.mxu0 %v1480
  %2796 = vmatmul.mubr.bf16.gmra.mxu0 %v1479
  %v2797 = vpop.f32.mrf.mxu0
  %v2798 = vadd.f32 %v2509, %v2797
  %v2799 = vpop.f32.mrf.mxu0
  %v2800 = vpop.f32.mrf.mxu0
  %v2801 = vadd.f32 %v2512, %v2800
  %v2802 = vpop.f32.mrf.mxu0
  %2803 = vmatprep.mubr.bf16.mxu0 %v1489
  %2804 = vmatmul.mubr.bf16.gmra.mxu0 %v1488
  %v2805 = vpop.f32.mrf.mxu0
  %v2806 = vadd.f32 %v2517, %v2805
  %v2807 = vpop.f32.mrf.mxu0
  %v2808 = vpop.f32.mrf.mxu0
  %v2809 = vadd.f32 %v2520, %v2808
  %v2810 = vpop.f32.mrf.mxu0
  %2811 = vmatprep.mubr.bf16.mxu0 %v1498
  %2812 = vmatmul.mubr.bf16.gmra.mxu0 %v1497
  %v2813 = vpop.f32.mrf.mxu0
  %v2814 = vadd.f32 %v2525, %v2813
  %v2815 = vpop.f32.mrf.mxu0
  %v2816 = vpop.f32.mrf.mxu0
  %v2817 = vadd.f32 %v2528, %v2816
  %v2818 = vpop.f32.mrf.mxu0
  %2819 = vmatprep.mubr.bf16.mxu0 %v1507
  %2820 = vmatmul.mubr.bf16.gmra.mxu0 %v1506
  %v2821 = vpop.f32.mrf.mxu0
  %v2822 = vadd.f32 %v2533, %v2821
  %v2823 = vpop.f32.mrf.mxu0
  %v2824 = vpop.f32.mrf.mxu0
  %v2825 = vadd.f32 %v2536, %v2824
  %v2826 = vpop.f32.mrf.mxu0
  %2827 = vmatprep.mubr.bf16.mxu0 %v1516
  %2828 = vmatmul.mubr.bf16.gmra.mxu0 %v1515
  %v2829 = vpop.f32.mrf.mxu0
  %v2830 = vadd.f32 %v2541, %v2829
  %v2831 = vpop.f32.mrf.mxu0
  %v2832 = vpop.f32.mrf.mxu0
  %v2833 = vadd.f32 %v2544, %v2832
  %v2834 = vpop.f32.mrf.mxu0
  %2835 = vmatprep.mubr.bf16.mxu0 %v1525
  %2836 = vmatmul.mubr.bf16.gmra.mxu0 %v1524
  %v2837 = vpop.f32.mrf.mxu0
  %v2838 = vadd.f32 %v2549, %v2837
  %v2839 = vpop.f32.mrf.mxu0
  %v2840 = vpop.f32.mrf.mxu0
  %v2841 = vadd.f32 %v2552, %v2840
  %v2842 = vpop.f32.mrf.mxu0
  %2843 = vmatprep.mubr.bf16.mxu0 %v1534
  %2844 = vmatmul.mubr.bf16.gmra.mxu0 %v1533
  %v2845 = vpop.f32.mrf.mxu0
  %v2846 = vadd.f32 %v2557, %v2845
  %v2847 = vpop.f32.mrf.mxu0
  %v2848 = vpop.f32.mrf.mxu0
  %v2849 = vadd.f32 %v2560, %v2848
  %v2850 = vpop.f32.mrf.mxu0
  %2851 = vmatprep.mubr.bf16.mxu0 %v1543
  %2852 = vmatmul.mubr.bf16.gmra.mxu0 %v1542
  %v2853 = vpop.f32.mrf.mxu0
  %v2854 = vadd.f32 %v2565, %v2853
  %v2855 = vpop.f32.mrf.mxu0
  %v2856 = vpop.f32.mrf.mxu0
  %v2857 = vadd.f32 %v2568, %v2856
  %v2858 = vpop.f32.mrf.mxu0
  %2859 = vmatprep.mubr.bf16.mxu0 %v1552
  %2860 = vmatmul.mubr.bf16.gmra.mxu0 %v1551
  %v2861 = vpop.f32.mrf.mxu0
  %v2862 = vadd.f32 %v2573, %v2861
  %v2863 = vpop.f32.mrf.mxu0
  %v2864 = vpop.f32.mrf.mxu0
  %v2865 = vadd.f32 %v2576, %v2864
  %v2866 = vpop.f32.mrf.mxu0
  %2867 = vmatprep.mubr.bf16.mxu0 %v1561
  %2868 = vmatmul.mubr.bf16.gmra.mxu0 %v1560
  %v2869 = vpop.f32.mrf.mxu0
  %v2870 = vadd.f32 %v2581, %v2869
  %v2871 = vpop.f32.mrf.mxu0
  %v2872 = vpop.f32.mrf.mxu0
  %v2873 = vadd.f32 %v2584, %v2872
  %v2874 = vpop.f32.mrf.mxu0
  %2875 = vmatprep.mubr.bf16.mxu0 %v1570
  %2876 = vmatmul.mubr.bf16.gmra.mxu0 %v1569
  %v2877 = vpop.f32.mrf.mxu0
  %v2878 = vadd.f32 %v2589, %v2877
  %v2879 = vpop.f32.mrf.mxu0
  %v2880 = vpop.f32.mrf.mxu0
  %v2881 = vadd.f32 %v2592, %v2880
  %v2882 = vpop.f32.mrf.mxu0
  %2883 = vmatprep.mubr.bf16.mxu0 %v1579
  %2884 = vmatmul.mubr.bf16.gmra.mxu0 %v1578
  %v2885 = vpop.f32.mrf.mxu0
  %v2886 = vadd.f32 %v2597, %v2885
  %v2887 = vpop.f32.mrf.mxu0
  %v2888 = vpop.f32.mrf.mxu0
  %v2889 = vadd.f32 %v2600, %v2888
  %v2890 = vpop.f32.mrf.mxu0
  %2891 = vmatprep.mubr.bf16.mxu0 %v1588
  %2892 = vmatmul.mubr.bf16.gmra.mxu0 %v1587
  %v2893 = vpop.f32.mrf.mxu0
  %v2894 = vadd.f32 %v2605, %v2893
  %v2895 = vpop.f32.mrf.mxu0
  %v2896 = vpop.f32.mrf.mxu0
  %v2897 = vadd.f32 %v2608, %v2896
  %v2898 = vpop.f32.mrf.mxu0
  %2899 = vmatprep.mubr.bf16.mxu0 %v1597
  %2900 = vmatmul.mubr.bf16.gmra.mxu0 %v1596
  %v2901 = vpop.f32.mrf.mxu0
  %v2902 = vadd.f32 %v2613, %v2901
  %v2903 = vpop.f32.mrf.mxu0
  %v2904 = vpop.f32.mrf.mxu0
  %v2905 = vadd.f32 %v2616, %v2904
  %v2906 = vpop.f32.mrf.mxu0
  %2907 = vmatprep.mubr.bf16.mxu0 %v1606
  %2908 = vmatmul.mubr.bf16.gmra.mxu0 %v1605
  %v2909 = vpop.f32.mrf.mxu0
  %v2910 = vadd.f32 %v2621, %v2909
  %v2911 = vpop.f32.mrf.mxu0
  %v2912 = vpop.f32.mrf.mxu0
  %v2913 = vadd.f32 %v2624, %v2912
  %v2914 = vpop.f32.mrf.mxu0
  %2915 = vmatprep.mubr.bf16.mxu0 %v1615
  %2916 = vmatmul.mubr.bf16.gmra.mxu0 %v1614
  %v2917 = vpop.f32.mrf.mxu0
  %v2918 = vadd.f32 %v2629, %v2917
  %v2919 = vpop.f32.mrf.mxu0
  %v2920 = vpop.f32.mrf.mxu0
  %v2921 = vadd.f32 %v2632, %v2920
  %v2922 = vpop.f32.mrf.mxu0
  %2923 = vmatprep.mubr.bf16.mxu0 %v1624
  %2924 = vmatmul.mubr.bf16.gmra.mxu0 %v1623
  %v2925 = vpop.f32.mrf.mxu0
  %v2926 = vadd.f32 %v2637, %v2925
  %v2927 = vpop.f32.mrf.mxu0
  %v2928 = vpop.f32.mrf.mxu0
  %v2929 = vadd.f32 %v2640, %v2928
  %v2930 = vpop.f32.mrf.mxu0
  %2931 = vmatprep.mubr.bf16.mxu0 %v1633
  %2932 = vmatmul.mubr.bf16.gmra.mxu0 %v1632
  %v2933 = vpop.f32.mrf.mxu0
  %v2934 = vadd.f32 %v2645, %v2933
  %v2935 = vpop.f32.mrf.mxu0
  %v2936 = vpop.f32.mrf.mxu0
  %v2937 = vadd.f32 %v2648, %v2936
  %v2938 = vpop.f32.mrf.mxu0
  %2939 = vmatprep.mubr.bf16.mxu0 %v1642
  %2940 = vmatmul.mubr.bf16.gmra.mxu0 %v1641
  %v2941 = vpop.f32.mrf.mxu0
  %v2942 = vadd.f32 %v2653, %v2941
  %v2943 = vpop.f32.mrf.mxu0
  %v2944 = vpop.f32.mrf.mxu0
  %v2945 = vadd.f32 %v2656, %v2944
  %v2946 = vpop.f32.mrf.mxu0
  %2947 = vmatprep.mubr.bf16.mxu0 %v1651
  %2948 = vmatmul.mubr.bf16.gmra.mxu0 %v1650
  %v2949 = vpop.f32.mrf.mxu0
  %v2950 = vadd.f32 %v2661, %v2949
  %v2951 = vpop.f32.mrf.mxu0
  %v2952 = vpop.f32.mrf.mxu0
  %v2953 = vadd.f32 %v2664, %v2952
  %v2954 = vpop.f32.mrf.mxu0
  %2955 = vmatprep.mubr.bf16.mxu0 %v1660
  %2956 = vmatmul.mubr.bf16.gmra.mxu0 %v1659
  %v2957 = vpop.f32.mrf.mxu0
  %v2958 = vadd.f32 %v2669, %v2957
  %v2959 = vpop.f32.mrf.mxu0
  %v2960 = vpop.f32.mrf.mxu0
  %v2961 = vadd.f32 %v2672, %v2960
  %v2962 = vpop.f32.mrf.mxu0
  %2963 = vdwg.mxu0
  %2964 = vmatprep.subr.bf16.mxu0 0
  %2965 = vmatpush1.bf16.msra.mxu0 %v2281
  %2966 = vmatprep.subr.bf16.mxu0 0
  %2967 = vmatpush1.bf16.msra.mxu0 %v2280
  %2968 = vmatprep.subr.bf16.mxu0 0
  %2969 = vmatpush1.bf16.msra.mxu0 %v2279
  %2970 = vmatprep.subr.bf16.mxu0 0
  %2971 = vmatpush1.bf16.msra.mxu0 %v2278
  %2972 = vmatprep.subr.bf16.mxu0 0
  %2973 = vmatpush1.bf16.msra.mxu0 %v2277
  %2974 = vmatprep.subr.bf16.mxu0 0
  %2975 = vmatpush1.bf16.msra.mxu0 %v2276
  %2976 = vmatprep.subr.bf16.mxu0 0
  %2977 = vmatpush1.bf16.msra.mxu0 %v2275
  %2978 = vmatprep.subr.bf16.mxu0 0
  %2979 = vmatpush1.bf16.msra.mxu0 %v2274
  %2980 = vmatprep.subr.bf16.mxu0 0
  %2981 = vmatpush2.bf16.msra.mxu0 %v2289
  %2982 = vmatprep.subr.bf16.mxu0 0
  %2983 = vmatpush2.bf16.msra.mxu0 %v2288
  %2984 = vmatprep.subr.bf16.mxu0 0
  %2985 = vmatpush2.bf16.msra.mxu0 %v2287
  %2986 = vmatprep.subr.bf16.mxu0 0
  %2987 = vmatpush2.bf16.msra.mxu0 %v2286
  %2988 = vmatprep.subr.bf16.mxu0 0
  %2989 = vmatpush2.bf16.msra.mxu0 %v2285
  %2990 = vmatprep.subr.bf16.mxu0 0
  %2991 = vmatpush2.bf16.msra.mxu0 %v2284
  %2992 = vmatprep.subr.bf16.mxu0 0
  %2993 = vmatpush2.bf16.msra.mxu0 %v2283
  %2994 = vmatprep.subr.bf16.mxu0 0
  %2995 = vmatpush2.bf16.msra.mxu0 %v2282
  %2996 = vmatprep.mubr.bf16.mxu0 %v1383
  %2997 = vmatmul.mubr.bf16.gmra.mxu0 %v1382
  %v2998 = vpop.f32.mrf.mxu0
  %v2999 = vadd.f32 %v2710, %v2998
  %v3000 = vpop.f32.mrf.mxu0
  %v3001 = vpop.f32.mrf.mxu0
  %v3002 = vadd.f32 %v2713, %v3001
  %v3003 = vpop.f32.mrf.mxu0
  %3004 = vmatprep.mubr.bf16.mxu0 %v1392
  %3005 = vmatmul.mubr.bf16.gmra.mxu0 %v1391
  %v3006 = vpop.f32.mrf.mxu0
  %v3007 = vadd.f32 %v2718, %v3006
  %v3008 = vpop.f32.mrf.mxu0
  %v3009 = vpop.f32.mrf.mxu0
  %v3010 = vadd.f32 %v2721, %v3009
  %v3011 = vpop.f32.mrf.mxu0
  %3012 = vmatprep.mubr.bf16.mxu0 %v1401
  %3013 = vmatmul.mubr.bf16.gmra.mxu0 %v1400
  %v3014 = vpop.f32.mrf.mxu0
  %v3015 = vadd.f32 %v2726, %v3014
  %v3016 = vpop.f32.mrf.mxu0
  %v3017 = vpop.f32.mrf.mxu0
  %v3018 = vadd.f32 %v2729, %v3017
  %v3019 = vpop.f32.mrf.mxu0
  %3020 = vmatprep.mubr.bf16.mxu0 %v1410
  %3021 = vmatmul.mubr.bf16.gmra.mxu0 %v1409
  %v3022 = vpop.f32.mrf.mxu0
  %v3023 = vadd.f32 %v2734, %v3022
  %v3024 = vpop.f32.mrf.mxu0
  %v3025 = vpop.f32.mrf.mxu0
  %v3026 = vadd.f32 %v2737, %v3025
  %v3027 = vpop.f32.mrf.mxu0
  %3028 = vmatprep.mubr.bf16.mxu0 %v1419
  %3029 = vmatmul.mubr.bf16.gmra.mxu0 %v1418
  %v3030 = vpop.f32.mrf.mxu0
  %v3031 = vadd.f32 %v2742, %v3030
  %v3032 = vpop.f32.mrf.mxu0
  %v3033 = vpop.f32.mrf.mxu0
  %v3034 = vadd.f32 %v2745, %v3033
  %v3035 = vpop.f32.mrf.mxu0
  %3036 = vmatprep.mubr.bf16.mxu0 %v1428
  %3037 = vmatmul.mubr.bf16.gmra.mxu0 %v1427
  %v3038 = vpop.f32.mrf.mxu0
  %v3039 = vadd.f32 %v2750, %v3038
  %v3040 = vpop.f32.mrf.mxu0
  %v3041 = vpop.f32.mrf.mxu0
  %v3042 = vadd.f32 %v2753, %v3041
  %v3043 = vpop.f32.mrf.mxu0
  %3044 = vmatprep.mubr.bf16.mxu0 %v1437
  %3045 = vmatmul.mubr.bf16.gmra.mxu0 %v1436
  %v3046 = vpop.f32.mrf.mxu0
  %v3047 = vadd.f32 %v2758, %v3046
  %v3048 = vpop.f32.mrf.mxu0
  %v3049 = vpop.f32.mrf.mxu0
  %v3050 = vadd.f32 %v2761, %v3049
  %v3051 = vpop.f32.mrf.mxu0
  %3052 = vmatprep.mubr.bf16.mxu0 %v1446
  %3053 = vmatmul.mubr.bf16.gmra.mxu0 %v1445
  %v3054 = vpop.f32.mrf.mxu0
  %v3055 = vadd.f32 %v2766, %v3054
  %v3056 = vpop.f32.mrf.mxu0
  %v3057 = vpop.f32.mrf.mxu0
  %v3058 = vadd.f32 %v2769, %v3057
  %v3059 = vpop.f32.mrf.mxu0
  %3060 = vmatprep.mubr.bf16.mxu0 %v1455
  %3061 = vmatmul.mubr.bf16.gmra.mxu0 %v1454
  %v3062 = vpop.f32.mrf.mxu0
  %v3063 = vadd.f32 %v2774, %v3062
  %v3064 = vpop.f32.mrf.mxu0
  %v3065 = vpop.f32.mrf.mxu0
  %v3066 = vadd.f32 %v2777, %v3065
  %v3067 = vpop.f32.mrf.mxu0
  %3068 = vmatprep.mubr.bf16.mxu0 %v1464
  %3069 = vmatmul.mubr.bf16.gmra.mxu0 %v1463
  %v3070 = vpop.f32.mrf.mxu0
  %v3071 = vadd.f32 %v2782, %v3070
  %v3072 = vpop.f32.mrf.mxu0
  %v3073 = vpop.f32.mrf.mxu0
  %v3074 = vadd.f32 %v2785, %v3073
  %v3075 = vpop.f32.mrf.mxu0
  %3076 = vmatprep.mubr.bf16.mxu0 %v1473
  %3077 = vmatmul.mubr.bf16.gmra.mxu0 %v1472
  %v3078 = vpop.f32.mrf.mxu0
  %v3079 = vadd.f32 %v2790, %v3078
  %v3080 = vpop.f32.mrf.mxu0
  %v3081 = vpop.f32.mrf.mxu0
  %v3082 = vadd.f32 %v2793, %v3081
  %v3083 = vpop.f32.mrf.mxu0
  %3084 = vmatprep.mubr.bf16.mxu0 %v1482
  %3085 = vmatmul.mubr.bf16.gmra.mxu0 %v1481
  %v3086 = vpop.f32.mrf.mxu0
  %v3087 = vadd.f32 %v2798, %v3086
  %v3088 = vpop.f32.mrf.mxu0
  %v3089 = vpop.f32.mrf.mxu0
  %v3090 = vadd.f32 %v2801, %v3089
  %v3091 = vpop.f32.mrf.mxu0
  %3092 = vmatprep.mubr.bf16.mxu0 %v1491
  %3093 = vmatmul.mubr.bf16.gmra.mxu0 %v1490
  %v3094 = vpop.f32.mrf.mxu0
  %v3095 = vadd.f32 %v2806, %v3094
  %v3096 = vpop.f32.mrf.mxu0
  %v3097 = vpop.f32.mrf.mxu0
  %v3098 = vadd.f32 %v2809, %v3097
  %v3099 = vpop.f32.mrf.mxu0
  %3100 = vmatprep.mubr.bf16.mxu0 %v1500
  %3101 = vmatmul.mubr.bf16.gmra.mxu0 %v1499
  %v3102 = vpop.f32.mrf.mxu0
  %v3103 = vadd.f32 %v2814, %v3102
  %v3104 = vpop.f32.mrf.mxu0
  %v3105 = vpop.f32.mrf.mxu0
  %v3106 = vadd.f32 %v2817, %v3105
  %v3107 = vpop.f32.mrf.mxu0
  %3108 = vmatprep.mubr.bf16.mxu0 %v1509
  %3109 = vmatmul.mubr.bf16.gmra.mxu0 %v1508
  %v3110 = vpop.f32.mrf.mxu0
  %v3111 = vadd.f32 %v2822, %v3110
  %v3112 = vpop.f32.mrf.mxu0
  %v3113 = vpop.f32.mrf.mxu0
  %v3114 = vadd.f32 %v2825, %v3113
  %v3115 = vpop.f32.mrf.mxu0
  %3116 = vmatprep.mubr.bf16.mxu0 %v1518
  %3117 = vmatmul.mubr.bf16.gmra.mxu0 %v1517
  %v3118 = vpop.f32.mrf.mxu0
  %v3119 = vadd.f32 %v2830, %v3118
  %v3120 = vpop.f32.mrf.mxu0
  %v3121 = vpop.f32.mrf.mxu0
  %v3122 = vadd.f32 %v2833, %v3121
  %v3123 = vpop.f32.mrf.mxu0
  %3124 = vmatprep.mubr.bf16.mxu0 %v1527
  %3125 = vmatmul.mubr.bf16.gmra.mxu0 %v1526
  %v3126 = vpop.f32.mrf.mxu0
  %v3127 = vadd.f32 %v2838, %v3126
  %v3128 = vpop.f32.mrf.mxu0
  %v3129 = vpop.f32.mrf.mxu0
  %v3130 = vadd.f32 %v2841, %v3129
  %v3131 = vpop.f32.mrf.mxu0
  %3132 = vmatprep.mubr.bf16.mxu0 %v1536
  %3133 = vmatmul.mubr.bf16.gmra.mxu0 %v1535
  %v3134 = vpop.f32.mrf.mxu0
  %v3135 = vadd.f32 %v2846, %v3134
  %v3136 = vpop.f32.mrf.mxu0
  %v3137 = vpop.f32.mrf.mxu0
  %v3138 = vadd.f32 %v2849, %v3137
  %v3139 = vpop.f32.mrf.mxu0
  %3140 = vmatprep.mubr.bf16.mxu0 %v1545
  %3141 = vmatmul.mubr.bf16.gmra.mxu0 %v1544
  %v3142 = vpop.f32.mrf.mxu0
  %v3143 = vadd.f32 %v2854, %v3142
  %v3144 = vpop.f32.mrf.mxu0
  %v3145 = vpop.f32.mrf.mxu0
  %v3146 = vadd.f32 %v2857, %v3145
  %v3147 = vpop.f32.mrf.mxu0
  %3148 = vmatprep.mubr.bf16.mxu0 %v1554
  %3149 = vmatmul.mubr.bf16.gmra.mxu0 %v1553
  %v3150 = vpop.f32.mrf.mxu0
  %v3151 = vadd.f32 %v2862, %v3150
  %v3152 = vpop.f32.mrf.mxu0
  %v3153 = vpop.f32.mrf.mxu0
  %v3154 = vadd.f32 %v2865, %v3153
  %v3155 = vpop.f32.mrf.mxu0
  %3156 = vmatprep.mubr.bf16.mxu0 %v1563
  %3157 = vmatmul.mubr.bf16.gmra.mxu0 %v1562
  %v3158 = vpop.f32.mrf.mxu0
  %v3159 = vadd.f32 %v2870, %v3158
  %v3160 = vpop.f32.mrf.mxu0
  %v3161 = vpop.f32.mrf.mxu0
  %v3162 = vadd.f32 %v2873, %v3161
  %v3163 = vpop.f32.mrf.mxu0
  %3164 = vmatprep.mubr.bf16.mxu0 %v1572
  %3165 = vmatmul.mubr.bf16.gmra.mxu0 %v1571
  %v3166 = vpop.f32.mrf.mxu0
  %v3167 = vadd.f32 %v2878, %v3166
  %v3168 = vpop.f32.mrf.mxu0
  %v3169 = vpop.f32.mrf.mxu0
  %v3170 = vadd.f32 %v2881, %v3169
  %v3171 = vpop.f32.mrf.mxu0
  %3172 = vmatprep.mubr.bf16.mxu0 %v1581
  %3173 = vmatmul.mubr.bf16.gmra.mxu0 %v1580
  %v3174 = vpop.f32.mrf.mxu0
  %v3175 = vadd.f32 %v2886, %v3174
  %v3176 = vpop.f32.mrf.mxu0
  %v3177 = vpop.f32.mrf.mxu0
  %v3178 = vadd.f32 %v2889, %v3177
  %v3179 = vpop.f32.mrf.mxu0
  %3180 = vmatprep.mubr.bf16.mxu0 %v1590
  %3181 = vmatmul.mubr.bf16.gmra.mxu0 %v1589
  %v3182 = vpop.f32.mrf.mxu0
  %v3183 = vadd.f32 %v2894, %v3182
  %v3184 = vpop.f32.mrf.mxu0
  %v3185 = vpop.f32.mrf.mxu0
  %v3186 = vadd.f32 %v2897, %v3185
  %v3187 = vpop.f32.mrf.mxu0
  %3188 = vmatprep.mubr.bf16.mxu0 %v1599
  %3189 = vmatmul.mubr.bf16.gmra.mxu0 %v1598
  %v3190 = vpop.f32.mrf.mxu0
  %v3191 = vadd.f32 %v2902, %v3190
  %v3192 = vpop.f32.mrf.mxu0
  %v3193 = vpop.f32.mrf.mxu0
  %v3194 = vadd.f32 %v2905, %v3193
  %v3195 = vpop.f32.mrf.mxu0
  %3196 = vmatprep.mubr.bf16.mxu0 %v1608
  %3197 = vmatmul.mubr.bf16.gmra.mxu0 %v1607
  %v3198 = vpop.f32.mrf.mxu0
  %v3199 = vadd.f32 %v2910, %v3198
  %v3200 = vpop.f32.mrf.mxu0
  %v3201 = vpop.f32.mrf.mxu0
  %v3202 = vadd.f32 %v2913, %v3201
  %v3203 = vpop.f32.mrf.mxu0
  %3204 = vmatprep.mubr.bf16.mxu0 %v1617
  %3205 = vmatmul.mubr.bf16.gmra.mxu0 %v1616
  %v3206 = vpop.f32.mrf.mxu0
  %v3207 = vadd.f32 %v2918, %v3206
  %v3208 = vpop.f32.mrf.mxu0
  %v3209 = vpop.f32.mrf.mxu0
  %v3210 = vadd.f32 %v2921, %v3209
  %v3211 = vpop.f32.mrf.mxu0
  %3212 = vmatprep.mubr.bf16.mxu0 %v1626
  %3213 = vmatmul.mubr.bf16.gmra.mxu0 %v1625
  %v3214 = vpop.f32.mrf.mxu0
  %v3215 = vadd.f32 %v2926, %v3214
  %v3216 = vpop.f32.mrf.mxu0
  %v3217 = vpop.f32.mrf.mxu0
  %v3218 = vadd.f32 %v2929, %v3217
  %v3219 = vpop.f32.mrf.mxu0
  %3220 = vmatprep.mubr.bf16.mxu0 %v1635
  %3221 = vmatmul.mubr.bf16.gmra.mxu0 %v1634
  %v3222 = vpop.f32.mrf.mxu0
  %v3223 = vadd.f32 %v2934, %v3222
  %v3224 = vpop.f32.mrf.mxu0
  %v3225 = vpop.f32.mrf.mxu0
  %v3226 = vadd.f32 %v2937, %v3225
  %v3227 = vpop.f32.mrf.mxu0
  %3228 = vmatprep.mubr.bf16.mxu0 %v1644
  %3229 = vmatmul.mubr.bf16.gmra.mxu0 %v1643
  %v3230 = vpop.f32.mrf.mxu0
  %v3231 = vadd.f32 %v2942, %v3230
  %v3232 = vpop.f32.mrf.mxu0
  %v3233 = vpop.f32.mrf.mxu0
  %v3234 = vadd.f32 %v2945, %v3233
  %v3235 = vpop.f32.mrf.mxu0
  %3236 = vmatprep.mubr.bf16.mxu0 %v1653
  %3237 = vmatmul.mubr.bf16.gmra.mxu0 %v1652
  %v3238 = vpop.f32.mrf.mxu0
  %v3239 = vadd.f32 %v2950, %v3238
  %v3240 = vpop.f32.mrf.mxu0
  %v3241 = vpop.f32.mrf.mxu0
  %v3242 = vadd.f32 %v2953, %v3241
  %v3243 = vpop.f32.mrf.mxu0
  %3244 = vmatprep.mubr.bf16.mxu0 %v1662
  %3245 = vmatmul.mubr.bf16.gmra.mxu0 %v1661
  %v3246 = vpop.f32.mrf.mxu0
  %v3247 = vadd.f32 %v2958, %v3246
  %v3248 = vpop.f32.mrf.mxu0
  %v3249 = vpop.f32.mrf.mxu0
  %v3250 = vadd.f32 %v2961, %v3249
  %v3251 = vpop.f32.mrf.mxu0
  %3252 = vdwg.mxu0
  %3253 = vmatprep.subr.bf16.mxu0 0
  %3254 = vmatpush1.bf16.msra.mxu0 %v2297
  %3255 = vmatprep.subr.bf16.mxu0 0
  %3256 = vmatpush1.bf16.msra.mxu0 %v2296
  %3257 = vmatprep.subr.bf16.mxu0 0
  %3258 = vmatpush1.bf16.msra.mxu0 %v2295
  %3259 = vmatprep.subr.bf16.mxu0 0
  %3260 = vmatpush1.bf16.msra.mxu0 %v2294
  %3261 = vmatprep.subr.bf16.mxu0 0
  %3262 = vmatpush1.bf16.msra.mxu0 %v2293
  %3263 = vmatprep.subr.bf16.mxu0 0
  %3264 = vmatpush1.bf16.msra.mxu0 %v2292
  %3265 = vmatprep.subr.bf16.mxu0 0
  %3266 = vmatpush1.bf16.msra.mxu0 %v2291
  %3267 = vmatprep.subr.bf16.mxu0 0
  %3268 = vmatpush1.bf16.msra.mxu0 %v2290
  %3269 = vmatprep.subr.bf16.mxu0 0
  %3270 = vmatpush2.bf16.msra.mxu0 %v2305
  %3271 = vmatprep.subr.bf16.mxu0 0
  %3272 = vmatpush2.bf16.msra.mxu0 %v2304
  %3273 = vmatprep.subr.bf16.mxu0 0
  %3274 = vmatpush2.bf16.msra.mxu0 %v2303
  %3275 = vmatprep.subr.bf16.mxu0 0
  %3276 = vmatpush2.bf16.msra.mxu0 %v2302
  %3277 = vmatprep.subr.bf16.mxu0 0
  %3278 = vmatpush2.bf16.msra.mxu0 %v2301
  %3279 = vmatprep.subr.bf16.mxu0 0
  %3280 = vmatpush2.bf16.msra.mxu0 %v2300
  %3281 = vmatprep.subr.bf16.mxu0 0
  %3282 = vmatpush2.bf16.msra.mxu0 %v2299
  %3283 = vmatprep.subr.bf16.mxu0 0
  %3284 = vmatpush2.bf16.msra.mxu0 %v2298
  %3285 = vmatprep.mubr.bf16.mxu0 %v1385
  %3286 = vmatmul.mubr.bf16.gmra.mxu0 %v1384
  %v3287 = vpop.f32.mrf.mxu0
  %v3288 = vadd.f32 %v2999, %v3287
  %v3289 = vpop.f32.mrf.mxu0
  %v3290 = vpop.f32.mrf.mxu0
  %v3291 = vadd.f32 %v3002, %v3290
  %v3292 = vpop.f32.mrf.mxu0
  %3293 = vmatprep.mubr.bf16.mxu0 %v1394
  %3294 = vmatmul.mubr.bf16.gmra.mxu0 %v1393
  %v3295 = vpop.f32.mrf.mxu0
  %v3296 = vadd.f32 %v3007, %v3295
  %v3297 = vpop.f32.mrf.mxu0
  %v3298 = vpop.f32.mrf.mxu0
  %v3299 = vadd.f32 %v3010, %v3298
  %v3300 = vpop.f32.mrf.mxu0
  %3301 = vmatprep.mubr.bf16.mxu0 %v1403
  %3302 = vmatmul.mubr.bf16.gmra.mxu0 %v1402
  %v3303 = vpop.f32.mrf.mxu0
  %v3304 = vadd.f32 %v3015, %v3303
  %v3305 = vpop.f32.mrf.mxu0
  %v3306 = vpop.f32.mrf.mxu0
  %v3307 = vadd.f32 %v3018, %v3306
  %v3308 = vpop.f32.mrf.mxu0
  %3309 = vmatprep.mubr.bf16.mxu0 %v1412
  %3310 = vmatmul.mubr.bf16.gmra.mxu0 %v1411
  %v3311 = vpop.f32.mrf.mxu0
  %v3312 = vadd.f32 %v3023, %v3311
  %v3313 = vpop.f32.mrf.mxu0
  %v3314 = vpop.f32.mrf.mxu0
  %v3315 = vadd.f32 %v3026, %v3314
  %v3316 = vpop.f32.mrf.mxu0
  %3317 = vmatprep.mubr.bf16.mxu0 %v1421
  %3318 = vmatmul.mubr.bf16.gmra.mxu0 %v1420
  %v3319 = vpop.f32.mrf.mxu0
  %v3320 = vadd.f32 %v3031, %v3319
  %v3321 = vpop.f32.mrf.mxu0
  %v3322 = vpop.f32.mrf.mxu0
  %v3323 = vadd.f32 %v3034, %v3322
  %v3324 = vpop.f32.mrf.mxu0
  %3325 = vmatprep.mubr.bf16.mxu0 %v1430
  %3326 = vmatmul.mubr.bf16.gmra.mxu0 %v1429
  %v3327 = vpop.f32.mrf.mxu0
  %v3328 = vadd.f32 %v3039, %v3327
  %v3329 = vpop.f32.mrf.mxu0
  %v3330 = vpop.f32.mrf.mxu0
  %v3331 = vadd.f32 %v3042, %v3330
  %v3332 = vpop.f32.mrf.mxu0
  %3333 = vmatprep.mubr.bf16.mxu0 %v1439
  %3334 = vmatmul.mubr.bf16.gmra.mxu0 %v1438
  %v3335 = vpop.f32.mrf.mxu0
  %v3336 = vadd.f32 %v3047, %v3335
  %v3337 = vpop.f32.mrf.mxu0
  %v3338 = vpop.f32.mrf.mxu0
  %v3339 = vadd.f32 %v3050, %v3338
  %v3340 = vpop.f32.mrf.mxu0
  %3341 = vmatprep.mubr.bf16.mxu0 %v1448
  %3342 = vmatmul.mubr.bf16.gmra.mxu0 %v1447
  %v3343 = vpop.f32.mrf.mxu0
  %v3344 = vadd.f32 %v3055, %v3343
  %v3345 = vpop.f32.mrf.mxu0
  %v3346 = vpop.f32.mrf.mxu0
  %v3347 = vadd.f32 %v3058, %v3346
  %v3348 = vpop.f32.mrf.mxu0
  %3349 = vmatprep.mubr.bf16.mxu0 %v1457
  %3350 = vmatmul.mubr.bf16.gmra.mxu0 %v1456
  %v3351 = vpop.f32.mrf.mxu0
  %v3352 = vadd.f32 %v3063, %v3351
  %v3353 = vpop.f32.mrf.mxu0
  %v3354 = vpop.f32.mrf.mxu0
  %v3355 = vadd.f32 %v3066, %v3354
  %v3356 = vpop.f32.mrf.mxu0
  %3357 = vmatprep.mubr.bf16.mxu0 %v1466
  %3358 = vmatmul.mubr.bf16.gmra.mxu0 %v1465
  %v3359 = vpop.f32.mrf.mxu0
  %v3360 = vadd.f32 %v3071, %v3359
  %v3361 = vpop.f32.mrf.mxu0
  %v3362 = vpop.f32.mrf.mxu0
  %v3363 = vadd.f32 %v3074, %v3362
  %v3364 = vpop.f32.mrf.mxu0
  %3365 = vmatprep.mubr.bf16.mxu0 %v1475
  %3366 = vmatmul.mubr.bf16.gmra.mxu0 %v1474
  %v3367 = vpop.f32.mrf.mxu0
  %v3368 = vadd.f32 %v3079, %v3367
  %v3369 = vpop.f32.mrf.mxu0
  %v3370 = vpop.f32.mrf.mxu0
  %v3371 = vadd.f32 %v3082, %v3370
  %v3372 = vpop.f32.mrf.mxu0
  %3373 = vmatprep.mubr.bf16.mxu0 %v1484
  %3374 = vmatmul.mubr.bf16.gmra.mxu0 %v1483
  %v3375 = vpop.f32.mrf.mxu0
  %v3376 = vadd.f32 %v3087, %v3375
  %v3377 = vpop.f32.mrf.mxu0
  %v3378 = vpop.f32.mrf.mxu0
  %v3379 = vadd.f32 %v3090, %v3378
  %v3380 = vpop.f32.mrf.mxu0
  %3381 = vmatprep.mubr.bf16.mxu0 %v1493
  %3382 = vmatmul.mubr.bf16.gmra.mxu0 %v1492
  %v3383 = vpop.f32.mrf.mxu0
  %v3384 = vadd.f32 %v3095, %v3383
  %v3385 = vpop.f32.mrf.mxu0
  %v3386 = vpop.f32.mrf.mxu0
  %v3387 = vadd.f32 %v3098, %v3386
  %v3388 = vpop.f32.mrf.mxu0
  %3389 = vmatprep.mubr.bf16.mxu0 %v1502
  %3390 = vmatmul.mubr.bf16.gmra.mxu0 %v1501
  %v3391 = vpop.f32.mrf.mxu0
  %v3392 = vadd.f32 %v3103, %v3391
  %v3393 = vpop.f32.mrf.mxu0
  %v3394 = vpop.f32.mrf.mxu0
  %v3395 = vadd.f32 %v3106, %v3394
  %v3396 = vpop.f32.mrf.mxu0
  %3397 = vmatprep.mubr.bf16.mxu0 %v1511
  %3398 = vmatmul.mubr.bf16.gmra.mxu0 %v1510
  %v3399 = vpop.f32.mrf.mxu0
  %v3400 = vadd.f32 %v3111, %v3399
  %v3401 = vpop.f32.mrf.mxu0
  %v3402 = vpop.f32.mrf.mxu0
  %v3403 = vadd.f32 %v3114, %v3402
  %v3404 = vpop.f32.mrf.mxu0
  %3405 = vmatprep.mubr.bf16.mxu0 %v1520
  %3406 = vmatmul.mubr.bf16.gmra.mxu0 %v1519
  %v3407 = vpop.f32.mrf.mxu0
  %v3408 = vadd.f32 %v3119, %v3407
  %v3409 = vpop.f32.mrf.mxu0
  %v3410 = vpop.f32.mrf.mxu0
  %v3411 = vadd.f32 %v3122, %v3410
  %v3412 = vpop.f32.mrf.mxu0
  %3413 = vmatprep.mubr.bf16.mxu0 %v1529
  %3414 = vmatmul.mubr.bf16.gmra.mxu0 %v1528
  %v3415 = vpop.f32.mrf.mxu0
  %v3416 = vadd.f32 %v3127, %v3415
  %v3417 = vpop.f32.mrf.mxu0
  %v3418 = vpop.f32.mrf.mxu0
  %v3419 = vadd.f32 %v3130, %v3418
  %v3420 = vpop.f32.mrf.mxu0
  %3421 = vmatprep.mubr.bf16.mxu0 %v1538
  %3422 = vmatmul.mubr.bf16.gmra.mxu0 %v1537
  %v3423 = vpop.f32.mrf.mxu0
  %v3424 = vadd.f32 %v3135, %v3423
  %v3425 = vpop.f32.mrf.mxu0
  %v3426 = vpop.f32.mrf.mxu0
  %v3427 = vadd.f32 %v3138, %v3426
  %v3428 = vpop.f32.mrf.mxu0
  %3429 = vmatprep.mubr.bf16.mxu0 %v1547
  %3430 = vmatmul.mubr.bf16.gmra.mxu0 %v1546
  %v3431 = vpop.f32.mrf.mxu0
  %v3432 = vadd.f32 %v3143, %v3431
  %v3433 = vpop.f32.mrf.mxu0
  %v3434 = vpop.f32.mrf.mxu0
  %v3435 = vadd.f32 %v3146, %v3434
  %v3436 = vpop.f32.mrf.mxu0
  %3437 = vmatprep.mubr.bf16.mxu0 %v1556
  %3438 = vmatmul.mubr.bf16.gmra.mxu0 %v1555
  %v3439 = vpop.f32.mrf.mxu0
  %v3440 = vadd.f32 %v3151, %v3439
  %v3441 = vpop.f32.mrf.mxu0
  %v3442 = vpop.f32.mrf.mxu0
  %v3443 = vadd.f32 %v3154, %v3442
  %v3444 = vpop.f32.mrf.mxu0
  %3445 = vmatprep.mubr.bf16.mxu0 %v1565
  %3446 = vmatmul.mubr.bf16.gmra.mxu0 %v1564
  %v3447 = vpop.f32.mrf.mxu0
  %v3448 = vadd.f32 %v3159, %v3447
  %v3449 = vpop.f32.mrf.mxu0
  %v3450 = vpop.f32.mrf.mxu0
  %v3451 = vadd.f32 %v3162, %v3450
  %v3452 = vpop.f32.mrf.mxu0
  %3453 = vmatprep.mubr.bf16.mxu0 %v1574
  %3454 = vmatmul.mubr.bf16.gmra.mxu0 %v1573
  %v3455 = vpop.f32.mrf.mxu0
  %v3456 = vadd.f32 %v3167, %v3455
  %v3457 = vpop.f32.mrf.mxu0
  %v3458 = vpop.f32.mrf.mxu0
  %v3459 = vadd.f32 %v3170, %v3458
  %v3460 = vpop.f32.mrf.mxu0
  %3461 = vmatprep.mubr.bf16.mxu0 %v1583
  %3462 = vmatmul.mubr.bf16.gmra.mxu0 %v1582
  %v3463 = vpop.f32.mrf.mxu0
  %v3464 = vadd.f32 %v3175, %v3463
  %v3465 = vpop.f32.mrf.mxu0
  %v3466 = vpop.f32.mrf.mxu0
  %v3467 = vadd.f32 %v3178, %v3466
  %v3468 = vpop.f32.mrf.mxu0
  %3469 = vmatprep.mubr.bf16.mxu0 %v1592
  %3470 = vmatmul.mubr.bf16.gmra.mxu0 %v1591
  %v3471 = vpop.f32.mrf.mxu0
  %v3472 = vadd.f32 %v3183, %v3471
  %v3473 = vpop.f32.mrf.mxu0
  %v3474 = vpop.f32.mrf.mxu0
  %v3475 = vadd.f32 %v3186, %v3474
  %v3476 = vpop.f32.mrf.mxu0
  %3477 = vmatprep.mubr.bf16.mxu0 %v1601
  %3478 = vmatmul.mubr.bf16.gmra.mxu0 %v1600
  %v3479 = vpop.f32.mrf.mxu0
  %v3480 = vadd.f32 %v3191, %v3479
  %v3481 = vpop.f32.mrf.mxu0
  %v3482 = vpop.f32.mrf.mxu0
  %v3483 = vadd.f32 %v3194, %v3482
  %v3484 = vpop.f32.mrf.mxu0
  %3485 = vmatprep.mubr.bf16.mxu0 %v1610
  %3486 = vmatmul.mubr.bf16.gmra.mxu0 %v1609
  %v3487 = vpop.f32.mrf.mxu0
  %v3488 = vadd.f32 %v3199, %v3487
  %v3489 = vpop.f32.mrf.mxu0
  %v3490 = vpop.f32.mrf.mxu0
  %v3491 = vadd.f32 %v3202, %v3490
  %v3492 = vpop.f32.mrf.mxu0
  %3493 = vmatprep.mubr.bf16.mxu0 %v1619
  %3494 = vmatmul.mubr.bf16.gmra.mxu0 %v1618
  %v3495 = vpop.f32.mrf.mxu0
  %v3496 = vadd.f32 %v3207, %v3495
  %v3497 = vpop.f32.mrf.mxu0
  %v3498 = vpop.f32.mrf.mxu0
  %v3499 = vadd.f32 %v3210, %v3498
  %v3500 = vpop.f32.mrf.mxu0
  %3501 = vmatprep.mubr.bf16.mxu0 %v1628
  %3502 = vmatmul.mubr.bf16.gmra.mxu0 %v1627
  %v3503 = vpop.f32.mrf.mxu0
  %v3504 = vadd.f32 %v3215, %v3503
  %v3505 = vpop.f32.mrf.mxu0
  %v3506 = vpop.f32.mrf.mxu0
  %v3507 = vadd.f32 %v3218, %v3506
  %v3508 = vpop.f32.mrf.mxu0
  %3509 = vmatprep.mubr.bf16.mxu0 %v1637
  %3510 = vmatmul.mubr.bf16.gmra.mxu0 %v1636
  %v3511 = vpop.f32.mrf.mxu0
  %v3512 = vadd.f32 %v3223, %v3511
  %v3513 = vpop.f32.mrf.mxu0
  %v3514 = vpop.f32.mrf.mxu0
  %v3515 = vadd.f32 %v3226, %v3514
  %v3516 = vpop.f32.mrf.mxu0
  %3517 = vmatprep.mubr.bf16.mxu0 %v1646
  %3518 = vmatmul.mubr.bf16.gmra.mxu0 %v1645
  %v3519 = vpop.f32.mrf.mxu0
  %v3520 = vadd.f32 %v3231, %v3519
  %v3521 = vpop.f32.mrf.mxu0
  %v3522 = vpop.f32.mrf.mxu0
  %v3523 = vadd.f32 %v3234, %v3522
  %v3524 = vpop.f32.mrf.mxu0
  %3525 = vmatprep.mubr.bf16.mxu0 %v1655
  %3526 = vmatmul.mubr.bf16.gmra.mxu0 %v1654
  %v3527 = vpop.f32.mrf.mxu0
  %v3528 = vadd.f32 %v3239, %v3527
  %v3529 = vpop.f32.mrf.mxu0
  %v3530 = vpop.f32.mrf.mxu0
  %v3531 = vadd.f32 %v3242, %v3530
  %v3532 = vpop.f32.mrf.mxu0
  %3533 = vmatprep.mubr.bf16.mxu0 %v1664
  %3534 = vmatmul.mubr.bf16.gmra.mxu0 %v1663
  %v3535 = vpop.f32.mrf.mxu0
  %v3536 = vadd.f32 %v3247, %v3535
  %v3537 = vpop.f32.mrf.mxu0
  %v3538 = vpop.f32.mrf.mxu0
  %v3539 = vadd.f32 %v3250, %v3538
  %v3540 = vpop.f32.mrf.mxu0
  %3541 = vdwg.mxu0
  %3542 = vmatprep.subr.bf16.mxu0 0
  %3543 = vmatpush1.bf16.msra.mxu0 %v2313
  %3544 = vmatprep.subr.bf16.mxu0 0
  %3545 = vmatpush1.bf16.msra.mxu0 %v2312
  %3546 = vmatprep.subr.bf16.mxu0 0
  %3547 = vmatpush1.bf16.msra.mxu0 %v2311
  %3548 = vmatprep.subr.bf16.mxu0 0
  %3549 = vmatpush1.bf16.msra.mxu0 %v2310
  %3550 = vmatprep.subr.bf16.mxu0 0
  %3551 = vmatpush1.bf16.msra.mxu0 %v2309
  %3552 = vmatprep.subr.bf16.mxu0 0
  %3553 = vmatpush1.bf16.msra.mxu0 %v2308
  %3554 = vmatprep.subr.bf16.mxu0 0
  %3555 = vmatpush1.bf16.msra.mxu0 %v2307
  %3556 = vmatprep.subr.bf16.mxu0 0
  %3557 = vmatpush1.bf16.msra.mxu0 %v2306
  %3558 = vmatprep.subr.bf16.mxu0 0
  %3559 = vmatpush2.bf16.msra.mxu0 0
  %3560 = vmatprep.subr.bf16.mxu0 0
  %3561 = vmatpush2.bf16.msra.mxu0 0
  %3562 = vmatprep.subr.bf16.mxu0 0
  %3563 = vmatpush2.bf16.msra.mxu0 0
  %3564 = vmatprep.subr.bf16.mxu0 0
  %3565 = vmatpush2.bf16.msra.mxu0 0
  %3566 = vmatprep.subr.bf16.mxu0 0
  %3567 = vmatpush2.bf16.msra.mxu0 0
  %3568 = vmatprep.subr.bf16.mxu0 0
  %3569 = vmatpush2.bf16.msra.mxu0 0
  %3570 = vmatprep.subr.bf16.mxu0 0
  %3571 = vmatpush2.bf16.msra.mxu0 0
  %3572 = vmatprep.subr.bf16.mxu0 0
  %3573 = vmatpush2.bf16.msra.mxu0 0
  %3574 = vmatprep.mubr.bf16.mxu0 0
  %3575 = vmatmul.mubr.bf16.gmra.mxu0 %v1386
  %v3576 = vpop.f32.mrf.mxu0
  %v3577 = vadd.f32 %v3288, %v3576
  %v3578 = vpop.f32.mrf.mxu0
  %v3579 = vpop.f32.mrf.mxu0
  %v3580 = vadd.f32 %v3291, %v3579
  %v3581 = vpop.f32.mrf.mxu0
  %3582 = vmatprep.mubr.bf16.mxu0 0
  %3583 = vmatmul.mubr.bf16.gmra.mxu0 %v1395
  %v3584 = vpop.f32.mrf.mxu0
  %v3585 = vadd.f32 %v3296, %v3584
  %v3586 = vpop.f32.mrf.mxu0
  %v3587 = vpop.f32.mrf.mxu0
  %v3588 = vadd.f32 %v3299, %v3587
  %v3589 = vpop.f32.mrf.mxu0
  %3590 = vmatprep.mubr.bf16.mxu0 0
  %3591 = vmatmul.mubr.bf16.gmra.mxu0 %v1404
  %v3592 = vpop.f32.mrf.mxu0
  %v3593 = vadd.f32 %v3304, %v3592
  %v3594 = vpop.f32.mrf.mxu0
  %v3595 = vpop.f32.mrf.mxu0
  %v3596 = vadd.f32 %v3307, %v3595
  %v3597 = vpop.f32.mrf.mxu0
  %3598 = vmatprep.mubr.bf16.mxu0 0
  %3599 = vmatmul.mubr.bf16.gmra.mxu0 %v1413
  %v3600 = vpop.f32.mrf.mxu0
  %v3601 = vadd.f32 %v3312, %v3600
  %v3602 = vpop.f32.mrf.mxu0
  %v3603 = vpop.f32.mrf.mxu0
  %v3604 = vadd.f32 %v3315, %v3603
  %v3605 = vpop.f32.mrf.mxu0
  %3606 = vmatprep.mubr.bf16.mxu0 0
  %3607 = vmatmul.mubr.bf16.gmra.mxu0 %v1422
  %v3608 = vpop.f32.mrf.mxu0
  %v3609 = vadd.f32 %v3320, %v3608
  %v3610 = vpop.f32.mrf.mxu0
  %v3611 = vpop.f32.mrf.mxu0
  %v3612 = vadd.f32 %v3323, %v3611
  %v3613 = vpop.f32.mrf.mxu0
  %3614 = vmatprep.mubr.bf16.mxu0 0
  %3615 = vmatmul.mubr.bf16.gmra.mxu0 %v1431
  %v3616 = vpop.f32.mrf.mxu0
  %v3617 = vadd.f32 %v3328, %v3616
  %v3618 = vpop.f32.mrf.mxu0
  %v3619 = vpop.f32.mrf.mxu0
  %v3620 = vadd.f32 %v3331, %v3619
  %v3621 = vpop.f32.mrf.mxu0
  %3622 = vmatprep.mubr.bf16.mxu0 0
  %3623 = vmatmul.mubr.bf16.gmra.mxu0 %v1440
  %v3624 = vpop.f32.mrf.mxu0
  %v3625 = vadd.f32 %v3336, %v3624
  %v3626 = vpop.f32.mrf.mxu0
  %v3627 = vpop.f32.mrf.mxu0
  %v3628 = vadd.f32 %v3339, %v3627
  %v3629 = vpop.f32.mrf.mxu0
  %3630 = vmatprep.mubr.bf16.mxu0 0
  %3631 = vmatmul.mubr.bf16.gmra.mxu0 %v1449
  %v3632 = vpop.f32.mrf.mxu0
  %v3633 = vadd.f32 %v3344, %v3632
  %v3634 = vpop.f32.mrf.mxu0
  %v3635 = vpop.f32.mrf.mxu0
  %v3636 = vadd.f32 %v3347, %v3635
  %v3637 = vpop.f32.mrf.mxu0
  %3638 = vmatprep.mubr.bf16.mxu0 0
  %3639 = vmatmul.mubr.bf16.gmra.mxu0 %v1458
  %v3640 = vpop.f32.mrf.mxu0
  %v3641 = vadd.f32 %v3352, %v3640
  %v3642 = vpop.f32.mrf.mxu0
  %v3643 = vpop.f32.mrf.mxu0
  %v3644 = vadd.f32 %v3355, %v3643
  %v3645 = vpop.f32.mrf.mxu0
  %3646 = vmatprep.mubr.bf16.mxu0 0
  %3647 = vmatmul.mubr.bf16.gmra.mxu0 %v1467
  %v3648 = vpop.f32.mrf.mxu0
  %v3649 = vadd.f32 %v3360, %v3648
  %v3650 = vpop.f32.mrf.mxu0
  %v3651 = vpop.f32.mrf.mxu0
  %v3652 = vadd.f32 %v3363, %v3651
  %v3653 = vpop.f32.mrf.mxu0
  %3654 = vmatprep.mubr.bf16.mxu0 0
  %3655 = vmatmul.mubr.bf16.gmra.mxu0 %v1476
  %v3656 = vpop.f32.mrf.mxu0
  %v3657 = vadd.f32 %v3368, %v3656
  %v3658 = vpop.f32.mrf.mxu0
  %v3659 = vpop.f32.mrf.mxu0
  %v3660 = vadd.f32 %v3371, %v3659
  %v3661 = vpop.f32.mrf.mxu0
  %3662 = vmatprep.mubr.bf16.mxu0 0
  %3663 = vmatmul.mubr.bf16.gmra.mxu0 %v1485
  %v3664 = vpop.f32.mrf.mxu0
  %v3665 = vadd.f32 %v3376, %v3664
  %v3666 = vpop.f32.mrf.mxu0
  %v3667 = vpop.f32.mrf.mxu0
  %v3668 = vadd.f32 %v3379, %v3667
  %v3669 = vpop.f32.mrf.mxu0
  %3670 = vmatprep.mubr.bf16.mxu0 0
  %3671 = vmatmul.mubr.bf16.gmra.mxu0 %v1494
  %v3672 = vpop.f32.mrf.mxu0
  %v3673 = vadd.f32 %v3384, %v3672
  %v3674 = vpop.f32.mrf.mxu0
  %v3675 = vpop.f32.mrf.mxu0
  %v3676 = vadd.f32 %v3387, %v3675
  %v3677 = vpop.f32.mrf.mxu0
  %3678 = vmatprep.mubr.bf16.mxu0 0
  %3679 = vmatmul.mubr.bf16.gmra.mxu0 %v1503
  %v3680 = vpop.f32.mrf.mxu0
  %v3681 = vadd.f32 %v3392, %v3680
  %v3682 = vpop.f32.mrf.mxu0
  %v3683 = vpop.f32.mrf.mxu0
  %v3684 = vadd.f32 %v3395, %v3683
  %v3685 = vpop.f32.mrf.mxu0
  %3686 = vmatprep.mubr.bf16.mxu0 0
  %3687 = vmatmul.mubr.bf16.gmra.mxu0 %v1512
  %v3688 = vpop.f32.mrf.mxu0
  %v3689 = vadd.f32 %v3400, %v3688
  %v3690 = vpop.f32.mrf.mxu0
  %v3691 = vpop.f32.mrf.mxu0
  %v3692 = vadd.f32 %v3403, %v3691
  %v3693 = vpop.f32.mrf.mxu0
  %3694 = vmatprep.mubr.bf16.mxu0 0
  %3695 = vmatmul.mubr.bf16.gmra.mxu0 %v1521
  %v3696 = vpop.f32.mrf.mxu0
  %v3697 = vadd.f32 %v3408, %v3696
  %v3698 = vpop.f32.mrf.mxu0
  %v3699 = vpop.f32.mrf.mxu0
  %v3700 = vadd.f32 %v3411, %v3699
  %v3701 = vpop.f32.mrf.mxu0
  %3702 = vmatprep.mubr.bf16.mxu0 0
  %3703 = vmatmul.mubr.bf16.gmra.mxu0 %v1530
  %v3704 = vpop.f32.mrf.mxu0
  %v3705 = vadd.f32 %v3416, %v3704
  %v3706 = vpop.f32.mrf.mxu0
  %v3707 = vpop.f32.mrf.mxu0
  %v3708 = vadd.f32 %v3419, %v3707
  %v3709 = vpop.f32.mrf.mxu0
  %3710 = vmatprep.mubr.bf16.mxu0 0
  %3711 = vmatmul.mubr.bf16.gmra.mxu0 %v1539
  %v3712 = vpop.f32.mrf.mxu0
  %v3713 = vadd.f32 %v3424, %v3712
  %v3714 = vpop.f32.mrf.mxu0
  %v3715 = vpop.f32.mrf.mxu0
  %v3716 = vadd.f32 %v3427, %v3715
  %v3717 = vpop.f32.mrf.mxu0
  %3718 = vmatprep.mubr.bf16.mxu0 0
  %3719 = vmatmul.mubr.bf16.gmra.mxu0 %v1548
  %v3720 = vpop.f32.mrf.mxu0
  %v3721 = vadd.f32 %v3432, %v3720
  %v3722 = vpop.f32.mrf.mxu0
  %v3723 = vpop.f32.mrf.mxu0
  %v3724 = vadd.f32 %v3435, %v3723
  %v3725 = vpop.f32.mrf.mxu0
  %3726 = vmatprep.mubr.bf16.mxu0 0
  %3727 = vmatmul.mubr.bf16.gmra.mxu0 %v1557
  %v3728 = vpop.f32.mrf.mxu0
  %v3729 = vadd.f32 %v3440, %v3728
  %v3730 = vpop.f32.mrf.mxu0
  %v3731 = vpop.f32.mrf.mxu0
  %v3732 = vadd.f32 %v3443, %v3731
  %v3733 = vpop.f32.mrf.mxu0
  %3734 = vmatprep.mubr.bf16.mxu0 0
  %3735 = vmatmul.mubr.bf16.gmra.mxu0 %v1566
  %v3736 = vpop.f32.mrf.mxu0
  %v3737 = vadd.f32 %v3448, %v3736
  %v3738 = vpop.f32.mrf.mxu0
  %v3739 = vpop.f32.mrf.mxu0
  %v3740 = vadd.f32 %v3451, %v3739
  %v3741 = vpop.f32.mrf.mxu0
  %3742 = vmatprep.mubr.bf16.mxu0 0
  %3743 = vmatmul.mubr.bf16.gmra.mxu0 %v1575
  %v3744 = vpop.f32.mrf.mxu0
  %v3745 = vadd.f32 %v3456, %v3744
  %v3746 = vpop.f32.mrf.mxu0
  %v3747 = vpop.f32.mrf.mxu0
  %v3748 = vadd.f32 %v3459, %v3747
  %v3749 = vpop.f32.mrf.mxu0
  %3750 = vmatprep.mubr.bf16.mxu0 0
  %3751 = vmatmul.mubr.bf16.gmra.mxu0 %v1584
  %v3752 = vpop.f32.mrf.mxu0
  %v3753 = vadd.f32 %v3464, %v3752
  %v3754 = vpop.f32.mrf.mxu0
  %v3755 = vpop.f32.mrf.mxu0
  %v3756 = vadd.f32 %v3467, %v3755
  %v3757 = vpop.f32.mrf.mxu0
  %3758 = vmatprep.mubr.bf16.mxu0 0
  %3759 = vmatmul.mubr.bf16.gmra.mxu0 %v1593
  %v3760 = vpop.f32.mrf.mxu0
  %v3761 = vadd.f32 %v3472, %v3760
  %v3762 = vpop.f32.mrf.mxu0
  %v3763 = vpop.f32.mrf.mxu0
  %v3764 = vadd.f32 %v3475, %v3763
  %v3765 = vpop.f32.mrf.mxu0
  %3766 = vmatprep.mubr.bf16.mxu0 0
  %3767 = vmatmul.mubr.bf16.gmra.mxu0 %v1602
  %v3768 = vpop.f32.mrf.mxu0
  %v3769 = vadd.f32 %v3480, %v3768
  %v3770 = vpop.f32.mrf.mxu0
  %v3771 = vpop.f32.mrf.mxu0
  %v3772 = vadd.f32 %v3483, %v3771
  %v3773 = vpop.f32.mrf.mxu0
  %3774 = vmatprep.mubr.bf16.mxu0 0
  %3775 = vmatmul.mubr.bf16.gmra.mxu0 %v1611
  %v3776 = vpop.f32.mrf.mxu0
  %v3777 = vadd.f32 %v3488, %v3776
  %v3778 = vpop.f32.mrf.mxu0
  %v3779 = vpop.f32.mrf.mxu0
  %v3780 = vadd.f32 %v3491, %v3779
  %v3781 = vpop.f32.mrf.mxu0
  %3782 = vmatprep.mubr.bf16.mxu0 0
  %3783 = vmatmul.mubr.bf16.gmra.mxu0 %v1620
  %v3784 = vpop.f32.mrf.mxu0
  %v3785 = vadd.f32 %v3496, %v3784
  %v3786 = vpop.f32.mrf.mxu0
  %v3787 = vpop.f32.mrf.mxu0
  %v3788 = vadd.f32 %v3499, %v3787
  %v3789 = vpop.f32.mrf.mxu0
  %3790 = vmatprep.mubr.bf16.mxu0 0
  %3791 = vmatmul.mubr.bf16.gmra.mxu0 %v1629
  %v3792 = vpop.f32.mrf.mxu0
  %v3793 = vadd.f32 %v3504, %v3792
  %v3794 = vpop.f32.mrf.mxu0
  %v3795 = vpop.f32.mrf.mxu0
  %v3796 = vadd.f32 %v3507, %v3795
  %v3797 = vpop.f32.mrf.mxu0
  %3798 = vmatprep.mubr.bf16.mxu0 0
  %3799 = vmatmul.mubr.bf16.gmra.mxu0 %v1638
  %v3800 = vpop.f32.mrf.mxu0
  %v3801 = vadd.f32 %v3512, %v3800
  %v3802 = vpop.f32.mrf.mxu0
  %v3803 = vpop.f32.mrf.mxu0
  %v3804 = vadd.f32 %v3515, %v3803
  %v3805 = vpop.f32.mrf.mxu0
  %3806 = vmatprep.mubr.bf16.mxu0 0
  %3807 = vmatmul.mubr.bf16.gmra.mxu0 %v1647
  %v3808 = vpop.f32.mrf.mxu0
  %v3809 = vadd.f32 %v3520, %v3808
  %v3810 = vpop.f32.mrf.mxu0
  %v3811 = vpop.f32.mrf.mxu0
  %v3812 = vadd.f32 %v3523, %v3811
  %v3813 = vpop.f32.mrf.mxu0
  %3814 = vmatprep.mubr.bf16.mxu0 0
  %3815 = vmatmul.mubr.bf16.gmra.mxu0 %v1656
  %v3816 = vpop.f32.mrf.mxu0
  %v3817 = vadd.f32 %v3528, %v3816
  %v3818 = vpop.f32.mrf.mxu0
  %v3819 = vpop.f32.mrf.mxu0
  %v3820 = vadd.f32 %v3531, %v3819
  %v3821 = vpop.f32.mrf.mxu0
  %3822 = vmatprep.mubr.bf16.mxu0 0
  %3823 = vmatmul.mubr.bf16.gmra.mxu0 %v1665
  %v3824 = vpop.f32.mrf.mxu0
  %v3825 = vadd.f32 %v3536, %v3824
  %v3826 = vpop.f32.mrf.mxu0
  %v3827 = vpop.f32.mrf.mxu0
  %v3828 = vadd.f32 %v3539, %v3827
  %v3829 = vpop.f32.mrf.mxu0
  %3830 = vdwg.mxu0
  %v3831 = vld [vmem:[%s2] sm:$0x1]
  %v3833 = vlaneseq
  %v3834 = vshrl.u32 %v3833, 7
  %v3835 = vsub.s32 0, %v3834
  %v3836 = vrot.slane %v3831, %v3835
  %v3838 = vmul.f32 %v3577, %v3836
  %v3839 = vmul.f32 %v3580, %v3836
  %v3840 = vmul.f32 %v3585, %v3836
  %v3841 = vmul.f32 %v3588, %v3836
  %v3842 = vmul.f32 %v3593, %v3836
  %v3843 = vmul.f32 %v3596, %v3836
  %v3844 = vmul.f32 %v3601, %v3836
  %v3845 = vmul.f32 %v3604, %v3836
  %v3846 = vmul.f32 %v3609, %v3836
  %v3847 = vmul.f32 %v3612, %v3836
  %v3848 = vmul.f32 %v3617, %v3836
  %v3849 = vmul.f32 %v3620, %v3836
  %v3850 = vmul.f32 %v3625, %v3836
  %v3851 = vmul.f32 %v3628, %v3836
  %v3852 = vmul.f32 %v3633, %v3836
  %v3853 = vmul.f32 %v3636, %v3836
  %v3854 = vmul.f32 %v3641, %v3836
  %v3855 = vmul.f32 %v3644, %v3836
  %v3856 = vmul.f32 %v3649, %v3836
  %v3857 = vmul.f32 %v3652, %v3836
  %v3858 = vmul.f32 %v3657, %v3836
  %v3859 = vmul.f32 %v3660, %v3836
  %v3860 = vmul.f32 %v3665, %v3836
  %v3861 = vmul.f32 %v3668, %v3836
  %v3862 = vmul.f32 %v3673, %v3836
  %v3863 = vmul.f32 %v3676, %v3836
  %v3864 = vmul.f32 %v3681, %v3836
  %v3865 = vmul.f32 %v3684, %v3836
  %v3866 = vmul.f32 %v3689, %v3836
  %v3867 = vmul.f32 %v3692, %v3836
  %v3868 = vmul.f32 %v3697, %v3836
  %v3869 = vmul.f32 %v3700, %v3836
  %v3870 = vmul.f32 %v3705, %v3836
  %v3871 = vmul.f32 %v3708, %v3836
  %v3872 = vmul.f32 %v3713, %v3836
  %v3873 = vmul.f32 %v3716, %v3836
  %v3874 = vmul.f32 %v3721, %v3836
  %v3875 = vmul.f32 %v3724, %v3836
  %v3876 = vmul.f32 %v3729, %v3836
  %v3877 = vmul.f32 %v3732, %v3836
  %v3878 = vmul.f32 %v3737, %v3836
  %v3879 = vmul.f32 %v3740, %v3836
  %v3880 = vmul.f32 %v3745, %v3836
  %v3881 = vmul.f32 %v3748, %v3836
  %v3882 = vmul.f32 %v3753, %v3836
  %v3883 = vmul.f32 %v3756, %v3836
  %v3884 = vmul.f32 %v3761, %v3836
  %v3885 = vmul.f32 %v3764, %v3836
  %v3886 = vmul.f32 %v3769, %v3836
  %v3887 = vmul.f32 %v3772, %v3836
  %v3888 = vmul.f32 %v3777, %v3836
  %v3889 = vmul.f32 %v3780, %v3836
  %v3890 = vmul.f32 %v3785, %v3836
  %v3891 = vmul.f32 %v3788, %v3836
  %v3892 = vmul.f32 %v3793, %v3836
  %v3893 = vmul.f32 %v3796, %v3836
  %v3894 = vmul.f32 %v3801, %v3836
  %v3895 = vmul.f32 %v3804, %v3836
  %v3896 = vmul.f32 %v3809, %v3836
  %v3897 = vmul.f32 %v3812, %v3836
  %v3898 = vmul.f32 %v3817, %v3836
  %v3899 = vmul.f32 %v3820, %v3836
  %v3900 = vmul.f32 %v3825, %v3836
  %v3901 = vmul.f32 %v3828, %v3836
  %v3902 = vld [vmem:[%s3] sm:$0x1]
  %v3904 = vlaneseq
  %v3905 = vshrl.u32 %v3904, 7
  %v3906 = vsub.s32 0, %v3905
  %v3907 = vrot.slane %v3902, %v3906
  %v3909 = vadd.f32 %v3838, %v3907
  %v3910 = vadd.f32 %v3839, %v3907
  %v3911 = vadd.f32 %v3840, %v3907
  %v3912 = vadd.f32 %v3841, %v3907
  %v3913 = vadd.f32 %v3842, %v3907
  %v3914 = vadd.f32 %v3843, %v3907
  %v3915 = vadd.f32 %v3844, %v3907
  %v3916 = vadd.f32 %v3845, %v3907
  %v3917 = vadd.f32 %v3846, %v3907
  %v3918 = vadd.f32 %v3847, %v3907
  %v3919 = vadd.f32 %v3848, %v3907
  %v3920 = vadd.f32 %v3849, %v3907
  %v3921 = vadd.f32 %v3850, %v3907
  %v3922 = vadd.f32 %v3851, %v3907
  %v3923 = vadd.f32 %v3852, %v3907
  %v3924 = vadd.f32 %v3853, %v3907
  %v3925 = vadd.f32 %v3854, %v3907
  %v3926 = vadd.f32 %v3855, %v3907
  %v3927 = vadd.f32 %v3856, %v3907
  %v3928 = vadd.f32 %v3857, %v3907
  %v3929 = vadd.f32 %v3858, %v3907
  %v3930 = vadd.f32 %v3859, %v3907
  %v3931 = vadd.f32 %v3860, %v3907
  %v3932 = vadd.f32 %v3861, %v3907
  %v3933 = vadd.f32 %v3862, %v3907
  %v3934 = vadd.f32 %v3863, %v3907
  %v3935 = vadd.f32 %v3864, %v3907
  %v3936 = vadd.f32 %v3865, %v3907
  %v3937 = vadd.f32 %v3866, %v3907
  %v3938 = vadd.f32 %v3867, %v3907
  %v3939 = vadd.f32 %v3868, %v3907
  %v3940 = vadd.f32 %v3869, %v3907
  %v3941 = vadd.f32 %v3870, %v3907
  %v3942 = vadd.f32 %v3871, %v3907
  %v3943 = vadd.f32 %v3872, %v3907
  %v3944 = vadd.f32 %v3873, %v3907
  %v3945 = vadd.f32 %v3874, %v3907
  %v3946 = vadd.f32 %v3875, %v3907
  %v3947 = vadd.f32 %v3876, %v3907
  %v3948 = vadd.f32 %v3877, %v3907
  %v3949 = vadd.f32 %v3878, %v3907
  %v3950 = vadd.f32 %v3879, %v3907
  %v3951 = vadd.f32 %v3880, %v3907
  %v3952 = vadd.f32 %v3881, %v3907
  %v3953 = vadd.f32 %v3882, %v3907
  %v3954 = vadd.f32 %v3883, %v3907
  %v3955 = vadd.f32 %v3884, %v3907
  %v3956 = vadd.f32 %v3885, %v3907
  %v3957 = vadd.f32 %v3886, %v3907
  %v3958 = vadd.f32 %v3887, %v3907
  %v3959 = vadd.f32 %v3888, %v3907
  %v3960 = vadd.f32 %v3889, %v3907
  %v3961 = vadd.f32 %v3890, %v3907
  %v3962 = vadd.f32 %v3891, %v3907
  %v3963 = vadd.f32 %v3892, %v3907
  %v3964 = vadd.f32 %v3893, %v3907
  %v3965 = vadd.f32 %v3894, %v3907
  %v3966 = vadd.f32 %v3895, %v3907
  %v3967 = vadd.f32 %v3896, %v3907
  %v3968 = vadd.f32 %v3897, %v3907
  %v3969 = vadd.f32 %v3898, %v3907
  %v3970 = vadd.f32 %v3899, %v3907
  %v3971 = vadd.f32 %v3900, %v3907
  %v3972 = vadd.f32 %v3901, %v3907
  %v3973 = vmax.f32 %v3909, 0.0
  %v3974 = vmax.f32 %v3910, 0.0
  %v3975 = vmax.f32 %v3911, 0.0
  %v3976 = vmax.f32 %v3912, 0.0
  %v3977 = vmax.f32 %v3913, 0.0
  %v3978 = vmax.f32 %v3914, 0.0
  %v3979 = vmax.f32 %v3915, 0.0
  %v3980 = vmax.f32 %v3916, 0.0
  %v3981 = vmax.f32 %v3917, 0.0
  %v3982 = vmax.f32 %v3918, 0.0
  %v3983 = vmax.f32 %v3919, 0.0
  %v3984 = vmax.f32 %v3920, 0.0
  %v3985 = vmax.f32 %v3921, 0.0
  %v3986 = vmax.f32 %v3922, 0.0
  %v3987 = vmax.f32 %v3923, 0.0
  %v3988 = vmax.f32 %v3924, 0.0
  %v3989 = vmax.f32 %v3925, 0.0
  %v3990 = vmax.f32 %v3926, 0.0
  %v3991 = vmax.f32 %v3927, 0.0
  %v3992 = vmax.f32 %v3928, 0.0
  %v3993 = vmax.f32 %v3929, 0.0
  %v3994 = vmax.f32 %v3930, 0.0
  %v3995 = vmax.f32 %v3931, 0.0
  %v3996 = vmax.f32 %v3932, 0.0
  %v3997 = vmax.f32 %v3933, 0.0
  %v3998 = vmax.f32 %v3934, 0.0
  %v3999 = vmax.f32 %v3935, 0.0
  %v4000 = vmax.f32 %v3936, 0.0
  %v4001 = vmax.f32 %v3937, 0.0
  %v4002 = vmax.f32 %v3938, 0.0
  %v4003 = vmax.f32 %v3939, 0.0
  %v4004 = vmax.f32 %v3940, 0.0
  %v4005 = vmax.f32 %v3941, 0.0
  %v4006 = vmax.f32 %v3942, 0.0
  %v4007 = vmax.f32 %v3943, 0.0
  %v4008 = vmax.f32 %v3944, 0.0
  %v4009 = vmax.f32 %v3945, 0.0
  %v4010 = vmax.f32 %v3946, 0.0
  %v4011 = vmax.f32 %v3947, 0.0
  %v4012 = vmax.f32 %v3948, 0.0
  %v4013 = vmax.f32 %v3949, 0.0
  %v4014 = vmax.f32 %v3950, 0.0
  %v4015 = vmax.f32 %v3951, 0.0
  %v4016 = vmax.f32 %v3952, 0.0
  %v4017 = vmax.f32 %v3953, 0.0
  %v4018 = vmax.f32 %v3954, 0.0
  %v4019 = vmax.f32 %v3955, 0.0
  %v4020 = vmax.f32 %v3956, 0.0
  %v4021 = vmax.f32 %v3957, 0.0
  %v4022 = vmax.f32 %v3958, 0.0
  %v4023 = vmax.f32 %v3959, 0.0
  %v4024 = vmax.f32 %v3960, 0.0
  %v4025 = vmax.f32 %v3961, 0.0
  %v4026 = vmax.f32 %v3962, 0.0
  %v4027 = vmax.f32 %v3963, 0.0
  %v4028 = vmax.f32 %v3964, 0.0
  %v4029 = vmax.f32 %v3965, 0.0
  %v4030 = vmax.f32 %v3966, 0.0
  %v4031 = vmax.f32 %v3967, 0.0
  %v4032 = vmax.f32 %v3968, 0.0
  %v4033 = vmax.f32 %v3969, 0.0
  %v4034 = vmax.f32 %v3970, 0.0
  %v4035 = vmax.f32 %v3971, 0.0
  %v4036 = vmax.f32 %v3972, 0.0
  %4037 = vst [vmem:[%s4] sm:$0xff] %v3973
  %4038 = vst [vmem:[%s4 + $0x8] sm:$0xff] %v3974
  %4039 = vst [vmem:[%s4 + $0x10] sm:$0xff] %v3975
  %4040 = vst [vmem:[%s4 + $0x18] sm:$0xff] %v3976
  %4041 = vst [vmem:[%s4 + $0x20] sm:$0xff] %v3977
  %4042 = vst [vmem:[%s4 + $0x28] sm:$0xff] %v3978
  %4043 = vst [vmem:[%s4 + $0x30] sm:$0xff] %v3979
  %4044 = vst [vmem:[%s4 + $0x38] sm:$0xff] %v3980
  %4045 = vst [vmem:[%s4 + $0x40] sm:$0xff] %v3981
  %4046 = vst [vmem:[%s4 + $0x48] sm:$0xff] %v3982
  %4047 = vst [vmem:[%s4 + $0x50] sm:$0xff] %v3983
  %4048 = vst [vmem:[%s4 + $0x58] sm:$0xff] %v3984
  %4049 = vst [vmem:[%s4 + $0x60] sm:$0xff] %v3985
  %4050 = vst [vmem:[%s4 + $0x68] sm:$0xff] %v3986
  %4051 = vst [vmem:[%s4 + $0x70] sm:$0xff] %v3987
  %4052 = vst [vmem:[%s4 + $0x78] sm:$0xff] %v3988
  %4053 = vst [vmem:[%s4 + $0x80] sm:$0xff] %v3989
  %4054 = vst [vmem:[%s4 + $0x88] sm:$0xff] %v3990
  %4055 = vst [vmem:[%s4 + $0x90] sm:$0xff] %v3991
  %4056 = vst [vmem:[%s4 + $0x98] sm:$0xff] %v3992
  %4057 = vst [vmem:[%s4 + $0xa0] sm:$0xff] %v3993
  %4058 = vst [vmem:[%s4 + $0xa8] sm:$0xff] %v3994
  %4059 = vst [vmem:[%s4 + $0xb0] sm:$0xff] %v3995
  %4060 = vst [vmem:[%s4 + $0xb8] sm:$0xff] %v3996
  %4061 = vst [vmem:[%s4 + $0xc0] sm:$0xff] %v3997
  %4062 = vst [vmem:[%s4 + $0xc8] sm:$0xff] %v3998
  %4063 = vst [vmem:[%s4 + $0xd0] sm:$0xff] %v3999
  %4064 = vst [vmem:[%s4 + $0xd8] sm:$0xff] %v4000
  %4065 = vst [vmem:[%s4 + $0xe0] sm:$0xff] %v4001
  %4066 = vst [vmem:[%s4 + $0xe8] sm:$0xff] %v4002
  %4067 = vst [vmem:[%s4 + $0xf0] sm:$0xff] %v4003
  %4068 = vst [vmem:[%s4 + $0xf8] sm:$0xff] %v4004
  %4069 = vst [vmem:[%s4 + $0x100] sm:$0xff] %v4005
  %4070 = vst [vmem:[%s4 + $0x108] sm:$0xff] %v4006
  %4071 = vst [vmem:[%s4 + $0x110] sm:$0xff] %v4007
  %4072 = vst [vmem:[%s4 + $0x118] sm:$0xff] %v4008
  %4073 = vst [vmem:[%s4 + $0x120] sm:$0xff] %v4009
  %4074 = vst [vmem:[%s4 + $0x128] sm:$0xff] %v4010
  %4075 = vst [vmem:[%s4 + $0x130] sm:$0xff] %v4011
  %4076 = vst [vmem:[%s4 + $0x138] sm:$0xff] %v4012
  %4077 = vst [vmem:[%s4 + $0x140] sm:$0xff] %v4013
  %4078 = vst [vmem:[%s4 + $0x148] sm:$0xff] %v4014
  %4079 = vst [vmem:[%s4 + $0x150] sm:$0xff] %v4015
  %4080 = vst [vmem:[%s4 + $0x158] sm:$0xff] %v4016
  %4081 = vst [vmem:[%s4 + $0x160] sm:$0xff] %v4017
  %4082 = vst [vmem:[%s4 + $0x168] sm:$0xff] %v4018
  %4083 = vst [vmem:[%s4 + $0x170] sm:$0xff] %v4019
  %4084 = vst [vmem:[%s4 + $0x178] sm:$0xff] %v4020
  %4085 = vst [vmem:[%s4 + $0x180] sm:$0xff] %v4021
  %4086 = vst [vmem:[%s4 + $0x188] sm:$0xff] %v4022
  %4087 = vst [vmem:[%s4 + $0x190] sm:$0xff] %v4023
  %4088 = vst [vmem:[%s4 + $0x198] sm:$0xff] %v4024
  %4089 = vst [vmem:[%s4 + $0x1a0] sm:$0xff] %v4025
  %4090 = vst [vmem:[%s4 + $0x1a8] sm:$0xff] %v4026
  %4091 = vst [vmem:[%s4 + $0x1b0] sm:$0xff] %v4027
  %4092 = vst [vmem:[%s4 + $0x1b8] sm:$0xff] %v4028
  %4093 = vst [vmem:[%s4 + $0x1c0] sm:$0xff] %v4029
  %4094 = vst [vmem:[%s4 + $0x1c8] sm:$0xff] %v4030
  %4095 = vst [vmem:[%s4 + $0x1d0] sm:$0xff] %v4031
  %4096 = vst [vmem:[%s4 + $0x1d8] sm:$0xff] %v4032
  %4097 = vst [vmem:[%s4 + $0x1e0] sm:$0xff] %v4033
  %4098 = vst [vmem:[%s4 + $0x1e8] sm:$0xff] %v4034
  %4099 = vst [vmem:[%s4 + $0x1f0] sm:$0xff] %v4035
  %4100 = vst [vmem:[%s4 + $0x1f8] sm:$0xff] %v4036
  // Predicated region
  $region18: #{ssl_encoder_forward.7} parent=0 // pred_check
    _
  $region19: #{ssl_encoder_forward.7} parent=0 // pred_check_branch
    %4102 = sbr.rel (0) target = $region21
  $region20: #{ssl_encoder_forward.7} parent=0 // pred_region
    _
  $region21: #{ssl_encoder_forward.7} parent=0 // pred_fallthru
    _
  // Predicated region
  $region22: #{ssl_encoder_forward.7} parent=0 // pred_check
    _
  $region23: #{ssl_encoder_forward.7} parent=0 // pred_check_branch
    %4104 = sbr.rel (0) target = $region25
  $region24: #{ssl_encoder_forward.7} parent=0 // pred_region
    _
  $region25: #{ssl_encoder_forward.7} parent=0 // pred_fallthru
    _

// kernel: ssl_encoder_forward.10
$region0: #{ssl_encoder_forward.10}
  #allocation0 [shape = 'u32[]', space=smem, size = 0x4, offset = 0x4, fixed_abs, tag = 'smem constant byte address 0x4 - core index']
  #allocation1 [shape = 'u32[144,128]{1,0:T(1,128)}', space=vmem, size = 0x12000, scoped, tag = 'internal scratch']
  %s0 = inlined_call_operand.vmem [shape: bf16[128,1152], index: 0, kind: input, shape index: {}]
  %s1 = inlined_call_operand.vmem [shape: bf16[1152,128], index: 1, kind: input, shape index: {}]
  %s2 = inlined_call_operand.vmem [shape: f32[1,128], index: 2, kind: input, shape index: {}]
  %s3 = inlined_call_operand.vmem [shape: f32[1,128], index: 3, kind: input, shape index: {}]
  %s4 = inlined_call_operand.vmem [shape: f32[128,128], index: 4, kind: output, shape index: {}]
  %s5 = sld [smem:[#allocation0]]
  $region26: #{ssl_encoder_forward.10} parent=0
    _
  %s7 = ssub.s32 1, %s5
  %s8 = scalar_select 0, %s7, %s5
  // Predicated region
  $region2: #{ssl_encoder_forward.10} parent=0 // pred_check
    _
  $region3: #{ssl_encoder_forward.10} parent=0 // pred_check_branch
    %10 = sbr.rel (0) target = $region5
  $region4: #{ssl_encoder_forward.10} parent=0 // pred_region
    _
  $region5: #{ssl_encoder_forward.10} parent=0 // pred_fallthru
    _
  // Predicated region
  $region6: #{ssl_encoder_forward.10} parent=0 // pred_check
    _
  $region7: #{ssl_encoder_forward.10} parent=0 // pred_check_branch
    %12 = sbr.rel (0) target = $region9
  $region8: #{ssl_encoder_forward.10} parent=0 // pred_region
    _
  $region9: #{ssl_encoder_forward.10} parent=0 // pred_fallthru
    _
  // Predicated region
  $region10: #{ssl_encoder_forward.10} parent=0 // pred_check
    _
  $region11: #{ssl_encoder_forward.10} parent=0 // pred_check_branch
    %14 = sbr.rel (0) target = $region13
  $region12: #{ssl_encoder_forward.10} parent=0 // pred_region
    _
  $region13: #{ssl_encoder_forward.10} parent=0 // pred_fallthru
    _
  // Predicated region
  $region14: #{ssl_encoder_forward.10} parent=0 // pred_check
    _
  $region15: #{ssl_encoder_forward.10} parent=0 // pred_check_branch
    %16 = sbr.rel (0) target = $region17
  $region16: #{ssl_encoder_forward.10} parent=0 // pred_region
    _
  $region17: #{ssl_encoder_forward.10} parent=0 // pred_fallthru
    _
  %v18 = vld [vmem:[%s0] sm:$0xff]
  %v19 = vld [vmem:[%s0 + $0x8] sm:$0xff]
  %v20 = vld [vmem:[%s0 + $0x10] sm:$0xff]
  %v21 = vld [vmem:[%s0 + $0x18] sm:$0xff]
  %v22 = vld [vmem:[%s0 + $0x20] sm:$0xf]
  %v23 = vld [vmem:[%s0 + $0x24] sm:$0xff]
  %v24 = vld [vmem:[%s0 + $0x2c] sm:$0xff]
  %v25 = vld [vmem:[%s0 + $0x34] sm:$0xff]
  %v26 = vld [vmem:[%s0 + $0x3c] sm:$0xff]
  %v27 = vld [vmem:[%s0 + $0x44] sm:$0xf]
  %v28 = vld [vmem:[%s0 + $0x48] sm:$0xff]
  %v29 = vld [vmem:[%s0 + $0x50] sm:$0xff]
  %v30 = vld [vmem:[%s0 + $0x58] sm:$0xff]
  %v31 = vld [vmem:[%s0 + $0x60] sm:$0xff]
  %v32 = vld [vmem:[%s0 + $0x68] sm:$0xf]
  %v33 = vld [vmem:[%s0 + $0x6c] sm:$0xff]
  %v34 = vld [vmem:[%s0 + $0x74] sm:$0xff]
  %v35 = vld [vmem:[%s0 + $0x7c] sm:$0xff]
  %v36 = vld [vmem:[%s0 + $0x84] sm:$0xff]
  %v37 = vld [vmem:[%s0 + $0x8c] sm:$0xf]
  %v38 = vld [vmem:[%s0 + $0x90] sm:$0xff]
  %v39 = vld [vmem:[%s0 + $0x98] sm:$0xff]
  %v40 = vld [vmem:[%s0 + $0xa0] sm:$0xff]
  %v41 = vld [vmem:[%s0 + $0xa8] sm:$0xff]
  %v42 = vld [vmem:[%s0 + $0xb0] sm:$0xf]
  %v43 = vld [vmem:[%s0 + $0xb4] sm:$0xff]
  %v44 = vld [vmem:[%s0 + $0xbc] sm:$0xff]
  %v45 = vld [vmem:[%s0 + $0xc4] sm:$0xff]
  %v46 = vld [vmem:[%s0 + $0xcc] sm:$0xff]
  %v47 = vld [vmem:[%s0 + $0xd4] sm:$0xf]
  %v48 = vld [vmem:[%s0 + $0xd8] sm:$0xff]
  %v49 = vld [vmem:[%s0 + $0xe0] sm:$0xff]
  %v50 = vld [vmem:[%s0 + $0xe8] sm:$0xff]
  %v51 = vld [vmem:[%s0 + $0xf0] sm:$0xff]
  %v52 = vld [vmem:[%s0 + $0xf8] sm:$0xf]
  %v53 = vld [vmem:[%s0 + $0xfc] sm:$0xff]
  %v54 = vld [vmem:[%s0 + $0x104] sm:$0xff]
  %v55 = vld [vmem:[%s0 + $0x10c] sm:$0xff]
  %v56 = vld [vmem:[%s0 + $0x114] sm:$0xff]
  %v57 = vld [vmem:[%s0 + $0x11c] sm:$0xf]
  %v58 = vld [vmem:[%s0 + $0x120] sm:$0xff]
  %v59 = vld [vmem:[%s0 + $0x128] sm:$0xff]
  %v60 = vld [vmem:[%s0 + $0x130] sm:$0xff]
  %v61 = vld [vmem:[%s0 + $0x138] sm:$0xff]
  %v62 = vld [vmem:[%s0 + $0x140] sm:$0xf]
  %v63 = vld [vmem:[%s0 + $0x144] sm:$0xff]
  %v64 = vld [vmem:[%s0 + $0x14c] sm:$0xff]
  %v65 = vld [vmem:[%s0 + $0x154] sm:$0xff]
  %v66 = vld [vmem:[%s0 + $0x15c] sm:$0xff]
  %v67 = vld [vmem:[%s0 + $0x164] sm:$0xf]
  %v68 = vld [vmem:[%s0 + $0x168] sm:$0xff]
  %v69 = vld [vmem:[%s0 + $0x170] sm:$0xff]
  %v70 = vld [vmem:[%s0 + $0x178] sm:$0xff]
  %v71 = vld [vmem:[%s0 + $0x180] sm:$0xff]
  %v72 = vld [vmem:[%s0 + $0x188] sm:$0xf]
  %v73 = vld [vmem:[%s0 + $0x18c] sm:$0xff]
  %v74 = vld [vmem:[%s0 + $0x194] sm:$0xff]
  %v75 = vld [vmem:[%s0 + $0x19c] sm:$0xff]
  %v76 = vld [vmem:[%s0 + $0x1a4] sm:$0xff]
  %v77 = vld [vmem:[%s0 + $0x1ac] sm:$0xf]
  %v78 = vld [vmem:[%s0 + $0x1b0] sm:$0xff]
  %v79 = vld [vmem:[%s0 + $0x1b8] sm:$0xff]
  %v80 = vld [vmem:[%s0 + $0x1c0] sm:$0xff]
  %v81 = vld [vmem:[%s0 + $0x1c8] sm:$0xff]
  %v82 = vld [vmem:[%s0 + $0x1d0] sm:$0xf]
  %v83 = vld [vmem:[%s0 + $0x1d4] sm:$0xff]
  %v84 = vld [vmem:[%s0 + $0x1dc] sm:$0xff]
  %v85 = vld [vmem:[%s0 + $0x1e4] sm:$0xff]
  %v86 = vld [vmem:[%s0 + $0x1ec] sm:$0xff]
  %v87 = vld [vmem:[%s0 + $0x1f4] sm:$0xf]
  %v88 = vld [vmem:[%s0 + $0x1f8] sm:$0xff]
  %v89 = vld [vmem:[%s0 + $0x200] sm:$0xff]
  %v90 = vld [vmem:[%s0 + $0x208] sm:$0xff]
  %v91 = vld [vmem:[%s0 + $0x210] sm:$0xff]
  %v92 = vld [vmem:[%s0 + $0x218] sm:$0xf]
  %v93 = vld [vmem:[%s0 + $0x21c] sm:$0xff]
  %v94 = vld [vmem:[%s0 + $0x224] sm:$0xff]
  %v95 = vld [vmem:[%s0 + $0x22c] sm:$0xff]
  %v96 = vld [vmem:[%s0 + $0x234] sm:$0xff]
  %v97 = vld [vmem:[%s0 + $0x23c] sm:$0xf]
  %v98 = vld [vmem:[%s1] sm:$0xf]
  %v99 = vld [vmem:[%s1 + $0x4] sm:$0xf]
  %v100 = vld [vmem:[%s1 + $0x8] sm:$0xf]
  %v101 = vld [vmem:[%s1 + $0xc] sm:$0xf]
  %v102 = vld [vmem:[%s1 + $0x10] sm:$0xf]
  %v103 = vld [vmem:[%s1 + $0x14] sm:$0xf]
  %v104 = vld [vmem:[%s1 + $0x18] sm:$0xf]
  %v105 = vld [vmem:[%s1 + $0x1c] sm:$0xf]
  %v106 = vld [vmem:[%s1 + $0x20] sm:$0xf]
  %v107 = vld [vmem:[%s1 + $0x24] sm:$0xf]
  %v108 = vld [vmem:[%s1 + $0x28] sm:$0xf]
  %v109 = vld [vmem:[%s1 + $0x2c] sm:$0xf]
  %v110 = vld [vmem:[%s1 + $0x30] sm:$0xf]
  %v111 = vld [vmem:[%s1 + $0x34] sm:$0xf]
  %v112 = vld [vmem:[%s1 + $0x38] sm:$0xf]
  %v113 = vld [vmem:[%s1 + $0x3c] sm:$0xf]
  %v114 = vld [vmem:[%s1 + $0x40] sm:$0xf]
  %v115 = vld [vmem:[%s1 + $0x44] sm:$0xf]
  %v116 = vld [vmem:[%s1 + $0x48] sm:$0xf]
  %v117 = vld [vmem:[%s1 + $0x4c] sm:$0xf]
  %v118 = vld [vmem:[%s1 + $0x50] sm:$0xf]
  %v119 = vld [vmem:[%s1 + $0x54] sm:$0xf]
  %v120 = vld [vmem:[%s1 + $0x58] sm:$0xf]
  %v121 = vld [vmem:[%s1 + $0x5c] sm:$0xf]
  %v122 = vld [vmem:[%s1 + $0x60] sm:$0xf]
  %v123 = vld [vmem:[%s1 + $0x64] sm:$0xf]
  %v124 = vld [vmem:[%s1 + $0x68] sm:$0xf]
  %v125 = vld [vmem:[%s1 + $0x6c] sm:$0xf]
  %v126 = vld [vmem:[%s1 + $0x70] sm:$0xf]
  %v127 = vld [vmem:[%s1 + $0x74] sm:$0xf]
  %v128 = vld [vmem:[%s1 + $0x78] sm:$0xf]
  %v129 = vld [vmem:[%s1 + $0x7c] sm:$0xf]
  %v130 = vld [vmem:[%s1 + $0x80] sm:$0xf]
  %v131 = vld [vmem:[%s1 + $0x84] sm:$0xf]
  %v132 = vld [vmem:[%s1 + $0x88] sm:$0xf]
  %v133 = vld [vmem:[%s1 + $0x8c] sm:$0xf]
  %v134 = vld [vmem:[%s1 + $0x90] sm:$0xf]
  %v135 = vld [vmem:[%s1 + $0x94] sm:$0xf]
  %v136 = vld [vmem:[%s1 + $0x98] sm:$0xf]
  %v137 = vld [vmem:[%s1 + $0x9c] sm:$0xf]
  %v138 = vld [vmem:[%s1 + $0xa0] sm:$0xf]
  %v139 = vld [vmem:[%s1 + $0xa4] sm:$0xf]
  %v140 = vld [vmem:[%s1 + $0xa8] sm:$0xf]
  %v141 = vld [vmem:[%s1 + $0xac] sm:$0xf]
  %v142 = vld [vmem:[%s1 + $0xb0] sm:$0xf]
  %v143 = vld [vmem:[%s1 + $0xb4] sm:$0xf]
  %v144 = vld [vmem:[%s1 + $0xb8] sm:$0xf]
  %v145 = vld [vmem:[%s1 + $0xbc] sm:$0xf]
  %v146 = vld [vmem:[%s1 + $0xc0] sm:$0xf]
  %v147 = vld [vmem:[%s1 + $0xc4] sm:$0xf]
  %v148 = vld [vmem:[%s1 + $0xc8] sm:$0xf]
  %v149 = vld [vmem:[%s1 + $0xcc] sm:$0xf]
  %v150 = vld [vmem:[%s1 + $0xd0] sm:$0xf]
  %v151 = vld [vmem:[%s1 + $0xd4] sm:$0xf]
  %v152 = vld [vmem:[%s1 + $0xd8] sm:$0xf]
  %v153 = vld [vmem:[%s1 + $0xdc] sm:$0xf]
  %v154 = vld [vmem:[%s1 + $0xe0] sm:$0xf]
  %v155 = vld [vmem:[%s1 + $0xe4] sm:$0xf]
  %v156 = vld [vmem:[%s1 + $0xe8] sm:$0xf]
  %v157 = vld [vmem:[%s1 + $0xec] sm:$0xf]
  %v158 = vld [vmem:[%s1 + $0xf0] sm:$0xf]
  %v159 = vld [vmem:[%s1 + $0xf4] sm:$0xf]
  %v160 = vld [vmem:[%s1 + $0xf8] sm:$0xf]
  %v161 = vld [vmem:[%s1 + $0xfc] sm:$0xf]
  %v162 = vld [vmem:[%s1 + $0x100] sm:$0xf]
  %v163 = vld [vmem:[%s1 + $0x104] sm:$0xf]
  %v164 = vld [vmem:[%s1 + $0x108] sm:$0xf]
  %v165 = vld [vmem:[%s1 + $0x10c] sm:$0xf]
  %v166 = vld [vmem:[%s1 + $0x110] sm:$0xf]
  %v167 = vld [vmem:[%s1 + $0x114] sm:$0xf]
  %v168 = vld [vmem:[%s1 + $0x118] sm:$0xf]
  %v169 = vld [vmem:[%s1 + $0x11c] sm:$0xf]
  %v170 = vld [vmem:[%s1 + $0x120] sm:$0xf]
  %v171 = vld [vmem:[%s1 + $0x124] sm:$0xf]
  %v172 = vld [vmem:[%s1 + $0x128] sm:$0xf]
  %v173 = vld [vmem:[%s1 + $0x12c] sm:$0xf]
  %v174 = vld [vmem:[%s1 + $0x130] sm:$0xf]
  %v175 = vld [vmem:[%s1 + $0x134] sm:$0xf]
  %v176 = vld [vmem:[%s1 + $0x138] sm:$0xf]
  %v177 = vld [vmem:[%s1 + $0x13c] sm:$0xf]
  %v178 = vld [vmem:[%s1 + $0x140] sm:$0xf]
  %v179 = vld [vmem:[%s1 + $0x144] sm:$0xf]
  %v180 = vld [vmem:[%s1 + $0x148] sm:$0xf]
  %v181 = vld [vmem:[%s1 + $0x14c] sm:$0xf]
  %v182 = vld [vmem:[%s1 + $0x150] sm:$0xf]
  %v183 = vld [vmem:[%s1 + $0x154] sm:$0xf]
  %v184 = vld [vmem:[%s1 + $0x158] sm:$0xf]
  %v185 = vld [vmem:[%s1 + $0x15c] sm:$0xf]
  %v186 = vld [vmem:[%s1 + $0x160] sm:$0xf]
  %v187 = vld [vmem:[%s1 + $0x164] sm:$0xf]
  %v188 = vld [vmem:[%s1 + $0x168] sm:$0xf]
  %v189 = vld [vmem:[%s1 + $0x16c] sm:$0xf]
  %v190 = vld [vmem:[%s1 + $0x170] sm:$0xf]
  %v191 = vld [vmem:[%s1 + $0x174] sm:$0xf]
  %v192 = vld [vmem:[%s1 + $0x178] sm:$0xf]
  %v193 = vld [vmem:[%s1 + $0x17c] sm:$0xf]
  %v194 = vld [vmem:[%s1 + $0x180] sm:$0xf]
  %v195 = vld [vmem:[%s1 + $0x184] sm:$0xf]
  %v196 = vld [vmem:[%s1 + $0x188] sm:$0xf]
  %v197 = vld [vmem:[%s1 + $0x18c] sm:$0xf]
  %v198 = vld [vmem:[%s1 + $0x190] sm:$0xf]
  %v199 = vld [vmem:[%s1 + $0x194] sm:$0xf]
  %v200 = vld [vmem:[%s1 + $0x198] sm:$0xf]
  %v201 = vld [vmem:[%s1 + $0x19c] sm:$0xf]
  %v202 = vld [vmem:[%s1 + $0x1a0] sm:$0xf]
  %v203 = vld [vmem:[%s1 + $0x1a4] sm:$0xf]
  %v204 = vld [vmem:[%s1 + $0x1a8] sm:$0xf]
  %v205 = vld [vmem:[%s1 + $0x1ac] sm:$0xf]
  %v206 = vld [vmem:[%s1 + $0x1b0] sm:$0xf]
  %v207 = vld [vmem:[%s1 + $0x1b4] sm:$0xf]
  %v208 = vld [vmem:[%s1 + $0x1b8] sm:$0xf]
  %v209 = vld [vmem:[%s1 + $0x1bc] sm:$0xf]
  %v210 = vld [vmem:[%s1 + $0x1c0] sm:$0xf]
  %v211 = vld [vmem:[%s1 + $0x1c4] sm:$0xf]
  %v212 = vld [vmem:[%s1 + $0x1c8] sm:$0xf]
  %v213 = vld [vmem:[%s1 + $0x1cc] sm:$0xf]
  %v214 = vld [vmem:[%s1 + $0x1d0] sm:$0xf]
  %v215 = vld [vmem:[%s1 + $0x1d4] sm:$0xf]
  %v216 = vld [vmem:[%s1 + $0x1d8] sm:$0xf]
  %v217 = vld [vmem:[%s1 + $0x1dc] sm:$0xf]
  %v218 = vld [vmem:[%s1 + $0x1e0] sm:$0xf]
  %v219 = vld [vmem:[%s1 + $0x1e4] sm:$0xf]
  %v220 = vld [vmem:[%s1 + $0x1e8] sm:$0xf]
  %v221 = vld [vmem:[%s1 + $0x1ec] sm:$0xf]
  %v222 = vld [vmem:[%s1 + $0x1f0] sm:$0xf]
  %v223 = vld [vmem:[%s1 + $0x1f4] sm:$0xf]
  %v224 = vld [vmem:[%s1 + $0x1f8] sm:$0xf]
  %v225 = vld [vmem:[%s1 + $0x1fc] sm:$0xf]
  %v226 = vld [vmem:[%s1 + $0x200] sm:$0xf]
  %v227 = vld [vmem:[%s1 + $0x204] sm:$0xf]
  %v228 = vld [vmem:[%s1 + $0x208] sm:$0xf]
  %v229 = vld [vmem:[%s1 + $0x20c] sm:$0xf]
  %v230 = vld [vmem:[%s1 + $0x210] sm:$0xf]
  %v231 = vld [vmem:[%s1 + $0x214] sm:$0xf]
  %v232 = vld [vmem:[%s1 + $0x218] sm:$0xf]
  %v233 = vld [vmem:[%s1 + $0x21c] sm:$0xf]
  %v234 = vld [vmem:[%s1 + $0x220] sm:$0xf]
  %v235 = vld [vmem:[%s1 + $0x224] sm:$0xf]
  %v236 = vld [vmem:[%s1 + $0x228] sm:$0xf]
  %v237 = vld [vmem:[%s1 + $0x22c] sm:$0xf]
  %v238 = vld [vmem:[%s1 + $0x230] sm:$0xf]
  %v239 = vld [vmem:[%s1 + $0x234] sm:$0xf]
  %v240 = vld [vmem:[%s1 + $0x238] sm:$0xf]
  %v241 = vld [vmem:[%s1 + $0x23c] sm:$0xf]
  %v322 = vunpack.c.l.b16 %v18
  %v323 = vunpack.c.h.b16 %v18
  %v324 = vunpack.c.l.b16 %v19
  %v325 = vunpack.c.h.b16 %v19
  %v326 = vunpack.c.l.b16 %v20
  %v327 = vunpack.c.h.b16 %v20
  %v328 = vunpack.c.l.b16 %v21
  %v329 = vunpack.c.h.b16 %v21
  %v330 = vunpack.c.l.b16 %v22
  %v331 = vunpack.c.l.b16 %v23
  %v332 = vunpack.c.h.b16 %v23
  %v333 = vunpack.c.l.b16 %v24
  %v334 = vunpack.c.h.b16 %v24
  %v335 = vunpack.c.l.b16 %v25
  %v336 = vunpack.c.h.b16 %v25
  %v337 = vunpack.c.l.b16 %v26
  %v338 = vunpack.c.h.b16 %v26
  %v339 = vunpack.c.l.b16 %v27
  %v340 = vunpack.c.l.b16 %v28
  %v341 = vunpack.c.h.b16 %v28
  %v342 = vunpack.c.l.b16 %v29
  %v343 = vunpack.c.h.b16 %v29
  %v344 = vunpack.c.l.b16 %v30
  %v345 = vunpack.c.h.b16 %v30
  %v346 = vunpack.c.l.b16 %v31
  %v347 = vunpack.c.h.b16 %v31
  %v348 = vunpack.c.l.b16 %v32
  %v349 = vunpack.c.l.b16 %v33
  %v350 = vunpack.c.h.b16 %v33
  %v351 = vunpack.c.l.b16 %v34
  %v352 = vunpack.c.h.b16 %v34
  %v353 = vunpack.c.l.b16 %v35
  %v354 = vunpack.c.h.b16 %v35
  %v355 = vunpack.c.l.b16 %v36
  %v356 = vunpack.c.h.b16 %v36
  %v357 = vunpack.c.l.b16 %v37
  %v358 = vunpack.c.l.b16 %v38
  %v359 = vunpack.c.h.b16 %v38
  %v360 = vunpack.c.l.b16 %v39
  %v361 = vunpack.c.h.b16 %v39
  %v362 = vunpack.c.l.b16 %v40
  %v363 = vunpack.c.h.b16 %v40
  %v364 = vunpack.c.l.b16 %v41
  %v365 = vunpack.c.h.b16 %v41
  %v366 = vunpack.c.l.b16 %v42
  %v367 = vunpack.c.l.b16 %v43
  %v368 = vunpack.c.h.b16 %v43
  %v369 = vunpack.c.l.b16 %v44
  %v370 = vunpack.c.h.b16 %v44
  %v371 = vunpack.c.l.b16 %v45
  %v372 = vunpack.c.h.b16 %v45
  %v373 = vunpack.c.l.b16 %v46
  %v374 = vunpack.c.h.b16 %v46
  %v375 = vunpack.c.l.b16 %v47
  %v376 = vunpack.c.l.b16 %v48
  %v377 = vunpack.c.h.b16 %v48
  %v378 = vunpack.c.l.b16 %v49
  %v379 = vunpack.c.h.b16 %v49
  %v380 = vunpack.c.l.b16 %v50
  %v381 = vunpack.c.h.b16 %v50
  %v382 = vunpack.c.l.b16 %v51
  %v383 = vunpack.c.h.b16 %v51
  %v384 = vunpack.c.l.b16 %v52
  %v385 = vunpack.c.l.b16 %v53
  %v386 = vunpack.c.h.b16 %v53
  %v387 = vunpack.c.l.b16 %v54
  %v388 = vunpack.c.h.b16 %v54
  %v389 = vunpack.c.l.b16 %v55
  %v390 = vunpack.c.h.b16 %v55
  %v391 = vunpack.c.l.b16 %v56
  %v392 = vunpack.c.h.b16 %v56
  %v393 = vunpack.c.l.b16 %v57
  %v394 = vunpack.c.l.b16 %v58
  %v395 = vunpack.c.h.b16 %v58
  %v396 = vunpack.c.l.b16 %v59
  %v397 = vunpack.c.h.b16 %v59
  %v398 = vunpack.c.l.b16 %v60
  %v399 = vunpack.c.h.b16 %v60
  %v400 = vunpack.c.l.b16 %v61
  %v401 = vunpack.c.h.b16 %v61
  %v402 = vunpack.c.l.b16 %v62
  %v403 = vunpack.c.l.b16 %v63
  %v404 = vunpack.c.h.b16 %v63
  %v405 = vunpack.c.l.b16 %v64
  %v406 = vunpack.c.h.b16 %v64
  %v407 = vunpack.c.l.b16 %v65
  %v408 = vunpack.c.h.b16 %v65
  %v409 = vunpack.c.l.b16 %v66
  %v410 = vunpack.c.h.b16 %v66
  %v411 = vunpack.c.l.b16 %v67
  %v412 = vunpack.c.l.b16 %v68
  %v413 = vunpack.c.h.b16 %v68
  %v414 = vunpack.c.l.b16 %v69
  %v415 = vunpack.c.h.b16 %v69
  %v416 = vunpack.c.l.b16 %v70
  %v417 = vunpack.c.h.b16 %v70
  %v418 = vunpack.c.l.b16 %v71
  %v419 = vunpack.c.h.b16 %v71
  %v420 = vunpack.c.l.b16 %v72
  %v421 = vunpack.c.l.b16 %v73
  %v422 = vunpack.c.h.b16 %v73
  %v423 = vunpack.c.l.b16 %v74
  %v424 = vunpack.c.h.b16 %v74
  %v425 = vunpack.c.l.b16 %v75
  %v426 = vunpack.c.h.b16 %v75
  %v427 = vunpack.c.l.b16 %v76
  %v428 = vunpack.c.h.b16 %v76
  %v429 = vunpack.c.l.b16 %v77
  %v430 = vunpack.c.l.b16 %v78
  %v431 = vunpack.c.h.b16 %v78
  %v432 = vunpack.c.l.b16 %v79
  %v433 = vunpack.c.h.b16 %v79
  %v434 = vunpack.c.l.b16 %v80
  %v435 = vunpack.c.h.b16 %v80
  %v436 = vunpack.c.l.b16 %v81
  %v437 = vunpack.c.h.b16 %v81
  %v438 = vunpack.c.l.b16 %v82
  %v439 = vunpack.c.l.b16 %v83
  %v440 = vunpack.c.h.b16 %v83
  %v441 = vunpack.c.l.b16 %v84
  %v442 = vunpack.c.h.b16 %v84
  %v443 = vunpack.c.l.b16 %v85
  %v444 = vunpack.c.h.b16 %v85
  %v445 = vunpack.c.l.b16 %v86
  %v446 = vunpack.c.h.b16 %v86
  %v447 = vunpack.c.l.b16 %v87
  %v448 = vunpack.c.l.b16 %v88
  %v449 = vunpack.c.h.b16 %v88
  %v450 = vunpack.c.l.b16 %v89
  %v451 = vunpack.c.h.b16 %v89
  %v452 = vunpack.c.l.b16 %v90
  %v453 = vunpack.c.h.b16 %v90
  %v454 = vunpack.c.l.b16 %v91
  %v455 = vunpack.c.h.b16 %v91
  %v456 = vunpack.c.l.b16 %v92
  %v457 = vunpack.c.l.b16 %v93
  %v458 = vunpack.c.h.b16 %v93
  %v459 = vunpack.c.l.b16 %v94
  %v460 = vunpack.c.h.b16 %v94
  %v461 = vunpack.c.l.b16 %v95
  %v462 = vunpack.c.h.b16 %v95
  %v463 = vunpack.c.l.b16 %v96
  %v464 = vunpack.c.h.b16 %v96
  %v465 = vunpack.c.l.b16 %v97
  %v466 = vpack.c.b16 %v331, %v322
  %v467 = vpack.c.b16 %v332, %v323
  %v468 = vpack.c.b16 %v333, %v324
  %v469 = vpack.c.b16 %v334, %v325
  %v470 = vpack.c.b16 %v335, %v326
  %v471 = vpack.c.b16 %v336, %v327
  %v472 = vpack.c.b16 %v337, %v328
  %v473 = vpack.c.b16 %v338, %v329
  %v474 = vpack.c.b16 %v339, %v330
  %v475 = vpack.c.b16 %v349, %v340
  %v476 = vpack.c.b16 %v350, %v341
  %v477 = vpack.c.b16 %v351, %v342
  %v478 = vpack.c.b16 %v352, %v343
  %v479 = vpack.c.b16 %v353, %v344
  %v480 = vpack.c.b16 %v354, %v345
  %v481 = vpack.c.b16 %v355, %v346
  %v482 = vpack.c.b16 %v356, %v347
  %v483 = vpack.c.b16 %v357, %v348
  %v484 = vpack.c.b16 %v367, %v358
  %v485 = vpack.c.b16 %v368, %v359
  %v486 = vpack.c.b16 %v369, %v360
  %v487 = vpack.c.b16 %v370, %v361
  %v488 = vpack.c.b16 %v371, %v362
  %v489 = vpack.c.b16 %v372, %v363
  %v490 = vpack.c.b16 %v373, %v364
  %v491 = vpack.c.b16 %v374, %v365
  %v492 = vpack.c.b16 %v375, %v366
  %v493 = vpack.c.b16 %v385, %v376
  %v494 = vpack.c.b16 %v386, %v377
  %v495 = vpack.c.b16 %v387, %v378
  %v496 = vpack.c.b16 %v388, %v379
  %v497 = vpack.c.b16 %v389, %v380
  %v498 = vpack.c.b16 %v390, %v381
  %v499 = vpack.c.b16 %v391, %v382
  %v500 = vpack.c.b16 %v392, %v383
  %v501 = vpack.c.b16 %v393, %v384
  %v502 = vpack.c.b16 %v403, %v394
  %v503 = vpack.c.b16 %v404, %v395
  %v504 = vpack.c.b16 %v405, %v396
  %v505 = vpack.c.b16 %v406, %v397
  %v506 = vpack.c.b16 %v407, %v398
  %v507 = vpack.c.b16 %v408, %v399
  %v508 = vpack.c.b16 %v409, %v400
  %v509 = vpack.c.b16 %v410, %v401
  %v510 = vpack.c.b16 %v411, %v402
  %v511 = vpack.c.b16 %v421, %v412
  %v512 = vpack.c.b16 %v422, %v413
  %v513 = vpack.c.b16 %v423, %v414
  %v514 = vpack.c.b16 %v424, %v415
  %v515 = vpack.c.b16 %v425, %v416
  %v516 = vpack.c.b16 %v426, %v417
  %v517 = vpack.c.b16 %v427, %v418
  %v518 = vpack.c.b16 %v428, %v419
  %v519 = vpack.c.b16 %v429, %v420
  %v520 = vpack.c.b16 %v439, %v430
  %v521 = vpack.c.b16 %v440, %v431
  %v522 = vpack.c.b16 %v441, %v432
  %v523 = vpack.c.b16 %v442, %v433
  %v524 = vpack.c.b16 %v443, %v434
  %v525 = vpack.c.b16 %v444, %v435
  %v526 = vpack.c.b16 %v445, %v436
  %v527 = vpack.c.b16 %v446, %v437
  %v528 = vpack.c.b16 %v447, %v438
  %v529 = vpack.c.b16 %v457, %v448
  %v530 = vpack.c.b16 %v458, %v449
  %v531 = vpack.c.b16 %v459, %v450
  %v532 = vpack.c.b16 %v460, %v451
  %v533 = vpack.c.b16 %v461, %v452
  %v534 = vpack.c.b16 %v462, %v453
  %v535 = vpack.c.b16 %v463, %v454
  %v536 = vpack.c.b16 %v464, %v455
  %v537 = vpack.c.b16 %v465, %v456
  %v754 = vunpack.c.l.b16 %v98
  %v755 = vunpack.c.l.b16 %v99
  %v756 = vunpack.c.l.b16 %v100
  %v757 = vunpack.c.l.b16 %v101
  %v758 = vunpack.c.l.b16 %v102
  %v759 = vunpack.c.l.b16 %v103
  %v760 = vunpack.c.l.b16 %v104
  %v761 = vunpack.c.l.b16 %v105
  %v762 = vunpack.c.l.b16 %v106
  %v763 = vunpack.c.l.b16 %v107
  %v764 = vunpack.c.l.b16 %v108
  %v765 = vunpack.c.l.b16 %v109
  %v766 = vunpack.c.l.b16 %v110
  %v767 = vunpack.c.l.b16 %v111
  %v768 = vunpack.c.l.b16 %v112
  %v769 = vunpack.c.l.b16 %v113
  %v770 = vunpack.c.l.b16 %v114
  %v771 = vunpack.c.l.b16 %v115
  %v772 = vunpack.c.l.b16 %v116
  %v773 = vunpack.c.l.b16 %v117
  %v774 = vunpack.c.l.b16 %v118
  %v775 = vunpack.c.l.b16 %v119
  %v776 = vunpack.c.l.b16 %v120
  %v777 = vunpack.c.l.b16 %v121
  %v778 = vunpack.c.l.b16 %v122
  %v779 = vunpack.c.l.b16 %v123
  %v780 = vunpack.c.l.b16 %v124
  %v781 = vunpack.c.l.b16 %v125
  %v782 = vunpack.c.l.b16 %v126
  %v783 = vunpack.c.l.b16 %v127
  %v784 = vunpack.c.l.b16 %v128
  %v785 = vunpack.c.l.b16 %v129
  %v786 = vunpack.c.l.b16 %v130
  %v787 = vunpack.c.l.b16 %v131
  %v788 = vunpack.c.l.b16 %v132
  %v789 = vunpack.c.l.b16 %v133
  %v790 = vunpack.c.l.b16 %v134
  %v791 = vunpack.c.l.b16 %v135
  %v792 = vunpack.c.l.b16 %v136
  %v793 = vunpack.c.l.b16 %v137
  %v794 = vunpack.c.l.b16 %v138
  %v795 = vunpack.c.l.b16 %v139
  %v796 = vunpack.c.l.b16 %v140
  %v797 = vunpack.c.l.b16 %v141
  %v798 = vunpack.c.l.b16 %v142
  %v799 = vunpack.c.l.b16 %v143
  %v800 = vunpack.c.l.b16 %v144
  %v801 = vunpack.c.l.b16 %v145
  %v802 = vunpack.c.l.b16 %v146
  %v803 = vunpack.c.l.b16 %v147
  %v804 = vunpack.c.l.b16 %v148
  %v805 = vunpack.c.l.b16 %v149
  %v806 = vunpack.c.l.b16 %v150
  %v807 = vunpack.c.l.b16 %v151
  %v808 = vunpack.c.l.b16 %v152
  %v809 = vunpack.c.l.b16 %v153
  %v810 = vunpack.c.l.b16 %v154
  %v811 = vunpack.c.l.b16 %v155
  %v812 = vunpack.c.l.b16 %v156
  %v813 = vunpack.c.l.b16 %v157
  %v814 = vunpack.c.l.b16 %v158
  %v815 = vunpack.c.l.b16 %v159
  %v816 = vunpack.c.l.b16 %v160
  %v817 = vunpack.c.l.b16 %v161
  %v818 = vunpack.c.l.b16 %v162
  %v819 = vunpack.c.l.b16 %v163
  %v820 = vunpack.c.l.b16 %v164
  %v821 = vunpack.c.l.b16 %v165
  %v822 = vunpack.c.l.b16 %v166
  %v823 = vunpack.c.l.b16 %v167
  %v824 = vunpack.c.l.b16 %v168
  %v825 = vunpack.c.l.b16 %v169
  %v826 = vunpack.c.l.b16 %v170
  %v827 = vunpack.c.l.b16 %v171
  %v828 = vunpack.c.l.b16 %v172
  %v829 = vunpack.c.l.b16 %v173
  %v830 = vunpack.c.l.b16 %v174
  %v831 = vunpack.c.l.b16 %v175
  %v832 = vunpack.c.l.b16 %v176
  %v833 = vunpack.c.l.b16 %v177
  %v834 = vunpack.c.l.b16 %v178
  %v835 = vunpack.c.l.b16 %v179
  %v836 = vunpack.c.l.b16 %v180
  %v837 = vunpack.c.l.b16 %v181
  %v838 = vunpack.c.l.b16 %v182
  %v839 = vunpack.c.l.b16 %v183
  %v840 = vunpack.c.l.b16 %v184
  %v841 = vunpack.c.l.b16 %v185
  %v842 = vunpack.c.l.b16 %v186
  %v843 = vunpack.c.l.b16 %v187
  %v844 = vunpack.c.l.b16 %v188
  %v845 = vunpack.c.l.b16 %v189
  %v846 = vunpack.c.l.b16 %v190
  %v847 = vunpack.c.l.b16 %v191
  %v848 = vunpack.c.l.b16 %v192
  %v849 = vunpack.c.l.b16 %v193
  %v850 = vunpack.c.l.b16 %v194
  %v851 = vunpack.c.l.b16 %v195
  %v852 = vunpack.c.l.b16 %v196
  %v853 = vunpack.c.l.b16 %v197
  %v854 = vunpack.c.l.b16 %v198
  %v855 = vunpack.c.l.b16 %v199
  %v856 = vunpack.c.l.b16 %v200
  %v857 = vunpack.c.l.b16 %v201
  %v858 = vunpack.c.l.b16 %v202
  %v859 = vunpack.c.l.b16 %v203
  %v860 = vunpack.c.l.b16 %v204
  %v861 = vunpack.c.l.b16 %v205
  %v862 = vunpack.c.l.b16 %v206
  %v863 = vunpack.c.l.b16 %v207
  %v864 = vunpack.c.l.b16 %v208
  %v865 = vunpack.c.l.b16 %v209
  %v866 = vunpack.c.l.b16 %v210
  %v867 = vunpack.c.l.b16 %v211
  %v868 = vunpack.c.l.b16 %v212
  %v869 = vunpack.c.l.b16 %v213
  %v870 = vunpack.c.l.b16 %v214
  %v871 = vunpack.c.l.b16 %v215
  %v872 = vunpack.c.l.b16 %v216
  %v873 = vunpack.c.l.b16 %v217
  %v874 = vunpack.c.l.b16 %v218
  %v875 = vunpack.c.l.b16 %v219
  %v876 = vunpack.c.l.b16 %v220
  %v877 = vunpack.c.l.b16 %v221
  %v878 = vunpack.c.l.b16 %v222
  %v879 = vunpack.c.l.b16 %v223
  %v880 = vunpack.c.l.b16 %v224
  %v881 = vunpack.c.l.b16 %v225
  %v882 = vunpack.c.l.b16 %v226
  %v883 = vunpack.c.l.b16 %v227
  %v884 = vunpack.c.l.b16 %v228
  %v885 = vunpack.c.l.b16 %v229
  %v886 = vunpack.c.l.b16 %v230
  %v887 = vunpack.c.l.b16 %v231
  %v888 = vunpack.c.l.b16 %v232
  %v889 = vunpack.c.l.b16 %v233
  %v890 = vunpack.c.l.b16 %v234
  %v891 = vunpack.c.l.b16 %v235
  %v892 = vunpack.c.l.b16 %v236
  %v893 = vunpack.c.l.b16 %v237
  %v894 = vunpack.c.l.b16 %v238
  %v895 = vunpack.c.l.b16 %v239
  %v896 = vunpack.c.l.b16 %v240
  %v897 = vunpack.c.l.b16 %v241
  %v898 = vpack.c.b16 %v755, %v754
  %v899 = vpack.c.b16 %v757, %v756
  %v900 = vpack.c.b16 %v759, %v758
  %v901 = vpack.c.b16 %v761, %v760
  %v902 = vpack.c.b16 %v763, %v762
  %v903 = vpack.c.b16 %v765, %v764
  %v904 = vpack.c.b16 %v767, %v766
  %v905 = vpack.c.b16 %v769, %v768
  %v906 = vpack.c.b16 %v771, %v770
  %v907 = vpack.c.b16 %v773, %v772
  %v908 = vpack.c.b16 %v775, %v774
  %v909 = vpack.c.b16 %v777, %v776
  %v910 = vpack.c.b16 %v779, %v778
  %v911 = vpack.c.b16 %v781, %v780
  %v912 = vpack.c.b16 %v783, %v782
  %v913 = vpack.c.b16 %v785, %v784
  %v914 = vpack.c.b16 %v787, %v786
  %v915 = vpack.c.b16 %v789, %v788
  %v916 = vpack.c.b16 %v791, %v790
  %v917 = vpack.c.b16 %v793, %v792
  %v918 = vpack.c.b16 %v795, %v794
  %v919 = vpack.c.b16 %v797, %v796
  %v920 = vpack.c.b16 %v799, %v798
  %v921 = vpack.c.b16 %v801, %v800
  %v922 = vpack.c.b16 %v803, %v802
  %v923 = vpack.c.b16 %v805, %v804
  %v924 = vpack.c.b16 %v807, %v806
  %v925 = vpack.c.b16 %v809, %v808
  %v926 = vpack.c.b16 %v811, %v810
  %v927 = vpack.c.b16 %v813, %v812
  %v928 = vpack.c.b16 %v815, %v814
  %v929 = vpack.c.b16 %v817, %v816
  %v930 = vpack.c.b16 %v819, %v818
  %v931 = vpack.c.b16 %v821, %v820
  %v932 = vpack.c.b16 %v823, %v822
  %v933 = vpack.c.b16 %v825, %v824
  %v934 = vpack.c.b16 %v827, %v826
  %v935 = vpack.c.b16 %v829, %v828
  %v936 = vpack.c.b16 %v831, %v830
  %v937 = vpack.c.b16 %v833, %v832
  %v938 = vpack.c.b16 %v835, %v834
  %v939 = vpack.c.b16 %v837, %v836
  %v940 = vpack.c.b16 %v839, %v838
  %v941 = vpack.c.b16 %v841, %v840
  %v942 = vpack.c.b16 %v843, %v842
  %v943 = vpack.c.b16 %v845, %v844
  %v944 = vpack.c.b16 %v847, %v846
  %v945 = vpack.c.b16 %v849, %v848
  %v946 = vpack.c.b16 %v851, %v850
  %v947 = vpack.c.b16 %v853, %v852
  %v948 = vpack.c.b16 %v855, %v854
  %v949 = vpack.c.b16 %v857, %v856
  %v950 = vpack.c.b16 %v859, %v858
  %v951 = vpack.c.b16 %v861, %v860
  %v952 = vpack.c.b16 %v863, %v862
  %v953 = vpack.c.b16 %v865, %v864
  %v954 = vpack.c.b16 %v867, %v866
  %v955 = vpack.c.b16 %v869, %v868
  %v956 = vpack.c.b16 %v871, %v870
  %v957 = vpack.c.b16 %v873, %v872
  %v958 = vpack.c.b16 %v875, %v874
  %v959 = vpack.c.b16 %v877, %v876
  %v960 = vpack.c.b16 %v879, %v878
  %v961 = vpack.c.b16 %v881, %v880
  %v962 = vpack.c.b16 %v883, %v882
  %v963 = vpack.c.b16 %v885, %v884
  %v964 = vpack.c.b16 %v887, %v886
  %v965 = vpack.c.b16 %v889, %v888
  %v966 = vpack.c.b16 %v891, %v890
  %v967 = vpack.c.b16 %v893, %v892
  %v968 = vpack.c.b16 %v895, %v894
  %v969 = vpack.c.b16 %v897, %v896
  %1042 = vmatprep.subr.bf16.mxu0 0
  %1043 = vmatpush1.bf16.msra.mxu0 %v905
  %1044 = vmatprep.subr.bf16.mxu0 0
  %1045 = vmatpush1.bf16.msra.mxu0 %v904
  %1046 = vmatprep.subr.bf16.mxu0 0
  %1047 = vmatpush1.bf16.msra.mxu0 %v903
  %1048 = vmatprep.subr.bf16.mxu0 0
  %1049 = vmatpush1.bf16.msra.mxu0 %v902
  %1050 = vmatprep.subr.bf16.mxu0 0
  %1051 = vmatpush1.bf16.msra.mxu0 %v901
  %1052 = vmatprep.subr.bf16.mxu0 0
  %1053 = vmatpush1.bf16.msra.mxu0 %v900
  %1054 = vmatprep.subr.bf16.mxu0 0
  %1055 = vmatpush1.bf16.msra.mxu0 %v899
  %1056 = vmatprep.subr.bf16.mxu0 0
  %1057 = vmatpush1.bf16.msra.mxu0 %v898
  %1058 = vmatprep.subr.bf16.mxu0 0
  %1059 = vmatpush2.bf16.msra.mxu0 %v913
  %1060 = vmatprep.subr.bf16.mxu0 0
  %1061 = vmatpush2.bf16.msra.mxu0 %v912
  %1062 = vmatprep.subr.bf16.mxu0 0
  %1063 = vmatpush2.bf16.msra.mxu0 %v911
  %1064 = vmatprep.subr.bf16.mxu0 0
  %1065 = vmatpush2.bf16.msra.mxu0 %v910
  %1066 = vmatprep.subr.bf16.mxu0 0
  %1067 = vmatpush2.bf16.msra.mxu0 %v909
  %1068 = vmatprep.subr.bf16.mxu0 0
  %1069 = vmatpush2.bf16.msra.mxu0 %v908
  %1070 = vmatprep.subr.bf16.mxu0 0
  %1071 = vmatpush2.bf16.msra.mxu0 %v907
  %1072 = vmatprep.subr.bf16.mxu0 0
  %1073 = vmatpush2.bf16.msra.mxu0 %v906
  %1074 = vmatprep.mubr.bf16.mxu0 %v467
  %1075 = vmatmul.mubr.bf16.gmra.mxu0 %v466
  %v1076 = vpop.f32.mrf.mxu0
  %v1077 = vadd.f32 0.0, %v1076
  %v1078 = vpop.f32.mrf.mxu0
  %v1079 = vpop.f32.mrf.mxu0
  %v1080 = vadd.f32 0.0, %v1079
  %v1081 = vpop.f32.mrf.mxu0
  %1082 = vmatprep.mubr.bf16.mxu0 %v476
  %1083 = vmatmul.mubr.bf16.gmra.mxu0 %v475
  %v1084 = vpop.f32.mrf.mxu0
  %v1085 = vadd.f32 0.0, %v1084
  %v1086 = vpop.f32.mrf.mxu0
  %v1087 = vpop.f32.mrf.mxu0
  %v1088 = vadd.f32 0.0, %v1087
  %v1089 = vpop.f32.mrf.mxu0
  %1090 = vmatprep.mubr.bf16.mxu0 %v485
  %1091 = vmatmul.mubr.bf16.gmra.mxu0 %v484
  %v1092 = vpop.f32.mrf.mxu0
  %v1093 = vadd.f32 0.0, %v1092
  %v1094 = vpop.f32.mrf.mxu0
  %v1095 = vpop.f32.mrf.mxu0
  %v1096 = vadd.f32 0.0, %v1095
  %v1097 = vpop.f32.mrf.mxu0
  %1098 = vmatprep.mubr.bf16.mxu0 %v494
  %1099 = vmatmul.mubr.bf16.gmra.mxu0 %v493
  %v1100 = vpop.f32.mrf.mxu0
  %v1101 = vadd.f32 0.0, %v1100
  %v1102 = vpop.f32.mrf.mxu0
  %v1103 = vpop.f32.mrf.mxu0
  %v1104 = vadd.f32 0.0, %v1103
  %v1105 = vpop.f32.mrf.mxu0
  %1106 = vmatprep.mubr.bf16.mxu0 %v503
  %1107 = vmatmul.mubr.bf16.gmra.mxu0 %v502
  %v1108 = vpop.f32.mrf.mxu0
  %v1109 = vadd.f32 0.0, %v1108
  %v1110 = vpop.f32.mrf.mxu0
  %v1111 = vpop.f32.mrf.mxu0
  %v1112 = vadd.f32 0.0, %v1111
  %v1113 = vpop.f32.mrf.mxu0
  %1114 = vmatprep.mubr.bf16.mxu0 %v512
  %1115 = vmatmul.mubr.bf16.gmra.mxu0 %v511
  %v1116 = vpop.f32.mrf.mxu0
  %v1117 = vadd.f32 0.0, %v1116
  %v1118 = vpop.f32.mrf.mxu0
  %v1119 = vpop.f32.mrf.mxu0
  %v1120 = vadd.f32 0.0, %v1119
  %v1121 = vpop.f32.mrf.mxu0
  %1122 = vmatprep.mubr.bf16.mxu0 %v521
  %1123 = vmatmul.mubr.bf16.gmra.mxu0 %v520
  %v1124 = vpop.f32.mrf.mxu0
  %v1125 = vadd.f32 0.0, %v1124
  %v1126 = vpop.f32.mrf.mxu0
  %v1127 = vpop.f32.mrf.mxu0
  %v1128 = vadd.f32 0.0, %v1127
  %v1129 = vpop.f32.mrf.mxu0
  %1130 = vmatprep.mubr.bf16.mxu0 %v530
  %1131 = vmatmul.mubr.bf16.gmra.mxu0 %v529
  %v1132 = vpop.f32.mrf.mxu0
  %v1133 = vadd.f32 0.0, %v1132
  %v1134 = vpop.f32.mrf.mxu0
  %v1135 = vpop.f32.mrf.mxu0
  %v1136 = vadd.f32 0.0, %v1135
  %v1137 = vpop.f32.mrf.mxu0
  %1138 = vdwg.mxu0
  %1139 = vmatprep.subr.bf16.mxu0 0
  %1140 = vmatpush1.bf16.msra.mxu0 %v921
  %1141 = vmatprep.subr.bf16.mxu0 0
  %1142 = vmatpush1.bf16.msra.mxu0 %v920
  %1143 = vmatprep.subr.bf16.mxu0 0
  %1144 = vmatpush1.bf16.msra.mxu0 %v919
  %1145 = vmatprep.subr.bf16.mxu0 0
  %1146 = vmatpush1.bf16.msra.mxu0 %v918
  %1147 = vmatprep.subr.bf16.mxu0 0
  %1148 = vmatpush1.bf16.msra.mxu0 %v917
  %1149 = vmatprep.subr.bf16.mxu0 0
  %1150 = vmatpush1.bf16.msra.mxu0 %v916
  %1151 = vmatprep.subr.bf16.mxu0 0
  %1152 = vmatpush1.bf16.msra.mxu0 %v915
  %1153 = vmatprep.subr.bf16.mxu0 0
  %1154 = vmatpush1.bf16.msra.mxu0 %v914
  %1155 = vmatprep.subr.bf16.mxu0 0
  %1156 = vmatpush2.bf16.msra.mxu0 %v929
  %1157 = vmatprep.subr.bf16.mxu0 0
  %1158 = vmatpush2.bf16.msra.mxu0 %v928
  %1159 = vmatprep.subr.bf16.mxu0 0
  %1160 = vmatpush2.bf16.msra.mxu0 %v927
  %1161 = vmatprep.subr.bf16.mxu0 0
  %1162 = vmatpush2.bf16.msra.mxu0 %v926
  %1163 = vmatprep.subr.bf16.mxu0 0
  %1164 = vmatpush2.bf16.msra.mxu0 %v925
  %1165 = vmatprep.subr.bf16.mxu0 0
  %1166 = vmatpush2.bf16.msra.mxu0 %v924
  %1167 = vmatprep.subr.bf16.mxu0 0
  %1168 = vmatpush2.bf16.msra.mxu0 %v923
  %1169 = vmatprep.subr.bf16.mxu0 0
  %1170 = vmatpush2.bf16.msra.mxu0 %v922
  %1171 = vmatprep.mubr.bf16.mxu0 %v469
  %1172 = vmatmul.mubr.bf16.gmra.mxu0 %v468
  %v1173 = vpop.f32.mrf.mxu0
  %v1174 = vadd.f32 %v1077, %v1173
  %v1175 = vpop.f32.mrf.mxu0
  %v1176 = vpop.f32.mrf.mxu0
  %v1177 = vadd.f32 %v1080, %v1176
  %v1178 = vpop.f32.mrf.mxu0
  %1179 = vmatprep.mubr.bf16.mxu0 %v478
  %1180 = vmatmul.mubr.bf16.gmra.mxu0 %v477
  %v1181 = vpop.f32.mrf.mxu0
  %v1182 = vadd.f32 %v1085, %v1181
  %v1183 = vpop.f32.mrf.mxu0
  %v1184 = vpop.f32.mrf.mxu0
  %v1185 = vadd.f32 %v1088, %v1184
  %v1186 = vpop.f32.mrf.mxu0
  %1187 = vmatprep.mubr.bf16.mxu0 %v487
  %1188 = vmatmul.mubr.bf16.gmra.mxu0 %v486
  %v1189 = vpop.f32.mrf.mxu0
  %v1190 = vadd.f32 %v1093, %v1189
  %v1191 = vpop.f32.mrf.mxu0
  %v1192 = vpop.f32.mrf.mxu0
  %v1193 = vadd.f32 %v1096, %v1192
  %v1194 = vpop.f32.mrf.mxu0
  %1195 = vmatprep.mubr.bf16.mxu0 %v496
  %1196 = vmatmul.mubr.bf16.gmra.mxu0 %v495
  %v1197 = vpop.f32.mrf.mxu0
  %v1198 = vadd.f32 %v1101, %v1197
  %v1199 = vpop.f32.mrf.mxu0
  %v1200 = vpop.f32.mrf.mxu0
  %v1201 = vadd.f32 %v1104, %v1200
  %v1202 = vpop.f32.mrf.mxu0
  %1203 = vmatprep.mubr.bf16.mxu0 %v505
  %1204 = vmatmul.mubr.bf16.gmra.mxu0 %v504
  %v1205 = vpop.f32.mrf.mxu0
  %v1206 = vadd.f32 %v1109, %v1205
  %v1207 = vpop.f32.mrf.mxu0
  %v1208 = vpop.f32.mrf.mxu0
  %v1209 = vadd.f32 %v1112, %v1208
  %v1210 = vpop.f32.mrf.mxu0
  %1211 = vmatprep.mubr.bf16.mxu0 %v514
  %1212 = vmatmul.mubr.bf16.gmra.mxu0 %v513
  %v1213 = vpop.f32.mrf.mxu0
  %v1214 = vadd.f32 %v1117, %v1213
  %v1215 = vpop.f32.mrf.mxu0
  %v1216 = vpop.f32.mrf.mxu0
  %v1217 = vadd.f32 %v1120, %v1216
  %v1218 = vpop.f32.mrf.mxu0
  %1219 = vmatprep.mubr.bf16.mxu0 %v523
  %1220 = vmatmul.mubr.bf16.gmra.mxu0 %v522
  %v1221 = vpop.f32.mrf.mxu0
  %v1222 = vadd.f32 %v1125, %v1221
  %v1223 = vpop.f32.mrf.mxu0
  %v1224 = vpop.f32.mrf.mxu0
  %v1225 = vadd.f32 %v1128, %v1224
  %v1226 = vpop.f32.mrf.mxu0
  %1227 = vmatprep.mubr.bf16.mxu0 %v532
  %1228 = vmatmul.mubr.bf16.gmra.mxu0 %v531
  %v1229 = vpop.f32.mrf.mxu0
  %v1230 = vadd.f32 %v1133, %v1229
  %v1231 = vpop.f32.mrf.mxu0
  %v1232 = vpop.f32.mrf.mxu0
  %v1233 = vadd.f32 %v1136, %v1232
  %v1234 = vpop.f32.mrf.mxu0
  %1235 = vdwg.mxu0
  %1236 = vmatprep.subr.bf16.mxu0 0
  %1237 = vmatpush1.bf16.msra.mxu0 %v937
  %1238 = vmatprep.subr.bf16.mxu0 0
  %1239 = vmatpush1.bf16.msra.mxu0 %v936
  %1240 = vmatprep.subr.bf16.mxu0 0
  %1241 = vmatpush1.bf16.msra.mxu0 %v935
  %1242 = vmatprep.subr.bf16.mxu0 0
  %1243 = vmatpush1.bf16.msra.mxu0 %v934
  %1244 = vmatprep.subr.bf16.mxu0 0
  %1245 = vmatpush1.bf16.msra.mxu0 %v933
  %1246 = vmatprep.subr.bf16.mxu0 0
  %1247 = vmatpush1.bf16.msra.mxu0 %v932
  %1248 = vmatprep.subr.bf16.mxu0 0
  %1249 = vmatpush1.bf16.msra.mxu0 %v931
  %1250 = vmatprep.subr.bf16.mxu0 0
  %1251 = vmatpush1.bf16.msra.mxu0 %v930
  %1252 = vmatprep.subr.bf16.mxu0 0
  %1253 = vmatpush2.bf16.msra.mxu0 %v945
  %1254 = vmatprep.subr.bf16.mxu0 0
  %1255 = vmatpush2.bf16.msra.mxu0 %v944
  %1256 = vmatprep.subr.bf16.mxu0 0
  %1257 = vmatpush2.bf16.msra.mxu0 %v943
  %1258 = vmatprep.subr.bf16.mxu0 0
  %1259 = vmatpush2.bf16.msra.mxu0 %v942
  %1260 = vmatprep.subr.bf16.mxu0 0
  %1261 = vmatpush2.bf16.msra.mxu0 %v941
  %1262 = vmatprep.subr.bf16.mxu0 0
  %1263 = vmatpush2.bf16.msra.mxu0 %v940
  %1264 = vmatprep.subr.bf16.mxu0 0
  %1265 = vmatpush2.bf16.msra.mxu0 %v939
  %1266 = vmatprep.subr.bf16.mxu0 0
  %1267 = vmatpush2.bf16.msra.mxu0 %v938
  %1268 = vmatprep.mubr.bf16.mxu0 %v471
  %1269 = vmatmul.mubr.bf16.gmra.mxu0 %v470
  %v1270 = vpop.f32.mrf.mxu0
  %v1271 = vadd.f32 %v1174, %v1270
  %v1272 = vpop.f32.mrf.mxu0
  %v1273 = vpop.f32.mrf.mxu0
  %v1274 = vadd.f32 %v1177, %v1273
  %v1275 = vpop.f32.mrf.mxu0
  %1276 = vmatprep.mubr.bf16.mxu0 %v480
  %1277 = vmatmul.mubr.bf16.gmra.mxu0 %v479
  %v1278 = vpop.f32.mrf.mxu0
  %v1279 = vadd.f32 %v1182, %v1278
  %v1280 = vpop.f32.mrf.mxu0
  %v1281 = vpop.f32.mrf.mxu0
  %v1282 = vadd.f32 %v1185, %v1281
  %v1283 = vpop.f32.mrf.mxu0
  %1284 = vmatprep.mubr.bf16.mxu0 %v489
  %1285 = vmatmul.mubr.bf16.gmra.mxu0 %v488
  %v1286 = vpop.f32.mrf.mxu0
  %v1287 = vadd.f32 %v1190, %v1286
  %v1288 = vpop.f32.mrf.mxu0
  %v1289 = vpop.f32.mrf.mxu0
  %v1290 = vadd.f32 %v1193, %v1289
  %v1291 = vpop.f32.mrf.mxu0
  %1292 = vmatprep.mubr.bf16.mxu0 %v498
  %1293 = vmatmul.mubr.bf16.gmra.mxu0 %v497
  %v1294 = vpop.f32.mrf.mxu0
  %v1295 = vadd.f32 %v1198, %v1294
  %v1296 = vpop.f32.mrf.mxu0
  %v1297 = vpop.f32.mrf.mxu0
  %v1298 = vadd.f32 %v1201, %v1297
  %v1299 = vpop.f32.mrf.mxu0
  %1300 = vmatprep.mubr.bf16.mxu0 %v507
  %1301 = vmatmul.mubr.bf16.gmra.mxu0 %v506
  %v1302 = vpop.f32.mrf.mxu0
  %v1303 = vadd.f32 %v1206, %v1302
  %v1304 = vpop.f32.mrf.mxu0
  %v1305 = vpop.f32.mrf.mxu0
  %v1306 = vadd.f32 %v1209, %v1305
  %v1307 = vpop.f32.mrf.mxu0
  %1308 = vmatprep.mubr.bf16.mxu0 %v516
  %1309 = vmatmul.mubr.bf16.gmra.mxu0 %v515
  %v1310 = vpop.f32.mrf.mxu0
  %v1311 = vadd.f32 %v1214, %v1310
  %v1312 = vpop.f32.mrf.mxu0
  %v1313 = vpop.f32.mrf.mxu0
  %v1314 = vadd.f32 %v1217, %v1313
  %v1315 = vpop.f32.mrf.mxu0
  %1316 = vmatprep.mubr.bf16.mxu0 %v525
  %1317 = vmatmul.mubr.bf16.gmra.mxu0 %v524
  %v1318 = vpop.f32.mrf.mxu0
  %v1319 = vadd.f32 %v1222, %v1318
  %v1320 = vpop.f32.mrf.mxu0
  %v1321 = vpop.f32.mrf.mxu0
  %v1322 = vadd.f32 %v1225, %v1321
  %v1323 = vpop.f32.mrf.mxu0
  %1324 = vmatprep.mubr.bf16.mxu0 %v534
  %1325 = vmatmul.mubr.bf16.gmra.mxu0 %v533
  %v1326 = vpop.f32.mrf.mxu0
  %v1327 = vadd.f32 %v1230, %v1326
  %v1328 = vpop.f32.mrf.mxu0
  %v1329 = vpop.f32.mrf.mxu0
  %v1330 = vadd.f32 %v1233, %v1329
  %v1331 = vpop.f32.mrf.mxu0
  %1332 = vdwg.mxu0
  %1333 = vmatprep.subr.bf16.mxu0 0
  %1334 = vmatpush1.bf16.msra.mxu0 %v953
  %1335 = vmatprep.subr.bf16.mxu0 0
  %1336 = vmatpush1.bf16.msra.mxu0 %v952
  %1337 = vmatprep.subr.bf16.mxu0 0
  %1338 = vmatpush1.bf16.msra.mxu0 %v951
  %1339 = vmatprep.subr.bf16.mxu0 0
  %1340 = vmatpush1.bf16.msra.mxu0 %v950
  %1341 = vmatprep.subr.bf16.mxu0 0
  %1342 = vmatpush1.bf16.msra.mxu0 %v949
  %1343 = vmatprep.subr.bf16.mxu0 0
  %1344 = vmatpush1.bf16.msra.mxu0 %v948
  %1345 = vmatprep.subr.bf16.mxu0 0
  %1346 = vmatpush1.bf16.msra.mxu0 %v947
  %1347 = vmatprep.subr.bf16.mxu0 0
  %1348 = vmatpush1.bf16.msra.mxu0 %v946
  %1349 = vmatprep.subr.bf16.mxu0 0
  %1350 = vmatpush2.bf16.msra.mxu0 %v961
  %1351 = vmatprep.subr.bf16.mxu0 0
  %1352 = vmatpush2.bf16.msra.mxu0 %v960
  %1353 = vmatprep.subr.bf16.mxu0 0
  %1354 = vmatpush2.bf16.msra.mxu0 %v959
  %1355 = vmatprep.subr.bf16.mxu0 0
  %1356 = vmatpush2.bf16.msra.mxu0 %v958
  %1357 = vmatprep.subr.bf16.mxu0 0
  %1358 = vmatpush2.bf16.msra.mxu0 %v957
  %1359 = vmatprep.subr.bf16.mxu0 0
  %1360 = vmatpush2.bf16.msra.mxu0 %v956
  %1361 = vmatprep.subr.bf16.mxu0 0
  %1362 = vmatpush2.bf16.msra.mxu0 %v955
  %1363 = vmatprep.subr.bf16.mxu0 0
  %1364 = vmatpush2.bf16.msra.mxu0 %v954
  %1365 = vmatprep.mubr.bf16.mxu0 %v473
  %1366 = vmatmul.mubr.bf16.gmra.mxu0 %v472
  %v1367 = vpop.f32.mrf.mxu0
  %v1368 = vadd.f32 %v1271, %v1367
  %v1369 = vpop.f32.mrf.mxu0
  %v1370 = vpop.f32.mrf.mxu0
  %v1371 = vadd.f32 %v1274, %v1370
  %v1372 = vpop.f32.mrf.mxu0
  %1373 = vmatprep.mubr.bf16.mxu0 %v482
  %1374 = vmatmul.mubr.bf16.gmra.mxu0 %v481
  %v1375 = vpop.f32.mrf.mxu0
  %v1376 = vadd.f32 %v1279, %v1375
  %v1377 = vpop.f32.mrf.mxu0
  %v1378 = vpop.f32.mrf.mxu0
  %v1379 = vadd.f32 %v1282, %v1378
  %v1380 = vpop.f32.mrf.mxu0
  %1381 = vmatprep.mubr.bf16.mxu0 %v491
  %1382 = vmatmul.mubr.bf16.gmra.mxu0 %v490
  %v1383 = vpop.f32.mrf.mxu0
  %v1384 = vadd.f32 %v1287, %v1383
  %v1385 = vpop.f32.mrf.mxu0
  %v1386 = vpop.f32.mrf.mxu0
  %v1387 = vadd.f32 %v1290, %v1386
  %v1388 = vpop.f32.mrf.mxu0
  %1389 = vmatprep.mubr.bf16.mxu0 %v500
  %1390 = vmatmul.mubr.bf16.gmra.mxu0 %v499
  %v1391 = vpop.f32.mrf.mxu0
  %v1392 = vadd.f32 %v1295, %v1391
  %v1393 = vpop.f32.mrf.mxu0
  %v1394 = vpop.f32.mrf.mxu0
  %v1395 = vadd.f32 %v1298, %v1394
  %v1396 = vpop.f32.mrf.mxu0
  %1397 = vmatprep.mubr.bf16.mxu0 %v509
  %1398 = vmatmul.mubr.bf16.gmra.mxu0 %v508
  %v1399 = vpop.f32.mrf.mxu0
  %v1400 = vadd.f32 %v1303, %v1399
  %v1401 = vpop.f32.mrf.mxu0
  %v1402 = vpop.f32.mrf.mxu0
  %v1403 = vadd.f32 %v1306, %v1402
  %v1404 = vpop.f32.mrf.mxu0
  %1405 = vmatprep.mubr.bf16.mxu0 %v518
  %1406 = vmatmul.mubr.bf16.gmra.mxu0 %v517
  %v1407 = vpop.f32.mrf.mxu0
  %v1408 = vadd.f32 %v1311, %v1407
  %v1409 = vpop.f32.mrf.mxu0
  %v1410 = vpop.f32.mrf.mxu0
  %v1411 = vadd.f32 %v1314, %v1410
  %v1412 = vpop.f32.mrf.mxu0
  %1413 = vmatprep.mubr.bf16.mxu0 %v527
  %1414 = vmatmul.mubr.bf16.gmra.mxu0 %v526
  %v1415 = vpop.f32.mrf.mxu0
  %v1416 = vadd.f32 %v1319, %v1415
  %v1417 = vpop.f32.mrf.mxu0
  %v1418 = vpop.f32.mrf.mxu0
  %v1419 = vadd.f32 %v1322, %v1418
  %v1420 = vpop.f32.mrf.mxu0
  %1421 = vmatprep.mubr.bf16.mxu0 %v536
  %1422 = vmatmul.mubr.bf16.gmra.mxu0 %v535
  %v1423 = vpop.f32.mrf.mxu0
  %v1424 = vadd.f32 %v1327, %v1423
  %v1425 = vpop.f32.mrf.mxu0
  %v1426 = vpop.f32.mrf.mxu0
  %v1427 = vadd.f32 %v1330, %v1426
  %v1428 = vpop.f32.mrf.mxu0
  %1429 = vdwg.mxu0
  %1430 = vmatprep.subr.bf16.mxu0 0
  %1431 = vmatpush1.bf16.msra.mxu0 %v969
  %1432 = vmatprep.subr.bf16.mxu0 0
  %1433 = vmatpush1.bf16.msra.mxu0 %v968
  %1434 = vmatprep.subr.bf16.mxu0 0
  %1435 = vmatpush1.bf16.msra.mxu0 %v967
  %1436 = vmatprep.subr.bf16.mxu0 0
  %1437 = vmatpush1.bf16.msra.mxu0 %v966
  %1438 = vmatprep.subr.bf16.mxu0 0
  %1439 = vmatpush1.bf16.msra.mxu0 %v965
  %1440 = vmatprep.subr.bf16.mxu0 0
  %1441 = vmatpush1.bf16.msra.mxu0 %v964
  %1442 = vmatprep.subr.bf16.mxu0 0
  %1443 = vmatpush1.bf16.msra.mxu0 %v963
  %1444 = vmatprep.subr.bf16.mxu0 0
  %1445 = vmatpush1.bf16.msra.mxu0 %v962
  %1446 = vmatprep.subr.bf16.mxu0 0
  %1447 = vmatpush2.bf16.msra.mxu0 0
  %1448 = vmatprep.subr.bf16.mxu0 0
  %1449 = vmatpush2.bf16.msra.mxu0 0
  %1450 = vmatprep.subr.bf16.mxu0 0
  %1451 = vmatpush2.bf16.msra.mxu0 0
  %1452 = vmatprep.subr.bf16.mxu0 0
  %1453 = vmatpush2.bf16.msra.mxu0 0
  %1454 = vmatprep.subr.bf16.mxu0 0
  %1455 = vmatpush2.bf16.msra.mxu0 0
  %1456 = vmatprep.subr.bf16.mxu0 0
  %1457 = vmatpush2.bf16.msra.mxu0 0
  %1458 = vmatprep.subr.bf16.mxu0 0
  %1459 = vmatpush2.bf16.msra.mxu0 0
  %1460 = vmatprep.subr.bf16.mxu0 0
  %1461 = vmatpush2.bf16.msra.mxu0 0
  %1462 = vmatprep.mubr.bf16.mxu0 0
  %1463 = vmatmul.mubr.bf16.gmra.mxu0 %v474
  %v1464 = vpop.f32.mrf.mxu0
  %v1465 = vadd.f32 %v1368, %v1464
  %v1466 = vpop.f32.mrf.mxu0
  %v1467 = vpop.f32.mrf.mxu0
  %v1468 = vadd.f32 %v1371, %v1467
  %v1469 = vpop.f32.mrf.mxu0
  %1470 = vmatprep.mubr.bf16.mxu0 0
  %1471 = vmatmul.mubr.bf16.gmra.mxu0 %v483
  %v1472 = vpop.f32.mrf.mxu0
  %v1473 = vadd.f32 %v1376, %v1472
  %v1474 = vpop.f32.mrf.mxu0
  %v1475 = vpop.f32.mrf.mxu0
  %v1476 = vadd.f32 %v1379, %v1475
  %v1477 = vpop.f32.mrf.mxu0
  %1478 = vmatprep.mubr.bf16.mxu0 0
  %1479 = vmatmul.mubr.bf16.gmra.mxu0 %v492
  %v1480 = vpop.f32.mrf.mxu0
  %v1481 = vadd.f32 %v1384, %v1480
  %v1482 = vpop.f32.mrf.mxu0
  %v1483 = vpop.f32.mrf.mxu0
  %v1484 = vadd.f32 %v1387, %v1483
  %v1485 = vpop.f32.mrf.mxu0
  %1486 = vmatprep.mubr.bf16.mxu0 0
  %1487 = vmatmul.mubr.bf16.gmra.mxu0 %v501
  %v1488 = vpop.f32.mrf.mxu0
  %v1489 = vadd.f32 %v1392, %v1488
  %v1490 = vpop.f32.mrf.mxu0
  %v1491 = vpop.f32.mrf.mxu0
  %v1492 = vadd.f32 %v1395, %v1491
  %v1493 = vpop.f32.mrf.mxu0
  %1494 = vmatprep.mubr.bf16.mxu0 0
  %1495 = vmatmul.mubr.bf16.gmra.mxu0 %v510
  %v1496 = vpop.f32.mrf.mxu0
  %v1497 = vadd.f32 %v1400, %v1496
  %v1498 = vpop.f32.mrf.mxu0
  %v1499 = vpop.f32.mrf.mxu0
  %v1500 = vadd.f32 %v1403, %v1499
  %v1501 = vpop.f32.mrf.mxu0
  %1502 = vmatprep.mubr.bf16.mxu0 0
  %1503 = vmatmul.mubr.bf16.gmra.mxu0 %v519
  %v1504 = vpop.f32.mrf.mxu0
  %v1505 = vadd.f32 %v1408, %v1504
  %v1506 = vpop.f32.mrf.mxu0
  %v1507 = vpop.f32.mrf.mxu0
  %v1508 = vadd.f32 %v1411, %v1507
  %v1509 = vpop.f32.mrf.mxu0
  %1510 = vmatprep.mubr.bf16.mxu0 0
  %1511 = vmatmul.mubr.bf16.gmra.mxu0 %v528
  %v1512 = vpop.f32.mrf.mxu0
  %v1513 = vadd.f32 %v1416, %v1512
  %v1514 = vpop.f32.mrf.mxu0
  %v1515 = vpop.f32.mrf.mxu0
  %v1516 = vadd.f32 %v1419, %v1515
  %v1517 = vpop.f32.mrf.mxu0
  %1518 = vmatprep.mubr.bf16.mxu0 0
  %1519 = vmatmul.mubr.bf16.gmra.mxu0 %v537
  %v1520 = vpop.f32.mrf.mxu0
  %v1521 = vadd.f32 %v1424, %v1520
  %v1522 = vpop.f32.mrf.mxu0
  %v1523 = vpop.f32.mrf.mxu0
  %v1524 = vadd.f32 %v1427, %v1523
  %v1525 = vpop.f32.mrf.mxu0
  %1526 = vdwg.mxu0
  %v1527 = vld [vmem:[%s2] sm:$0x1]
  %v1529 = vlaneseq
  %v1530 = vshrl.u32 %v1529, 7
  %v1531 = vsub.s32 0, %v1530
  %v1532 = vrot.slane %v1527, %v1531
  %v1534 = vmul.f32 %v1465, %v1532
  %v1535 = vmul.f32 %v1468, %v1532
  %v1536 = vmul.f32 %v1473, %v1532
  %v1537 = vmul.f32 %v1476, %v1532
  %v1538 = vmul.f32 %v1481, %v1532
  %v1539 = vmul.f32 %v1484, %v1532
  %v1540 = vmul.f32 %v1489, %v1532
  %v1541 = vmul.f32 %v1492, %v1532
  %v1542 = vmul.f32 %v1497, %v1532
  %v1543 = vmul.f32 %v1500, %v1532
  %v1544 = vmul.f32 %v1505, %v1532
  %v1545 = vmul.f32 %v1508, %v1532
  %v1546 = vmul.f32 %v1513, %v1532
  %v1547 = vmul.f32 %v1516, %v1532
  %v1548 = vmul.f32 %v1521, %v1532
  %v1549 = vmul.f32 %v1524, %v1532
  %v1550 = vld [vmem:[%s3] sm:$0x1]
  %v1552 = vlaneseq
  %v1553 = vshrl.u32 %v1552, 7
  %v1554 = vsub.s32 0, %v1553
  %v1555 = vrot.slane %v1550, %v1554
  %v1557 = vadd.f32 %v1534, %v1555
  %v1558 = vadd.f32 %v1535, %v1555
  %v1559 = vadd.f32 %v1536, %v1555
  %v1560 = vadd.f32 %v1537, %v1555
  %v1561 = vadd.f32 %v1538, %v1555
  %v1562 = vadd.f32 %v1539, %v1555
  %v1563 = vadd.f32 %v1540, %v1555
  %v1564 = vadd.f32 %v1541, %v1555
  %v1565 = vadd.f32 %v1542, %v1555
  %v1566 = vadd.f32 %v1543, %v1555
  %v1567 = vadd.f32 %v1544, %v1555
  %v1568 = vadd.f32 %v1545, %v1555
  %v1569 = vadd.f32 %v1546, %v1555
  %v1570 = vadd.f32 %v1547, %v1555
  %v1571 = vadd.f32 %v1548, %v1555
  %v1572 = vadd.f32 %v1549, %v1555
  %v1573 = vmax.f32 %v1557, 0.0
  %v1574 = vmax.f32 %v1558, 0.0
  %v1575 = vmax.f32 %v1559, 0.0
  %v1576 = vmax.f32 %v1560, 0.0
  %v1577 = vmax.f32 %v1561, 0.0
  %v1578 = vmax.f32 %v1562, 0.0
  %v1579 = vmax.f32 %v1563, 0.0
  %v1580 = vmax.f32 %v1564, 0.0
  %v1581 = vmax.f32 %v1565, 0.0
  %v1582 = vmax.f32 %v1566, 0.0
  %v1583 = vmax.f32 %v1567, 0.0
  %v1584 = vmax.f32 %v1568, 0.0
  %v1585 = vmax.f32 %v1569, 0.0
  %v1586 = vmax.f32 %v1570, 0.0
  %v1587 = vmax.f32 %v1571, 0.0
  %v1588 = vmax.f32 %v1572, 0.0
  %1589 = vst [vmem:[%s4] sm:$0xff] %v1573
  %1590 = vst [vmem:[%s4 + $0x8] sm:$0xff] %v1574
  %1591 = vst [vmem:[%s4 + $0x10] sm:$0xff] %v1575
  %1592 = vst [vmem:[%s4 + $0x18] sm:$0xff] %v1576
  %1593 = vst [vmem:[%s4 + $0x20] sm:$0xff] %v1577
  %1594 = vst [vmem:[%s4 + $0x28] sm:$0xff] %v1578
  %1595 = vst [vmem:[%s4 + $0x30] sm:$0xff] %v1579
  %1596 = vst [vmem:[%s4 + $0x38] sm:$0xff] %v1580
  %1597 = vst [vmem:[%s4 + $0x40] sm:$0xff] %v1581
  %1598 = vst [vmem:[%s4 + $0x48] sm:$0xff] %v1582
  %1599 = vst [vmem:[%s4 + $0x50] sm:$0xff] %v1583
  %1600 = vst [vmem:[%s4 + $0x58] sm:$0xff] %v1584
  %1601 = vst [vmem:[%s4 + $0x60] sm:$0xff] %v1585
  %1602 = vst [vmem:[%s4 + $0x68] sm:$0xff] %v1586
  %1603 = vst [vmem:[%s4 + $0x70] sm:$0xff] %v1587
  %1604 = vst [vmem:[%s4 + $0x78] sm:$0xff] %v1588
  // Predicated region
  $region18: #{ssl_encoder_forward.10} parent=0 // pred_check
    _
  $region19: #{ssl_encoder_forward.10} parent=0 // pred_check_branch
    %1606 = sbr.rel (0) target = $region21
  $region20: #{ssl_encoder_forward.10} parent=0 // pred_region
    _
  $region21: #{ssl_encoder_forward.10} parent=0 // pred_fallthru
    _
  // Predicated region
  $region22: #{ssl_encoder_forward.10} parent=0 // pred_check
    _
  $region23: #{ssl_encoder_forward.10} parent=0 // pred_check_branch
    %1608 = sbr.rel (0) target = $region25
  $region24: #{ssl_encoder_forward.10} parent=0 // pred_region
    _
  $region25: #{ssl_encoder_forward.10} parent=0 // pred_fallthru
    _

// kernel: ssl_encoder_forward.8
$region0: #{ssl_encoder_forward.8}
  #allocation0 [shape = 'u32[]', space=smem, size = 0x4, offset = 0x4, fixed_abs, tag = 'smem constant byte address 0x4 - core index']
  #allocation1 [shape = 'u32[144,128]{1,0:T(1,128)}', space=vmem, size = 0x12000, scoped, tag = 'internal scratch']
  %s0 = inlined_call_operand.vmem [shape: bf16[512,1152], index: 0, kind: input, shape index: {}]
  %s1 = inlined_call_operand.vmem [shape: bf16[1152,128], index: 1, kind: input, shape index: {}]
  %s2 = inlined_call_operand.vmem [shape: f32[1,128], index: 2, kind: input, shape index: {}]
  %s3 = inlined_call_operand.vmem [shape: f32[1,128], index: 3, kind: input, shape index: {}]
  %s4 = inlined_call_operand.vmem [shape: f32[512,128], index: 4, kind: input, shape index: {}, may-alias: {4,5}]
  %s5 = inlined_call_operand.vmem [shape: f32[512,128], index: 5, kind: output, shape index: {}, may-alias: {4,5}]
  %s6 = sld [smem:[#allocation0]]
  $region30: #{ssl_encoder_forward.8} parent=0
    _
  %s8 = ssub.s32 1, %s6
  %s9 = scalar_select 0, %s8, %s6
  // Predicated region
  $region2: #{ssl_encoder_forward.8} parent=0 // pred_check
    _
  $region3: #{ssl_encoder_forward.8} parent=0 // pred_check_branch
    %11 = sbr.rel (0) target = $region5
  $region4: #{ssl_encoder_forward.8} parent=0 // pred_region
    _
  $region5: #{ssl_encoder_forward.8} parent=0 // pred_fallthru
    _
  // Predicated region
  $region6: #{ssl_encoder_forward.8} parent=0 // pred_check
    _
  $region7: #{ssl_encoder_forward.8} parent=0 // pred_check_branch
    %13 = sbr.rel (0) target = $region9
  $region8: #{ssl_encoder_forward.8} parent=0 // pred_region
    _
  $region9: #{ssl_encoder_forward.8} parent=0 // pred_fallthru
    _
  // Predicated region
  $region10: #{ssl_encoder_forward.8} parent=0 // pred_check
    _
  $region11: #{ssl_encoder_forward.8} parent=0 // pred_check_branch
    %15 = sbr.rel (0) target = $region13
  $region12: #{ssl_encoder_forward.8} parent=0 // pred_region
    _
  $region13: #{ssl_encoder_forward.8} parent=0 // pred_fallthru
    _
  // Predicated region
  $region14: #{ssl_encoder_forward.8} parent=0 // pred_check
    _
  $region15: #{ssl_encoder_forward.8} parent=0 // pred_check_branch
    %17 = sbr.rel (0) target = $region17
  $region16: #{ssl_encoder_forward.8} parent=0 // pred_region
    _
  $region17: #{ssl_encoder_forward.8} parent=0 // pred_fallthru
    _
  // Predicated region
  $region18: #{ssl_encoder_forward.8} parent=0 // pred_check
    _
  $region19: #{ssl_encoder_forward.8} parent=0 // pred_check_branch
    %19 = sbr.rel (0) target = $region21
  $region20: #{ssl_encoder_forward.8} parent=0 // pred_region
    _
  $region21: #{ssl_encoder_forward.8} parent=0 // pred_fallthru
    _
  %v21 = vld [vmem:[%s0] sm:$0xff]
  %v22 = vld [vmem:[%s0 + $0x8] sm:$0xff]
  %v23 = vld [vmem:[%s0 + $0x10] sm:$0xff]
  %v24 = vld [vmem:[%s0 + $0x18] sm:$0xff]
  %v25 = vld [vmem:[%s0 + $0x20] sm:$0xf]
  %v26 = vld [vmem:[%s0 + $0x24] sm:$0xff]
  %v27 = vld [vmem:[%s0 + $0x2c] sm:$0xff]
  %v28 = vld [vmem:[%s0 + $0x34] sm:$0xff]
  %v29 = vld [vmem:[%s0 + $0x3c] sm:$0xff]
  %v30 = vld [vmem:[%s0 + $0x44] sm:$0xf]
  %v31 = vld [vmem:[%s0 + $0x48] sm:$0xff]
  %v32 = vld [vmem:[%s0 + $0x50] sm:$0xff]
  %v33 = vld [vmem:[%s0 + $0x58] sm:$0xff]
  %v34 = vld [vmem:[%s0 + $0x60] sm:$0xff]
  %v35 = vld [vmem:[%s0 + $0x68] sm:$0xf]
  %v36 = vld [vmem:[%s0 + $0x6c] sm:$0xff]
  %v37 = vld [vmem:[%s0 + $0x74] sm:$0xff]
  %v38 = vld [vmem:[%s0 + $0x7c] sm:$0xff]
  %v39 = vld [vmem:[%s0 + $0x84] sm:$0xff]
  %v40 = vld [vmem:[%s0 + $0x8c] sm:$0xf]
  %v41 = vld [vmem:[%s0 + $0x90] sm:$0xff]
  %v42 = vld [vmem:[%s0 + $0x98] sm:$0xff]
  %v43 = vld [vmem:[%s0 + $0xa0] sm:$0xff]
  %v44 = vld [vmem:[%s0 + $0xa8] sm:$0xff]
  %v45 = vld [vmem:[%s0 + $0xb0] sm:$0xf]
  %v46 = vld [vmem:[%s0 + $0xb4] sm:$0xff]
  %v47 = vld [vmem:[%s0 + $0xbc] sm:$0xff]
  %v48 = vld [vmem:[%s0 + $0xc4] sm:$0xff]
  %v49 = vld [vmem:[%s0 + $0xcc] sm:$0xff]
  %v50 = vld [vmem:[%s0 + $0xd4] sm:$0xf]
  %v51 = vld [vmem:[%s0 + $0xd8] sm:$0xff]
  %v52 = vld [vmem:[%s0 + $0xe0] sm:$0xff]
  %v53 = vld [vmem:[%s0 + $0xe8] sm:$0xff]
  %v54 = vld [vmem:[%s0 + $0xf0] sm:$0xff]
  %v55 = vld [vmem:[%s0 + $0xf8] sm:$0xf]
  %v56 = vld [vmem:[%s0 + $0xfc] sm:$0xff]
  %v57 = vld [vmem:[%s0 + $0x104] sm:$0xff]
  %v58 = vld [vmem:[%s0 + $0x10c] sm:$0xff]
  %v59 = vld [vmem:[%s0 + $0x114] sm:$0xff]
  %v60 = vld [vmem:[%s0 + $0x11c] sm:$0xf]
  %v61 = vld [vmem:[%s0 + $0x120] sm:$0xff]
  %v62 = vld [vmem:[%s0 + $0x128] sm:$0xff]
  %v63 = vld [vmem:[%s0 + $0x130] sm:$0xff]
  %v64 = vld [vmem:[%s0 + $0x138] sm:$0xff]
  %v65 = vld [vmem:[%s0 + $0x140] sm:$0xf]
  %v66 = vld [vmem:[%s0 + $0x144] sm:$0xff]
  %v67 = vld [vmem:[%s0 + $0x14c] sm:$0xff]
  %v68 = vld [vmem:[%s0 + $0x154] sm:$0xff]
  %v69 = vld [vmem:[%s0 + $0x15c] sm:$0xff]
  %v70 = vld [vmem:[%s0 + $0x164] sm:$0xf]
  %v71 = vld [vmem:[%s0 + $0x168] sm:$0xff]
  %v72 = vld [vmem:[%s0 + $0x170] sm:$0xff]
  %v73 = vld [vmem:[%s0 + $0x178] sm:$0xff]
  %v74 = vld [vmem:[%s0 + $0x180] sm:$0xff]
  %v75 = vld [vmem:[%s0 + $0x188] sm:$0xf]
  %v76 = vld [vmem:[%s0 + $0x18c] sm:$0xff]
  %v77 = vld [vmem:[%s0 + $0x194] sm:$0xff]
  %v78 = vld [vmem:[%s0 + $0x19c] sm:$0xff]
  %v79 = vld [vmem:[%s0 + $0x1a4] sm:$0xff]
  %v80 = vld [vmem:[%s0 + $0x1ac] sm:$0xf]
  %v81 = vld [vmem:[%s0 + $0x1b0] sm:$0xff]
  %v82 = vld [vmem:[%s0 + $0x1b8] sm:$0xff]
  %v83 = vld [vmem:[%s0 + $0x1c0] sm:$0xff]
  %v84 = vld [vmem:[%s0 + $0x1c8] sm:$0xff]
  %v85 = vld [vmem:[%s0 + $0x1d0] sm:$0xf]
  %v86 = vld [vmem:[%s0 + $0x1d4] sm:$0xff]
  %v87 = vld [vmem:[%s0 + $0x1dc] sm:$0xff]
  %v88 = vld [vmem:[%s0 + $0x1e4] sm:$0xff]
  %v89 = vld [vmem:[%s0 + $0x1ec] sm:$0xff]
  %v90 = vld [vmem:[%s0 + $0x1f4] sm:$0xf]
  %v91 = vld [vmem:[%s0 + $0x1f8] sm:$0xff]
  %v92 = vld [vmem:[%s0 + $0x200] sm:$0xff]
  %v93 = vld [vmem:[%s0 + $0x208] sm:$0xff]
  %v94 = vld [vmem:[%s0 + $0x210] sm:$0xff]
  %v95 = vld [vmem:[%s0 + $0x218] sm:$0xf]
  %v96 = vld [vmem:[%s0 + $0x21c] sm:$0xff]
  %v97 = vld [vmem:[%s0 + $0x224] sm:$0xff]
  %v98 = vld [vmem:[%s0 + $0x22c] sm:$0xff]
  %v99 = vld [vmem:[%s0 + $0x234] sm:$0xff]
  %v100 = vld [vmem:[%s0 + $0x23c] sm:$0xf]
  %v101 = vld [vmem:[%s0 + $0x240] sm:$0xff]
  %v102 = vld [vmem:[%s0 + $0x248] sm:$0xff]
  %v103 = vld [vmem:[%s0 + $0x250] sm:$0xff]
  %v104 = vld [vmem:[%s0 + $0x258] sm:$0xff]
  %v105 = vld [vmem:[%s0 + $0x260] sm:$0xf]
  %v106 = vld [vmem:[%s0 + $0x264] sm:$0xff]
  %v107 = vld [vmem:[%s0 + $0x26c] sm:$0xff]
  %v108 = vld [vmem:[%s0 + $0x274] sm:$0xff]
  %v109 = vld [vmem:[%s0 + $0x27c] sm:$0xff]
  %v110 = vld [vmem:[%s0 + $0x284] sm:$0xf]
  %v111 = vld [vmem:[%s0 + $0x288] sm:$0xff]
  %v112 = vld [vmem:[%s0 + $0x290] sm:$0xff]
  %v113 = vld [vmem:[%s0 + $0x298] sm:$0xff]
  %v114 = vld [vmem:[%s0 + $0x2a0] sm:$0xff]
  %v115 = vld [vmem:[%s0 + $0x2a8] sm:$0xf]
  %v116 = vld [vmem:[%s0 + $0x2ac] sm:$0xff]
  %v117 = vld [vmem:[%s0 + $0x2b4] sm:$0xff]
  %v118 = vld [vmem:[%s0 + $0x2bc] sm:$0xff]
  %v119 = vld [vmem:[%s0 + $0x2c4] sm:$0xff]
  %v120 = vld [vmem:[%s0 + $0x2cc] sm:$0xf]
  %v121 = vld [vmem:[%s0 + $0x2d0] sm:$0xff]
  %v122 = vld [vmem:[%s0 + $0x2d8] sm:$0xff]
  %v123 = vld [vmem:[%s0 + $0x2e0] sm:$0xff]
  %v124 = vld [vmem:[%s0 + $0x2e8] sm:$0xff]
  %v125 = vld [vmem:[%s0 + $0x2f0] sm:$0xf]
  %v126 = vld [vmem:[%s0 + $0x2f4] sm:$0xff]
  %v127 = vld [vmem:[%s0 + $0x2fc] sm:$0xff]
  %v128 = vld [vmem:[%s0 + $0x304] sm:$0xff]
  %v129 = vld [vmem:[%s0 + $0x30c] sm:$0xff]
  %v130 = vld [vmem:[%s0 + $0x314] sm:$0xf]
  %v131 = vld [vmem:[%s0 + $0x318] sm:$0xff]
  %v132 = vld [vmem:[%s0 + $0x320] sm:$0xff]
  %v133 = vld [vmem:[%s0 + $0x328] sm:$0xff]
  %v134 = vld [vmem:[%s0 + $0x330] sm:$0xff]
  %v135 = vld [vmem:[%s0 + $0x338] sm:$0xf]
  %v136 = vld [vmem:[%s0 + $0x33c] sm:$0xff]
  %v137 = vld [vmem:[%s0 + $0x344] sm:$0xff]
  %v138 = vld [vmem:[%s0 + $0x34c] sm:$0xff]
  %v139 = vld [vmem:[%s0 + $0x354] sm:$0xff]
  %v140 = vld [vmem:[%s0 + $0x35c] sm:$0xf]
  %v141 = vld [vmem:[%s0 + $0x360] sm:$0xff]
  %v142 = vld [vmem:[%s0 + $0x368] sm:$0xff]
  %v143 = vld [vmem:[%s0 + $0x370] sm:$0xff]
  %v144 = vld [vmem:[%s0 + $0x378] sm:$0xff]
  %v145 = vld [vmem:[%s0 + $0x380] sm:$0xf]
  %v146 = vld [vmem:[%s0 + $0x384] sm:$0xff]
  %v147 = vld [vmem:[%s0 + $0x38c] sm:$0xff]
  %v148 = vld [vmem:[%s0 + $0x394] sm:$0xff]
  %v149 = vld [vmem:[%s0 + $0x39c] sm:$0xff]
  %v150 = vld [vmem:[%s0 + $0x3a4] sm:$0xf]
  %v151 = vld [vmem:[%s0 + $0x3a8] sm:$0xff]
  %v152 = vld [vmem:[%s0 + $0x3b0] sm:$0xff]
  %v153 = vld [vmem:[%s0 + $0x3b8] sm:$0xff]
  %v154 = vld [vmem:[%s0 + $0x3c0] sm:$0xff]
  %v155 = vld [vmem:[%s0 + $0x3c8] sm:$0xf]
  %v156 = vld [vmem:[%s0 + $0x3cc] sm:$0xff]
  %v157 = vld [vmem:[%s0 + $0x3d4] sm:$0xff]
  %v158 = vld [vmem:[%s0 + $0x3dc] sm:$0xff]
  %v159 = vld [vmem:[%s0 + $0x3e4] sm:$0xff]
  %v160 = vld [vmem:[%s0 + $0x3ec] sm:$0xf]
  %v161 = vld [vmem:[%s0 + $0x3f0] sm:$0xff]
  %v162 = vld [vmem:[%s0 + $0x3f8] sm:$0xff]
  %v163 = vld [vmem:[%s0 + $0x400] sm:$0xff]
  %v164 = vld [vmem:[%s0 + $0x408] sm:$0xff]
  %v165 = vld [vmem:[%s0 + $0x410] sm:$0xf]
  %v166 = vld [vmem:[%s0 + $0x414] sm:$0xff]
  %v167 = vld [vmem:[%s0 + $0x41c] sm:$0xff]
  %v168 = vld [vmem:[%s0 + $0x424] sm:$0xff]
  %v169 = vld [vmem:[%s0 + $0x42c] sm:$0xff]
  %v170 = vld [vmem:[%s0 + $0x434] sm:$0xf]
  %v171 = vld [vmem:[%s0 + $0x438] sm:$0xff]
  %v172 = vld [vmem:[%s0 + $0x440] sm:$0xff]
  %v173 = vld [vmem:[%s0 + $0x448] sm:$0xff]
  %v174 = vld [vmem:[%s0 + $0x450] sm:$0xff]
  %v175 = vld [vmem:[%s0 + $0x458] sm:$0xf]
  %v176 = vld [vmem:[%s0 + $0x45c] sm:$0xff]
  %v177 = vld [vmem:[%s0 + $0x464] sm:$0xff]
  %v178 = vld [vmem:[%s0 + $0x46c] sm:$0xff]
  %v179 = vld [vmem:[%s0 + $0x474] sm:$0xff]
  %v180 = vld [vmem:[%s0 + $0x47c] sm:$0xf]
  %v181 = vld [vmem:[%s0 + $0x480] sm:$0xff]
  %v182 = vld [vmem:[%s0 + $0x488] sm:$0xff]
  %v183 = vld [vmem:[%s0 + $0x490] sm:$0xff]
  %v184 = vld [vmem:[%s0 + $0x498] sm:$0xff]
  %v185 = vld [vmem:[%s0 + $0x4a0] sm:$0xf]
  %v186 = vld [vmem:[%s0 + $0x4a4] sm:$0xff]
  %v187 = vld [vmem:[%s0 + $0x4ac] sm:$0xff]
  %v188 = vld [vmem:[%s0 + $0x4b4] sm:$0xff]
  %v189 = vld [vmem:[%s0 + $0x4bc] sm:$0xff]
  %v190 = vld [vmem:[%s0 + $0x4c4] sm:$0xf]
  %v191 = vld [vmem:[%s0 + $0x4c8] sm:$0xff]
  %v192 = vld [vmem:[%s0 + $0x4d0] sm:$0xff]
  %v193 = vld [vmem:[%s0 + $0x4d8] sm:$0xff]
  %v194 = vld [vmem:[%s0 + $0x4e0] sm:$0xff]
  %v195 = vld [vmem:[%s0 + $0x4e8] sm:$0xf]
  %v196 = vld [vmem:[%s0 + $0x4ec] sm:$0xff]
  %v197 = vld [vmem:[%s0 + $0x4f4] sm:$0xff]
  %v198 = vld [vmem:[%s0 + $0x4fc] sm:$0xff]
  %v199 = vld [vmem:[%s0 + $0x504] sm:$0xff]
  %v200 = vld [vmem:[%s0 + $0x50c] sm:$0xf]
  %v201 = vld [vmem:[%s0 + $0x510] sm:$0xff]
  %v202 = vld [vmem:[%s0 + $0x518] sm:$0xff]
  %v203 = vld [vmem:[%s0 + $0x520] sm:$0xff]
  %v204 = vld [vmem:[%s0 + $0x528] sm:$0xff]
  %v205 = vld [vmem:[%s0 + $0x530] sm:$0xf]
  %v206 = vld [vmem:[%s0 + $0x534] sm:$0xff]
  %v207 = vld [vmem:[%s0 + $0x53c] sm:$0xff]
  %v208 = vld [vmem:[%s0 + $0x544] sm:$0xff]
  %v209 = vld [vmem:[%s0 + $0x54c] sm:$0xff]
  %v210 = vld [vmem:[%s0 + $0x554] sm:$0xf]
  %v211 = vld [vmem:[%s0 + $0x558] sm:$0xff]
  %v212 = vld [vmem:[%s0 + $0x560] sm:$0xff]
  %v213 = vld [vmem:[%s0 + $0x568] sm:$0xff]
  %v214 = vld [vmem:[%s0 + $0x570] sm:$0xff]
  %v215 = vld [vmem:[%s0 + $0x578] sm:$0xf]
  %v216 = vld [vmem:[%s0 + $0x57c] sm:$0xff]
  %v217 = vld [vmem:[%s0 + $0x584] sm:$0xff]
  %v218 = vld [vmem:[%s0 + $0x58c] sm:$0xff]
  %v219 = vld [vmem:[%s0 + $0x594] sm:$0xff]
  %v220 = vld [vmem:[%s0 + $0x59c] sm:$0xf]
  %v221 = vld [vmem:[%s0 + $0x5a0] sm:$0xff]
  %v222 = vld [vmem:[%s0 + $0x5a8] sm:$0xff]
  %v223 = vld [vmem:[%s0 + $0x5b0] sm:$0xff]
  %v224 = vld [vmem:[%s0 + $0x5b8] sm:$0xff]
  %v225 = vld [vmem:[%s0 + $0x5c0] sm:$0xf]
  %v226 = vld [vmem:[%s0 + $0x5c4] sm:$0xff]
  %v227 = vld [vmem:[%s0 + $0x5cc] sm:$0xff]
  %v228 = vld [vmem:[%s0 + $0x5d4] sm:$0xff]
  %v229 = vld [vmem:[%s0 + $0x5dc] sm:$0xff]
  %v230 = vld [vmem:[%s0 + $0x5e4] sm:$0xf]
  %v231 = vld [vmem:[%s0 + $0x5e8] sm:$0xff]
  %v232 = vld [vmem:[%s0 + $0x5f0] sm:$0xff]
  %v233 = vld [vmem:[%s0 + $0x5f8] sm:$0xff]
  %v234 = vld [vmem:[%s0 + $0x600] sm:$0xff]
  %v235 = vld [vmem:[%s0 + $0x608] sm:$0xf]
  %v236 = vld [vmem:[%s0 + $0x60c] sm:$0xff]
  %v237 = vld [vmem:[%s0 + $0x614] sm:$0xff]
  %v238 = vld [vmem:[%s0 + $0x61c] sm:$0xff]
  %v239 = vld [vmem:[%s0 + $0x624] sm:$0xff]
  %v240 = vld [vmem:[%s0 + $0x62c] sm:$0xf]
  %v241 = vld [vmem:[%s0 + $0x630] sm:$0xff]
  %v242 = vld [vmem:[%s0 + $0x638] sm:$0xff]
  %v243 = vld [vmem:[%s0 + $0x640] sm:$0xff]
  %v244 = vld [vmem:[%s0 + $0x648] sm:$0xff]
  %v245 = vld [vmem:[%s0 + $0x650] sm:$0xf]
  %v246 = vld [vmem:[%s0 + $0x654] sm:$0xff]
  %v247 = vld [vmem:[%s0 + $0x65c] sm:$0xff]
  %v248 = vld [vmem:[%s0 + $0x664] sm:$0xff]
  %v249 = vld [vmem:[%s0 + $0x66c] sm:$0xff]
  %v250 = vld [vmem:[%s0 + $0x674] sm:$0xf]
  %v251 = vld [vmem:[%s0 + $0x678] sm:$0xff]
  %v252 = vld [vmem:[%s0 + $0x680] sm:$0xff]
  %v253 = vld [vmem:[%s0 + $0x688] sm:$0xff]
  %v254 = vld [vmem:[%s0 + $0x690] sm:$0xff]
  %v255 = vld [vmem:[%s0 + $0x698] sm:$0xf]
  %v256 = vld [vmem:[%s0 + $0x69c] sm:$0xff]
  %v257 = vld [vmem:[%s0 + $0x6a4] sm:$0xff]
  %v258 = vld [vmem:[%s0 + $0x6ac] sm:$0xff]
  %v259 = vld [vmem:[%s0 + $0x6b4] sm:$0xff]
  %v260 = vld [vmem:[%s0 + $0x6bc] sm:$0xf]
  %v261 = vld [vmem:[%s0 + $0x6c0] sm:$0xff]
  %v262 = vld [vmem:[%s0 + $0x6c8] sm:$0xff]
  %v263 = vld [vmem:[%s0 + $0x6d0] sm:$0xff]
  %v264 = vld [vmem:[%s0 + $0x6d8] sm:$0xff]
  %v265 = vld [vmem:[%s0 + $0x6e0] sm:$0xf]
  %v266 = vld [vmem:[%s0 + $0x6e4] sm:$0xff]
  %v267 = vld [vmem:[%s0 + $0x6ec] sm:$0xff]
  %v268 = vld [vmem:[%s0 + $0x6f4] sm:$0xff]
  %v269 = vld [vmem:[%s0 + $0x6fc] sm:$0xff]
  %v270 = vld [vmem:[%s0 + $0x704] sm:$0xf]
  %v271 = vld [vmem:[%s0 + $0x708] sm:$0xff]
  %v272 = vld [vmem:[%s0 + $0x710] sm:$0xff]
  %v273 = vld [vmem:[%s0 + $0x718] sm:$0xff]
  %v274 = vld [vmem:[%s0 + $0x720] sm:$0xff]
  %v275 = vld [vmem:[%s0 + $0x728] sm:$0xf]
  %v276 = vld [vmem:[%s0 + $0x72c] sm:$0xff]
  %v277 = vld [vmem:[%s0 + $0x734] sm:$0xff]
  %v278 = vld [vmem:[%s0 + $0x73c] sm:$0xff]
  %v279 = vld [vmem:[%s0 + $0x744] sm:$0xff]
  %v280 = vld [vmem:[%s0 + $0x74c] sm:$0xf]
  %v281 = vld [vmem:[%s0 + $0x750] sm:$0xff]
  %v282 = vld [vmem:[%s0 + $0x758] sm:$0xff]
  %v283 = vld [vmem:[%s0 + $0x760] sm:$0xff]
  %v284 = vld [vmem:[%s0 + $0x768] sm:$0xff]
  %v285 = vld [vmem:[%s0 + $0x770] sm:$0xf]
  %v286 = vld [vmem:[%s0 + $0x774] sm:$0xff]
  %v287 = vld [vmem:[%s0 + $0x77c] sm:$0xff]
  %v288 = vld [vmem:[%s0 + $0x784] sm:$0xff]
  %v289 = vld [vmem:[%s0 + $0x78c] sm:$0xff]
  %v290 = vld [vmem:[%s0 + $0x794] sm:$0xf]
  %v291 = vld [vmem:[%s0 + $0x798] sm:$0xff]
  %v292 = vld [vmem:[%s0 + $0x7a0] sm:$0xff]
  %v293 = vld [vmem:[%s0 + $0x7a8] sm:$0xff]
  %v294 = vld [vmem:[%s0 + $0x7b0] sm:$0xff]
  %v295 = vld [vmem:[%s0 + $0x7b8] sm:$0xf]
  %v296 = vld [vmem:[%s0 + $0x7bc] sm:$0xff]
  %v297 = vld [vmem:[%s0 + $0x7c4] sm:$0xff]
  %v298 = vld [vmem:[%s0 + $0x7cc] sm:$0xff]
  %v299 = vld [vmem:[%s0 + $0x7d4] sm:$0xff]
  %v300 = vld [vmem:[%s0 + $0x7dc] sm:$0xf]
  %v301 = vld [vmem:[%s0 + $0x7e0] sm:$0xff]
  %v302 = vld [vmem:[%s0 + $0x7e8] sm:$0xff]
  %v303 = vld [vmem:[%s0 + $0x7f0] sm:$0xff]
  %v304 = vld [vmem:[%s0 + $0x7f8] sm:$0xff]
  %v305 = vld [vmem:[%s0 + $0x800] sm:$0xf]
  %v306 = vld [vmem:[%s0 + $0x804] sm:$0xff]
  %v307 = vld [vmem:[%s0 + $0x80c] sm:$0xff]
  %v308 = vld [vmem:[%s0 + $0x814] sm:$0xff]
  %v309 = vld [vmem:[%s0 + $0x81c] sm:$0xff]
  %v310 = vld [vmem:[%s0 + $0x824] sm:$0xf]
  %v311 = vld [vmem:[%s0 + $0x828] sm:$0xff]
  %v312 = vld [vmem:[%s0 + $0x830] sm:$0xff]
  %v313 = vld [vmem:[%s0 + $0x838] sm:$0xff]
  %v314 = vld [vmem:[%s0 + $0x840] sm:$0xff]
  %v315 = vld [vmem:[%s0 + $0x848] sm:$0xf]
  %v316 = vld [vmem:[%s0 + $0x84c] sm:$0xff]
  %v317 = vld [vmem:[%s0 + $0x854] sm:$0xff]
  %v318 = vld [vmem:[%s0 + $0x85c] sm:$0xff]
  %v319 = vld [vmem:[%s0 + $0x864] sm:$0xff]
  %v320 = vld [vmem:[%s0 + $0x86c] sm:$0xf]
  %v321 = vld [vmem:[%s0 + $0x870] sm:$0xff]
  %v322 = vld [vmem:[%s0 + $0x878] sm:$0xff]
  %v323 = vld [vmem:[%s0 + $0x880] sm:$0xff]
  %v324 = vld [vmem:[%s0 + $0x888] sm:$0xff]
  %v325 = vld [vmem:[%s0 + $0x890] sm:$0xf]
  %v326 = vld [vmem:[%s0 + $0x894] sm:$0xff]
  %v327 = vld [vmem:[%s0 + $0x89c] sm:$0xff]
  %v328 = vld [vmem:[%s0 + $0x8a4] sm:$0xff]
  %v329 = vld [vmem:[%s0 + $0x8ac] sm:$0xff]
  %v330 = vld [vmem:[%s0 + $0x8b4] sm:$0xf]
  %v331 = vld [vmem:[%s0 + $0x8b8] sm:$0xff]
  %v332 = vld [vmem:[%s0 + $0x8c0] sm:$0xff]
  %v333 = vld [vmem:[%s0 + $0x8c8] sm:$0xff]
  %v334 = vld [vmem:[%s0 + $0x8d0] sm:$0xff]
  %v335 = vld [vmem:[%s0 + $0x8d8] sm:$0xf]
  %v336 = vld [vmem:[%s0 + $0x8dc] sm:$0xff]
  %v337 = vld [vmem:[%s0 + $0x8e4] sm:$0xff]
  %v338 = vld [vmem:[%s0 + $0x8ec] sm:$0xff]
  %v339 = vld [vmem:[%s0 + $0x8f4] sm:$0xff]
  %v340 = vld [vmem:[%s0 + $0x8fc] sm:$0xf]
  %v341 = vld [vmem:[%s1] sm:$0xf]
  %v342 = vld [vmem:[%s1 + $0x4] sm:$0xf]
  %v343 = vld [vmem:[%s1 + $0x8] sm:$0xf]
  %v344 = vld [vmem:[%s1 + $0xc] sm:$0xf]
  %v345 = vld [vmem:[%s1 + $0x10] sm:$0xf]
  %v346 = vld [vmem:[%s1 + $0x14] sm:$0xf]
  %v347 = vld [vmem:[%s1 + $0x18] sm:$0xf]
  %v348 = vld [vmem:[%s1 + $0x1c] sm:$0xf]
  %v349 = vld [vmem:[%s1 + $0x20] sm:$0xf]
  %v350 = vld [vmem:[%s1 + $0x24] sm:$0xf]
  %v351 = vld [vmem:[%s1 + $0x28] sm:$0xf]
  %v352 = vld [vmem:[%s1 + $0x2c] sm:$0xf]
  %v353 = vld [vmem:[%s1 + $0x30] sm:$0xf]
  %v354 = vld [vmem:[%s1 + $0x34] sm:$0xf]
  %v355 = vld [vmem:[%s1 + $0x38] sm:$0xf]
  %v356 = vld [vmem:[%s1 + $0x3c] sm:$0xf]
  %v357 = vld [vmem:[%s1 + $0x40] sm:$0xf]
  %v358 = vld [vmem:[%s1 + $0x44] sm:$0xf]
  %v359 = vld [vmem:[%s1 + $0x48] sm:$0xf]
  %v360 = vld [vmem:[%s1 + $0x4c] sm:$0xf]
  %v361 = vld [vmem:[%s1 + $0x50] sm:$0xf]
  %v362 = vld [vmem:[%s1 + $0x54] sm:$0xf]
  %v363 = vld [vmem:[%s1 + $0x58] sm:$0xf]
  %v364 = vld [vmem:[%s1 + $0x5c] sm:$0xf]
  %v365 = vld [vmem:[%s1 + $0x60] sm:$0xf]
  %v366 = vld [vmem:[%s1 + $0x64] sm:$0xf]
  %v367 = vld [vmem:[%s1 + $0x68] sm:$0xf]
  %v368 = vld [vmem:[%s1 + $0x6c] sm:$0xf]
  %v369 = vld [vmem:[%s1 + $0x70] sm:$0xf]
  %v370 = vld [vmem:[%s1 + $0x74] sm:$0xf]
  %v371 = vld [vmem:[%s1 + $0x78] sm:$0xf]
  %v372 = vld [vmem:[%s1 + $0x7c] sm:$0xf]
  %v373 = vld [vmem:[%s1 + $0x80] sm:$0xf]
  %v374 = vld [vmem:[%s1 + $0x84] sm:$0xf]
  %v375 = vld [vmem:[%s1 + $0x88] sm:$0xf]
  %v376 = vld [vmem:[%s1 + $0x8c] sm:$0xf]
  %v377 = vld [vmem:[%s1 + $0x90] sm:$0xf]
  %v378 = vld [vmem:[%s1 + $0x94] sm:$0xf]
  %v379 = vld [vmem:[%s1 + $0x98] sm:$0xf]
  %v380 = vld [vmem:[%s1 + $0x9c] sm:$0xf]
  %v381 = vld [vmem:[%s1 + $0xa0] sm:$0xf]
  %v382 = vld [vmem:[%s1 + $0xa4] sm:$0xf]
  %v383 = vld [vmem:[%s1 + $0xa8] sm:$0xf]
  %v384 = vld [vmem:[%s1 + $0xac] sm:$0xf]
  %v385 = vld [vmem:[%s1 + $0xb0] sm:$0xf]
  %v386 = vld [vmem:[%s1 + $0xb4] sm:$0xf]
  %v387 = vld [vmem:[%s1 + $0xb8] sm:$0xf]
  %v388 = vld [vmem:[%s1 + $0xbc] sm:$0xf]
  %v389 = vld [vmem:[%s1 + $0xc0] sm:$0xf]
  %v390 = vld [vmem:[%s1 + $0xc4] sm:$0xf]
  %v391 = vld [vmem:[%s1 + $0xc8] sm:$0xf]
  %v392 = vld [vmem:[%s1 + $0xcc] sm:$0xf]
  %v393 = vld [vmem:[%s1 + $0xd0] sm:$0xf]
  %v394 = vld [vmem:[%s1 + $0xd4] sm:$0xf]
  %v395 = vld [vmem:[%s1 + $0xd8] sm:$0xf]
  %v396 = vld [vmem:[%s1 + $0xdc] sm:$0xf]
  %v397 = vld [vmem:[%s1 + $0xe0] sm:$0xf]
  %v398 = vld [vmem:[%s1 + $0xe4] sm:$0xf]
  %v399 = vld [vmem:[%s1 + $0xe8] sm:$0xf]
  %v400 = vld [vmem:[%s1 + $0xec] sm:$0xf]
  %v401 = vld [vmem:[%s1 + $0xf0] sm:$0xf]
  %v402 = vld [vmem:[%s1 + $0xf4] sm:$0xf]
  %v403 = vld [vmem:[%s1 + $0xf8] sm:$0xf]
  %v404 = vld [vmem:[%s1 + $0xfc] sm:$0xf]
  %v405 = vld [vmem:[%s1 + $0x100] sm:$0xf]
  %v406 = vld [vmem:[%s1 + $0x104] sm:$0xf]
  %v407 = vld [vmem:[%s1 + $0x108] sm:$0xf]
  %v408 = vld [vmem:[%s1 + $0x10c] sm:$0xf]
  %v409 = vld [vmem:[%s1 + $0x110] sm:$0xf]
  %v410 = vld [vmem:[%s1 + $0x114] sm:$0xf]
  %v411 = vld [vmem:[%s1 + $0x118] sm:$0xf]
  %v412 = vld [vmem:[%s1 + $0x11c] sm:$0xf]
  %v413 = vld [vmem:[%s1 + $0x120] sm:$0xf]
  %v414 = vld [vmem:[%s1 + $0x124] sm:$0xf]
  %v415 = vld [vmem:[%s1 + $0x128] sm:$0xf]
  %v416 = vld [vmem:[%s1 + $0x12c] sm:$0xf]
  %v417 = vld [vmem:[%s1 + $0x130] sm:$0xf]
  %v418 = vld [vmem:[%s1 + $0x134] sm:$0xf]
  %v419 = vld [vmem:[%s1 + $0x138] sm:$0xf]
  %v420 = vld [vmem:[%s1 + $0x13c] sm:$0xf]
  %v421 = vld [vmem:[%s1 + $0x140] sm:$0xf]
  %v422 = vld [vmem:[%s1 + $0x144] sm:$0xf]
  %v423 = vld [vmem:[%s1 + $0x148] sm:$0xf]
  %v424 = vld [vmem:[%s1 + $0x14c] sm:$0xf]
  %v425 = vld [vmem:[%s1 + $0x150] sm:$0xf]
  %v426 = vld [vmem:[%s1 + $0x154] sm:$0xf]
  %v427 = vld [vmem:[%s1 + $0x158] sm:$0xf]
  %v428 = vld [vmem:[%s1 + $0x15c] sm:$0xf]
  %v429 = vld [vmem:[%s1 + $0x160] sm:$0xf]
  %v430 = vld [vmem:[%s1 + $0x164] sm:$0xf]
  %v431 = vld [vmem:[%s1 + $0x168] sm:$0xf]
  %v432 = vld [vmem:[%s1 + $0x16c] sm:$0xf]
  %v433 = vld [vmem:[%s1 + $0x170] sm:$0xf]
  %v434 = vld [vmem:[%s1 + $0x174] sm:$0xf]
  %v435 = vld [vmem:[%s1 + $0x178] sm:$0xf]
  %v436 = vld [vmem:[%s1 + $0x17c] sm:$0xf]
  %v437 = vld [vmem:[%s1 + $0x180] sm:$0xf]
  %v438 = vld [vmem:[%s1 + $0x184] sm:$0xf]
  %v439 = vld [vmem:[%s1 + $0x188] sm:$0xf]
  %v440 = vld [vmem:[%s1 + $0x18c] sm:$0xf]
  %v441 = vld [vmem:[%s1 + $0x190] sm:$0xf]
  %v442 = vld [vmem:[%s1 + $0x194] sm:$0xf]
  %v443 = vld [vmem:[%s1 + $0x198] sm:$0xf]
  %v444 = vld [vmem:[%s1 + $0x19c] sm:$0xf]
  %v445 = vld [vmem:[%s1 + $0x1a0] sm:$0xf]
  %v446 = vld [vmem:[%s1 + $0x1a4] sm:$0xf]
  %v447 = vld [vmem:[%s1 + $0x1a8] sm:$0xf]
  %v448 = vld [vmem:[%s1 + $0x1ac] sm:$0xf]
  %v449 = vld [vmem:[%s1 + $0x1b0] sm:$0xf]
  %v450 = vld [vmem:[%s1 + $0x1b4] sm:$0xf]
  %v451 = vld [vmem:[%s1 + $0x1b8] sm:$0xf]
  %v452 = vld [vmem:[%s1 + $0x1bc] sm:$0xf]
  %v453 = vld [vmem:[%s1 + $0x1c0] sm:$0xf]
  %v454 = vld [vmem:[%s1 + $0x1c4] sm:$0xf]
  %v455 = vld [vmem:[%s1 + $0x1c8] sm:$0xf]
  %v456 = vld [vmem:[%s1 + $0x1cc] sm:$0xf]
  %v457 = vld [vmem:[%s1 + $0x1d0] sm:$0xf]
  %v458 = vld [vmem:[%s1 + $0x1d4] sm:$0xf]
  %v459 = vld [vmem:[%s1 + $0x1d8] sm:$0xf]
  %v460 = vld [vmem:[%s1 + $0x1dc] sm:$0xf]
  %v461 = vld [vmem:[%s1 + $0x1e0] sm:$0xf]
  %v462 = vld [vmem:[%s1 + $0x1e4] sm:$0xf]
  %v463 = vld [vmem:[%s1 + $0x1e8] sm:$0xf]
  %v464 = vld [vmem:[%s1 + $0x1ec] sm:$0xf]
  %v465 = vld [vmem:[%s1 + $0x1f0] sm:$0xf]
  %v466 = vld [vmem:[%s1 + $0x1f4] sm:$0xf]
  %v467 = vld [vmem:[%s1 + $0x1f8] sm:$0xf]
  %v468 = vld [vmem:[%s1 + $0x1fc] sm:$0xf]
  %v469 = vld [vmem:[%s1 + $0x200] sm:$0xf]
  %v470 = vld [vmem:[%s1 + $0x204] sm:$0xf]
  %v471 = vld [vmem:[%s1 + $0x208] sm:$0xf]
  %v472 = vld [vmem:[%s1 + $0x20c] sm:$0xf]
  %v473 = vld [vmem:[%s1 + $0x210] sm:$0xf]
  %v474 = vld [vmem:[%s1 + $0x214] sm:$0xf]
  %v475 = vld [vmem:[%s1 + $0x218] sm:$0xf]
  %v476 = vld [vmem:[%s1 + $0x21c] sm:$0xf]
  %v477 = vld [vmem:[%s1 + $0x220] sm:$0xf]
  %v478 = vld [vmem:[%s1 + $0x224] sm:$0xf]
  %v479 = vld [vmem:[%s1 + $0x228] sm:$0xf]
  %v480 = vld [vmem:[%s1 + $0x22c] sm:$0xf]
  %v481 = vld [vmem:[%s1 + $0x230] sm:$0xf]
  %v482 = vld [vmem:[%s1 + $0x234] sm:$0xf]
  %v483 = vld [vmem:[%s1 + $0x238] sm:$0xf]
  %v484 = vld [vmem:[%s1 + $0x23c] sm:$0xf]
  %v805 = vunpack.c.l.b16 %v21
  %v806 = vunpack.c.h.b16 %v21
  %v807 = vunpack.c.l.b16 %v22
  %v808 = vunpack.c.h.b16 %v22
  %v809 = vunpack.c.l.b16 %v23
  %v810 = vunpack.c.h.b16 %v23
  %v811 = vunpack.c.l.b16 %v24
  %v812 = vunpack.c.h.b16 %v24
  %v813 = vunpack.c.l.b16 %v25
  %v814 = vunpack.c.l.b16 %v26
  %v815 = vunpack.c.h.b16 %v26
  %v816 = vunpack.c.l.b16 %v27
  %v817 = vunpack.c.h.b16 %v27
  %v818 = vunpack.c.l.b16 %v28
  %v819 = vunpack.c.h.b16 %v28
  %v820 = vunpack.c.l.b16 %v29
  %v821 = vunpack.c.h.b16 %v29
  %v822 = vunpack.c.l.b16 %v30
  %v823 = vunpack.c.l.b16 %v31
  %v824 = vunpack.c.h.b16 %v31
  %v825 = vunpack.c.l.b16 %v32
  %v826 = vunpack.c.h.b16 %v32
  %v827 = vunpack.c.l.b16 %v33
  %v828 = vunpack.c.h.b16 %v33
  %v829 = vunpack.c.l.b16 %v34
  %v830 = vunpack.c.h.b16 %v34
  %v831 = vunpack.c.l.b16 %v35
  %v832 = vunpack.c.l.b16 %v36
  %v833 = vunpack.c.h.b16 %v36
  %v834 = vunpack.c.l.b16 %v37
  %v835 = vunpack.c.h.b16 %v37
  %v836 = vunpack.c.l.b16 %v38
  %v837 = vunpack.c.h.b16 %v38
  %v838 = vunpack.c.l.b16 %v39
  %v839 = vunpack.c.h.b16 %v39
  %v840 = vunpack.c.l.b16 %v40
  %v841 = vunpack.c.l.b16 %v41
  %v842 = vunpack.c.h.b16 %v41
  %v843 = vunpack.c.l.b16 %v42
  %v844 = vunpack.c.h.b16 %v42
  %v845 = vunpack.c.l.b16 %v43
  %v846 = vunpack.c.h.b16 %v43
  %v847 = vunpack.c.l.b16 %v44
  %v848 = vunpack.c.h.b16 %v44
  %v849 = vunpack.c.l.b16 %v45
  %v850 = vunpack.c.l.b16 %v46
  %v851 = vunpack.c.h.b16 %v46
  %v852 = vunpack.c.l.b16 %v47
  %v853 = vunpack.c.h.b16 %v47
  %v854 = vunpack.c.l.b16 %v48
  %v855 = vunpack.c.h.b16 %v48
  %v856 = vunpack.c.l.b16 %v49
  %v857 = vunpack.c.h.b16 %v49
  %v858 = vunpack.c.l.b16 %v50
  %v859 = vunpack.c.l.b16 %v51
  %v860 = vunpack.c.h.b16 %v51
  %v861 = vunpack.c.l.b16 %v52
  %v862 = vunpack.c.h.b16 %v52
  %v863 = vunpack.c.l.b16 %v53
  %v864 = vunpack.c.h.b16 %v53
  %v865 = vunpack.c.l.b16 %v54
  %v866 = vunpack.c.h.b16 %v54
  %v867 = vunpack.c.l.b16 %v55
  %v868 = vunpack.c.l.b16 %v56
  %v869 = vunpack.c.h.b16 %v56
  %v870 = vunpack.c.l.b16 %v57
  %v871 = vunpack.c.h.b16 %v57
  %v872 = vunpack.c.l.b16 %v58
  %v873 = vunpack.c.h.b16 %v58
  %v874 = vunpack.c.l.b16 %v59
  %v875 = vunpack.c.h.b16 %v59
  %v876 = vunpack.c.l.b16 %v60
  %v877 = vunpack.c.l.b16 %v61
  %v878 = vunpack.c.h.b16 %v61
  %v879 = vunpack.c.l.b16 %v62
  %v880 = vunpack.c.h.b16 %v62
  %v881 = vunpack.c.l.b16 %v63
  %v882 = vunpack.c.h.b16 %v63
  %v883 = vunpack.c.l.b16 %v64
  %v884 = vunpack.c.h.b16 %v64
  %v885 = vunpack.c.l.b16 %v65
  %v886 = vunpack.c.l.b16 %v66
  %v887 = vunpack.c.h.b16 %v66
  %v888 = vunpack.c.l.b16 %v67
  %v889 = vunpack.c.h.b16 %v67
  %v890 = vunpack.c.l.b16 %v68
  %v891 = vunpack.c.h.b16 %v68
  %v892 = vunpack.c.l.b16 %v69
  %v893 = vunpack.c.h.b16 %v69
  %v894 = vunpack.c.l.b16 %v70
  %v895 = vunpack.c.l.b16 %v71
  %v896 = vunpack.c.h.b16 %v71
  %v897 = vunpack.c.l.b16 %v72
  %v898 = vunpack.c.h.b16 %v72
  %v899 = vunpack.c.l.b16 %v73
  %v900 = vunpack.c.h.b16 %v73
  %v901 = vunpack.c.l.b16 %v74
  %v902 = vunpack.c.h.b16 %v74
  %v903 = vunpack.c.l.b16 %v75
  %v904 = vunpack.c.l.b16 %v76
  %v905 = vunpack.c.h.b16 %v76
  %v906 = vunpack.c.l.b16 %v77
  %v907 = vunpack.c.h.b16 %v77
  %v908 = vunpack.c.l.b16 %v78
  %v909 = vunpack.c.h.b16 %v78
  %v910 = vunpack.c.l.b16 %v79
  %v911 = vunpack.c.h.b16 %v79
  %v912 = vunpack.c.l.b16 %v80
  %v913 = vunpack.c.l.b16 %v81
  %v914 = vunpack.c.h.b16 %v81
  %v915 = vunpack.c.l.b16 %v82
  %v916 = vunpack.c.h.b16 %v82
  %v917 = vunpack.c.l.b16 %v83
  %v918 = vunpack.c.h.b16 %v83
  %v919 = vunpack.c.l.b16 %v84
  %v920 = vunpack.c.h.b16 %v84
  %v921 = vunpack.c.l.b16 %v85
  %v922 = vunpack.c.l.b16 %v86
  %v923 = vunpack.c.h.b16 %v86
  %v924 = vunpack.c.l.b16 %v87
  %v925 = vunpack.c.h.b16 %v87
  %v926 = vunpack.c.l.b16 %v88
  %v927 = vunpack.c.h.b16 %v88
  %v928 = vunpack.c.l.b16 %v89
  %v929 = vunpack.c.h.b16 %v89
  %v930 = vunpack.c.l.b16 %v90
  %v931 = vunpack.c.l.b16 %v91
  %v932 = vunpack.c.h.b16 %v91
  %v933 = vunpack.c.l.b16 %v92
  %v934 = vunpack.c.h.b16 %v92
  %v935 = vunpack.c.l.b16 %v93
  %v936 = vunpack.c.h.b16 %v93
  %v937 = vunpack.c.l.b16 %v94
  %v938 = vunpack.c.h.b16 %v94
  %v939 = vunpack.c.l.b16 %v95
  %v940 = vunpack.c.l.b16 %v96
  %v941 = vunpack.c.h.b16 %v96
  %v942 = vunpack.c.l.b16 %v97
  %v943 = vunpack.c.h.b16 %v97
  %v944 = vunpack.c.l.b16 %v98
  %v945 = vunpack.c.h.b16 %v98
  %v946 = vunpack.c.l.b16 %v99
  %v947 = vunpack.c.h.b16 %v99
  %v948 = vunpack.c.l.b16 %v100
  %v949 = vunpack.c.l.b16 %v101
  %v950 = vunpack.c.h.b16 %v101
  %v951 = vunpack.c.l.b16 %v102
  %v952 = vunpack.c.h.b16 %v102
  %v953 = vunpack.c.l.b16 %v103
  %v954 = vunpack.c.h.b16 %v103
  %v955 = vunpack.c.l.b16 %v104
  %v956 = vunpack.c.h.b16 %v104
  %v957 = vunpack.c.l.b16 %v105
  %v958 = vunpack.c.l.b16 %v106
  %v959 = vunpack.c.h.b16 %v106
  %v960 = vunpack.c.l.b16 %v107
  %v961 = vunpack.c.h.b16 %v107
  %v962 = vunpack.c.l.b16 %v108
  %v963 = vunpack.c.h.b16 %v108
  %v964 = vunpack.c.l.b16 %v109
  %v965 = vunpack.c.h.b16 %v109
  %v966 = vunpack.c.l.b16 %v110
  %v967 = vunpack.c.l.b16 %v111
  %v968 = vunpack.c.h.b16 %v111
  %v969 = vunpack.c.l.b16 %v112
  %v970 = vunpack.c.h.b16 %v112
  %v971 = vunpack.c.l.b16 %v113
  %v972 = vunpack.c.h.b16 %v113
  %v973 = vunpack.c.l.b16 %v114
  %v974 = vunpack.c.h.b16 %v114
  %v975 = vunpack.c.l.b16 %v115
  %v976 = vunpack.c.l.b16 %v116
  %v977 = vunpack.c.h.b16 %v116
  %v978 = vunpack.c.l.b16 %v117
  %v979 = vunpack.c.h.b16 %v117
  %v980 = vunpack.c.l.b16 %v118
  %v981 = vunpack.c.h.b16 %v118
  %v982 = vunpack.c.l.b16 %v119
  %v983 = vunpack.c.h.b16 %v119
  %v984 = vunpack.c.l.b16 %v120
  %v985 = vunpack.c.l.b16 %v121
  %v986 = vunpack.c.h.b16 %v121
  %v987 = vunpack.c.l.b16 %v122
  %v988 = vunpack.c.h.b16 %v122
  %v989 = vunpack.c.l.b16 %v123
  %v990 = vunpack.c.h.b16 %v123
  %v991 = vunpack.c.l.b16 %v124
  %v992 = vunpack.c.h.b16 %v124
  %v993 = vunpack.c.l.b16 %v125
  %v994 = vunpack.c.l.b16 %v126
  %v995 = vunpack.c.h.b16 %v126
  %v996 = vunpack.c.l.b16 %v127
  %v997 = vunpack.c.h.b16 %v127
  %v998 = vunpack.c.l.b16 %v128
  %v999 = vunpack.c.h.b16 %v128
  %v1000 = vunpack.c.l.b16 %v129
  %v1001 = vunpack.c.h.b16 %v129
  %v1002 = vunpack.c.l.b16 %v130
  %v1003 = vunpack.c.l.b16 %v131
  %v1004 = vunpack.c.h.b16 %v131
  %v1005 = vunpack.c.l.b16 %v132
  %v1006 = vunpack.c.h.b16 %v132
  %v1007 = vunpack.c.l.b16 %v133
  %v1008 = vunpack.c.h.b16 %v133
  %v1009 = vunpack.c.l.b16 %v134
  %v1010 = vunpack.c.h.b16 %v134
  %v1011 = vunpack.c.l.b16 %v135
  %v1012 = vunpack.c.l.b16 %v136
  %v1013 = vunpack.c.h.b16 %v136
  %v1014 = vunpack.c.l.b16 %v137
  %v1015 = vunpack.c.h.b16 %v137
  %v1016 = vunpack.c.l.b16 %v138
  %v1017 = vunpack.c.h.b16 %v138
  %v1018 = vunpack.c.l.b16 %v139
  %v1019 = vunpack.c.h.b16 %v139
  %v1020 = vunpack.c.l.b16 %v140
  %v1021 = vunpack.c.l.b16 %v141
  %v1022 = vunpack.c.h.b16 %v141
  %v1023 = vunpack.c.l.b16 %v142
  %v1024 = vunpack.c.h.b16 %v142
  %v1025 = vunpack.c.l.b16 %v143
  %v1026 = vunpack.c.h.b16 %v143
  %v1027 = vunpack.c.l.b16 %v144
  %v1028 = vunpack.c.h.b16 %v144
  %v1029 = vunpack.c.l.b16 %v145
  %v1030 = vunpack.c.l.b16 %v146
  %v1031 = vunpack.c.h.b16 %v146
  %v1032 = vunpack.c.l.b16 %v147
  %v1033 = vunpack.c.h.b16 %v147
  %v1034 = vunpack.c.l.b16 %v148
  %v1035 = vunpack.c.h.b16 %v148
  %v1036 = vunpack.c.l.b16 %v149
  %v1037 = vunpack.c.h.b16 %v149
  %v1038 = vunpack.c.l.b16 %v150
  %v1039 = vunpack.c.l.b16 %v151
  %v1040 = vunpack.c.h.b16 %v151
  %v1041 = vunpack.c.l.b16 %v152
  %v1042 = vunpack.c.h.b16 %v152
  %v1043 = vunpack.c.l.b16 %v153
  %v1044 = vunpack.c.h.b16 %v153
  %v1045 = vunpack.c.l.b16 %v154
  %v1046 = vunpack.c.h.b16 %v154
  %v1047 = vunpack.c.l.b16 %v155
  %v1048 = vunpack.c.l.b16 %v156
  %v1049 = vunpack.c.h.b16 %v156
  %v1050 = vunpack.c.l.b16 %v157
  %v1051 = vunpack.c.h.b16 %v157
  %v1052 = vunpack.c.l.b16 %v158
  %v1053 = vunpack.c.h.b16 %v158
  %v1054 = vunpack.c.l.b16 %v159
  %v1055 = vunpack.c.h.b16 %v159
  %v1056 = vunpack.c.l.b16 %v160
  %v1057 = vunpack.c.l.b16 %v161
  %v1058 = vunpack.c.h.b16 %v161
  %v1059 = vunpack.c.l.b16 %v162
  %v1060 = vunpack.c.h.b16 %v162
  %v1061 = vunpack.c.l.b16 %v163
  %v1062 = vunpack.c.h.b16 %v163
  %v1063 = vunpack.c.l.b16 %v164
  %v1064 = vunpack.c.h.b16 %v164
  %v1065 = vunpack.c.l.b16 %v165
  %v1066 = vunpack.c.l.b16 %v166
  %v1067 = vunpack.c.h.b16 %v166
  %v1068 = vunpack.c.l.b16 %v167
  %v1069 = vunpack.c.h.b16 %v167
  %v1070 = vunpack.c.l.b16 %v168
  %v1071 = vunpack.c.h.b16 %v168
  %v1072 = vunpack.c.l.b16 %v169
  %v1073 = vunpack.c.h.b16 %v169
  %v1074 = vunpack.c.l.b16 %v170
  %v1075 = vunpack.c.l.b16 %v171
  %v1076 = vunpack.c.h.b16 %v171
  %v1077 = vunpack.c.l.b16 %v172
  %v1078 = vunpack.c.h.b16 %v172
  %v1079 = vunpack.c.l.b16 %v173
  %v1080 = vunpack.c.h.b16 %v173
  %v1081 = vunpack.c.l.b16 %v174
  %v1082 = vunpack.c.h.b16 %v174
  %v1083 = vunpack.c.l.b16 %v175
  %v1084 = vunpack.c.l.b16 %v176
  %v1085 = vunpack.c.h.b16 %v176
  %v1086 = vunpack.c.l.b16 %v177
  %v1087 = vunpack.c.h.b16 %v177
  %v1088 = vunpack.c.l.b16 %v178
  %v1089 = vunpack.c.h.b16 %v178
  %v1090 = vunpack.c.l.b16 %v179
  %v1091 = vunpack.c.h.b16 %v179
  %v1092 = vunpack.c.l.b16 %v180
  %v1093 = vunpack.c.l.b16 %v181
  %v1094 = vunpack.c.h.b16 %v181
  %v1095 = vunpack.c.l.b16 %v182
  %v1096 = vunpack.c.h.b16 %v182
  %v1097 = vunpack.c.l.b16 %v183
  %v1098 = vunpack.c.h.b16 %v183
  %v1099 = vunpack.c.l.b16 %v184
  %v1100 = vunpack.c.h.b16 %v184
  %v1101 = vunpack.c.l.b16 %v185
  %v1102 = vunpack.c.l.b16 %v186
  %v1103 = vunpack.c.h.b16 %v186
  %v1104 = vunpack.c.l.b16 %v187
  %v1105 = vunpack.c.h.b16 %v187
  %v1106 = vunpack.c.l.b16 %v188
  %v1107 = vunpack.c.h.b16 %v188
  %v1108 = vunpack.c.l.b16 %v189
  %v1109 = vunpack.c.h.b16 %v189
  %v1110 = vunpack.c.l.b16 %v190
  %v1111 = vunpack.c.l.b16 %v191
  %v1112 = vunpack.c.h.b16 %v191
  %v1113 = vunpack.c.l.b16 %v192
  %v1114 = vunpack.c.h.b16 %v192
  %v1115 = vunpack.c.l.b16 %v193
  %v1116 = vunpack.c.h.b16 %v193
  %v1117 = vunpack.c.l.b16 %v194
  %v1118 = vunpack.c.h.b16 %v194
  %v1119 = vunpack.c.l.b16 %v195
  %v1120 = vunpack.c.l.b16 %v196
  %v1121 = vunpack.c.h.b16 %v196
  %v1122 = vunpack.c.l.b16 %v197
  %v1123 = vunpack.c.h.b16 %v197
  %v1124 = vunpack.c.l.b16 %v198
  %v1125 = vunpack.c.h.b16 %v198
  %v1126 = vunpack.c.l.b16 %v199
  %v1127 = vunpack.c.h.b16 %v199
  %v1128 = vunpack.c.l.b16 %v200
  %v1129 = vunpack.c.l.b16 %v201
  %v1130 = vunpack.c.h.b16 %v201
  %v1131 = vunpack.c.l.b16 %v202
  %v1132 = vunpack.c.h.b16 %v202
  %v1133 = vunpack.c.l.b16 %v203
  %v1134 = vunpack.c.h.b16 %v203
  %v1135 = vunpack.c.l.b16 %v204
  %v1136 = vunpack.c.h.b16 %v204
  %v1137 = vunpack.c.l.b16 %v205
  %v1138 = vunpack.c.l.b16 %v206
  %v1139 = vunpack.c.h.b16 %v206
  %v1140 = vunpack.c.l.b16 %v207
  %v1141 = vunpack.c.h.b16 %v207
  %v1142 = vunpack.c.l.b16 %v208
  %v1143 = vunpack.c.h.b16 %v208
  %v1144 = vunpack.c.l.b16 %v209
  %v1145 = vunpack.c.h.b16 %v209
  %v1146 = vunpack.c.l.b16 %v210
  %v1147 = vunpack.c.l.b16 %v211
  %v1148 = vunpack.c.h.b16 %v211
  %v1149 = vunpack.c.l.b16 %v212
  %v1150 = vunpack.c.h.b16 %v212
  %v1151 = vunpack.c.l.b16 %v213
  %v1152 = vunpack.c.h.b16 %v213
  %v1153 = vunpack.c.l.b16 %v214
  %v1154 = vunpack.c.h.b16 %v214
  %v1155 = vunpack.c.l.b16 %v215
  %v1156 = vunpack.c.l.b16 %v216
  %v1157 = vunpack.c.h.b16 %v216
  %v1158 = vunpack.c.l.b16 %v217
  %v1159 = vunpack.c.h.b16 %v217
  %v1160 = vunpack.c.l.b16 %v218
  %v1161 = vunpack.c.h.b16 %v218
  %v1162 = vunpack.c.l.b16 %v219
  %v1163 = vunpack.c.h.b16 %v219
  %v1164 = vunpack.c.l.b16 %v220
  %v1165 = vunpack.c.l.b16 %v221
  %v1166 = vunpack.c.h.b16 %v221
  %v1167 = vunpack.c.l.b16 %v222
  %v1168 = vunpack.c.h.b16 %v222
  %v1169 = vunpack.c.l.b16 %v223
  %v1170 = vunpack.c.h.b16 %v223
  %v1171 = vunpack.c.l.b16 %v224
  %v1172 = vunpack.c.h.b16 %v224
  %v1173 = vunpack.c.l.b16 %v225
  %v1174 = vunpack.c.l.b16 %v226
  %v1175 = vunpack.c.h.b16 %v226
  %v1176 = vunpack.c.l.b16 %v227
  %v1177 = vunpack.c.h.b16 %v227
  %v1178 = vunpack.c.l.b16 %v228
  %v1179 = vunpack.c.h.b16 %v228
  %v1180 = vunpack.c.l.b16 %v229
  %v1181 = vunpack.c.h.b16 %v229
  %v1182 = vunpack.c.l.b16 %v230
  %v1183 = vunpack.c.l.b16 %v231
  %v1184 = vunpack.c.h.b16 %v231
  %v1185 = vunpack.c.l.b16 %v232
  %v1186 = vunpack.c.h.b16 %v232
  %v1187 = vunpack.c.l.b16 %v233
  %v1188 = vunpack.c.h.b16 %v233
  %v1189 = vunpack.c.l.b16 %v234
  %v1190 = vunpack.c.h.b16 %v234
  %v1191 = vunpack.c.l.b16 %v235
  %v1192 = vunpack.c.l.b16 %v236
  %v1193 = vunpack.c.h.b16 %v236
  %v1194 = vunpack.c.l.b16 %v237
  %v1195 = vunpack.c.h.b16 %v237
  %v1196 = vunpack.c.l.b16 %v238
  %v1197 = vunpack.c.h.b16 %v238
  %v1198 = vunpack.c.l.b16 %v239
  %v1199 = vunpack.c.h.b16 %v239
  %v1200 = vunpack.c.l.b16 %v240
  %v1201 = vunpack.c.l.b16 %v241
  %v1202 = vunpack.c.h.b16 %v241
  %v1203 = vunpack.c.l.b16 %v242
  %v1204 = vunpack.c.h.b16 %v242
  %v1205 = vunpack.c.l.b16 %v243
  %v1206 = vunpack.c.h.b16 %v243
  %v1207 = vunpack.c.l.b16 %v244
  %v1208 = vunpack.c.h.b16 %v244
  %v1209 = vunpack.c.l.b16 %v245
  %v1210 = vunpack.c.l.b16 %v246
  %v1211 = vunpack.c.h.b16 %v246
  %v1212 = vunpack.c.l.b16 %v247
  %v1213 = vunpack.c.h.b16 %v247
  %v1214 = vunpack.c.l.b16 %v248
  %v1215 = vunpack.c.h.b16 %v248
  %v1216 = vunpack.c.l.b16 %v249
  %v1217 = vunpack.c.h.b16 %v249
  %v1218 = vunpack.c.l.b16 %v250
  %v1219 = vunpack.c.l.b16 %v251
  %v1220 = vunpack.c.h.b16 %v251
  %v1221 = vunpack.c.l.b16 %v252
  %v1222 = vunpack.c.h.b16 %v252
  %v1223 = vunpack.c.l.b16 %v253
  %v1224 = vunpack.c.h.b16 %v253
  %v1225 = vunpack.c.l.b16 %v254
  %v1226 = vunpack.c.h.b16 %v254
  %v1227 = vunpack.c.l.b16 %v255
  %v1228 = vunpack.c.l.b16 %v256
  %v1229 = vunpack.c.h.b16 %v256
  %v1230 = vunpack.c.l.b16 %v257
  %v1231 = vunpack.c.h.b16 %v257
  %v1232 = vunpack.c.l.b16 %v258
  %v1233 = vunpack.c.h.b16 %v258
  %v1234 = vunpack.c.l.b16 %v259
  %v1235 = vunpack.c.h.b16 %v259
  %v1236 = vunpack.c.l.b16 %v260
  %v1237 = vunpack.c.l.b16 %v261
  %v1238 = vunpack.c.h.b16 %v261
  %v1239 = vunpack.c.l.b16 %v262
  %v1240 = vunpack.c.h.b16 %v262
  %v1241 = vunpack.c.l.b16 %v263
  %v1242 = vunpack.c.h.b16 %v263
  %v1243 = vunpack.c.l.b16 %v264
  %v1244 = vunpack.c.h.b16 %v264
  %v1245 = vunpack.c.l.b16 %v265
  %v1246 = vunpack.c.l.b16 %v266
  %v1247 = vunpack.c.h.b16 %v266
  %v1248 = vunpack.c.l.b16 %v267
  %v1249 = vunpack.c.h.b16 %v267
  %v1250 = vunpack.c.l.b16 %v268
  %v1251 = vunpack.c.h.b16 %v268
  %v1252 = vunpack.c.l.b16 %v269
  %v1253 = vunpack.c.h.b16 %v269
  %v1254 = vunpack.c.l.b16 %v270
  %v1255 = vunpack.c.l.b16 %v271
  %v1256 = vunpack.c.h.b16 %v271
  %v1257 = vunpack.c.l.b16 %v272
  %v1258 = vunpack.c.h.b16 %v272
  %v1259 = vunpack.c.l.b16 %v273
  %v1260 = vunpack.c.h.b16 %v273
  %v1261 = vunpack.c.l.b16 %v274
  %v1262 = vunpack.c.h.b16 %v274
  %v1263 = vunpack.c.l.b16 %v275
  %v1264 = vunpack.c.l.b16 %v276
  %v1265 = vunpack.c.h.b16 %v276
  %v1266 = vunpack.c.l.b16 %v277
  %v1267 = vunpack.c.h.b16 %v277
  %v1268 = vunpack.c.l.b16 %v278
  %v1269 = vunpack.c.h.b16 %v278
  %v1270 = vunpack.c.l.b16 %v279
  %v1271 = vunpack.c.h.b16 %v279
  %v1272 = vunpack.c.l.b16 %v280
  %v1273 = vunpack.c.l.b16 %v281
  %v1274 = vunpack.c.h.b16 %v281
  %v1275 = vunpack.c.l.b16 %v282
  %v1276 = vunpack.c.h.b16 %v282
  %v1277 = vunpack.c.l.b16 %v283
  %v1278 = vunpack.c.h.b16 %v283
  %v1279 = vunpack.c.l.b16 %v284
  %v1280 = vunpack.c.h.b16 %v284
  %v1281 = vunpack.c.l.b16 %v285
  %v1282 = vunpack.c.l.b16 %v286
  %v1283 = vunpack.c.h.b16 %v286
  %v1284 = vunpack.c.l.b16 %v287
  %v1285 = vunpack.c.h.b16 %v287
  %v1286 = vunpack.c.l.b16 %v288
  %v1287 = vunpack.c.h.b16 %v288
  %v1288 = vunpack.c.l.b16 %v289
  %v1289 = vunpack.c.h.b16 %v289
  %v1290 = vunpack.c.l.b16 %v290
  %v1291 = vunpack.c.l.b16 %v291
  %v1292 = vunpack.c.h.b16 %v291
  %v1293 = vunpack.c.l.b16 %v292
  %v1294 = vunpack.c.h.b16 %v292
  %v1295 = vunpack.c.l.b16 %v293
  %v1296 = vunpack.c.h.b16 %v293
  %v1297 = vunpack.c.l.b16 %v294
  %v1298 = vunpack.c.h.b16 %v294
  %v1299 = vunpack.c.l.b16 %v295
  %v1300 = vunpack.c.l.b16 %v296
  %v1301 = vunpack.c.h.b16 %v296
  %v1302 = vunpack.c.l.b16 %v297
  %v1303 = vunpack.c.h.b16 %v297
  %v1304 = vunpack.c.l.b16 %v298
  %v1305 = vunpack.c.h.b16 %v298
  %v1306 = vunpack.c.l.b16 %v299
  %v1307 = vunpack.c.h.b16 %v299
  %v1308 = vunpack.c.l.b16 %v300
  %v1309 = vunpack.c.l.b16 %v301
  %v1310 = vunpack.c.h.b16 %v301
  %v1311 = vunpack.c.l.b16 %v302
  %v1312 = vunpack.c.h.b16 %v302
  %v1313 = vunpack.c.l.b16 %v303
  %v1314 = vunpack.c.h.b16 %v303
  %v1315 = vunpack.c.l.b16 %v304
  %v1316 = vunpack.c.h.b16 %v304
  %v1317 = vunpack.c.l.b16 %v305
  %v1318 = vunpack.c.l.b16 %v306
  %v1319 = vunpack.c.h.b16 %v306
  %v1320 = vunpack.c.l.b16 %v307
  %v1321 = vunpack.c.h.b16 %v307
  %v1322 = vunpack.c.l.b16 %v308
  %v1323 = vunpack.c.h.b16 %v308
  %v1324 = vunpack.c.l.b16 %v309
  %v1325 = vunpack.c.h.b16 %v309
  %v1326 = vunpack.c.l.b16 %v310
  %v1327 = vunpack.c.l.b16 %v311
  %v1328 = vunpack.c.h.b16 %v311
  %v1329 = vunpack.c.l.b16 %v312
  %v1330 = vunpack.c.h.b16 %v312
  %v1331 = vunpack.c.l.b16 %v313
  %v1332 = vunpack.c.h.b16 %v313
  %v1333 = vunpack.c.l.b16 %v314
  %v1334 = vunpack.c.h.b16 %v314
  %v1335 = vunpack.c.l.b16 %v315
  %v1336 = vunpack.c.l.b16 %v316
  %v1337 = vunpack.c.h.b16 %v316
  %v1338 = vunpack.c.l.b16 %v317
  %v1339 = vunpack.c.h.b16 %v317
  %v1340 = vunpack.c.l.b16 %v318
  %v1341 = vunpack.c.h.b16 %v318
  %v1342 = vunpack.c.l.b16 %v319
  %v1343 = vunpack.c.h.b16 %v319
  %v1344 = vunpack.c.l.b16 %v320
  %v1345 = vunpack.c.l.b16 %v321
  %v1346 = vunpack.c.h.b16 %v321
  %v1347 = vunpack.c.l.b16 %v322
  %v1348 = vunpack.c.h.b16 %v322
  %v1349 = vunpack.c.l.b16 %v323
  %v1350 = vunpack.c.h.b16 %v323
  %v1351 = vunpack.c.l.b16 %v324
  %v1352 = vunpack.c.h.b16 %v324
  %v1353 = vunpack.c.l.b16 %v325
  %v1354 = vunpack.c.l.b16 %v326
  %v1355 = vunpack.c.h.b16 %v326
  %v1356 = vunpack.c.l.b16 %v327
  %v1357 = vunpack.c.h.b16 %v327
  %v1358 = vunpack.c.l.b16 %v328
  %v1359 = vunpack.c.h.b16 %v328
  %v1360 = vunpack.c.l.b16 %v329
  %v1361 = vunpack.c.h.b16 %v329
  %v1362 = vunpack.c.l.b16 %v330
  %v1363 = vunpack.c.l.b16 %v331
  %v1364 = vunpack.c.h.b16 %v331
  %v1365 = vunpack.c.l.b16 %v332
  %v1366 = vunpack.c.h.b16 %v332
  %v1367 = vunpack.c.l.b16 %v333
  %v1368 = vunpack.c.h.b16 %v333
  %v1369 = vunpack.c.l.b16 %v334
  %v1370 = vunpack.c.h.b16 %v334
  %v1371 = vunpack.c.l.b16 %v335
  %v1372 = vunpack.c.l.b16 %v336
  %v1373 = vunpack.c.h.b16 %v336
  %v1374 = vunpack.c.l.b16 %v337
  %v1375 = vunpack.c.h.b16 %v337
  %v1376 = vunpack.c.l.b16 %v338
  %v1377 = vunpack.c.h.b16 %v338
  %v1378 = vunpack.c.l.b16 %v339
  %v1379 = vunpack.c.h.b16 %v339
  %v1380 = vunpack.c.l.b16 %v340
  %v1381 = vpack.c.b16 %v814, %v805
  %v1382 = vpack.c.b16 %v815, %v806
  %v1383 = vpack.c.b16 %v816, %v807
  %v1384 = vpack.c.b16 %v817, %v808
  %v1385 = vpack.c.b16 %v818, %v809
  %v1386 = vpack.c.b16 %v819, %v810
  %v1387 = vpack.c.b16 %v820, %v811
  %v1388 = vpack.c.b16 %v821, %v812
  %v1389 = vpack.c.b16 %v822, %v813
  %v1390 = vpack.c.b16 %v832, %v823
  %v1391 = vpack.c.b16 %v833, %v824
  %v1392 = vpack.c.b16 %v834, %v825
  %v1393 = vpack.c.b16 %v835, %v826
  %v1394 = vpack.c.b16 %v836, %v827
  %v1395 = vpack.c.b16 %v837, %v828
  %v1396 = vpack.c.b16 %v838, %v829
  %v1397 = vpack.c.b16 %v839, %v830
  %v1398 = vpack.c.b16 %v840, %v831
  %v1399 = vpack.c.b16 %v850, %v841
  %v1400 = vpack.c.b16 %v851, %v842
  %v1401 = vpack.c.b16 %v852, %v843
  %v1402 = vpack.c.b16 %v853, %v844
  %v1403 = vpack.c.b16 %v854, %v845
  %v1404 = vpack.c.b16 %v855, %v846
  %v1405 = vpack.c.b16 %v856, %v847
  %v1406 = vpack.c.b16 %v857, %v848
  %v1407 = vpack.c.b16 %v858, %v849
  %v1408 = vpack.c.b16 %v868, %v859
  %v1409 = vpack.c.b16 %v869, %v860
  %v1410 = vpack.c.b16 %v870, %v861
  %v1411 = vpack.c.b16 %v871, %v862
  %v1412 = vpack.c.b16 %v872, %v863
  %v1413 = vpack.c.b16 %v873, %v864
  %v1414 = vpack.c.b16 %v874, %v865
  %v1415 = vpack.c.b16 %v875, %v866
  %v1416 = vpack.c.b16 %v876, %v867
  %v1417 = vpack.c.b16 %v886, %v877
  %v1418 = vpack.c.b16 %v887, %v878
  %v1419 = vpack.c.b16 %v888, %v879
  %v1420 = vpack.c.b16 %v889, %v880
  %v1421 = vpack.c.b16 %v890, %v881
  %v1422 = vpack.c.b16 %v891, %v882
  %v1423 = vpack.c.b16 %v892, %v883
  %v1424 = vpack.c.b16 %v893, %v884
  %v1425 = vpack.c.b16 %v894, %v885
  %v1426 = vpack.c.b16 %v904, %v895
  %v1427 = vpack.c.b16 %v905, %v896
  %v1428 = vpack.c.b16 %v906, %v897
  %v1429 = vpack.c.b16 %v907, %v898
  %v1430 = vpack.c.b16 %v908, %v899
  %v1431 = vpack.c.b16 %v909, %v900
  %v1432 = vpack.c.b16 %v910, %v901
  %v1433 = vpack.c.b16 %v911, %v902
  %v1434 = vpack.c.b16 %v912, %v903
  %v1435 = vpack.c.b16 %v922, %v913
  %v1436 = vpack.c.b16 %v923, %v914
  %v1437 = vpack.c.b16 %v924, %v915
  %v1438 = vpack.c.b16 %v925, %v916
  %v1439 = vpack.c.b16 %v926, %v917
  %v1440 = vpack.c.b16 %v927, %v918
  %v1441 = vpack.c.b16 %v928, %v919
  %v1442 = vpack.c.b16 %v929, %v920
  %v1443 = vpack.c.b16 %v930, %v921
  %v1444 = vpack.c.b16 %v940, %v931
  %v1445 = vpack.c.b16 %v941, %v932
  %v1446 = vpack.c.b16 %v942, %v933
  %v1447 = vpack.c.b16 %v943, %v934
  %v1448 = vpack.c.b16 %v944, %v935
  %v1449 = vpack.c.b16 %v945, %v936
  %v1450 = vpack.c.b16 %v946, %v937
  %v1451 = vpack.c.b16 %v947, %v938
  %v1452 = vpack.c.b16 %v948, %v939
  %v1453 = vpack.c.b16 %v958, %v949
  %v1454 = vpack.c.b16 %v959, %v950
  %v1455 = vpack.c.b16 %v960, %v951
  %v1456 = vpack.c.b16 %v961, %v952
  %v1457 = vpack.c.b16 %v962, %v953
  %v1458 = vpack.c.b16 %v963, %v954
  %v1459 = vpack.c.b16 %v964, %v955
  %v1460 = vpack.c.b16 %v965, %v956
  %v1461 = vpack.c.b16 %v966, %v957
  %v1462 = vpack.c.b16 %v976, %v967
  %v1463 = vpack.c.b16 %v977, %v968
  %v1464 = vpack.c.b16 %v978, %v969
  %v1465 = vpack.c.b16 %v979, %v970
  %v1466 = vpack.c.b16 %v980, %v971
  %v1467 = vpack.c.b16 %v981, %v972
  %v1468 = vpack.c.b16 %v982, %v973
  %v1469 = vpack.c.b16 %v983, %v974
  %v1470 = vpack.c.b16 %v984, %v975
  %v1471 = vpack.c.b16 %v994, %v985
  %v1472 = vpack.c.b16 %v995, %v986
  %v1473 = vpack.c.b16 %v996, %v987
  %v1474 = vpack.c.b16 %v997, %v988
  %v1475 = vpack.c.b16 %v998, %v989
  %v1476 = vpack.c.b16 %v999, %v990
  %v1477 = vpack.c.b16 %v1000, %v991
  %v1478 = vpack.c.b16 %v1001, %v992
  %v1479 = vpack.c.b16 %v1002, %v993
  %v1480 = vpack.c.b16 %v1012, %v1003
  %v1481 = vpack.c.b16 %v1013, %v1004
  %v1482 = vpack.c.b16 %v1014, %v1005
  %v1483 = vpack.c.b16 %v1015, %v1006
  %v1484 = vpack.c.b16 %v1016, %v1007
  %v1485 = vpack.c.b16 %v1017, %v1008
  %v1486 = vpack.c.b16 %v1018, %v1009
  %v1487 = vpack.c.b16 %v1019, %v1010
  %v1488 = vpack.c.b16 %v1020, %v1011
  %v1489 = vpack.c.b16 %v1030, %v1021
  %v1490 = vpack.c.b16 %v1031, %v1022
  %v1491 = vpack.c.b16 %v1032, %v1023
  %v1492 = vpack.c.b16 %v1033, %v1024
  %v1493 = vpack.c.b16 %v1034, %v1025
  %v1494 = vpack.c.b16 %v1035, %v1026
  %v1495 = vpack.c.b16 %v1036, %v1027
  %v1496 = vpack.c.b16 %v1037, %v1028
  %v1497 = vpack.c.b16 %v1038, %v1029
  %v1498 = vpack.c.b16 %v1048, %v1039
  %v1499 = vpack.c.b16 %v1049, %v1040
  %v1500 = vpack.c.b16 %v1050, %v1041
  %v1501 = vpack.c.b16 %v1051, %v1042
  %v1502 = vpack.c.b16 %v1052, %v1043
  %v1503 = vpack.c.b16 %v1053, %v1044
  %v1504 = vpack.c.b16 %v1054, %v1045
  %v1505 = vpack.c.b16 %v1055, %v1046
  %v1506 = vpack.c.b16 %v1056, %v1047
  %v1507 = vpack.c.b16 %v1066, %v1057
  %v1508 = vpack.c.b16 %v1067, %v1058
  %v1509 = vpack.c.b16 %v1068, %v1059
  %v1510 = vpack.c.b16 %v1069, %v1060
  %v1511 = vpack.c.b16 %v1070, %v1061
  %v1512 = vpack.c.b16 %v1071, %v1062
  %v1513 = vpack.c.b16 %v1072, %v1063
  %v1514 = vpack.c.b16 %v1073, %v1064
  %v1515 = vpack.c.b16 %v1074, %v1065
  %v1516 = vpack.c.b16 %v1084, %v1075
  %v1517 = vpack.c.b16 %v1085, %v1076
  %v1518 = vpack.c.b16 %v1086, %v1077
  %v1519 = vpack.c.b16 %v1087, %v1078
  %v1520 = vpack.c.b16 %v1088, %v1079
  %v1521 = vpack.c.b16 %v1089, %v1080
  %v1522 = vpack.c.b16 %v1090, %v1081
  %v1523 = vpack.c.b16 %v1091, %v1082
  %v1524 = vpack.c.b16 %v1092, %v1083
  %v1525 = vpack.c.b16 %v1102, %v1093
  %v1526 = vpack.c.b16 %v1103, %v1094
  %v1527 = vpack.c.b16 %v1104, %v1095
  %v1528 = vpack.c.b16 %v1105, %v1096
  %v1529 = vpack.c.b16 %v1106, %v1097
  %v1530 = vpack.c.b16 %v1107, %v1098
  %v1531 = vpack.c.b16 %v1108, %v1099
  %v1532 = vpack.c.b16 %v1109, %v1100
  %v1533 = vpack.c.b16 %v1110, %v1101
  %v1534 = vpack.c.b16 %v1120, %v1111
  %v1535 = vpack.c.b16 %v1121, %v1112
  %v1536 = vpack.c.b16 %v1122, %v1113
  %v1537 = vpack.c.b16 %v1123, %v1114
  %v1538 = vpack.c.b16 %v1124, %v1115
  %v1539 = vpack.c.b16 %v1125, %v1116
  %v1540 = vpack.c.b16 %v1126, %v1117
  %v1541 = vpack.c.b16 %v1127, %v1118
  %v1542 = vpack.c.b16 %v1128, %v1119
  %v1543 = vpack.c.b16 %v1138, %v1129
  %v1544 = vpack.c.b16 %v1139, %v1130
  %v1545 = vpack.c.b16 %v1140, %v1131
  %v1546 = vpack.c.b16 %v1141, %v1132
  %v1547 = vpack.c.b16 %v1142, %v1133
  %v1548 = vpack.c.b16 %v1143, %v1134
  %v1549 = vpack.c.b16 %v1144, %v1135
  %v1550 = vpack.c.b16 %v1145, %v1136
  %v1551 = vpack.c.b16 %v1146, %v1137
  %v1552 = vpack.c.b16 %v1156, %v1147
  %v1553 = vpack.c.b16 %v1157, %v1148
  %v1554 = vpack.c.b16 %v1158, %v1149
  %v1555 = vpack.c.b16 %v1159, %v1150
  %v1556 = vpack.c.b16 %v1160, %v1151
  %v1557 = vpack.c.b16 %v1161, %v1152
  %v1558 = vpack.c.b16 %v1162, %v1153
  %v1559 = vpack.c.b16 %v1163, %v1154
  %v1560 = vpack.c.b16 %v1164, %v1155
  %v1561 = vpack.c.b16 %v1174, %v1165
  %v1562 = vpack.c.b16 %v1175, %v1166
  %v1563 = vpack.c.b16 %v1176, %v1167
  %v1564 = vpack.c.b16 %v1177, %v1168
  %v1565 = vpack.c.b16 %v1178, %v1169
  %v1566 = vpack.c.b16 %v1179, %v1170
  %v1567 = vpack.c.b16 %v1180, %v1171
  %v1568 = vpack.c.b16 %v1181, %v1172
  %v1569 = vpack.c.b16 %v1182, %v1173
  %v1570 = vpack.c.b16 %v1192, %v1183
  %v1571 = vpack.c.b16 %v1193, %v1184
  %v1572 = vpack.c.b16 %v1194, %v1185
  %v1573 = vpack.c.b16 %v1195, %v1186
  %v1574 = vpack.c.b16 %v1196, %v1187
  %v1575 = vpack.c.b16 %v1197, %v1188
  %v1576 = vpack.c.b16 %v1198, %v1189
  %v1577 = vpack.c.b16 %v1199, %v1190
  %v1578 = vpack.c.b16 %v1200, %v1191
  %v1579 = vpack.c.b16 %v1210, %v1201
  %v1580 = vpack.c.b16 %v1211, %v1202
  %v1581 = vpack.c.b16 %v1212, %v1203
  %v1582 = vpack.c.b16 %v1213, %v1204
  %v1583 = vpack.c.b16 %v1214, %v1205
  %v1584 = vpack.c.b16 %v1215, %v1206
  %v1585 = vpack.c.b16 %v1216, %v1207
  %v1586 = vpack.c.b16 %v1217, %v1208
  %v1587 = vpack.c.b16 %v1218, %v1209
  %v1588 = vpack.c.b16 %v1228, %v1219
  %v1589 = vpack.c.b16 %v1229, %v1220
  %v1590 = vpack.c.b16 %v1230, %v1221
  %v1591 = vpack.c.b16 %v1231, %v1222
  %v1592 = vpack.c.b16 %v1232, %v1223
  %v1593 = vpack.c.b16 %v1233, %v1224
  %v1594 = vpack.c.b16 %v1234, %v1225
  %v1595 = vpack.c.b16 %v1235, %v1226
  %v1596 = vpack.c.b16 %v1236, %v1227
  %v1597 = vpack.c.b16 %v1246, %v1237
  %v1598 = vpack.c.b16 %v1247, %v1238
  %v1599 = vpack.c.b16 %v1248, %v1239
  %v1600 = vpack.c.b16 %v1249, %v1240
  %v1601 = vpack.c.b16 %v1250, %v1241
  %v1602 = vpack.c.b16 %v1251, %v1242
  %v1603 = vpack.c.b16 %v1252, %v1243
  %v1604 = vpack.c.b16 %v1253, %v1244
  %v1605 = vpack.c.b16 %v1254, %v1245
  %v1606 = vpack.c.b16 %v1264, %v1255
  %v1607 = vpack.c.b16 %v1265, %v1256
  %v1608 = vpack.c.b16 %v1266, %v1257
  %v1609 = vpack.c.b16 %v1267, %v1258
  %v1610 = vpack.c.b16 %v1268, %v1259
  %v1611 = vpack.c.b16 %v1269, %v1260
  %v1612 = vpack.c.b16 %v1270, %v1261
  %v1613 = vpack.c.b16 %v1271, %v1262
  %v1614 = vpack.c.b16 %v1272, %v1263
  %v1615 = vpack.c.b16 %v1282, %v1273
  %v1616 = vpack.c.b16 %v1283, %v1274
  %v1617 = vpack.c.b16 %v1284, %v1275
  %v1618 = vpack.c.b16 %v1285, %v1276
  %v1619 = vpack.c.b16 %v1286, %v1277
  %v1620 = vpack.c.b16 %v1287, %v1278
  %v1621 = vpack.c.b16 %v1288, %v1279
  %v1622 = vpack.c.b16 %v1289, %v1280
  %v1623 = vpack.c.b16 %v1290, %v1281
  %v1624 = vpack.c.b16 %v1300, %v1291
  %v1625 = vpack.c.b16 %v1301, %v1292
  %v1626 = vpack.c.b16 %v1302, %v1293
  %v1627 = vpack.c.b16 %v1303, %v1294
  %v1628 = vpack.c.b16 %v1304, %v1295
  %v1629 = vpack.c.b16 %v1305, %v1296
  %v1630 = vpack.c.b16 %v1306, %v1297
  %v1631 = vpack.c.b16 %v1307, %v1298
  %v1632 = vpack.c.b16 %v1308, %v1299
  %v1633 = vpack.c.b16 %v1318, %v1309
  %v1634 = vpack.c.b16 %v1319, %v1310
  %v1635 = vpack.c.b16 %v1320, %v1311
  %v1636 = vpack.c.b16 %v1321, %v1312
  %v1637 = vpack.c.b16 %v1322, %v1313
  %v1638 = vpack.c.b16 %v1323, %v1314
  %v1639 = vpack.c.b16 %v1324, %v1315
  %v1640 = vpack.c.b16 %v1325, %v1316
  %v1641 = vpack.c.b16 %v1326, %v1317
  %v1642 = vpack.c.b16 %v1336, %v1327
  %v1643 = vpack.c.b16 %v1337, %v1328
  %v1644 = vpack.c.b16 %v1338, %v1329
  %v1645 = vpack.c.b16 %v1339, %v1330
  %v1646 = vpack.c.b16 %v1340, %v1331
  %v1647 = vpack.c.b16 %v1341, %v1332
  %v1648 = vpack.c.b16 %v1342, %v1333
  %v1649 = vpack.c.b16 %v1343, %v1334
  %v1650 = vpack.c.b16 %v1344, %v1335
  %v1651 = vpack.c.b16 %v1354, %v1345
  %v1652 = vpack.c.b16 %v1355, %v1346
  %v1653 = vpack.c.b16 %v1356, %v1347
  %v1654 = vpack.c.b16 %v1357, %v1348
  %v1655 = vpack.c.b16 %v1358, %v1349
  %v1656 = vpack.c.b16 %v1359, %v1350
  %v1657 = vpack.c.b16 %v1360, %v1351
  %v1658 = vpack.c.b16 %v1361, %v1352
  %v1659 = vpack.c.b16 %v1362, %v1353
  %v1660 = vpack.c.b16 %v1372, %v1363
  %v1661 = vpack.c.b16 %v1373, %v1364
  %v1662 = vpack.c.b16 %v1374, %v1365
  %v1663 = vpack.c.b16 %v1375, %v1366
  %v1664 = vpack.c.b16 %v1376, %v1367
  %v1665 = vpack.c.b16 %v1377, %v1368
  %v1666 = vpack.c.b16 %v1378, %v1369
  %v1667 = vpack.c.b16 %v1379, %v1370
  %v1668 = vpack.c.b16 %v1380, %v1371
  %v2101 = vunpack.c.l.b16 %v341
  %v2102 = vunpack.c.l.b16 %v342
  %v2103 = vunpack.c.l.b16 %v343
  %v2104 = vunpack.c.l.b16 %v344
  %v2105 = vunpack.c.l.b16 %v345
  %v2106 = vunpack.c.l.b16 %v346
  %v2107 = vunpack.c.l.b16 %v347
  %v2108 = vunpack.c.l.b16 %v348
  %v2109 = vunpack.c.l.b16 %v349
  %v2110 = vunpack.c.l.b16 %v350
  %v2111 = vunpack.c.l.b16 %v351
  %v2112 = vunpack.c.l.b16 %v352
  %v2113 = vunpack.c.l.b16 %v353
  %v2114 = vunpack.c.l.b16 %v354
  %v2115 = vunpack.c.l.b16 %v355
  %v2116 = vunpack.c.l.b16 %v356
  %v2117 = vunpack.c.l.b16 %v357
  %v2118 = vunpack.c.l.b16 %v358
  %v2119 = vunpack.c.l.b16 %v359
  %v2120 = vunpack.c.l.b16 %v360
  %v2121 = vunpack.c.l.b16 %v361
  %v2122 = vunpack.c.l.b16 %v362
  %v2123 = vunpack.c.l.b16 %v363
  %v2124 = vunpack.c.l.b16 %v364
  %v2125 = vunpack.c.l.b16 %v365
  %v2126 = vunpack.c.l.b16 %v366
  %v2127 = vunpack.c.l.b16 %v367
  %v2128 = vunpack.c.l.b16 %v368
  %v2129 = vunpack.c.l.b16 %v369
  %v2130 = vunpack.c.l.b16 %v370
  %v2131 = vunpack.c.l.b16 %v371
  %v2132 = vunpack.c.l.b16 %v372
  %v2133 = vunpack.c.l.b16 %v373
  %v2134 = vunpack.c.l.b16 %v374
  %v2135 = vunpack.c.l.b16 %v375
  %v2136 = vunpack.c.l.b16 %v376
  %v2137 = vunpack.c.l.b16 %v377
  %v2138 = vunpack.c.l.b16 %v378
  %v2139 = vunpack.c.l.b16 %v379
  %v2140 = vunpack.c.l.b16 %v380
  %v2141 = vunpack.c.l.b16 %v381
  %v2142 = vunpack.c.l.b16 %v382
  %v2143 = vunpack.c.l.b16 %v383
  %v2144 = vunpack.c.l.b16 %v384
  %v2145 = vunpack.c.l.b16 %v385
  %v2146 = vunpack.c.l.b16 %v386
  %v2147 = vunpack.c.l.b16 %v387
  %v2148 = vunpack.c.l.b16 %v388
  %v2149 = vunpack.c.l.b16 %v389
  %v2150 = vunpack.c.l.b16 %v390
  %v2151 = vunpack.c.l.b16 %v391
  %v2152 = vunpack.c.l.b16 %v392
  %v2153 = vunpack.c.l.b16 %v393
  %v2154 = vunpack.c.l.b16 %v394
  %v2155 = vunpack.c.l.b16 %v395
  %v2156 = vunpack.c.l.b16 %v396
  %v2157 = vunpack.c.l.b16 %v397
  %v2158 = vunpack.c.l.b16 %v398
  %v2159 = vunpack.c.l.b16 %v399
  %v2160 = vunpack.c.l.b16 %v400
  %v2161 = vunpack.c.l.b16 %v401
  %v2162 = vunpack.c.l.b16 %v402
  %v2163 = vunpack.c.l.b16 %v403
  %v2164 = vunpack.c.l.b16 %v404
  %v2165 = vunpack.c.l.b16 %v405
  %v2166 = vunpack.c.l.b16 %v406
  %v2167 = vunpack.c.l.b16 %v407
  %v2168 = vunpack.c.l.b16 %v408
  %v2169 = vunpack.c.l.b16 %v409
  %v2170 = vunpack.c.l.b16 %v410
  %v2171 = vunpack.c.l.b16 %v411
  %v2172 = vunpack.c.l.b16 %v412
  %v2173 = vunpack.c.l.b16 %v413
  %v2174 = vunpack.c.l.b16 %v414
  %v2175 = vunpack.c.l.b16 %v415
  %v2176 = vunpack.c.l.b16 %v416
  %v2177 = vunpack.c.l.b16 %v417
  %v2178 = vunpack.c.l.b16 %v418
  %v2179 = vunpack.c.l.b16 %v419
  %v2180 = vunpack.c.l.b16 %v420
  %v2181 = vunpack.c.l.b16 %v421
  %v2182 = vunpack.c.l.b16 %v422
  %v2183 = vunpack.c.l.b16 %v423
  %v2184 = vunpack.c.l.b16 %v424
  %v2185 = vunpack.c.l.b16 %v425
  %v2186 = vunpack.c.l.b16 %v426
  %v2187 = vunpack.c.l.b16 %v427
  %v2188 = vunpack.c.l.b16 %v428
  %v2189 = vunpack.c.l.b16 %v429
  %v2190 = vunpack.c.l.b16 %v430
  %v2191 = vunpack.c.l.b16 %v431
  %v2192 = vunpack.c.l.b16 %v432
  %v2193 = vunpack.c.l.b16 %v433
  %v2194 = vunpack.c.l.b16 %v434
  %v2195 = vunpack.c.l.b16 %v435
  %v2196 = vunpack.c.l.b16 %v436
  %v2197 = vunpack.c.l.b16 %v437
  %v2198 = vunpack.c.l.b16 %v438
  %v2199 = vunpack.c.l.b16 %v439
  %v2200 = vunpack.c.l.b16 %v440
  %v2201 = vunpack.c.l.b16 %v441
  %v2202 = vunpack.c.l.b16 %v442
  %v2203 = vunpack.c.l.b16 %v443
  %v2204 = vunpack.c.l.b16 %v444
  %v2205 = vunpack.c.l.b16 %v445
  %v2206 = vunpack.c.l.b16 %v446
  %v2207 = vunpack.c.l.b16 %v447
  %v2208 = vunpack.c.l.b16 %v448
  %v2209 = vunpack.c.l.b16 %v449
  %v2210 = vunpack.c.l.b16 %v450
  %v2211 = vunpack.c.l.b16 %v451
  %v2212 = vunpack.c.l.b16 %v452
  %v2213 = vunpack.c.l.b16 %v453
  %v2214 = vunpack.c.l.b16 %v454
  %v2215 = vunpack.c.l.b16 %v455
  %v2216 = vunpack.c.l.b16 %v456
  %v2217 = vunpack.c.l.b16 %v457
  %v2218 = vunpack.c.l.b16 %v458
  %v2219 = vunpack.c.l.b16 %v459
  %v2220 = vunpack.c.l.b16 %v460
  %v2221 = vunpack.c.l.b16 %v461
  %v2222 = vunpack.c.l.b16 %v462
  %v2223 = vunpack.c.l.b16 %v463
  %v2224 = vunpack.c.l.b16 %v464
  %v2225 = vunpack.c.l.b16 %v465
  %v2226 = vunpack.c.l.b16 %v466
  %v2227 = vunpack.c.l.b16 %v467
  %v2228 = vunpack.c.l.b16 %v468
  %v2229 = vunpack.c.l.b16 %v469
  %v2230 = vunpack.c.l.b16 %v470
  %v2231 = vunpack.c.l.b16 %v471
  %v2232 = vunpack.c.l.b16 %v472
  %v2233 = vunpack.c.l.b16 %v473
  %v2234 = vunpack.c.l.b16 %v474
  %v2235 = vunpack.c.l.b16 %v475
  %v2236 = vunpack.c.l.b16 %v476
  %v2237 = vunpack.c.l.b16 %v477
  %v2238 = vunpack.c.l.b16 %v478
  %v2239 = vunpack.c.l.b16 %v479
  %v2240 = vunpack.c.l.b16 %v480
  %v2241 = vunpack.c.l.b16 %v481
  %v2242 = vunpack.c.l.b16 %v482
  %v2243 = vunpack.c.l.b16 %v483
  %v2244 = vunpack.c.l.b16 %v484
  %v2245 = vpack.c.b16 %v2102, %v2101
  %v2246 = vpack.c.b16 %v2104, %v2103
  %v2247 = vpack.c.b16 %v2106, %v2105
  %v2248 = vpack.c.b16 %v2108, %v2107
  %v2249 = vpack.c.b16 %v2110, %v2109
  %v2250 = vpack.c.b16 %v2112, %v2111
  %v2251 = vpack.c.b16 %v2114, %v2113
  %v2252 = vpack.c.b16 %v2116, %v2115
  %v2253 = vpack.c.b16 %v2118, %v2117
  %v2254 = vpack.c.b16 %v2120, %v2119
  %v2255 = vpack.c.b16 %v2122, %v2121
  %v2256 = vpack.c.b16 %v2124, %v2123
  %v2257 = vpack.c.b16 %v2126, %v2125
  %v2258 = vpack.c.b16 %v2128, %v2127
  %v2259 = vpack.c.b16 %v2130, %v2129
  %v2260 = vpack.c.b16 %v2132, %v2131
  %v2261 = vpack.c.b16 %v2134, %v2133
  %v2262 = vpack.c.b16 %v2136, %v2135
  %v2263 = vpack.c.b16 %v2138, %v2137
  %v2264 = vpack.c.b16 %v2140, %v2139
  %v2265 = vpack.c.b16 %v2142, %v2141
  %v2266 = vpack.c.b16 %v2144, %v2143
  %v2267 = vpack.c.b16 %v2146, %v2145
  %v2268 = vpack.c.b16 %v2148, %v2147
  %v2269 = vpack.c.b16 %v2150, %v2149
  %v2270 = vpack.c.b16 %v2152, %v2151
  %v2271 = vpack.c.b16 %v2154, %v2153
  %v2272 = vpack.c.b16 %v2156, %v2155
  %v2273 = vpack.c.b16 %v2158, %v2157
  %v2274 = vpack.c.b16 %v2160, %v2159
  %v2275 = vpack.c.b16 %v2162, %v2161
  %v2276 = vpack.c.b16 %v2164, %v2163
  %v2277 = vpack.c.b16 %v2166, %v2165
  %v2278 = vpack.c.b16 %v2168, %v2167
  %v2279 = vpack.c.b16 %v2170, %v2169
  %v2280 = vpack.c.b16 %v2172, %v2171
  %v2281 = vpack.c.b16 %v2174, %v2173
  %v2282 = vpack.c.b16 %v2176, %v2175
  %v2283 = vpack.c.b16 %v2178, %v2177
  %v2284 = vpack.c.b16 %v2180, %v2179
  %v2285 = vpack.c.b16 %v2182, %v2181
  %v2286 = vpack.c.b16 %v2184, %v2183
  %v2287 = vpack.c.b16 %v2186, %v2185
  %v2288 = vpack.c.b16 %v2188, %v2187
  %v2289 = vpack.c.b16 %v2190, %v2189
  %v2290 = vpack.c.b16 %v2192, %v2191
  %v2291 = vpack.c.b16 %v2194, %v2193
  %v2292 = vpack.c.b16 %v2196, %v2195
  %v2293 = vpack.c.b16 %v2198, %v2197
  %v2294 = vpack.c.b16 %v2200, %v2199
  %v2295 = vpack.c.b16 %v2202, %v2201
  %v2296 = vpack.c.b16 %v2204, %v2203
  %v2297 = vpack.c.b16 %v2206, %v2205
  %v2298 = vpack.c.b16 %v2208, %v2207
  %v2299 = vpack.c.b16 %v2210, %v2209
  %v2300 = vpack.c.b16 %v2212, %v2211
  %v2301 = vpack.c.b16 %v2214, %v2213
  %v2302 = vpack.c.b16 %v2216, %v2215
  %v2303 = vpack.c.b16 %v2218, %v2217
  %v2304 = vpack.c.b16 %v2220, %v2219
  %v2305 = vpack.c.b16 %v2222, %v2221
  %v2306 = vpack.c.b16 %v2224, %v2223
  %v2307 = vpack.c.b16 %v2226, %v2225
  %v2308 = vpack.c.b16 %v2228, %v2227
  %v2309 = vpack.c.b16 %v2230, %v2229
  %v2310 = vpack.c.b16 %v2232, %v2231
  %v2311 = vpack.c.b16 %v2234, %v2233
  %v2312 = vpack.c.b16 %v2236, %v2235
  %v2313 = vpack.c.b16 %v2238, %v2237
  %v2314 = vpack.c.b16 %v2240, %v2239
  %v2315 = vpack.c.b16 %v2242, %v2241
  %v2316 = vpack.c.b16 %v2244, %v2243
  %2389 = vmatprep.subr.bf16.mxu0 0
  %2390 = vmatpush1.bf16.msra.mxu0 %v2252
  %2391 = vmatprep.subr.bf16.mxu0 0
  %2392 = vmatpush1.bf16.msra.mxu0 %v2251
  %2393 = vmatprep.subr.bf16.mxu0 0
  %2394 = vmatpush1.bf16.msra.mxu0 %v2250
  %2395 = vmatprep.subr.bf16.mxu0 0
  %2396 = vmatpush1.bf16.msra.mxu0 %v2249
  %2397 = vmatprep.subr.bf16.mxu0 0
  %2398 = vmatpush1.bf16.msra.mxu0 %v2248
  %2399 = vmatprep.subr.bf16.mxu0 0
  %2400 = vmatpush1.bf16.msra.mxu0 %v2247
  %2401 = vmatprep.subr.bf16.mxu0 0
  %2402 = vmatpush1.bf16.msra.mxu0 %v2246
  %2403 = vmatprep.subr.bf16.mxu0 0
  %2404 = vmatpush1.bf16.msra.mxu0 %v2245
  %2405 = vmatprep.subr.bf16.mxu0 0
  %2406 = vmatpush2.bf16.msra.mxu0 %v2260
  %2407 = vmatprep.subr.bf16.mxu0 0
  %2408 = vmatpush2.bf16.msra.mxu0 %v2259
  %2409 = vmatprep.subr.bf16.mxu0 0
  %2410 = vmatpush2.bf16.msra.mxu0 %v2258
  %2411 = vmatprep.subr.bf16.mxu0 0
  %2412 = vmatpush2.bf16.msra.mxu0 %v2257
  %2413 = vmatprep.subr.bf16.mxu0 0
  %2414 = vmatpush2.bf16.msra.mxu0 %v2256
  %2415 = vmatprep.subr.bf16.mxu0 0
  %2416 = vmatpush2.bf16.msra.mxu0 %v2255
  %2417 = vmatprep.subr.bf16.mxu0 0
  %2418 = vmatpush2.bf16.msra.mxu0 %v2254
  %2419 = vmatprep.subr.bf16.mxu0 0
  %2420 = vmatpush2.bf16.msra.mxu0 %v2253
  %2421 = vmatprep.mubr.bf16.mxu0 %v1382
  %2422 = vmatmul.mubr.bf16.gmra.mxu0 %v1381
  %v2423 = vpop.f32.mrf.mxu0
  %v2424 = vadd.f32 0.0, %v2423
  %v2425 = vpop.f32.mrf.mxu0
  %v2426 = vpop.f32.mrf.mxu0
  %v2427 = vadd.f32 0.0, %v2426
  %v2428 = vpop.f32.mrf.mxu0
  %2429 = vmatprep.mubr.bf16.mxu0 %v1391
  %2430 = vmatmul.mubr.bf16.gmra.mxu0 %v1390
  %v2431 = vpop.f32.mrf.mxu0
  %v2432 = vadd.f32 0.0, %v2431
  %v2433 = vpop.f32.mrf.mxu0
  %v2434 = vpop.f32.mrf.mxu0
  %v2435 = vadd.f32 0.0, %v2434
  %v2436 = vpop.f32.mrf.mxu0
  %2437 = vmatprep.mubr.bf16.mxu0 %v1400
  %2438 = vmatmul.mubr.bf16.gmra.mxu0 %v1399
  %v2439 = vpop.f32.mrf.mxu0
  %v2440 = vadd.f32 0.0, %v2439
  %v2441 = vpop.f32.mrf.mxu0
  %v2442 = vpop.f32.mrf.mxu0
  %v2443 = vadd.f32 0.0, %v2442
  %v2444 = vpop.f32.mrf.mxu0
  %2445 = vmatprep.mubr.bf16.mxu0 %v1409
  %2446 = vmatmul.mubr.bf16.gmra.mxu0 %v1408
  %v2447 = vpop.f32.mrf.mxu0
  %v2448 = vadd.f32 0.0, %v2447
  %v2449 = vpop.f32.mrf.mxu0
  %v2450 = vpop.f32.mrf.mxu0
  %v2451 = vadd.f32 0.0, %v2450
  %v2452 = vpop.f32.mrf.mxu0
  %2453 = vmatprep.mubr.bf16.mxu0 %v1418
  %2454 = vmatmul.mubr.bf16.gmra.mxu0 %v1417
  %v2455 = vpop.f32.mrf.mxu0
  %v2456 = vadd.f32 0.0, %v2455
  %v2457 = vpop.f32.mrf.mxu0
  %v2458 = vpop.f32.mrf.mxu0
  %v2459 = vadd.f32 0.0, %v2458
  %v2460 = vpop.f32.mrf.mxu0
  %2461 = vmatprep.mubr.bf16.mxu0 %v1427
  %2462 = vmatmul.mubr.bf16.gmra.mxu0 %v1426
  %v2463 = vpop.f32.mrf.mxu0
  %v2464 = vadd.f32 0.0, %v2463
  %v2465 = vpop.f32.mrf.mxu0
  %v2466 = vpop.f32.mrf.mxu0
  %v2467 = vadd.f32 0.0, %v2466
  %v2468 = vpop.f32.mrf.mxu0
  %2469 = vmatprep.mubr.bf16.mxu0 %v1436
  %2470 = vmatmul.mubr.bf16.gmra.mxu0 %v1435
  %v2471 = vpop.f32.mrf.mxu0
  %v2472 = vadd.f32 0.0, %v2471
  %v2473 = vpop.f32.mrf.mxu0
  %v2474 = vpop.f32.mrf.mxu0
  %v2475 = vadd.f32 0.0, %v2474
  %v2476 = vpop.f32.mrf.mxu0
  %2477 = vmatprep.mubr.bf16.mxu0 %v1445
  %2478 = vmatmul.mubr.bf16.gmra.mxu0 %v1444
  %v2479 = vpop.f32.mrf.mxu0
  %v2480 = vadd.f32 0.0, %v2479
  %v2481 = vpop.f32.mrf.mxu0
  %v2482 = vpop.f32.mrf.mxu0
  %v2483 = vadd.f32 0.0, %v2482
  %v2484 = vpop.f32.mrf.mxu0
  %2485 = vmatprep.mubr.bf16.mxu0 %v1454
  %2486 = vmatmul.mubr.bf16.gmra.mxu0 %v1453
  %v2487 = vpop.f32.mrf.mxu0
  %v2488 = vadd.f32 0.0, %v2487
  %v2489 = vpop.f32.mrf.mxu0
  %v2490 = vpop.f32.mrf.mxu0
  %v2491 = vadd.f32 0.0, %v2490
  %v2492 = vpop.f32.mrf.mxu0
  %2493 = vmatprep.mubr.bf16.mxu0 %v1463
  %2494 = vmatmul.mubr.bf16.gmra.mxu0 %v1462
  %v2495 = vpop.f32.mrf.mxu0
  %v2496 = vadd.f32 0.0, %v2495
  %v2497 = vpop.f32.mrf.mxu0
  %v2498 = vpop.f32.mrf.mxu0
  %v2499 = vadd.f32 0.0, %v2498
  %v2500 = vpop.f32.mrf.mxu0
  %2501 = vmatprep.mubr.bf16.mxu0 %v1472
  %2502 = vmatmul.mubr.bf16.gmra.mxu0 %v1471
  %v2503 = vpop.f32.mrf.mxu0
  %v2504 = vadd.f32 0.0, %v2503
  %v2505 = vpop.f32.mrf.mxu0
  %v2506 = vpop.f32.mrf.mxu0
  %v2507 = vadd.f32 0.0, %v2506
  %v2508 = vpop.f32.mrf.mxu0
  %2509 = vmatprep.mubr.bf16.mxu0 %v1481
  %2510 = vmatmul.mubr.bf16.gmra.mxu0 %v1480
  %v2511 = vpop.f32.mrf.mxu0
  %v2512 = vadd.f32 0.0, %v2511
  %v2513 = vpop.f32.mrf.mxu0
  %v2514 = vpop.f32.mrf.mxu0
  %v2515 = vadd.f32 0.0, %v2514
  %v2516 = vpop.f32.mrf.mxu0
  %2517 = vmatprep.mubr.bf16.mxu0 %v1490
  %2518 = vmatmul.mubr.bf16.gmra.mxu0 %v1489
  %v2519 = vpop.f32.mrf.mxu0
  %v2520 = vadd.f32 0.0, %v2519
  %v2521 = vpop.f32.mrf.mxu0
  %v2522 = vpop.f32.mrf.mxu0
  %v2523 = vadd.f32 0.0, %v2522
  %v2524 = vpop.f32.mrf.mxu0
  %2525 = vmatprep.mubr.bf16.mxu0 %v1499
  %2526 = vmatmul.mubr.bf16.gmra.mxu0 %v1498
  %v2527 = vpop.f32.mrf.mxu0
  %v2528 = vadd.f32 0.0, %v2527
  %v2529 = vpop.f32.mrf.mxu0
  %v2530 = vpop.f32.mrf.mxu0
  %v2531 = vadd.f32 0.0, %v2530
  %v2532 = vpop.f32.mrf.mxu0
  %2533 = vmatprep.mubr.bf16.mxu0 %v1508
  %2534 = vmatmul.mubr.bf16.gmra.mxu0 %v1507
  %v2535 = vpop.f32.mrf.mxu0
  %v2536 = vadd.f32 0.0, %v2535
  %v2537 = vpop.f32.mrf.mxu0
  %v2538 = vpop.f32.mrf.mxu0
  %v2539 = vadd.f32 0.0, %v2538
  %v2540 = vpop.f32.mrf.mxu0
  %2541 = vmatprep.mubr.bf16.mxu0 %v1517
  %2542 = vmatmul.mubr.bf16.gmra.mxu0 %v1516
  %v2543 = vpop.f32.mrf.mxu0
  %v2544 = vadd.f32 0.0, %v2543
  %v2545 = vpop.f32.mrf.mxu0
  %v2546 = vpop.f32.mrf.mxu0
  %v2547 = vadd.f32 0.0, %v2546
  %v2548 = vpop.f32.mrf.mxu0
  %2549 = vmatprep.mubr.bf16.mxu0 %v1526
  %2550 = vmatmul.mubr.bf16.gmra.mxu0 %v1525
  %v2551 = vpop.f32.mrf.mxu0
  %v2552 = vadd.f32 0.0, %v2551
  %v2553 = vpop.f32.mrf.mxu0
  %v2554 = vpop.f32.mrf.mxu0
  %v2555 = vadd.f32 0.0, %v2554
  %v2556 = vpop.f32.mrf.mxu0
  %2557 = vmatprep.mubr.bf16.mxu0 %v1535
  %2558 = vmatmul.mubr.bf16.gmra.mxu0 %v1534
  %v2559 = vpop.f32.mrf.mxu0
  %v2560 = vadd.f32 0.0, %v2559
  %v2561 = vpop.f32.mrf.mxu0
  %v2562 = vpop.f32.mrf.mxu0
  %v2563 = vadd.f32 0.0, %v2562
  %v2564 = vpop.f32.mrf.mxu0
  %2565 = vmatprep.mubr.bf16.mxu0 %v1544
  %2566 = vmatmul.mubr.bf16.gmra.mxu0 %v1543
  %v2567 = vpop.f32.mrf.mxu0
  %v2568 = vadd.f32 0.0, %v2567
  %v2569 = vpop.f32.mrf.mxu0
  %v2570 = vpop.f32.mrf.mxu0
  %v2571 = vadd.f32 0.0, %v2570
  %v2572 = vpop.f32.mrf.mxu0
  %2573 = vmatprep.mubr.bf16.mxu0 %v1553
  %2574 = vmatmul.mubr.bf16.gmra.mxu0 %v1552
  %v2575 = vpop.f32.mrf.mxu0
  %v2576 = vadd.f32 0.0, %v2575
  %v2577 = vpop.f32.mrf.mxu0
  %v2578 = vpop.f32.mrf.mxu0
  %v2579 = vadd.f32 0.0, %v2578
  %v2580 = vpop.f32.mrf.mxu0
  %2581 = vmatprep.mubr.bf16.mxu0 %v1562
  %2582 = vmatmul.mubr.bf16.gmra.mxu0 %v1561
  %v2583 = vpop.f32.mrf.mxu0
  %v2584 = vadd.f32 0.0, %v2583
  %v2585 = vpop.f32.mrf.mxu0
  %v2586 = vpop.f32.mrf.mxu0
  %v2587 = vadd.f32 0.0, %v2586
  %v2588 = vpop.f32.mrf.mxu0
  %2589 = vmatprep.mubr.bf16.mxu0 %v1571
  %2590 = vmatmul.mubr.bf16.gmra.mxu0 %v1570
  %v2591 = vpop.f32.mrf.mxu0
  %v2592 = vadd.f32 0.0, %v2591
  %v2593 = vpop.f32.mrf.mxu0
  %v2594 = vpop.f32.mrf.mxu0
  %v2595 = vadd.f32 0.0, %v2594
  %v2596 = vpop.f32.mrf.mxu0
  %2597 = vmatprep.mubr.bf16.mxu0 %v1580
  %2598 = vmatmul.mubr.bf16.gmra.mxu0 %v1579
  %v2599 = vpop.f32.mrf.mxu0
  %v2600 = vadd.f32 0.0, %v2599
  %v2601 = vpop.f32.mrf.mxu0
  %v2602 = vpop.f32.mrf.mxu0
  %v2603 = vadd.f32 0.0, %v2602
  %v2604 = vpop.f32.mrf.mxu0
  %2605 = vmatprep.mubr.bf16.mxu0 %v1589
  %2606 = vmatmul.mubr.bf16.gmra.mxu0 %v1588
  %v2607 = vpop.f32.mrf.mxu0
  %v2608 = vadd.f32 0.0, %v2607
  %v2609 = vpop.f32.mrf.mxu0
  %v2610 = vpop.f32.mrf.mxu0
  %v2611 = vadd.f32 0.0, %v2610
  %v2612 = vpop.f32.mrf.mxu0
  %2613 = vmatprep.mubr.bf16.mxu0 %v1598
  %2614 = vmatmul.mubr.bf16.gmra.mxu0 %v1597
  %v2615 = vpop.f32.mrf.mxu0
  %v2616 = vadd.f32 0.0, %v2615
  %v2617 = vpop.f32.mrf.mxu0
  %v2618 = vpop.f32.mrf.mxu0
  %v2619 = vadd.f32 0.0, %v2618
  %v2620 = vpop.f32.mrf.mxu0
  %2621 = vmatprep.mubr.bf16.mxu0 %v1607
  %2622 = vmatmul.mubr.bf16.gmra.mxu0 %v1606
  %v2623 = vpop.f32.mrf.mxu0
  %v2624 = vadd.f32 0.0, %v2623
  %v2625 = vpop.f32.mrf.mxu0
  %v2626 = vpop.f32.mrf.mxu0
  %v2627 = vadd.f32 0.0, %v2626
  %v2628 = vpop.f32.mrf.mxu0
  %2629 = vmatprep.mubr.bf16.mxu0 %v1616
  %2630 = vmatmul.mubr.bf16.gmra.mxu0 %v1615
  %v2631 = vpop.f32.mrf.mxu0
  %v2632 = vadd.f32 0.0, %v2631
  %v2633 = vpop.f32.mrf.mxu0
  %v2634 = vpop.f32.mrf.mxu0
  %v2635 = vadd.f32 0.0, %v2634
  %v2636 = vpop.f32.mrf.mxu0
  %2637 = vmatprep.mubr.bf16.mxu0 %v1625
  %2638 = vmatmul.mubr.bf16.gmra.mxu0 %v1624
  %v2639 = vpop.f32.mrf.mxu0
  %v2640 = vadd.f32 0.0, %v2639
  %v2641 = vpop.f32.mrf.mxu0
  %v2642 = vpop.f32.mrf.mxu0
  %v2643 = vadd.f32 0.0, %v2642
  %v2644 = vpop.f32.mrf.mxu0
  %2645 = vmatprep.mubr.bf16.mxu0 %v1634
  %2646 = vmatmul.mubr.bf16.gmra.mxu0 %v1633
  %v2647 = vpop.f32.mrf.mxu0
  %v2648 = vadd.f32 0.0, %v2647
  %v2649 = vpop.f32.mrf.mxu0
  %v2650 = vpop.f32.mrf.mxu0
  %v2651 = vadd.f32 0.0, %v2650
  %v2652 = vpop.f32.mrf.mxu0
  %2653 = vmatprep.mubr.bf16.mxu0 %v1643
  %2654 = vmatmul.mubr.bf16.gmra.mxu0 %v1642
  %v2655 = vpop.f32.mrf.mxu0
  %v2656 = vadd.f32 0.0, %v2655
  %v2657 = vpop.f32.mrf.mxu0
  %v2658 = vpop.f32.mrf.mxu0
  %v2659 = vadd.f32 0.0, %v2658
  %v2660 = vpop.f32.mrf.mxu0
  %2661 = vmatprep.mubr.bf16.mxu0 %v1652
  %2662 = vmatmul.mubr.bf16.gmra.mxu0 %v1651
  %v2663 = vpop.f32.mrf.mxu0
  %v2664 = vadd.f32 0.0, %v2663
  %v2665 = vpop.f32.mrf.mxu0
  %v2666 = vpop.f32.mrf.mxu0
  %v2667 = vadd.f32 0.0, %v2666
  %v2668 = vpop.f32.mrf.mxu0
  %2669 = vmatprep.mubr.bf16.mxu0 %v1661
  %2670 = vmatmul.mubr.bf16.gmra.mxu0 %v1660
  %v2671 = vpop.f32.mrf.mxu0
  %v2672 = vadd.f32 0.0, %v2671
  %v2673 = vpop.f32.mrf.mxu0
  %v2674 = vpop.f32.mrf.mxu0
  %v2675 = vadd.f32 0.0, %v2674
  %v2676 = vpop.f32.mrf.mxu0
  %2677 = vdwg.mxu0
  %2678 = vmatprep.subr.bf16.mxu0 0
  %2679 = vmatpush1.bf16.msra.mxu0 %v2268
  %2680 = vmatprep.subr.bf16.mxu0 0
  %2681 = vmatpush1.bf16.msra.mxu0 %v2267
  %2682 = vmatprep.subr.bf16.mxu0 0
  %2683 = vmatpush1.bf16.msra.mxu0 %v2266
  %2684 = vmatprep.subr.bf16.mxu0 0
  %2685 = vmatpush1.bf16.msra.mxu0 %v2265
  %2686 = vmatprep.subr.bf16.mxu0 0
  %2687 = vmatpush1.bf16.msra.mxu0 %v2264
  %2688 = vmatprep.subr.bf16.mxu0 0
  %2689 = vmatpush1.bf16.msra.mxu0 %v2263
  %2690 = vmatprep.subr.bf16.mxu0 0
  %2691 = vmatpush1.bf16.msra.mxu0 %v2262
  %2692 = vmatprep.subr.bf16.mxu0 0
  %2693 = vmatpush1.bf16.msra.mxu0 %v2261
  %2694 = vmatprep.subr.bf16.mxu0 0
  %2695 = vmatpush2.bf16.msra.mxu0 %v2276
  %2696 = vmatprep.subr.bf16.mxu0 0
  %2697 = vmatpush2.bf16.msra.mxu0 %v2275
  %2698 = vmatprep.subr.bf16.mxu0 0
  %2699 = vmatpush2.bf16.msra.mxu0 %v2274
  %2700 = vmatprep.subr.bf16.mxu0 0
  %2701 = vmatpush2.bf16.msra.mxu0 %v2273
  %2702 = vmatprep.subr.bf16.mxu0 0
  %2703 = vmatpush2.bf16.msra.mxu0 %v2272
  %2704 = vmatprep.subr.bf16.mxu0 0
  %2705 = vmatpush2.bf16.msra.mxu0 %v2271
  %2706 = vmatprep.subr.bf16.mxu0 0
  %2707 = vmatpush2.bf16.msra.mxu0 %v2270
  %2708 = vmatprep.subr.bf16.mxu0 0
  %2709 = vmatpush2.bf16.msra.mxu0 %v2269
  %2710 = vmatprep.mubr.bf16.mxu0 %v1384
  %2711 = vmatmul.mubr.bf16.gmra.mxu0 %v1383
  %v2712 = vpop.f32.mrf.mxu0
  %v2713 = vadd.f32 %v2424, %v2712
  %v2714 = vpop.f32.mrf.mxu0
  %v2715 = vpop.f32.mrf.mxu0
  %v2716 = vadd.f32 %v2427, %v2715
  %v2717 = vpop.f32.mrf.mxu0
  %2718 = vmatprep.mubr.bf16.mxu0 %v1393
  %2719 = vmatmul.mubr.bf16.gmra.mxu0 %v1392
  %v2720 = vpop.f32.mrf.mxu0
  %v2721 = vadd.f32 %v2432, %v2720
  %v2722 = vpop.f32.mrf.mxu0
  %v2723 = vpop.f32.mrf.mxu0
  %v2724 = vadd.f32 %v2435, %v2723
  %v2725 = vpop.f32.mrf.mxu0
  %2726 = vmatprep.mubr.bf16.mxu0 %v1402
  %2727 = vmatmul.mubr.bf16.gmra.mxu0 %v1401
  %v2728 = vpop.f32.mrf.mxu0
  %v2729 = vadd.f32 %v2440, %v2728
  %v2730 = vpop.f32.mrf.mxu0
  %v2731 = vpop.f32.mrf.mxu0
  %v2732 = vadd.f32 %v2443, %v2731
  %v2733 = vpop.f32.mrf.mxu0
  %2734 = vmatprep.mubr.bf16.mxu0 %v1411
  %2735 = vmatmul.mubr.bf16.gmra.mxu0 %v1410
  %v2736 = vpop.f32.mrf.mxu0
  %v2737 = vadd.f32 %v2448, %v2736
  %v2738 = vpop.f32.mrf.mxu0
  %v2739 = vpop.f32.mrf.mxu0
  %v2740 = vadd.f32 %v2451, %v2739
  %v2741 = vpop.f32.mrf.mxu0
  %2742 = vmatprep.mubr.bf16.mxu0 %v1420
  %2743 = vmatmul.mubr.bf16.gmra.mxu0 %v1419
  %v2744 = vpop.f32.mrf.mxu0
  %v2745 = vadd.f32 %v2456, %v2744
  %v2746 = vpop.f32.mrf.mxu0
  %v2747 = vpop.f32.mrf.mxu0
  %v2748 = vadd.f32 %v2459, %v2747
  %v2749 = vpop.f32.mrf.mxu0
  %2750 = vmatprep.mubr.bf16.mxu0 %v1429
  %2751 = vmatmul.mubr.bf16.gmra.mxu0 %v1428
  %v2752 = vpop.f32.mrf.mxu0
  %v2753 = vadd.f32 %v2464, %v2752
  %v2754 = vpop.f32.mrf.mxu0
  %v2755 = vpop.f32.mrf.mxu0
  %v2756 = vadd.f32 %v2467, %v2755
  %v2757 = vpop.f32.mrf.mxu0
  %2758 = vmatprep.mubr.bf16.mxu0 %v1438
  %2759 = vmatmul.mubr.bf16.gmra.mxu0 %v1437
  %v2760 = vpop.f32.mrf.mxu0
  %v2761 = vadd.f32 %v2472, %v2760
  %v2762 = vpop.f32.mrf.mxu0
  %v2763 = vpop.f32.mrf.mxu0
  %v2764 = vadd.f32 %v2475, %v2763
  %v2765 = vpop.f32.mrf.mxu0
  %2766 = vmatprep.mubr.bf16.mxu0 %v1447
  %2767 = vmatmul.mubr.bf16.gmra.mxu0 %v1446
  %v2768 = vpop.f32.mrf.mxu0
  %v2769 = vadd.f32 %v2480, %v2768
  %v2770 = vpop.f32.mrf.mxu0
  %v2771 = vpop.f32.mrf.mxu0
  %v2772 = vadd.f32 %v2483, %v2771
  %v2773 = vpop.f32.mrf.mxu0
  %2774 = vmatprep.mubr.bf16.mxu0 %v1456
  %2775 = vmatmul.mubr.bf16.gmra.mxu0 %v1455
  %v2776 = vpop.f32.mrf.mxu0
  %v2777 = vadd.f32 %v2488, %v2776
  %v2778 = vpop.f32.mrf.mxu0
  %v2779 = vpop.f32.mrf.mxu0
  %v2780 = vadd.f32 %v2491, %v2779
  %v2781 = vpop.f32.mrf.mxu0
  %2782 = vmatprep.mubr.bf16.mxu0 %v1465
  %2783 = vmatmul.mubr.bf16.gmra.mxu0 %v1464
  %v2784 = vpop.f32.mrf.mxu0
  %v2785 = vadd.f32 %v2496, %v2784
  %v2786 = vpop.f32.mrf.mxu0
  %v2787 = vpop.f32.mrf.mxu0
  %v2788 = vadd.f32 %v2499, %v2787
  %v2789 = vpop.f32.mrf.mxu0
  %2790 = vmatprep.mubr.bf16.mxu0 %v1474
  %2791 = vmatmul.mubr.bf16.gmra.mxu0 %v1473
  %v2792 = vpop.f32.mrf.mxu0
  %v2793 = vadd.f32 %v2504, %v2792
  %v2794 = vpop.f32.mrf.mxu0
  %v2795 = vpop.f32.mrf.mxu0
  %v2796 = vadd.f32 %v2507, %v2795
  %v2797 = vpop.f32.mrf.mxu0
  %2798 = vmatprep.mubr.bf16.mxu0 %v1483
  %2799 = vmatmul.mubr.bf16.gmra.mxu0 %v1482
  %v2800 = vpop.f32.mrf.mxu0
  %v2801 = vadd.f32 %v2512, %v2800
  %v2802 = vpop.f32.mrf.mxu0
  %v2803 = vpop.f32.mrf.mxu0
  %v2804 = vadd.f32 %v2515, %v2803
  %v2805 = vpop.f32.mrf.mxu0
  %2806 = vmatprep.mubr.bf16.mxu0 %v1492
  %2807 = vmatmul.mubr.bf16.gmra.mxu0 %v1491
  %v2808 = vpop.f32.mrf.mxu0
  %v2809 = vadd.f32 %v2520, %v2808
  %v2810 = vpop.f32.mrf.mxu0
  %v2811 = vpop.f32.mrf.mxu0
  %v2812 = vadd.f32 %v2523, %v2811
  %v2813 = vpop.f32.mrf.mxu0
  %2814 = vmatprep.mubr.bf16.mxu0 %v1501
  %2815 = vmatmul.mubr.bf16.gmra.mxu0 %v1500
  %v2816 = vpop.f32.mrf.mxu0
  %v2817 = vadd.f32 %v2528, %v2816
  %v2818 = vpop.f32.mrf.mxu0
  %v2819 = vpop.f32.mrf.mxu0
  %v2820 = vadd.f32 %v2531, %v2819
  %v2821 = vpop.f32.mrf.mxu0
  %2822 = vmatprep.mubr.bf16.mxu0 %v1510
  %2823 = vmatmul.mubr.bf16.gmra.mxu0 %v1509
  %v2824 = vpop.f32.mrf.mxu0
  %v2825 = vadd.f32 %v2536, %v2824
  %v2826 = vpop.f32.mrf.mxu0
  %v2827 = vpop.f32.mrf.mxu0
  %v2828 = vadd.f32 %v2539, %v2827
  %v2829 = vpop.f32.mrf.mxu0
  %2830 = vmatprep.mubr.bf16.mxu0 %v1519
  %2831 = vmatmul.mubr.bf16.gmra.mxu0 %v1518
  %v2832 = vpop.f32.mrf.mxu0
  %v2833 = vadd.f32 %v2544, %v2832
  %v2834 = vpop.f32.mrf.mxu0
  %v2835 = vpop.f32.mrf.mxu0
  %v2836 = vadd.f32 %v2547, %v2835
  %v2837 = vpop.f32.mrf.mxu0
  %2838 = vmatprep.mubr.bf16.mxu0 %v1528
  %2839 = vmatmul.mubr.bf16.gmra.mxu0 %v1527
  %v2840 = vpop.f32.mrf.mxu0
  %v2841 = vadd.f32 %v2552, %v2840
  %v2842 = vpop.f32.mrf.mxu0
  %v2843 = vpop.f32.mrf.mxu0
  %v2844 = vadd.f32 %v2555, %v2843
  %v2845 = vpop.f32.mrf.mxu0
  %2846 = vmatprep.mubr.bf16.mxu0 %v1537
  %2847 = vmatmul.mubr.bf16.gmra.mxu0 %v1536
  %v2848 = vpop.f32.mrf.mxu0
  %v2849 = vadd.f32 %v2560, %v2848
  %v2850 = vpop.f32.mrf.mxu0
  %v2851 = vpop.f32.mrf.mxu0
  %v2852 = vadd.f32 %v2563, %v2851
  %v2853 = vpop.f32.mrf.mxu0
  %2854 = vmatprep.mubr.bf16.mxu0 %v1546
  %2855 = vmatmul.mubr.bf16.gmra.mxu0 %v1545
  %v2856 = vpop.f32.mrf.mxu0
  %v2857 = vadd.f32 %v2568, %v2856
  %v2858 = vpop.f32.mrf.mxu0
  %v2859 = vpop.f32.mrf.mxu0
  %v2860 = vadd.f32 %v2571, %v2859
  %v2861 = vpop.f32.mrf.mxu0
  %2862 = vmatprep.mubr.bf16.mxu0 %v1555
  %2863 = vmatmul.mubr.bf16.gmra.mxu0 %v1554
  %v2864 = vpop.f32.mrf.mxu0
  %v2865 = vadd.f32 %v2576, %v2864
  %v2866 = vpop.f32.mrf.mxu0
  %v2867 = vpop.f32.mrf.mxu0
  %v2868 = vadd.f32 %v2579, %v2867
  %v2869 = vpop.f32.mrf.mxu0
  %2870 = vmatprep.mubr.bf16.mxu0 %v1564
  %2871 = vmatmul.mubr.bf16.gmra.mxu0 %v1563
  %v2872 = vpop.f32.mrf.mxu0
  %v2873 = vadd.f32 %v2584, %v2872
  %v2874 = vpop.f32.mrf.mxu0
  %v2875 = vpop.f32.mrf.mxu0
  %v2876 = vadd.f32 %v2587, %v2875
  %v2877 = vpop.f32.mrf.mxu0
  %2878 = vmatprep.mubr.bf16.mxu0 %v1573
  %2879 = vmatmul.mubr.bf16.gmra.mxu0 %v1572
  %v2880 = vpop.f32.mrf.mxu0
  %v2881 = vadd.f32 %v2592, %v2880
  %v2882 = vpop.f32.mrf.mxu0
  %v2883 = vpop.f32.mrf.mxu0
  %v2884 = vadd.f32 %v2595, %v2883
  %v2885 = vpop.f32.mrf.mxu0
  %2886 = vmatprep.mubr.bf16.mxu0 %v1582
  %2887 = vmatmul.mubr.bf16.gmra.mxu0 %v1581
  %v2888 = vpop.f32.mrf.mxu0
  %v2889 = vadd.f32 %v2600, %v2888
  %v2890 = vpop.f32.mrf.mxu0
  %v2891 = vpop.f32.mrf.mxu0
  %v2892 = vadd.f32 %v2603, %v2891
  %v2893 = vpop.f32.mrf.mxu0
  %2894 = vmatprep.mubr.bf16.mxu0 %v1591
  %2895 = vmatmul.mubr.bf16.gmra.mxu0 %v1590
  %v2896 = vpop.f32.mrf.mxu0
  %v2897 = vadd.f32 %v2608, %v2896
  %v2898 = vpop.f32.mrf.mxu0
  %v2899 = vpop.f32.mrf.mxu0
  %v2900 = vadd.f32 %v2611, %v2899
  %v2901 = vpop.f32.mrf.mxu0
  %2902 = vmatprep.mubr.bf16.mxu0 %v1600
  %2903 = vmatmul.mubr.bf16.gmra.mxu0 %v1599
  %v2904 = vpop.f32.mrf.mxu0
  %v2905 = vadd.f32 %v2616, %v2904
  %v2906 = vpop.f32.mrf.mxu0
  %v2907 = vpop.f32.mrf.mxu0
  %v2908 = vadd.f32 %v2619, %v2907
  %v2909 = vpop.f32.mrf.mxu0
  %2910 = vmatprep.mubr.bf16.mxu0 %v1609
  %2911 = vmatmul.mubr.bf16.gmra.mxu0 %v1608
  %v2912 = vpop.f32.mrf.mxu0
  %v2913 = vadd.f32 %v2624, %v2912
  %v2914 = vpop.f32.mrf.mxu0
  %v2915 = vpop.f32.mrf.mxu0
  %v2916 = vadd.f32 %v2627, %v2915
  %v2917 = vpop.f32.mrf.mxu0
  %2918 = vmatprep.mubr.bf16.mxu0 %v1618
  %2919 = vmatmul.mubr.bf16.gmra.mxu0 %v1617
  %v2920 = vpop.f32.mrf.mxu0
  %v2921 = vadd.f32 %v2632, %v2920
  %v2922 = vpop.f32.mrf.mxu0
  %v2923 = vpop.f32.mrf.mxu0
  %v2924 = vadd.f32 %v2635, %v2923
  %v2925 = vpop.f32.mrf.mxu0
  %2926 = vmatprep.mubr.bf16.mxu0 %v1627
  %2927 = vmatmul.mubr.bf16.gmra.mxu0 %v1626
  %v2928 = vpop.f32.mrf.mxu0
  %v2929 = vadd.f32 %v2640, %v2928
  %v2930 = vpop.f32.mrf.mxu0
  %v2931 = vpop.f32.mrf.mxu0
  %v2932 = vadd.f32 %v2643, %v2931
  %v2933 = vpop.f32.mrf.mxu0
  %2934 = vmatprep.mubr.bf16.mxu0 %v1636
  %2935 = vmatmul.mubr.bf16.gmra.mxu0 %v1635
  %v2936 = vpop.f32.mrf.mxu0
  %v2937 = vadd.f32 %v2648, %v2936
  %v2938 = vpop.f32.mrf.mxu0
  %v2939 = vpop.f32.mrf.mxu0
  %v2940 = vadd.f32 %v2651, %v2939
  %v2941 = vpop.f32.mrf.mxu0
  %2942 = vmatprep.mubr.bf16.mxu0 %v1645
  %2943 = vmatmul.mubr.bf16.gmra.mxu0 %v1644
  %v2944 = vpop.f32.mrf.mxu0
  %v2945 = vadd.f32 %v2656, %v2944
  %v2946 = vpop.f32.mrf.mxu0
  %v2947 = vpop.f32.mrf.mxu0
  %v2948 = vadd.f32 %v2659, %v2947
  %v2949 = vpop.f32.mrf.mxu0
  %2950 = vmatprep.mubr.bf16.mxu0 %v1654
  %2951 = vmatmul.mubr.bf16.gmra.mxu0 %v1653
  %v2952 = vpop.f32.mrf.mxu0
  %v2953 = vadd.f32 %v2664, %v2952
  %v2954 = vpop.f32.mrf.mxu0
  %v2955 = vpop.f32.mrf.mxu0
  %v2956 = vadd.f32 %v2667, %v2955
  %v2957 = vpop.f32.mrf.mxu0
  %2958 = vmatprep.mubr.bf16.mxu0 %v1663
  %2959 = vmatmul.mubr.bf16.gmra.mxu0 %v1662
  %v2960 = vpop.f32.mrf.mxu0
  %v2961 = vadd.f32 %v2672, %v2960
  %v2962 = vpop.f32.mrf.mxu0
  %v2963 = vpop.f32.mrf.mxu0
  %v2964 = vadd.f32 %v2675, %v2963
  %v2965 = vpop.f32.mrf.mxu0
  %2966 = vdwg.mxu0
  %2967 = vmatprep.subr.bf16.mxu0 0
  %2968 = vmatpush1.bf16.msra.mxu0 %v2284
  %2969 = vmatprep.subr.bf16.mxu0 0
  %2970 = vmatpush1.bf16.msra.mxu0 %v2283
  %2971 = vmatprep.subr.bf16.mxu0 0
  %2972 = vmatpush1.bf16.msra.mxu0 %v2282
  %2973 = vmatprep.subr.bf16.mxu0 0
  %2974 = vmatpush1.bf16.msra.mxu0 %v2281
  %2975 = vmatprep.subr.bf16.mxu0 0
  %2976 = vmatpush1.bf16.msra.mxu0 %v2280
  %2977 = vmatprep.subr.bf16.mxu0 0
  %2978 = vmatpush1.bf16.msra.mxu0 %v2279
  %2979 = vmatprep.subr.bf16.mxu0 0
  %2980 = vmatpush1.bf16.msra.mxu0 %v2278
  %2981 = vmatprep.subr.bf16.mxu0 0
  %2982 = vmatpush1.bf16.msra.mxu0 %v2277
  %2983 = vmatprep.subr.bf16.mxu0 0
  %2984 = vmatpush2.bf16.msra.mxu0 %v2292
  %2985 = vmatprep.subr.bf16.mxu0 0
  %2986 = vmatpush2.bf16.msra.mxu0 %v2291
  %2987 = vmatprep.subr.bf16.mxu0 0
  %2988 = vmatpush2.bf16.msra.mxu0 %v2290
  %2989 = vmatprep.subr.bf16.mxu0 0
  %2990 = vmatpush2.bf16.msra.mxu0 %v2289
  %2991 = vmatprep.subr.bf16.mxu0 0
  %2992 = vmatpush2.bf16.msra.mxu0 %v2288
  %2993 = vmatprep.subr.bf16.mxu0 0
  %2994 = vmatpush2.bf16.msra.mxu0 %v2287
  %2995 = vmatprep.subr.bf16.mxu0 0
  %2996 = vmatpush2.bf16.msra.mxu0 %v2286
  %2997 = vmatprep.subr.bf16.mxu0 0
  %2998 = vmatpush2.bf16.msra.mxu0 %v2285
  %2999 = vmatprep.mubr.bf16.mxu0 %v1386
  %3000 = vmatmul.mubr.bf16.gmra.mxu0 %v1385
  %v3001 = vpop.f32.mrf.mxu0
  %v3002 = vadd.f32 %v2713, %v3001
  %v3003 = vpop.f32.mrf.mxu0
  %v3004 = vpop.f32.mrf.mxu0
  %v3005 = vadd.f32 %v2716, %v3004
  %v3006 = vpop.f32.mrf.mxu0
  %3007 = vmatprep.mubr.bf16.mxu0 %v1395
  %3008 = vmatmul.mubr.bf16.gmra.mxu0 %v1394
  %v3009 = vpop.f32.mrf.mxu0
  %v3010 = vadd.f32 %v2721, %v3009
  %v3011 = vpop.f32.mrf.mxu0
  %v3012 = vpop.f32.mrf.mxu0
  %v3013 = vadd.f32 %v2724, %v3012
  %v3014 = vpop.f32.mrf.mxu0
  %3015 = vmatprep.mubr.bf16.mxu0 %v1404
  %3016 = vmatmul.mubr.bf16.gmra.mxu0 %v1403
  %v3017 = vpop.f32.mrf.mxu0
  %v3018 = vadd.f32 %v2729, %v3017
  %v3019 = vpop.f32.mrf.mxu0
  %v3020 = vpop.f32.mrf.mxu0
  %v3021 = vadd.f32 %v2732, %v3020
  %v3022 = vpop.f32.mrf.mxu0
  %3023 = vmatprep.mubr.bf16.mxu0 %v1413
  %3024 = vmatmul.mubr.bf16.gmra.mxu0 %v1412
  %v3025 = vpop.f32.mrf.mxu0
  %v3026 = vadd.f32 %v2737, %v3025
  %v3027 = vpop.f32.mrf.mxu0
  %v3028 = vpop.f32.mrf.mxu0
  %v3029 = vadd.f32 %v2740, %v3028
  %v3030 = vpop.f32.mrf.mxu0
  %3031 = vmatprep.mubr.bf16.mxu0 %v1422
  %3032 = vmatmul.mubr.bf16.gmra.mxu0 %v1421
  %v3033 = vpop.f32.mrf.mxu0
  %v3034 = vadd.f32 %v2745, %v3033
  %v3035 = vpop.f32.mrf.mxu0
  %v3036 = vpop.f32.mrf.mxu0
  %v3037 = vadd.f32 %v2748, %v3036
  %v3038 = vpop.f32.mrf.mxu0
  %3039 = vmatprep.mubr.bf16.mxu0 %v1431
  %3040 = vmatmul.mubr.bf16.gmra.mxu0 %v1430
  %v3041 = vpop.f32.mrf.mxu0
  %v3042 = vadd.f32 %v2753, %v3041
  %v3043 = vpop.f32.mrf.mxu0
  %v3044 = vpop.f32.mrf.mxu0
  %v3045 = vadd.f32 %v2756, %v3044
  %v3046 = vpop.f32.mrf.mxu0
  %3047 = vmatprep.mubr.bf16.mxu0 %v1440
  %3048 = vmatmul.mubr.bf16.gmra.mxu0 %v1439
  %v3049 = vpop.f32.mrf.mxu0
  %v3050 = vadd.f32 %v2761, %v3049
  %v3051 = vpop.f32.mrf.mxu0
  %v3052 = vpop.f32.mrf.mxu0
  %v3053 = vadd.f32 %v2764, %v3052
  %v3054 = vpop.f32.mrf.mxu0
  %3055 = vmatprep.mubr.bf16.mxu0 %v1449
  %3056 = vmatmul.mubr.bf16.gmra.mxu0 %v1448
  %v3057 = vpop.f32.mrf.mxu0
  %v3058 = vadd.f32 %v2769, %v3057
  %v3059 = vpop.f32.mrf.mxu0
  %v3060 = vpop.f32.mrf.mxu0
  %v3061 = vadd.f32 %v2772, %v3060
  %v3062 = vpop.f32.mrf.mxu0
  %3063 = vmatprep.mubr.bf16.mxu0 %v1458
  %3064 = vmatmul.mubr.bf16.gmra.mxu0 %v1457
  %v3065 = vpop.f32.mrf.mxu0
  %v3066 = vadd.f32 %v2777, %v3065
  %v3067 = vpop.f32.mrf.mxu0
  %v3068 = vpop.f32.mrf.mxu0
  %v3069 = vadd.f32 %v2780, %v3068
  %v3070 = vpop.f32.mrf.mxu0
  %3071 = vmatprep.mubr.bf16.mxu0 %v1467
  %3072 = vmatmul.mubr.bf16.gmra.mxu0 %v1466
  %v3073 = vpop.f32.mrf.mxu0
  %v3074 = vadd.f32 %v2785, %v3073
  %v3075 = vpop.f32.mrf.mxu0
  %v3076 = vpop.f32.mrf.mxu0
  %v3077 = vadd.f32 %v2788, %v3076
  %v3078 = vpop.f32.mrf.mxu0
  %3079 = vmatprep.mubr.bf16.mxu0 %v1476
  %3080 = vmatmul.mubr.bf16.gmra.mxu0 %v1475
  %v3081 = vpop.f32.mrf.mxu0
  %v3082 = vadd.f32 %v2793, %v3081
  %v3083 = vpop.f32.mrf.mxu0
  %v3084 = vpop.f32.mrf.mxu0
  %v3085 = vadd.f32 %v2796, %v3084
  %v3086 = vpop.f32.mrf.mxu0
  %3087 = vmatprep.mubr.bf16.mxu0 %v1485
  %3088 = vmatmul.mubr.bf16.gmra.mxu0 %v1484
  %v3089 = vpop.f32.mrf.mxu0
  %v3090 = vadd.f32 %v2801, %v3089
  %v3091 = vpop.f32.mrf.mxu0
  %v3092 = vpop.f32.mrf.mxu0
  %v3093 = vadd.f32 %v2804, %v3092
  %v3094 = vpop.f32.mrf.mxu0
  %3095 = vmatprep.mubr.bf16.mxu0 %v1494
  %3096 = vmatmul.mubr.bf16.gmra.mxu0 %v1493
  %v3097 = vpop.f32.mrf.mxu0
  %v3098 = vadd.f32 %v2809, %v3097
  %v3099 = vpop.f32.mrf.mxu0
  %v3100 = vpop.f32.mrf.mxu0
  %v3101 = vadd.f32 %v2812, %v3100
  %v3102 = vpop.f32.mrf.mxu0
  %3103 = vmatprep.mubr.bf16.mxu0 %v1503
  %3104 = vmatmul.mubr.bf16.gmra.mxu0 %v1502
  %v3105 = vpop.f32.mrf.mxu0
  %v3106 = vadd.f32 %v2817, %v3105
  %v3107 = vpop.f32.mrf.mxu0
  %v3108 = vpop.f32.mrf.mxu0
  %v3109 = vadd.f32 %v2820, %v3108
  %v3110 = vpop.f32.mrf.mxu0
  %3111 = vmatprep.mubr.bf16.mxu0 %v1512
  %3112 = vmatmul.mubr.bf16.gmra.mxu0 %v1511
  %v3113 = vpop.f32.mrf.mxu0
  %v3114 = vadd.f32 %v2825, %v3113
  %v3115 = vpop.f32.mrf.mxu0
  %v3116 = vpop.f32.mrf.mxu0
  %v3117 = vadd.f32 %v2828, %v3116
  %v3118 = vpop.f32.mrf.mxu0
  %3119 = vmatprep.mubr.bf16.mxu0 %v1521
  %3120 = vmatmul.mubr.bf16.gmra.mxu0 %v1520
  %v3121 = vpop.f32.mrf.mxu0
  %v3122 = vadd.f32 %v2833, %v3121
  %v3123 = vpop.f32.mrf.mxu0
  %v3124 = vpop.f32.mrf.mxu0
  %v3125 = vadd.f32 %v2836, %v3124
  %v3126 = vpop.f32.mrf.mxu0
  %3127 = vmatprep.mubr.bf16.mxu0 %v1530
  %3128 = vmatmul.mubr.bf16.gmra.mxu0 %v1529
  %v3129 = vpop.f32.mrf.mxu0
  %v3130 = vadd.f32 %v2841, %v3129
  %v3131 = vpop.f32.mrf.mxu0
  %v3132 = vpop.f32.mrf.mxu0
  %v3133 = vadd.f32 %v2844, %v3132
  %v3134 = vpop.f32.mrf.mxu0
  %3135 = vmatprep.mubr.bf16.mxu0 %v1539
  %3136 = vmatmul.mubr.bf16.gmra.mxu0 %v1538
  %v3137 = vpop.f32.mrf.mxu0
  %v3138 = vadd.f32 %v2849, %v3137
  %v3139 = vpop.f32.mrf.mxu0
  %v3140 = vpop.f32.mrf.mxu0
  %v3141 = vadd.f32 %v2852, %v3140
  %v3142 = vpop.f32.mrf.mxu0
  %3143 = vmatprep.mubr.bf16.mxu0 %v1548
  %3144 = vmatmul.mubr.bf16.gmra.mxu0 %v1547
  %v3145 = vpop.f32.mrf.mxu0
  %v3146 = vadd.f32 %v2857, %v3145
  %v3147 = vpop.f32.mrf.mxu0
  %v3148 = vpop.f32.mrf.mxu0
  %v3149 = vadd.f32 %v2860, %v3148
  %v3150 = vpop.f32.mrf.mxu0
  %3151 = vmatprep.mubr.bf16.mxu0 %v1557
  %3152 = vmatmul.mubr.bf16.gmra.mxu0 %v1556
  %v3153 = vpop.f32.mrf.mxu0
  %v3154 = vadd.f32 %v2865, %v3153
  %v3155 = vpop.f32.mrf.mxu0
  %v3156 = vpop.f32.mrf.mxu0
  %v3157 = vadd.f32 %v2868, %v3156
  %v3158 = vpop.f32.mrf.mxu0
  %3159 = vmatprep.mubr.bf16.mxu0 %v1566
  %3160 = vmatmul.mubr.bf16.gmra.mxu0 %v1565
  %v3161 = vpop.f32.mrf.mxu0
  %v3162 = vadd.f32 %v2873, %v3161
  %v3163 = vpop.f32.mrf.mxu0
  %v3164 = vpop.f32.mrf.mxu0
  %v3165 = vadd.f32 %v2876, %v3164
  %v3166 = vpop.f32.mrf.mxu0
  %3167 = vmatprep.mubr.bf16.mxu0 %v1575
  %3168 = vmatmul.mubr.bf16.gmra.mxu0 %v1574
  %v3169 = vpop.f32.mrf.mxu0
  %v3170 = vadd.f32 %v2881, %v3169
  %v3171 = vpop.f32.mrf.mxu0
  %v3172 = vpop.f32.mrf.mxu0
  %v3173 = vadd.f32 %v2884, %v3172
  %v3174 = vpop.f32.mrf.mxu0
  %3175 = vmatprep.mubr.bf16.mxu0 %v1584
  %3176 = vmatmul.mubr.bf16.gmra.mxu0 %v1583
  %v3177 = vpop.f32.mrf.mxu0
  %v3178 = vadd.f32 %v2889, %v3177
  %v3179 = vpop.f32.mrf.mxu0
  %v3180 = vpop.f32.mrf.mxu0
  %v3181 = vadd.f32 %v2892, %v3180
  %v3182 = vpop.f32.mrf.mxu0
  %3183 = vmatprep.mubr.bf16.mxu0 %v1593
  %3184 = vmatmul.mubr.bf16.gmra.mxu0 %v1592
  %v3185 = vpop.f32.mrf.mxu0
  %v3186 = vadd.f32 %v2897, %v3185
  %v3187 = vpop.f32.mrf.mxu0
  %v3188 = vpop.f32.mrf.mxu0
  %v3189 = vadd.f32 %v2900, %v3188
  %v3190 = vpop.f32.mrf.mxu0
  %3191 = vmatprep.mubr.bf16.mxu0 %v1602
  %3192 = vmatmul.mubr.bf16.gmra.mxu0 %v1601
  %v3193 = vpop.f32.mrf.mxu0
  %v3194 = vadd.f32 %v2905, %v3193
  %v3195 = vpop.f32.mrf.mxu0
  %v3196 = vpop.f32.mrf.mxu0
  %v3197 = vadd.f32 %v2908, %v3196
  %v3198 = vpop.f32.mrf.mxu0
  %3199 = vmatprep.mubr.bf16.mxu0 %v1611
  %3200 = vmatmul.mubr.bf16.gmra.mxu0 %v1610
  %v3201 = vpop.f32.mrf.mxu0
  %v3202 = vadd.f32 %v2913, %v3201
  %v3203 = vpop.f32.mrf.mxu0
  %v3204 = vpop.f32.mrf.mxu0
  %v3205 = vadd.f32 %v2916, %v3204
  %v3206 = vpop.f32.mrf.mxu0
  %3207 = vmatprep.mubr.bf16.mxu0 %v1620
  %3208 = vmatmul.mubr.bf16.gmra.mxu0 %v1619
  %v3209 = vpop.f32.mrf.mxu0
  %v3210 = vadd.f32 %v2921, %v3209
  %v3211 = vpop.f32.mrf.mxu0
  %v3212 = vpop.f32.mrf.mxu0
  %v3213 = vadd.f32 %v2924, %v3212
  %v3214 = vpop.f32.mrf.mxu0
  %3215 = vmatprep.mubr.bf16.mxu0 %v1629
  %3216 = vmatmul.mubr.bf16.gmra.mxu0 %v1628
  %v3217 = vpop.f32.mrf.mxu0
  %v3218 = vadd.f32 %v2929, %v3217
  %v3219 = vpop.f32.mrf.mxu0
  %v3220 = vpop.f32.mrf.mxu0
  %v3221 = vadd.f32 %v2932, %v3220
  %v3222 = vpop.f32.mrf.mxu0
  %3223 = vmatprep.mubr.bf16.mxu0 %v1638
  %3224 = vmatmul.mubr.bf16.gmra.mxu0 %v1637
  %v3225 = vpop.f32.mrf.mxu0
  %v3226 = vadd.f32 %v2937, %v3225
  %v3227 = vpop.f32.mrf.mxu0
  %v3228 = vpop.f32.mrf.mxu0
  %v3229 = vadd.f32 %v2940, %v3228
  %v3230 = vpop.f32.mrf.mxu0
  %3231 = vmatprep.mubr.bf16.mxu0 %v1647
  %3232 = vmatmul.mubr.bf16.gmra.mxu0 %v1646
  %v3233 = vpop.f32.mrf.mxu0
  %v3234 = vadd.f32 %v2945, %v3233
  %v3235 = vpop.f32.mrf.mxu0
  %v3236 = vpop.f32.mrf.mxu0
  %v3237 = vadd.f32 %v2948, %v3236
  %v3238 = vpop.f32.mrf.mxu0
  %3239 = vmatprep.mubr.bf16.mxu0 %v1656
  %3240 = vmatmul.mubr.bf16.gmra.mxu0 %v1655
  %v3241 = vpop.f32.mrf.mxu0
  %v3242 = vadd.f32 %v2953, %v3241
  %v3243 = vpop.f32.mrf.mxu0
  %v3244 = vpop.f32.mrf.mxu0
  %v3245 = vadd.f32 %v2956, %v3244
  %v3246 = vpop.f32.mrf.mxu0
  %3247 = vmatprep.mubr.bf16.mxu0 %v1665
  %3248 = vmatmul.mubr.bf16.gmra.mxu0 %v1664
  %v3249 = vpop.f32.mrf.mxu0
  %v3250 = vadd.f32 %v2961, %v3249
  %v3251 = vpop.f32.mrf.mxu0
  %v3252 = vpop.f32.mrf.mxu0
  %v3253 = vadd.f32 %v2964, %v3252
  %v3254 = vpop.f32.mrf.mxu0
  %3255 = vdwg.mxu0
  %3256 = vmatprep.subr.bf16.mxu0 0
  %3257 = vmatpush1.bf16.msra.mxu0 %v2300
  %3258 = vmatprep.subr.bf16.mxu0 0
  %3259 = vmatpush1.bf16.msra.mxu0 %v2299
  %3260 = vmatprep.subr.bf16.mxu0 0
  %3261 = vmatpush1.bf16.msra.mxu0 %v2298
  %3262 = vmatprep.subr.bf16.mxu0 0
  %3263 = vmatpush1.bf16.msra.mxu0 %v2297
  %3264 = vmatprep.subr.bf16.mxu0 0
  %3265 = vmatpush1.bf16.msra.mxu0 %v2296
  %3266 = vmatprep.subr.bf16.mxu0 0
  %3267 = vmatpush1.bf16.msra.mxu0 %v2295
  %3268 = vmatprep.subr.bf16.mxu0 0
  %3269 = vmatpush1.bf16.msra.mxu0 %v2294
  %3270 = vmatprep.subr.bf16.mxu0 0
  %3271 = vmatpush1.bf16.msra.mxu0 %v2293
  %3272 = vmatprep.subr.bf16.mxu0 0
  %3273 = vmatpush2.bf16.msra.mxu0 %v2308
  %3274 = vmatprep.subr.bf16.mxu0 0
  %3275 = vmatpush2.bf16.msra.mxu0 %v2307
  %3276 = vmatprep.subr.bf16.mxu0 0
  %3277 = vmatpush2.bf16.msra.mxu0 %v2306
  %3278 = vmatprep.subr.bf16.mxu0 0
  %3279 = vmatpush2.bf16.msra.mxu0 %v2305
  %3280 = vmatprep.subr.bf16.mxu0 0
  %3281 = vmatpush2.bf16.msra.mxu0 %v2304
  %3282 = vmatprep.subr.bf16.mxu0 0
  %3283 = vmatpush2.bf16.msra.mxu0 %v2303
  %3284 = vmatprep.subr.bf16.mxu0 0
  %3285 = vmatpush2.bf16.msra.mxu0 %v2302
  %3286 = vmatprep.subr.bf16.mxu0 0
  %3287 = vmatpush2.bf16.msra.mxu0 %v2301
  %3288 = vmatprep.mubr.bf16.mxu0 %v1388
  %3289 = vmatmul.mubr.bf16.gmra.mxu0 %v1387
  %v3290 = vpop.f32.mrf.mxu0
  %v3291 = vadd.f32 %v3002, %v3290
  %v3292 = vpop.f32.mrf.mxu0
  %v3293 = vpop.f32.mrf.mxu0
  %v3294 = vadd.f32 %v3005, %v3293
  %v3295 = vpop.f32.mrf.mxu0
  %3296 = vmatprep.mubr.bf16.mxu0 %v1397
  %3297 = vmatmul.mubr.bf16.gmra.mxu0 %v1396
  %v3298 = vpop.f32.mrf.mxu0
  %v3299 = vadd.f32 %v3010, %v3298
  %v3300 = vpop.f32.mrf.mxu0
  %v3301 = vpop.f32.mrf.mxu0
  %v3302 = vadd.f32 %v3013, %v3301
  %v3303 = vpop.f32.mrf.mxu0
  %3304 = vmatprep.mubr.bf16.mxu0 %v1406
  %3305 = vmatmul.mubr.bf16.gmra.mxu0 %v1405
  %v3306 = vpop.f32.mrf.mxu0
  %v3307 = vadd.f32 %v3018, %v3306
  %v3308 = vpop.f32.mrf.mxu0
  %v3309 = vpop.f32.mrf.mxu0
  %v3310 = vadd.f32 %v3021, %v3309
  %v3311 = vpop.f32.mrf.mxu0
  %3312 = vmatprep.mubr.bf16.mxu0 %v1415
  %3313 = vmatmul.mubr.bf16.gmra.mxu0 %v1414
  %v3314 = vpop.f32.mrf.mxu0
  %v3315 = vadd.f32 %v3026, %v3314
  %v3316 = vpop.f32.mrf.mxu0
  %v3317 = vpop.f32.mrf.mxu0
  %v3318 = vadd.f32 %v3029, %v3317
  %v3319 = vpop.f32.mrf.mxu0
  %3320 = vmatprep.mubr.bf16.mxu0 %v1424
  %3321 = vmatmul.mubr.bf16.gmra.mxu0 %v1423
  %v3322 = vpop.f32.mrf.mxu0
  %v3323 = vadd.f32 %v3034, %v3322
  %v3324 = vpop.f32.mrf.mxu0
  %v3325 = vpop.f32.mrf.mxu0
  %v3326 = vadd.f32 %v3037, %v3325
  %v3327 = vpop.f32.mrf.mxu0
  %3328 = vmatprep.mubr.bf16.mxu0 %v1433
  %3329 = vmatmul.mubr.bf16.gmra.mxu0 %v1432
  %v3330 = vpop.f32.mrf.mxu0
  %v3331 = vadd.f32 %v3042, %v3330
  %v3332 = vpop.f32.mrf.mxu0
  %v3333 = vpop.f32.mrf.mxu0
  %v3334 = vadd.f32 %v3045, %v3333
  %v3335 = vpop.f32.mrf.mxu0
  %3336 = vmatprep.mubr.bf16.mxu0 %v1442
  %3337 = vmatmul.mubr.bf16.gmra.mxu0 %v1441
  %v3338 = vpop.f32.mrf.mxu0
  %v3339 = vadd.f32 %v3050, %v3338
  %v3340 = vpop.f32.mrf.mxu0
  %v3341 = vpop.f32.mrf.mxu0
  %v3342 = vadd.f32 %v3053, %v3341
  %v3343 = vpop.f32.mrf.mxu0
  %3344 = vmatprep.mubr.bf16.mxu0 %v1451
  %3345 = vmatmul.mubr.bf16.gmra.mxu0 %v1450
  %v3346 = vpop.f32.mrf.mxu0
  %v3347 = vadd.f32 %v3058, %v3346
  %v3348 = vpop.f32.mrf.mxu0
  %v3349 = vpop.f32.mrf.mxu0
  %v3350 = vadd.f32 %v3061, %v3349
  %v3351 = vpop.f32.mrf.mxu0
  %3352 = vmatprep.mubr.bf16.mxu0 %v1460
  %3353 = vmatmul.mubr.bf16.gmra.mxu0 %v1459
  %v3354 = vpop.f32.mrf.mxu0
  %v3355 = vadd.f32 %v3066, %v3354
  %v3356 = vpop.f32.mrf.mxu0
  %v3357 = vpop.f32.mrf.mxu0
  %v3358 = vadd.f32 %v3069, %v3357
  %v3359 = vpop.f32.mrf.mxu0
  %3360 = vmatprep.mubr.bf16.mxu0 %v1469
  %3361 = vmatmul.mubr.bf16.gmra.mxu0 %v1468
  %v3362 = vpop.f32.mrf.mxu0
  %v3363 = vadd.f32 %v3074, %v3362
  %v3364 = vpop.f32.mrf.mxu0
  %v3365 = vpop.f32.mrf.mxu0
  %v3366 = vadd.f32 %v3077, %v3365
  %v3367 = vpop.f32.mrf.mxu0
  %3368 = vmatprep.mubr.bf16.mxu0 %v1478
  %3369 = vmatmul.mubr.bf16.gmra.mxu0 %v1477
  %v3370 = vpop.f32.mrf.mxu0
  %v3371 = vadd.f32 %v3082, %v3370
  %v3372 = vpop.f32.mrf.mxu0
  %v3373 = vpop.f32.mrf.mxu0
  %v3374 = vadd.f32 %v3085, %v3373
  %v3375 = vpop.f32.mrf.mxu0
  %3376 = vmatprep.mubr.bf16.mxu0 %v1487
  %3377 = vmatmul.mubr.bf16.gmra.mxu0 %v1486
  %v3378 = vpop.f32.mrf.mxu0
  %v3379 = vadd.f32 %v3090, %v3378
  %v3380 = vpop.f32.mrf.mxu0
  %v3381 = vpop.f32.mrf.mxu0
  %v3382 = vadd.f32 %v3093, %v3381
  %v3383 = vpop.f32.mrf.mxu0
  %3384 = vmatprep.mubr.bf16.mxu0 %v1496
  %3385 = vmatmul.mubr.bf16.gmra.mxu0 %v1495
  %v3386 = vpop.f32.mrf.mxu0
  %v3387 = vadd.f32 %v3098, %v3386
  %v3388 = vpop.f32.mrf.mxu0
  %v3389 = vpop.f32.mrf.mxu0
  %v3390 = vadd.f32 %v3101, %v3389
  %v3391 = vpop.f32.mrf.mxu0
  %3392 = vmatprep.mubr.bf16.mxu0 %v1505
  %3393 = vmatmul.mubr.bf16.gmra.mxu0 %v1504
  %v3394 = vpop.f32.mrf.mxu0
  %v3395 = vadd.f32 %v3106, %v3394
  %v3396 = vpop.f32.mrf.mxu0
  %v3397 = vpop.f32.mrf.mxu0
  %v3398 = vadd.f32 %v3109, %v3397
  %v3399 = vpop.f32.mrf.mxu0
  %3400 = vmatprep.mubr.bf16.mxu0 %v1514
  %3401 = vmatmul.mubr.bf16.gmra.mxu0 %v1513
  %v3402 = vpop.f32.mrf.mxu0
  %v3403 = vadd.f32 %v3114, %v3402
  %v3404 = vpop.f32.mrf.mxu0
  %v3405 = vpop.f32.mrf.mxu0
  %v3406 = vadd.f32 %v3117, %v3405
  %v3407 = vpop.f32.mrf.mxu0
  %3408 = vmatprep.mubr.bf16.mxu0 %v1523
  %3409 = vmatmul.mubr.bf16.gmra.mxu0 %v1522
  %v3410 = vpop.f32.mrf.mxu0
  %v3411 = vadd.f32 %v3122, %v3410
  %v3412 = vpop.f32.mrf.mxu0
  %v3413 = vpop.f32.mrf.mxu0
  %v3414 = vadd.f32 %v3125, %v3413
  %v3415 = vpop.f32.mrf.mxu0
  %3416 = vmatprep.mubr.bf16.mxu0 %v1532
  %3417 = vmatmul.mubr.bf16.gmra.mxu0 %v1531
  %v3418 = vpop.f32.mrf.mxu0
  %v3419 = vadd.f32 %v3130, %v3418
  %v3420 = vpop.f32.mrf.mxu0
  %v3421 = vpop.f32.mrf.mxu0
  %v3422 = vadd.f32 %v3133, %v3421
  %v3423 = vpop.f32.mrf.mxu0
  %3424 = vmatprep.mubr.bf16.mxu0 %v1541
  %3425 = vmatmul.mubr.bf16.gmra.mxu0 %v1540
  %v3426 = vpop.f32.mrf.mxu0
  %v3427 = vadd.f32 %v3138, %v3426
  %v3428 = vpop.f32.mrf.mxu0
  %v3429 = vpop.f32.mrf.mxu0
  %v3430 = vadd.f32 %v3141, %v3429
  %v3431 = vpop.f32.mrf.mxu0
  %3432 = vmatprep.mubr.bf16.mxu0 %v1550
  %3433 = vmatmul.mubr.bf16.gmra.mxu0 %v1549
  %v3434 = vpop.f32.mrf.mxu0
  %v3435 = vadd.f32 %v3146, %v3434
  %v3436 = vpop.f32.mrf.mxu0
  %v3437 = vpop.f32.mrf.mxu0
  %v3438 = vadd.f32 %v3149, %v3437
  %v3439 = vpop.f32.mrf.mxu0
  %3440 = vmatprep.mubr.bf16.mxu0 %v1559
  %3441 = vmatmul.mubr.bf16.gmra.mxu0 %v1558
  %v3442 = vpop.f32.mrf.mxu0
  %v3443 = vadd.f32 %v3154, %v3442
  %v3444 = vpop.f32.mrf.mxu0
  %v3445 = vpop.f32.mrf.mxu0
  %v3446 = vadd.f32 %v3157, %v3445
  %v3447 = vpop.f32.mrf.mxu0
  %3448 = vmatprep.mubr.bf16.mxu0 %v1568
  %3449 = vmatmul.mubr.bf16.gmra.mxu0 %v1567
  %v3450 = vpop.f32.mrf.mxu0
  %v3451 = vadd.f32 %v3162, %v3450
  %v3452 = vpop.f32.mrf.mxu0
  %v3453 = vpop.f32.mrf.mxu0
  %v3454 = vadd.f32 %v3165, %v3453
  %v3455 = vpop.f32.mrf.mxu0
  %3456 = vmatprep.mubr.bf16.mxu0 %v1577
  %3457 = vmatmul.mubr.bf16.gmra.mxu0 %v1576
  %v3458 = vpop.f32.mrf.mxu0
  %v3459 = vadd.f32 %v3170, %v3458
  %v3460 = vpop.f32.mrf.mxu0
  %v3461 = vpop.f32.mrf.mxu0
  %v3462 = vadd.f32 %v3173, %v3461
  %v3463 = vpop.f32.mrf.mxu0
  %3464 = vmatprep.mubr.bf16.mxu0 %v1586
  %3465 = vmatmul.mubr.bf16.gmra.mxu0 %v1585
  %v3466 = vpop.f32.mrf.mxu0
  %v3467 = vadd.f32 %v3178, %v3466
  %v3468 = vpop.f32.mrf.mxu0
  %v3469 = vpop.f32.mrf.mxu0
  %v3470 = vadd.f32 %v3181, %v3469
  %v3471 = vpop.f32.mrf.mxu0
  %3472 = vmatprep.mubr.bf16.mxu0 %v1595
  %3473 = vmatmul.mubr.bf16.gmra.mxu0 %v1594
  %v3474 = vpop.f32.mrf.mxu0
  %v3475 = vadd.f32 %v3186, %v3474
  %v3476 = vpop.f32.mrf.mxu0
  %v3477 = vpop.f32.mrf.mxu0
  %v3478 = vadd.f32 %v3189, %v3477
  %v3479 = vpop.f32.mrf.mxu0
  %3480 = vmatprep.mubr.bf16.mxu0 %v1604
  %3481 = vmatmul.mubr.bf16.gmra.mxu0 %v1603
  %v3482 = vpop.f32.mrf.mxu0
  %v3483 = vadd.f32 %v3194, %v3482
  %v3484 = vpop.f32.mrf.mxu0
  %v3485 = vpop.f32.mrf.mxu0
  %v3486 = vadd.f32 %v3197, %v3485
  %v3487 = vpop.f32.mrf.mxu0
  %3488 = vmatprep.mubr.bf16.mxu0 %v1613
  %3489 = vmatmul.mubr.bf16.gmra.mxu0 %v1612
  %v3490 = vpop.f32.mrf.mxu0
  %v3491 = vadd.f32 %v3202, %v3490
  %v3492 = vpop.f32.mrf.mxu0
  %v3493 = vpop.f32.mrf.mxu0
  %v3494 = vadd.f32 %v3205, %v3493
  %v3495 = vpop.f32.mrf.mxu0
  %3496 = vmatprep.mubr.bf16.mxu0 %v1622
  %3497 = vmatmul.mubr.bf16.gmra.mxu0 %v1621
  %v3498 = vpop.f32.mrf.mxu0
  %v3499 = vadd.f32 %v3210, %v3498
  %v3500 = vpop.f32.mrf.mxu0
  %v3501 = vpop.f32.mrf.mxu0
  %v3502 = vadd.f32 %v3213, %v3501
  %v3503 = vpop.f32.mrf.mxu0
  %3504 = vmatprep.mubr.bf16.mxu0 %v1631
  %3505 = vmatmul.mubr.bf16.gmra.mxu0 %v1630
  %v3506 = vpop.f32.mrf.mxu0
  %v3507 = vadd.f32 %v3218, %v3506
  %v3508 = vpop.f32.mrf.mxu0
  %v3509 = vpop.f32.mrf.mxu0
  %v3510 = vadd.f32 %v3221, %v3509
  %v3511 = vpop.f32.mrf.mxu0
  %3512 = vmatprep.mubr.bf16.mxu0 %v1640
  %3513 = vmatmul.mubr.bf16.gmra.mxu0 %v1639
  %v3514 = vpop.f32.mrf.mxu0
  %v3515 = vadd.f32 %v3226, %v3514
  %v3516 = vpop.f32.mrf.mxu0
  %v3517 = vpop.f32.mrf.mxu0
  %v3518 = vadd.f32 %v3229, %v3517
  %v3519 = vpop.f32.mrf.mxu0
  %3520 = vmatprep.mubr.bf16.mxu0 %v1649
  %3521 = vmatmul.mubr.bf16.gmra.mxu0 %v1648
  %v3522 = vpop.f32.mrf.mxu0
  %v3523 = vadd.f32 %v3234, %v3522
  %v3524 = vpop.f32.mrf.mxu0
  %v3525 = vpop.f32.mrf.mxu0
  %v3526 = vadd.f32 %v3237, %v3525
  %v3527 = vpop.f32.mrf.mxu0
  %3528 = vmatprep.mubr.bf16.mxu0 %v1658
  %3529 = vmatmul.mubr.bf16.gmra.mxu0 %v1657
  %v3530 = vpop.f32.mrf.mxu0
  %v3531 = vadd.f32 %v3242, %v3530
  %v3532 = vpop.f32.mrf.mxu0
  %v3533 = vpop.f32.mrf.mxu0
  %v3534 = vadd.f32 %v3245, %v3533
  %v3535 = vpop.f32.mrf.mxu0
  %3536 = vmatprep.mubr.bf16.mxu0 %v1667
  %3537 = vmatmul.mubr.bf16.gmra.mxu0 %v1666
  %v3538 = vpop.f32.mrf.mxu0
  %v3539 = vadd.f32 %v3250, %v3538
  %v3540 = vpop.f32.mrf.mxu0
  %v3541 = vpop.f32.mrf.mxu0
  %v3542 = vadd.f32 %v3253, %v3541
  %v3543 = vpop.f32.mrf.mxu0
  %3544 = vdwg.mxu0
  %3545 = vmatprep.subr.bf16.mxu0 0
  %3546 = vmatpush1.bf16.msra.mxu0 %v2316
  %3547 = vmatprep.subr.bf16.mxu0 0
  %3548 = vmatpush1.bf16.msra.mxu0 %v2315
  %3549 = vmatprep.subr.bf16.mxu0 0
  %3550 = vmatpush1.bf16.msra.mxu0 %v2314
  %3551 = vmatprep.subr.bf16.mxu0 0
  %3552 = vmatpush1.bf16.msra.mxu0 %v2313
  %3553 = vmatprep.subr.bf16.mxu0 0
  %3554 = vmatpush1.bf16.msra.mxu0 %v2312
  %3555 = vmatprep.subr.bf16.mxu0 0
  %3556 = vmatpush1.bf16.msra.mxu0 %v2311
  %3557 = vmatprep.subr.bf16.mxu0 0
  %3558 = vmatpush1.bf16.msra.mxu0 %v2310
  %3559 = vmatprep.subr.bf16.mxu0 0
  %3560 = vmatpush1.bf16.msra.mxu0 %v2309
  %3561 = vmatprep.subr.bf16.mxu0 0
  %3562 = vmatpush2.bf16.msra.mxu0 0
  %3563 = vmatprep.subr.bf16.mxu0 0
  %3564 = vmatpush2.bf16.msra.mxu0 0
  %3565 = vmatprep.subr.bf16.mxu0 0
  %3566 = vmatpush2.bf16.msra.mxu0 0
  %3567 = vmatprep.subr.bf16.mxu0 0
  %3568 = vmatpush2.bf16.msra.mxu0 0
  %3569 = vmatprep.subr.bf16.mxu0 0
  %3570 = vmatpush2.bf16.msra.mxu0 0
  %3571 = vmatprep.subr.bf16.mxu0 0
  %3572 = vmatpush2.bf16.msra.mxu0 0
  %3573 = vmatprep.subr.bf16.mxu0 0
  %3574 = vmatpush2.bf16.msra.mxu0 0
  %3575 = vmatprep.subr.bf16.mxu0 0
  %3576 = vmatpush2.bf16.msra.mxu0 0
  %3577 = vmatprep.mubr.bf16.mxu0 0
  %3578 = vmatmul.mubr.bf16.gmra.mxu0 %v1389
  %v3579 = vpop.f32.mrf.mxu0
  %v3580 = vadd.f32 %v3291, %v3579
  %v3581 = vpop.f32.mrf.mxu0
  %v3582 = vpop.f32.mrf.mxu0
  %v3583 = vadd.f32 %v3294, %v3582
  %v3584 = vpop.f32.mrf.mxu0
  %3585 = vmatprep.mubr.bf16.mxu0 0
  %3586 = vmatmul.mubr.bf16.gmra.mxu0 %v1398
  %v3587 = vpop.f32.mrf.mxu0
  %v3588 = vadd.f32 %v3299, %v3587
  %v3589 = vpop.f32.mrf.mxu0
  %v3590 = vpop.f32.mrf.mxu0
  %v3591 = vadd.f32 %v3302, %v3590
  %v3592 = vpop.f32.mrf.mxu0
  %3593 = vmatprep.mubr.bf16.mxu0 0
  %3594 = vmatmul.mubr.bf16.gmra.mxu0 %v1407
  %v3595 = vpop.f32.mrf.mxu0
  %v3596 = vadd.f32 %v3307, %v3595
  %v3597 = vpop.f32.mrf.mxu0
  %v3598 = vpop.f32.mrf.mxu0
  %v3599 = vadd.f32 %v3310, %v3598
  %v3600 = vpop.f32.mrf.mxu0
  %3601 = vmatprep.mubr.bf16.mxu0 0
  %3602 = vmatmul.mubr.bf16.gmra.mxu0 %v1416
  %v3603 = vpop.f32.mrf.mxu0
  %v3604 = vadd.f32 %v3315, %v3603
  %v3605 = vpop.f32.mrf.mxu0
  %v3606 = vpop.f32.mrf.mxu0
  %v3607 = vadd.f32 %v3318, %v3606
  %v3608 = vpop.f32.mrf.mxu0
  %3609 = vmatprep.mubr.bf16.mxu0 0
  %3610 = vmatmul.mubr.bf16.gmra.mxu0 %v1425
  %v3611 = vpop.f32.mrf.mxu0
  %v3612 = vadd.f32 %v3323, %v3611
  %v3613 = vpop.f32.mrf.mxu0
  %v3614 = vpop.f32.mrf.mxu0
  %v3615 = vadd.f32 %v3326, %v3614
  %v3616 = vpop.f32.mrf.mxu0
  %3617 = vmatprep.mubr.bf16.mxu0 0
  %3618 = vmatmul.mubr.bf16.gmra.mxu0 %v1434
  %v3619 = vpop.f32.mrf.mxu0
  %v3620 = vadd.f32 %v3331, %v3619
  %v3621 = vpop.f32.mrf.mxu0
  %v3622 = vpop.f32.mrf.mxu0
  %v3623 = vadd.f32 %v3334, %v3622
  %v3624 = vpop.f32.mrf.mxu0
  %3625 = vmatprep.mubr.bf16.mxu0 0
  %3626 = vmatmul.mubr.bf16.gmra.mxu0 %v1443
  %v3627 = vpop.f32.mrf.mxu0
  %v3628 = vadd.f32 %v3339, %v3627
  %v3629 = vpop.f32.mrf.mxu0
  %v3630 = vpop.f32.mrf.mxu0
  %v3631 = vadd.f32 %v3342, %v3630
  %v3632 = vpop.f32.mrf.mxu0
  %3633 = vmatprep.mubr.bf16.mxu0 0
  %3634 = vmatmul.mubr.bf16.gmra.mxu0 %v1452
  %v3635 = vpop.f32.mrf.mxu0
  %v3636 = vadd.f32 %v3347, %v3635
  %v3637 = vpop.f32.mrf.mxu0
  %v3638 = vpop.f32.mrf.mxu0
  %v3639 = vadd.f32 %v3350, %v3638
  %v3640 = vpop.f32.mrf.mxu0
  %3641 = vmatprep.mubr.bf16.mxu0 0
  %3642 = vmatmul.mubr.bf16.gmra.mxu0 %v1461
  %v3643 = vpop.f32.mrf.mxu0
  %v3644 = vadd.f32 %v3355, %v3643
  %v3645 = vpop.f32.mrf.mxu0
  %v3646 = vpop.f32.mrf.mxu0
  %v3647 = vadd.f32 %v3358, %v3646
  %v3648 = vpop.f32.mrf.mxu0
  %3649 = vmatprep.mubr.bf16.mxu0 0
  %3650 = vmatmul.mubr.bf16.gmra.mxu0 %v1470
  %v3651 = vpop.f32.mrf.mxu0
  %v3652 = vadd.f32 %v3363, %v3651
  %v3653 = vpop.f32.mrf.mxu0
  %v3654 = vpop.f32.mrf.mxu0
  %v3655 = vadd.f32 %v3366, %v3654
  %v3656 = vpop.f32.mrf.mxu0
  %3657 = vmatprep.mubr.bf16.mxu0 0
  %3658 = vmatmul.mubr.bf16.gmra.mxu0 %v1479
  %v3659 = vpop.f32.mrf.mxu0
  %v3660 = vadd.f32 %v3371, %v3659
  %v3661 = vpop.f32.mrf.mxu0
  %v3662 = vpop.f32.mrf.mxu0
  %v3663 = vadd.f32 %v3374, %v3662
  %v3664 = vpop.f32.mrf.mxu0
  %3665 = vmatprep.mubr.bf16.mxu0 0
  %3666 = vmatmul.mubr.bf16.gmra.mxu0 %v1488
  %v3667 = vpop.f32.mrf.mxu0
  %v3668 = vadd.f32 %v3379, %v3667
  %v3669 = vpop.f32.mrf.mxu0
  %v3670 = vpop.f32.mrf.mxu0
  %v3671 = vadd.f32 %v3382, %v3670
  %v3672 = vpop.f32.mrf.mxu0
  %3673 = vmatprep.mubr.bf16.mxu0 0
  %3674 = vmatmul.mubr.bf16.gmra.mxu0 %v1497
  %v3675 = vpop.f32.mrf.mxu0
  %v3676 = vadd.f32 %v3387, %v3675
  %v3677 = vpop.f32.mrf.mxu0
  %v3678 = vpop.f32.mrf.mxu0
  %v3679 = vadd.f32 %v3390, %v3678
  %v3680 = vpop.f32.mrf.mxu0
  %3681 = vmatprep.mubr.bf16.mxu0 0
  %3682 = vmatmul.mubr.bf16.gmra.mxu0 %v1506
  %v3683 = vpop.f32.mrf.mxu0
  %v3684 = vadd.f32 %v3395, %v3683
  %v3685 = vpop.f32.mrf.mxu0
  %v3686 = vpop.f32.mrf.mxu0
  %v3687 = vadd.f32 %v3398, %v3686
  %v3688 = vpop.f32.mrf.mxu0
  %3689 = vmatprep.mubr.bf16.mxu0 0
  %3690 = vmatmul.mubr.bf16.gmra.mxu0 %v1515
  %v3691 = vpop.f32.mrf.mxu0
  %v3692 = vadd.f32 %v3403, %v3691
  %v3693 = vpop.f32.mrf.mxu0
  %v3694 = vpop.f32.mrf.mxu0
  %v3695 = vadd.f32 %v3406, %v3694
  %v3696 = vpop.f32.mrf.mxu0
  %3697 = vmatprep.mubr.bf16.mxu0 0
  %3698 = vmatmul.mubr.bf16.gmra.mxu0 %v1524
  %v3699 = vpop.f32.mrf.mxu0
  %v3700 = vadd.f32 %v3411, %v3699
  %v3701 = vpop.f32.mrf.mxu0
  %v3702 = vpop.f32.mrf.mxu0
  %v3703 = vadd.f32 %v3414, %v3702
  %v3704 = vpop.f32.mrf.mxu0
  %3705 = vmatprep.mubr.bf16.mxu0 0
  %3706 = vmatmul.mubr.bf16.gmra.mxu0 %v1533
  %v3707 = vpop.f32.mrf.mxu0
  %v3708 = vadd.f32 %v3419, %v3707
  %v3709 = vpop.f32.mrf.mxu0
  %v3710 = vpop.f32.mrf.mxu0
  %v3711 = vadd.f32 %v3422, %v3710
  %v3712 = vpop.f32.mrf.mxu0
  %3713 = vmatprep.mubr.bf16.mxu0 0
  %3714 = vmatmul.mubr.bf16.gmra.mxu0 %v1542
  %v3715 = vpop.f32.mrf.mxu0
  %v3716 = vadd.f32 %v3427, %v3715
  %v3717 = vpop.f32.mrf.mxu0
  %v3718 = vpop.f32.mrf.mxu0
  %v3719 = vadd.f32 %v3430, %v3718
  %v3720 = vpop.f32.mrf.mxu0
  %3721 = vmatprep.mubr.bf16.mxu0 0
  %3722 = vmatmul.mubr.bf16.gmra.mxu0 %v1551
  %v3723 = vpop.f32.mrf.mxu0
  %v3724 = vadd.f32 %v3435, %v3723
  %v3725 = vpop.f32.mrf.mxu0
  %v3726 = vpop.f32.mrf.mxu0
  %v3727 = vadd.f32 %v3438, %v3726
  %v3728 = vpop.f32.mrf.mxu0
  %3729 = vmatprep.mubr.bf16.mxu0 0
  %3730 = vmatmul.mubr.bf16.gmra.mxu0 %v1560
  %v3731 = vpop.f32.mrf.mxu0
  %v3732 = vadd.f32 %v3443, %v3731
  %v3733 = vpop.f32.mrf.mxu0
  %v3734 = vpop.f32.mrf.mxu0
  %v3735 = vadd.f32 %v3446, %v3734
  %v3736 = vpop.f32.mrf.mxu0
  %3737 = vmatprep.mubr.bf16.mxu0 0
  %3738 = vmatmul.mubr.bf16.gmra.mxu0 %v1569
  %v3739 = vpop.f32.mrf.mxu0
  %v3740 = vadd.f32 %v3451, %v3739
  %v3741 = vpop.f32.mrf.mxu0
  %v3742 = vpop.f32.mrf.mxu0
  %v3743 = vadd.f32 %v3454, %v3742
  %v3744 = vpop.f32.mrf.mxu0
  %3745 = vmatprep.mubr.bf16.mxu0 0
  %3746 = vmatmul.mubr.bf16.gmra.mxu0 %v1578
  %v3747 = vpop.f32.mrf.mxu0
  %v3748 = vadd.f32 %v3459, %v3747
  %v3749 = vpop.f32.mrf.mxu0
  %v3750 = vpop.f32.mrf.mxu0
  %v3751 = vadd.f32 %v3462, %v3750
  %v3752 = vpop.f32.mrf.mxu0
  %3753 = vmatprep.mubr.bf16.mxu0 0
  %3754 = vmatmul.mubr.bf16.gmra.mxu0 %v1587
  %v3755 = vpop.f32.mrf.mxu0
  %v3756 = vadd.f32 %v3467, %v3755
  %v3757 = vpop.f32.mrf.mxu0
  %v3758 = vpop.f32.mrf.mxu0
  %v3759 = vadd.f32 %v3470, %v3758
  %v3760 = vpop.f32.mrf.mxu0
  %3761 = vmatprep.mubr.bf16.mxu0 0
  %3762 = vmatmul.mubr.bf16.gmra.mxu0 %v1596
  %v3763 = vpop.f32.mrf.mxu0
  %v3764 = vadd.f32 %v3475, %v3763
  %v3765 = vpop.f32.mrf.mxu0
  %v3766 = vpop.f32.mrf.mxu0
  %v3767 = vadd.f32 %v3478, %v3766
  %v3768 = vpop.f32.mrf.mxu0
  %3769 = vmatprep.mubr.bf16.mxu0 0
  %3770 = vmatmul.mubr.bf16.gmra.mxu0 %v1605
  %v3771 = vpop.f32.mrf.mxu0
  %v3772 = vadd.f32 %v3483, %v3771
  %v3773 = vpop.f32.mrf.mxu0
  %v3774 = vpop.f32.mrf.mxu0
  %v3775 = vadd.f32 %v3486, %v3774
  %v3776 = vpop.f32.mrf.mxu0
  %3777 = vmatprep.mubr.bf16.mxu0 0
  %3778 = vmatmul.mubr.bf16.gmra.mxu0 %v1614
  %v3779 = vpop.f32.mrf.mxu0
  %v3780 = vadd.f32 %v3491, %v3779
  %v3781 = vpop.f32.mrf.mxu0
  %v3782 = vpop.f32.mrf.mxu0
  %v3783 = vadd.f32 %v3494, %v3782
  %v3784 = vpop.f32.mrf.mxu0
  %3785 = vmatprep.mubr.bf16.mxu0 0
  %3786 = vmatmul.mubr.bf16.gmra.mxu0 %v1623
  %v3787 = vpop.f32.mrf.mxu0
  %v3788 = vadd.f32 %v3499, %v3787
  %v3789 = vpop.f32.mrf.mxu0
  %v3790 = vpop.f32.mrf.mxu0
  %v3791 = vadd.f32 %v3502, %v3790
  %v3792 = vpop.f32.mrf.mxu0
  %3793 = vmatprep.mubr.bf16.mxu0 0
  %3794 = vmatmul.mubr.bf16.gmra.mxu0 %v1632
  %v3795 = vpop.f32.mrf.mxu0
  %v3796 = vadd.f32 %v3507, %v3795
  %v3797 = vpop.f32.mrf.mxu0
  %v3798 = vpop.f32.mrf.mxu0
  %v3799 = vadd.f32 %v3510, %v3798
  %v3800 = vpop.f32.mrf.mxu0
  %3801 = vmatprep.mubr.bf16.mxu0 0
  %3802 = vmatmul.mubr.bf16.gmra.mxu0 %v1641
  %v3803 = vpop.f32.mrf.mxu0
  %v3804 = vadd.f32 %v3515, %v3803
  %v3805 = vpop.f32.mrf.mxu0
  %v3806 = vpop.f32.mrf.mxu0
  %v3807 = vadd.f32 %v3518, %v3806
  %v3808 = vpop.f32.mrf.mxu0
  %3809 = vmatprep.mubr.bf16.mxu0 0
  %3810 = vmatmul.mubr.bf16.gmra.mxu0 %v1650
  %v3811 = vpop.f32.mrf.mxu0
  %v3812 = vadd.f32 %v3523, %v3811
  %v3813 = vpop.f32.mrf.mxu0
  %v3814 = vpop.f32.mrf.mxu0
  %v3815 = vadd.f32 %v3526, %v3814
  %v3816 = vpop.f32.mrf.mxu0
  %3817 = vmatprep.mubr.bf16.mxu0 0
  %3818 = vmatmul.mubr.bf16.gmra.mxu0 %v1659
  %v3819 = vpop.f32.mrf.mxu0
  %v3820 = vadd.f32 %v3531, %v3819
  %v3821 = vpop.f32.mrf.mxu0
  %v3822 = vpop.f32.mrf.mxu0
  %v3823 = vadd.f32 %v3534, %v3822
  %v3824 = vpop.f32.mrf.mxu0
  %3825 = vmatprep.mubr.bf16.mxu0 0
  %3826 = vmatmul.mubr.bf16.gmra.mxu0 %v1668
  %v3827 = vpop.f32.mrf.mxu0
  %v3828 = vadd.f32 %v3539, %v3827
  %v3829 = vpop.f32.mrf.mxu0
  %v3830 = vpop.f32.mrf.mxu0
  %v3831 = vadd.f32 %v3542, %v3830
  %v3832 = vpop.f32.mrf.mxu0
  %3833 = vdwg.mxu0
  %v3834 = vld [vmem:[%s2] sm:$0x1]
  %v3836 = vlaneseq
  %v3837 = vshrl.u32 %v3836, 7
  %v3838 = vsub.s32 0, %v3837
  %v3839 = vrot.slane %v3834, %v3838
  %v3841 = vmul.f32 %v3580, %v3839
  %v3842 = vmul.f32 %v3583, %v3839
  %v3843 = vmul.f32 %v3588, %v3839
  %v3844 = vmul.f32 %v3591, %v3839
  %v3845 = vmul.f32 %v3596, %v3839
  %v3846 = vmul.f32 %v3599, %v3839
  %v3847 = vmul.f32 %v3604, %v3839
  %v3848 = vmul.f32 %v3607, %v3839
  %v3849 = vmul.f32 %v3612, %v3839
  %v3850 = vmul.f32 %v3615, %v3839
  %v3851 = vmul.f32 %v3620, %v3839
  %v3852 = vmul.f32 %v3623, %v3839
  %v3853 = vmul.f32 %v3628, %v3839
  %v3854 = vmul.f32 %v3631, %v3839
  %v3855 = vmul.f32 %v3636, %v3839
  %v3856 = vmul.f32 %v3639, %v3839
  %v3857 = vmul.f32 %v3644, %v3839
  %v3858 = vmul.f32 %v3647, %v3839
  %v3859 = vmul.f32 %v3652, %v3839
  %v3860 = vmul.f32 %v3655, %v3839
  %v3861 = vmul.f32 %v3660, %v3839
  %v3862 = vmul.f32 %v3663, %v3839
  %v3863 = vmul.f32 %v3668, %v3839
  %v3864 = vmul.f32 %v3671, %v3839
  %v3865 = vmul.f32 %v3676, %v3839
  %v3866 = vmul.f32 %v3679, %v3839
  %v3867 = vmul.f32 %v3684, %v3839
  %v3868 = vmul.f32 %v3687, %v3839
  %v3869 = vmul.f32 %v3692, %v3839
  %v3870 = vmul.f32 %v3695, %v3839
  %v3871 = vmul.f32 %v3700, %v3839
  %v3872 = vmul.f32 %v3703, %v3839
  %v3873 = vmul.f32 %v3708, %v3839
  %v3874 = vmul.f32 %v3711, %v3839
  %v3875 = vmul.f32 %v3716, %v3839
  %v3876 = vmul.f32 %v3719, %v3839
  %v3877 = vmul.f32 %v3724, %v3839
  %v3878 = vmul.f32 %v3727, %v3839
  %v3879 = vmul.f32 %v3732, %v3839
  %v3880 = vmul.f32 %v3735, %v3839
  %v3881 = vmul.f32 %v3740, %v3839
  %v3882 = vmul.f32 %v3743, %v3839
  %v3883 = vmul.f32 %v3748, %v3839
  %v3884 = vmul.f32 %v3751, %v3839
  %v3885 = vmul.f32 %v3756, %v3839
  %v3886 = vmul.f32 %v3759, %v3839
  %v3887 = vmul.f32 %v3764, %v3839
  %v3888 = vmul.f32 %v3767, %v3839
  %v3889 = vmul.f32 %v3772, %v3839
  %v3890 = vmul.f32 %v3775, %v3839
  %v3891 = vmul.f32 %v3780, %v3839
  %v3892 = vmul.f32 %v3783, %v3839
  %v3893 = vmul.f32 %v3788, %v3839
  %v3894 = vmul.f32 %v3791, %v3839
  %v3895 = vmul.f32 %v3796, %v3839
  %v3896 = vmul.f32 %v3799, %v3839
  %v3897 = vmul.f32 %v3804, %v3839
  %v3898 = vmul.f32 %v3807, %v3839
  %v3899 = vmul.f32 %v3812, %v3839
  %v3900 = vmul.f32 %v3815, %v3839
  %v3901 = vmul.f32 %v3820, %v3839
  %v3902 = vmul.f32 %v3823, %v3839
  %v3903 = vmul.f32 %v3828, %v3839
  %v3904 = vmul.f32 %v3831, %v3839
  %v3905 = vld [vmem:[%s3] sm:$0x1]
  %v3907 = vlaneseq
  %v3908 = vshrl.u32 %v3907, 7
  %v3909 = vsub.s32 0, %v3908
  %v3910 = vrot.slane %v3905, %v3909
  %v3912 = vadd.f32 %v3841, %v3910
  %v3913 = vadd.f32 %v3842, %v3910
  %v3914 = vadd.f32 %v3843, %v3910
  %v3915 = vadd.f32 %v3844, %v3910
  %v3916 = vadd.f32 %v3845, %v3910
  %v3917 = vadd.f32 %v3846, %v3910
  %v3918 = vadd.f32 %v3847, %v3910
  %v3919 = vadd.f32 %v3848, %v3910
  %v3920 = vadd.f32 %v3849, %v3910
  %v3921 = vadd.f32 %v3850, %v3910
  %v3922 = vadd.f32 %v3851, %v3910
  %v3923 = vadd.f32 %v3852, %v3910
  %v3924 = vadd.f32 %v3853, %v3910
  %v3925 = vadd.f32 %v3854, %v3910
  %v3926 = vadd.f32 %v3855, %v3910
  %v3927 = vadd.f32 %v3856, %v3910
  %v3928 = vadd.f32 %v3857, %v3910
  %v3929 = vadd.f32 %v3858, %v3910
  %v3930 = vadd.f32 %v3859, %v3910
  %v3931 = vadd.f32 %v3860, %v3910
  %v3932 = vadd.f32 %v3861, %v3910
  %v3933 = vadd.f32 %v3862, %v3910
  %v3934 = vadd.f32 %v3863, %v3910
  %v3935 = vadd.f32 %v3864, %v3910
  %v3936 = vadd.f32 %v3865, %v3910
  %v3937 = vadd.f32 %v3866, %v3910
  %v3938 = vadd.f32 %v3867, %v3910
  %v3939 = vadd.f32 %v3868, %v3910
  %v3940 = vadd.f32 %v3869, %v3910
  %v3941 = vadd.f32 %v3870, %v3910
  %v3942 = vadd.f32 %v3871, %v3910
  %v3943 = vadd.f32 %v3872, %v3910
  %v3944 = vadd.f32 %v3873, %v3910
  %v3945 = vadd.f32 %v3874, %v3910
  %v3946 = vadd.f32 %v3875, %v3910
  %v3947 = vadd.f32 %v3876, %v3910
  %v3948 = vadd.f32 %v3877, %v3910
  %v3949 = vadd.f32 %v3878, %v3910
  %v3950 = vadd.f32 %v3879, %v3910
  %v3951 = vadd.f32 %v3880, %v3910
  %v3952 = vadd.f32 %v3881, %v3910
  %v3953 = vadd.f32 %v3882, %v3910
  %v3954 = vadd.f32 %v3883, %v3910
  %v3955 = vadd.f32 %v3884, %v3910
  %v3956 = vadd.f32 %v3885, %v3910
  %v3957 = vadd.f32 %v3886, %v3910
  %v3958 = vadd.f32 %v3887, %v3910
  %v3959 = vadd.f32 %v3888, %v3910
  %v3960 = vadd.f32 %v3889, %v3910
  %v3961 = vadd.f32 %v3890, %v3910
  %v3962 = vadd.f32 %v3891, %v3910
  %v3963 = vadd.f32 %v3892, %v3910
  %v3964 = vadd.f32 %v3893, %v3910
  %v3965 = vadd.f32 %v3894, %v3910
  %v3966 = vadd.f32 %v3895, %v3910
  %v3967 = vadd.f32 %v3896, %v3910
  %v3968 = vadd.f32 %v3897, %v3910
  %v3969 = vadd.f32 %v3898, %v3910
  %v3970 = vadd.f32 %v3899, %v3910
  %v3971 = vadd.f32 %v3900, %v3910
  %v3972 = vadd.f32 %v3901, %v3910
  %v3973 = vadd.f32 %v3902, %v3910
  %v3974 = vadd.f32 %v3903, %v3910
  %v3975 = vadd.f32 %v3904, %v3910
  %v3976 = vld [vmem:[%s4] sm:$0xff]
  %v3977 = vld [vmem:[%s4 + $0x8] sm:$0xff]
  %v3978 = vld [vmem:[%s4 + $0x10] sm:$0xff]
  %v3979 = vld [vmem:[%s4 + $0x18] sm:$0xff]
  %v3980 = vld [vmem:[%s4 + $0x20] sm:$0xff]
  %v3981 = vld [vmem:[%s4 + $0x28] sm:$0xff]
  %v3982 = vld [vmem:[%s4 + $0x30] sm:$0xff]
  %v3983 = vld [vmem:[%s4 + $0x38] sm:$0xff]
  %v3984 = vld [vmem:[%s4 + $0x40] sm:$0xff]
  %v3985 = vld [vmem:[%s4 + $0x48] sm:$0xff]
  %v3986 = vld [vmem:[%s4 + $0x50] sm:$0xff]
  %v3987 = vld [vmem:[%s4 + $0x58] sm:$0xff]
  %v3988 = vld [vmem:[%s4 + $0x60] sm:$0xff]
  %v3989 = vld [vmem:[%s4 + $0x68] sm:$0xff]
  %v3990 = vld [vmem:[%s4 + $0x70] sm:$0xff]
  %v3991 = vld [vmem:[%s4 + $0x78] sm:$0xff]
  %v3992 = vld [vmem:[%s4 + $0x80] sm:$0xff]
  %v3993 = vld [vmem:[%s4 + $0x88] sm:$0xff]
  %v3994 = vld [vmem:[%s4 + $0x90] sm:$0xff]
  %v3995 = vld [vmem:[%s4 + $0x98] sm:$0xff]
  %v3996 = vld [vmem:[%s4 + $0xa0] sm:$0xff]
  %v3997 = vld [vmem:[%s4 + $0xa8] sm:$0xff]
  %v3998 = vld [vmem:[%s4 + $0xb0] sm:$0xff]
  %v3999 = vld [vmem:[%s4 + $0xb8] sm:$0xff]
  %v4000 = vld [vmem:[%s4 + $0xc0] sm:$0xff]
  %v4001 = vld [vmem:[%s4 + $0xc8] sm:$0xff]
  %v4002 = vld [vmem:[%s4 + $0xd0] sm:$0xff]
  %v4003 = vld [vmem:[%s4 + $0xd8] sm:$0xff]
  %v4004 = vld [vmem:[%s4 + $0xe0] sm:$0xff]
  %v4005 = vld [vmem:[%s4 + $0xe8] sm:$0xff]
  %v4006 = vld [vmem:[%s4 + $0xf0] sm:$0xff]
  %v4007 = vld [vmem:[%s4 + $0xf8] sm:$0xff]
  %v4008 = vld [vmem:[%s4 + $0x100] sm:$0xff]
  %v4009 = vld [vmem:[%s4 + $0x108] sm:$0xff]
  %v4010 = vld [vmem:[%s4 + $0x110] sm:$0xff]
  %v4011 = vld [vmem:[%s4 + $0x118] sm:$0xff]
  %v4012 = vld [vmem:[%s4 + $0x120] sm:$0xff]
  %v4013 = vld [vmem:[%s4 + $0x128] sm:$0xff]
  %v4014 = vld [vmem:[%s4 + $0x130] sm:$0xff]
  %v4015 = vld [vmem:[%s4 + $0x138] sm:$0xff]
  %v4016 = vld [vmem:[%s4 + $0x140] sm:$0xff]
  %v4017 = vld [vmem:[%s4 + $0x148] sm:$0xff]
  %v4018 = vld [vmem:[%s4 + $0x150] sm:$0xff]
  %v4019 = vld [vmem:[%s4 + $0x158] sm:$0xff]
  %v4020 = vld [vmem:[%s4 + $0x160] sm:$0xff]
  %v4021 = vld [vmem:[%s4 + $0x168] sm:$0xff]
  %v4022 = vld [vmem:[%s4 + $0x170] sm:$0xff]
  %v4023 = vld [vmem:[%s4 + $0x178] sm:$0xff]
  %v4024 = vld [vmem:[%s4 + $0x180] sm:$0xff]
  %v4025 = vld [vmem:[%s4 + $0x188] sm:$0xff]
  %v4026 = vld [vmem:[%s4 + $0x190] sm:$0xff]
  %v4027 = vld [vmem:[%s4 + $0x198] sm:$0xff]
  %v4028 = vld [vmem:[%s4 + $0x1a0] sm:$0xff]
  %v4029 = vld [vmem:[%s4 + $0x1a8] sm:$0xff]
  %v4030 = vld [vmem:[%s4 + $0x1b0] sm:$0xff]
  %v4031 = vld [vmem:[%s4 + $0x1b8] sm:$0xff]
  %v4032 = vld [vmem:[%s4 + $0x1c0] sm:$0xff]
  %v4033 = vld [vmem:[%s4 + $0x1c8] sm:$0xff]
  %v4034 = vld [vmem:[%s4 + $0x1d0] sm:$0xff]
  %v4035 = vld [vmem:[%s4 + $0x1d8] sm:$0xff]
  %v4036 = vld [vmem:[%s4 + $0x1e0] sm:$0xff]
  %v4037 = vld [vmem:[%s4 + $0x1e8] sm:$0xff]
  %v4038 = vld [vmem:[%s4 + $0x1f0] sm:$0xff]
  %v4039 = vld [vmem:[%s4 + $0x1f8] sm:$0xff]
  %v4040 = vadd.f32 %v3912, %v3976
  %v4041 = vadd.f32 %v3913, %v3977
  %v4042 = vadd.f32 %v3914, %v3978
  %v4043 = vadd.f32 %v3915, %v3979
  %v4044 = vadd.f32 %v3916, %v3980
  %v4045 = vadd.f32 %v3917, %v3981
  %v4046 = vadd.f32 %v3918, %v3982
  %v4047 = vadd.f32 %v3919, %v3983
  %v4048 = vadd.f32 %v3920, %v3984
  %v4049 = vadd.f32 %v3921, %v3985
  %v4050 = vadd.f32 %v3922, %v3986
  %v4051 = vadd.f32 %v3923, %v3987
  %v4052 = vadd.f32 %v3924, %v3988
  %v4053 = vadd.f32 %v3925, %v3989
  %v4054 = vadd.f32 %v3926, %v3990
  %v4055 = vadd.f32 %v3927, %v3991
  %v4056 = vadd.f32 %v3928, %v3992
  %v4057 = vadd.f32 %v3929, %v3993
  %v4058 = vadd.f32 %v3930, %v3994
  %v4059 = vadd.f32 %v3931, %v3995
  %v4060 = vadd.f32 %v3932, %v3996
  %v4061 = vadd.f32 %v3933, %v3997
  %v4062 = vadd.f32 %v3934, %v3998
  %v4063 = vadd.f32 %v3935, %v3999
  %v4064 = vadd.f32 %v3936, %v4000
  %v4065 = vadd.f32 %v3937, %v4001
  %v4066 = vadd.f32 %v3938, %v4002
  %v4067 = vadd.f32 %v3939, %v4003
  %v4068 = vadd.f32 %v3940, %v4004
  %v4069 = vadd.f32 %v3941, %v4005
  %v4070 = vadd.f32 %v3942, %v4006
  %v4071 = vadd.f32 %v3943, %v4007
  %v4072 = vadd.f32 %v3944, %v4008
  %v4073 = vadd.f32 %v3945, %v4009
  %v4074 = vadd.f32 %v3946, %v4010
  %v4075 = vadd.f32 %v3947, %v4011
  %v4076 = vadd.f32 %v3948, %v4012
  %v4077 = vadd.f32 %v3949, %v4013
  %v4078 = vadd.f32 %v3950, %v4014
  %v4079 = vadd.f32 %v3951, %v4015
  %v4080 = vadd.f32 %v3952, %v4016
  %v4081 = vadd.f32 %v3953, %v4017
  %v4082 = vadd.f32 %v3954, %v4018
  %v4083 = vadd.f32 %v3955, %v4019
  %v4084 = vadd.f32 %v3956, %v4020
  %v4085 = vadd.f32 %v3957, %v4021
  %v4086 = vadd.f32 %v3958, %v4022
  %v4087 = vadd.f32 %v3959, %v4023
  %v4088 = vadd.f32 %v3960, %v4024
  %v4089 = vadd.f32 %v3961, %v4025
  %v4090 = vadd.f32 %v3962, %v4026
  %v4091 = vadd.f32 %v3963, %v4027
  %v4092 = vadd.f32 %v3964, %v4028
  %v4093 = vadd.f32 %v3965, %v4029
  %v4094 = vadd.f32 %v3966, %v4030
  %v4095 = vadd.f32 %v3967, %v4031
  %v4096 = vadd.f32 %v3968, %v4032
  %v4097 = vadd.f32 %v3969, %v4033
  %v4098 = vadd.f32 %v3970, %v4034
  %v4099 = vadd.f32 %v3971, %v4035
  %v4100 = vadd.f32 %v3972, %v4036
  %v4101 = vadd.f32 %v3973, %v4037
  %v4102 = vadd.f32 %v3974, %v4038
  %v4103 = vadd.f32 %v3975, %v4039
  %v4104 = vmax.f32 %v4040, 0.0
  %v4105 = vmax.f32 %v4041, 0.0
  %v4106 = vmax.f32 %v4042, 0.0
  %v4107 = vmax.f32 %v4043, 0.0
  %v4108 = vmax.f32 %v4044, 0.0
  %v4109 = vmax.f32 %v4045, 0.0
  %v4110 = vmax.f32 %v4046, 0.0
  %v4111 = vmax.f32 %v4047, 0.0
  %v4112 = vmax.f32 %v4048, 0.0
  %v4113 = vmax.f32 %v4049, 0.0
  %v4114 = vmax.f32 %v4050, 0.0
  %v4115 = vmax.f32 %v4051, 0.0
  %v4116 = vmax.f32 %v4052, 0.0
  %v4117 = vmax.f32 %v4053, 0.0
  %v4118 = vmax.f32 %v4054, 0.0
  %v4119 = vmax.f32 %v4055, 0.0
  %v4120 = vmax.f32 %v4056, 0.0
  %v4121 = vmax.f32 %v4057, 0.0
  %v4122 = vmax.f32 %v4058, 0.0
  %v4123 = vmax.f32 %v4059, 0.0
  %v4124 = vmax.f32 %v4060, 0.0
  %v4125 = vmax.f32 %v4061, 0.0
  %v4126 = vmax.f32 %v4062, 0.0
  %v4127 = vmax.f32 %v4063, 0.0
  %v4128 = vmax.f32 %v4064, 0.0
  %v4129 = vmax.f32 %v4065, 0.0
  %v4130 = vmax.f32 %v4066, 0.0
  %v4131 = vmax.f32 %v4067, 0.0
  %v4132 = vmax.f32 %v4068, 0.0
  %v4133 = vmax.f32 %v4069, 0.0
  %v4134 = vmax.f32 %v4070, 0.0
  %v4135 = vmax.f32 %v4071, 0.0
  %v4136 = vmax.f32 %v4072, 0.0
  %v4137 = vmax.f32 %v4073, 0.0
  %v4138 = vmax.f32 %v4074, 0.0
  %v4139 = vmax.f32 %v4075, 0.0
  %v4140 = vmax.f32 %v4076, 0.0
  %v4141 = vmax.f32 %v4077, 0.0
  %v4142 = vmax.f32 %v4078, 0.0
  %v4143 = vmax.f32 %v4079, 0.0
  %v4144 = vmax.f32 %v4080, 0.0
  %v4145 = vmax.f32 %v4081, 0.0
  %v4146 = vmax.f32 %v4082, 0.0
  %v4147 = vmax.f32 %v4083, 0.0
  %v4148 = vmax.f32 %v4084, 0.0
  %v4149 = vmax.f32 %v4085, 0.0
  %v4150 = vmax.f32 %v4086, 0.0
  %v4151 = vmax.f32 %v4087, 0.0
  %v4152 = vmax.f32 %v4088, 0.0
  %v4153 = vmax.f32 %v4089, 0.0
  %v4154 = vmax.f32 %v4090, 0.0
  %v4155 = vmax.f32 %v4091, 0.0
  %v4156 = vmax.f32 %v4092, 0.0
  %v4157 = vmax.f32 %v4093, 0.0
  %v4158 = vmax.f32 %v4094, 0.0
  %v4159 = vmax.f32 %v4095, 0.0
  %v4160 = vmax.f32 %v4096, 0.0
  %v4161 = vmax.f32 %v4097, 0.0
  %v4162 = vmax.f32 %v4098, 0.0
  %v4163 = vmax.f32 %v4099, 0.0
  %v4164 = vmax.f32 %v4100, 0.0
  %v4165 = vmax.f32 %v4101, 0.0
  %v4166 = vmax.f32 %v4102, 0.0
  %v4167 = vmax.f32 %v4103, 0.0
  %4168 = vst [vmem:[%s5] sm:$0xff] %v4104
  %4169 = vst [vmem:[%s5 + $0x8] sm:$0xff] %v4105
  %4170 = vst [vmem:[%s5 + $0x10] sm:$0xff] %v4106
  %4171 = vst [vmem:[%s5 + $0x18] sm:$0xff] %v4107
  %4172 = vst [vmem:[%s5 + $0x20] sm:$0xff] %v4108
  %4173 = vst [vmem:[%s5 + $0x28] sm:$0xff] %v4109
  %4174 = vst [vmem:[%s5 + $0x30] sm:$0xff] %v4110
  %4175 = vst [vmem:[%s5 + $0x38] sm:$0xff] %v4111
  %4176 = vst [vmem:[%s5 + $0x40] sm:$0xff] %v4112
  %4177 = vst [vmem:[%s5 + $0x48] sm:$0xff] %v4113
  %4178 = vst [vmem:[%s5 + $0x50] sm:$0xff] %v4114
  %4179 = vst [vmem:[%s5 + $0x58] sm:$0xff] %v4115
  %4180 = vst [vmem:[%s5 + $0x60] sm:$0xff] %v4116
  %4181 = vst [vmem:[%s5 + $0x68] sm:$0xff] %v4117
  %4182 = vst [vmem:[%s5 + $0x70] sm:$0xff] %v4118
  %4183 = vst [vmem:[%s5 + $0x78] sm:$0xff] %v4119
  %4184 = vst [vmem:[%s5 + $0x80] sm:$0xff] %v4120
  %4185 = vst [vmem:[%s5 + $0x88] sm:$0xff] %v4121
  %4186 = vst [vmem:[%s5 + $0x90] sm:$0xff] %v4122
  %4187 = vst [vmem:[%s5 + $0x98] sm:$0xff] %v4123
  %4188 = vst [vmem:[%s5 + $0xa0] sm:$0xff] %v4124
  %4189 = vst [vmem:[%s5 + $0xa8] sm:$0xff] %v4125
  %4190 = vst [vmem:[%s5 + $0xb0] sm:$0xff] %v4126
  %4191 = vst [vmem:[%s5 + $0xb8] sm:$0xff] %v4127
  %4192 = vst [vmem:[%s5 + $0xc0] sm:$0xff] %v4128
  %4193 = vst [vmem:[%s5 + $0xc8] sm:$0xff] %v4129
  %4194 = vst [vmem:[%s5 + $0xd0] sm:$0xff] %v4130
  %4195 = vst [vmem:[%s5 + $0xd8] sm:$0xff] %v4131
  %4196 = vst [vmem:[%s5 + $0xe0] sm:$0xff] %v4132
  %4197 = vst [vmem:[%s5 + $0xe8] sm:$0xff] %v4133
  %4198 = vst [vmem:[%s5 + $0xf0] sm:$0xff] %v4134
  %4199 = vst [vmem:[%s5 + $0xf8] sm:$0xff] %v4135
  %4200 = vst [vmem:[%s5 + $0x100] sm:$0xff] %v4136
  %4201 = vst [vmem:[%s5 + $0x108] sm:$0xff] %v4137
  %4202 = vst [vmem:[%s5 + $0x110] sm:$0xff] %v4138
  %4203 = vst [vmem:[%s5 + $0x118] sm:$0xff] %v4139
  %4204 = vst [vmem:[%s5 + $0x120] sm:$0xff] %v4140
  %4205 = vst [vmem:[%s5 + $0x128] sm:$0xff] %v4141
  %4206 = vst [vmem:[%s5 + $0x130] sm:$0xff] %v4142
  %4207 = vst [vmem:[%s5 + $0x138] sm:$0xff] %v4143
  %4208 = vst [vmem:[%s5 + $0x140] sm:$0xff] %v4144
  %4209 = vst [vmem:[%s5 + $0x148] sm:$0xff] %v4145
  %4210 = vst [vmem:[%s5 + $0x150] sm:$0xff] %v4146
  %4211 = vst [vmem:[%s5 + $0x158] sm:$0xff] %v4147
  %4212 = vst [vmem:[%s5 + $0x160] sm:$0xff] %v4148
  %4213 = vst [vmem:[%s5 + $0x168] sm:$0xff] %v4149
  %4214 = vst [vmem:[%s5 + $0x170] sm:$0xff] %v4150
  %4215 = vst [vmem:[%s5 + $0x178] sm:$0xff] %v4151
  %4216 = vst [vmem:[%s5 + $0x180] sm:$0xff] %v4152
  %4217 = vst [vmem:[%s5 + $0x188] sm:$0xff] %v4153
  %4218 = vst [vmem:[%s5 + $0x190] sm:$0xff] %v4154
  %4219 = vst [vmem:[%s5 + $0x198] sm:$0xff] %v4155
  %4220 = vst [vmem:[%s5 + $0x1a0] sm:$0xff] %v4156
  %4221 = vst [vmem:[%s5 + $0x1a8] sm:$0xff] %v4157
  %4222 = vst [vmem:[%s5 + $0x1b0] sm:$0xff] %v4158
  %4223 = vst [vmem:[%s5 + $0x1b8] sm:$0xff] %v4159
  %4224 = vst [vmem:[%s5 + $0x1c0] sm:$0xff] %v4160
  %4225 = vst [vmem:[%s5 + $0x1c8] sm:$0xff] %v4161
  %4226 = vst [vmem:[%s5 + $0x1d0] sm:$0xff] %v4162
  %4227 = vst [vmem:[%s5 + $0x1d8] sm:$0xff] %v4163
  %4228 = vst [vmem:[%s5 + $0x1e0] sm:$0xff] %v4164
  %4229 = vst [vmem:[%s5 + $0x1e8] sm:$0xff] %v4165
  %4230 = vst [vmem:[%s5 + $0x1f0] sm:$0xff] %v4166
  %4231 = vst [vmem:[%s5 + $0x1f8] sm:$0xff] %v4167
  // Predicated region
  $region22: #{ssl_encoder_forward.8} parent=0 // pred_check
    _
  $region23: #{ssl_encoder_forward.8} parent=0 // pred_check_branch
    %4233 = sbr.rel (0) target = $region25
  $region24: #{ssl_encoder_forward.8} parent=0 // pred_region
    _
  $region25: #{ssl_encoder_forward.8} parent=0 // pred_fallthru
    _
  // Predicated region
  $region26: #{ssl_encoder_forward.8} parent=0 // pred_check
    _
  $region27: #{ssl_encoder_forward.8} parent=0 // pred_check_branch
    %4235 = sbr.rel (0) target = $region29
  $region28: #{ssl_encoder_forward.8} parent=0 // pred_region
    _
  $region29: #{ssl_encoder_forward.8} parent=0 // pred_fallthru
    _

// kernel: ssl_encoder_forward.9
$region0: #{ssl_encoder_forward.9}
  #allocation0 [shape = 'u32[]', space=smem, size = 0x4, offset = 0x4, fixed_abs, tag = 'smem constant byte address 0x4 - core index']
  #allocation1 [shape = 'u32[144,128]{1,0:T(1,128)}', space=vmem, size = 0x12000, scoped, tag = 'internal scratch']
  %s0 = inlined_call_operand.vmem [shape: bf16[128,128], index: 0, kind: input, shape index: {}]
  %s1 = inlined_call_operand.vmem [shape: bf16[128,128], index: 1, kind: input, shape index: {}]
  %s2 = inlined_call_operand.vmem [shape: f32[1,128], index: 2, kind: input, shape index: {}]
  %s3 = inlined_call_operand.vmem [shape: f32[1,128], index: 3, kind: input, shape index: {}]
  %s4 = inlined_call_operand.vmem [shape: f32[128,128], index: 4, kind: output, shape index: {}]
  %s5 = sld [smem:[#allocation0]]
  $region26: #{ssl_encoder_forward.9} parent=0
    _
  %s7 = ssub.s32 1, %s5
  %s8 = scalar_select 0, %s7, %s5
  // Predicated region
  $region2: #{ssl_encoder_forward.9} parent=0 // pred_check
    _
  $region3: #{ssl_encoder_forward.9} parent=0 // pred_check_branch
    %10 = sbr.rel (0) target = $region5
  $region4: #{ssl_encoder_forward.9} parent=0 // pred_region
    _
  $region5: #{ssl_encoder_forward.9} parent=0 // pred_fallthru
    _
  // Predicated region
  $region6: #{ssl_encoder_forward.9} parent=0 // pred_check
    _
  $region7: #{ssl_encoder_forward.9} parent=0 // pred_check_branch
    %12 = sbr.rel (0) target = $region9
  $region8: #{ssl_encoder_forward.9} parent=0 // pred_region
    _
  $region9: #{ssl_encoder_forward.9} parent=0 // pred_fallthru
    _
  // Predicated region
  $region10: #{ssl_encoder_forward.9} parent=0 // pred_check
    _
  $region11: #{ssl_encoder_forward.9} parent=0 // pred_check_branch
    %14 = sbr.rel (0) target = $region13
  $region12: #{ssl_encoder_forward.9} parent=0 // pred_region
    _
  $region13: #{ssl_encoder_forward.9} parent=0 // pred_fallthru
    _
  // Predicated region
  $region14: #{ssl_encoder_forward.9} parent=0 // pred_check
    _
  $region15: #{ssl_encoder_forward.9} parent=0 // pred_check_branch
    %16 = sbr.rel (0) target = $region17
  $region16: #{ssl_encoder_forward.9} parent=0 // pred_region
    _
  $region17: #{ssl_encoder_forward.9} parent=0 // pred_fallthru
    _
  %v18 = vld [vmem:[%s0] sm:$0xf]
  %v19 = vld [vmem:[%s0 + $0x4] sm:$0xf]
  %v20 = vld [vmem:[%s0 + $0x8] sm:$0xf]
  %v21 = vld [vmem:[%s0 + $0xc] sm:$0xf]
  %v22 = vld [vmem:[%s0 + $0x10] sm:$0xf]
  %v23 = vld [vmem:[%s0 + $0x14] sm:$0xf]
  %v24 = vld [vmem:[%s0 + $0x18] sm:$0xf]
  %v25 = vld [vmem:[%s0 + $0x1c] sm:$0xf]
  %v26 = vld [vmem:[%s0 + $0x20] sm:$0xf]
  %v27 = vld [vmem:[%s0 + $0x24] sm:$0xf]
  %v28 = vld [vmem:[%s0 + $0x28] sm:$0xf]
  %v29 = vld [vmem:[%s0 + $0x2c] sm:$0xf]
  %v30 = vld [vmem:[%s0 + $0x30] sm:$0xf]
  %v31 = vld [vmem:[%s0 + $0x34] sm:$0xf]
  %v32 = vld [vmem:[%s0 + $0x38] sm:$0xf]
  %v33 = vld [vmem:[%s0 + $0x3c] sm:$0xf]
  %v34 = vld [vmem:[%s1] sm:$0xf]
  %v35 = vld [vmem:[%s1 + $0x4] sm:$0xf]
  %v36 = vld [vmem:[%s1 + $0x8] sm:$0xf]
  %v37 = vld [vmem:[%s1 + $0xc] sm:$0xf]
  %v38 = vld [vmem:[%s1 + $0x10] sm:$0xf]
  %v39 = vld [vmem:[%s1 + $0x14] sm:$0xf]
  %v40 = vld [vmem:[%s1 + $0x18] sm:$0xf]
  %v41 = vld [vmem:[%s1 + $0x1c] sm:$0xf]
  %v42 = vld [vmem:[%s1 + $0x20] sm:$0xf]
  %v43 = vld [vmem:[%s1 + $0x24] sm:$0xf]
  %v44 = vld [vmem:[%s1 + $0x28] sm:$0xf]
  %v45 = vld [vmem:[%s1 + $0x2c] sm:$0xf]
  %v46 = vld [vmem:[%s1 + $0x30] sm:$0xf]
  %v47 = vld [vmem:[%s1 + $0x34] sm:$0xf]
  %v48 = vld [vmem:[%s1 + $0x38] sm:$0xf]
  %v49 = vld [vmem:[%s1 + $0x3c] sm:$0xf]
  %v66 = vunpack.c.l.b16 %v18
  %v67 = vunpack.c.l.b16 %v19
  %v68 = vunpack.c.l.b16 %v20
  %v69 = vunpack.c.l.b16 %v21
  %v70 = vunpack.c.l.b16 %v22
  %v71 = vunpack.c.l.b16 %v23
  %v72 = vunpack.c.l.b16 %v24
  %v73 = vunpack.c.l.b16 %v25
  %v74 = vunpack.c.l.b16 %v26
  %v75 = vunpack.c.l.b16 %v27
  %v76 = vunpack.c.l.b16 %v28
  %v77 = vunpack.c.l.b16 %v29
  %v78 = vunpack.c.l.b16 %v30
  %v79 = vunpack.c.l.b16 %v31
  %v80 = vunpack.c.l.b16 %v32
  %v81 = vunpack.c.l.b16 %v33
  %v82 = vpack.c.b16 %v67, %v66
  %v83 = vpack.c.b16 %v69, %v68
  %v84 = vpack.c.b16 %v71, %v70
  %v85 = vpack.c.b16 %v73, %v72
  %v86 = vpack.c.b16 %v75, %v74
  %v87 = vpack.c.b16 %v77, %v76
  %v88 = vpack.c.b16 %v79, %v78
  %v89 = vpack.c.b16 %v81, %v80
  %v114 = vunpack.c.l.b16 %v34
  %v115 = vunpack.c.l.b16 %v35
  %v116 = vunpack.c.l.b16 %v36
  %v117 = vunpack.c.l.b16 %v37
  %v118 = vunpack.c.l.b16 %v38
  %v119 = vunpack.c.l.b16 %v39
  %v120 = vunpack.c.l.b16 %v40
  %v121 = vunpack.c.l.b16 %v41
  %v122 = vunpack.c.l.b16 %v42
  %v123 = vunpack.c.l.b16 %v43
  %v124 = vunpack.c.l.b16 %v44
  %v125 = vunpack.c.l.b16 %v45
  %v126 = vunpack.c.l.b16 %v46
  %v127 = vunpack.c.l.b16 %v47
  %v128 = vunpack.c.l.b16 %v48
  %v129 = vunpack.c.l.b16 %v49
  %v130 = vpack.c.b16 %v115, %v114
  %v131 = vpack.c.b16 %v117, %v116
  %v132 = vpack.c.b16 %v119, %v118
  %v133 = vpack.c.b16 %v121, %v120
  %v134 = vpack.c.b16 %v123, %v122
  %v135 = vpack.c.b16 %v125, %v124
  %v136 = vpack.c.b16 %v127, %v126
  %v137 = vpack.c.b16 %v129, %v128
  %146 = vmatprep.subr.bf16.mxu0 0
  %147 = vmatpush1.bf16.msra.mxu0 %v137
  %148 = vmatprep.subr.bf16.mxu0 0
  %149 = vmatpush1.bf16.msra.mxu0 %v136
  %150 = vmatprep.subr.bf16.mxu0 0
  %151 = vmatpush1.bf16.msra.mxu0 %v135
  %152 = vmatprep.subr.bf16.mxu0 0
  %153 = vmatpush1.bf16.msra.mxu0 %v134
  %154 = vmatprep.subr.bf16.mxu0 0
  %155 = vmatpush1.bf16.msra.mxu0 %v133
  %156 = vmatprep.subr.bf16.mxu0 0
  %157 = vmatpush1.bf16.msra.mxu0 %v132
  %158 = vmatprep.subr.bf16.mxu0 0
  %159 = vmatpush1.bf16.msra.mxu0 %v131
  %160 = vmatprep.subr.bf16.mxu0 0
  %161 = vmatpush1.bf16.msra.mxu0 %v130
  %162 = vmatprep.subr.bf16.mxu0 0
  %163 = vmatpush2.bf16.msra.mxu0 0
  %164 = vmatprep.subr.bf16.mxu0 0
  %165 = vmatpush2.bf16.msra.mxu0 0
  %166 = vmatprep.subr.bf16.mxu0 0
  %167 = vmatpush2.bf16.msra.mxu0 0
  %168 = vmatprep.subr.bf16.mxu0 0
  %169 = vmatpush2.bf16.msra.mxu0 0
  %170 = vmatprep.subr.bf16.mxu0 0
  %171 = vmatpush2.bf16.msra.mxu0 0
  %172 = vmatprep.subr.bf16.mxu0 0
  %173 = vmatpush2.bf16.msra.mxu0 0
  %174 = vmatprep.subr.bf16.mxu0 0
  %175 = vmatpush2.bf16.msra.mxu0 0
  %176 = vmatprep.subr.bf16.mxu0 0
  %177 = vmatpush2.bf16.msra.mxu0 0
  %178 = vmatprep.mubr.bf16.mxu0 0
  %179 = vmatmul.mubr.bf16.gmra.mxu0 %v82
  %v180 = vpop.f32.mrf.mxu0
  %v181 = vadd.f32 0.0, %v180
  %v182 = vpop.f32.mrf.mxu0
  %v183 = vpop.f32.mrf.mxu0
  %v184 = vadd.f32 0.0, %v183
  %v185 = vpop.f32.mrf.mxu0
  %186 = vmatprep.mubr.bf16.mxu0 0
  %187 = vmatmul.mubr.bf16.gmra.mxu0 %v83
  %v188 = vpop.f32.mrf.mxu0
  %v189 = vadd.f32 0.0, %v188
  %v190 = vpop.f32.mrf.mxu0
  %v191 = vpop.f32.mrf.mxu0
  %v192 = vadd.f32 0.0, %v191
  %v193 = vpop.f32.mrf.mxu0
  %194 = vmatprep.mubr.bf16.mxu0 0
  %195 = vmatmul.mubr.bf16.gmra.mxu0 %v84
  %v196 = vpop.f32.mrf.mxu0
  %v197 = vadd.f32 0.0, %v196
  %v198 = vpop.f32.mrf.mxu0
  %v199 = vpop.f32.mrf.mxu0
  %v200 = vadd.f32 0.0, %v199
  %v201 = vpop.f32.mrf.mxu0
  %202 = vmatprep.mubr.bf16.mxu0 0
  %203 = vmatmul.mubr.bf16.gmra.mxu0 %v85
  %v204 = vpop.f32.mrf.mxu0
  %v205 = vadd.f32 0.0, %v204
  %v206 = vpop.f32.mrf.mxu0
  %v207 = vpop.f32.mrf.mxu0
  %v208 = vadd.f32 0.0, %v207
  %v209 = vpop.f32.mrf.mxu0
  %210 = vmatprep.mubr.bf16.mxu0 0
  %211 = vmatmul.mubr.bf16.gmra.mxu0 %v86
  %v212 = vpop.f32.mrf.mxu0
  %v213 = vadd.f32 0.0, %v212
  %v214 = vpop.f32.mrf.mxu0
  %v215 = vpop.f32.mrf.mxu0
  %v216 = vadd.f32 0.0, %v215
  %v217 = vpop.f32.mrf.mxu0
  %218 = vmatprep.mubr.bf16.mxu0 0
  %219 = vmatmul.mubr.bf16.gmra.mxu0 %v87
  %v220 = vpop.f32.mrf.mxu0
  %v221 = vadd.f32 0.0, %v220
  %v222 = vpop.f32.mrf.mxu0
  %v223 = vpop.f32.mrf.mxu0
  %v224 = vadd.f32 0.0, %v223
  %v225 = vpop.f32.mrf.mxu0
  %226 = vmatprep.mubr.bf16.mxu0 0
  %227 = vmatmul.mubr.bf16.gmra.mxu0 %v88
  %v228 = vpop.f32.mrf.mxu0
  %v229 = vadd.f32 0.0, %v228
  %v230 = vpop.f32.mrf.mxu0
  %v231 = vpop.f32.mrf.mxu0
  %v232 = vadd.f32 0.0, %v231
  %v233 = vpop.f32.mrf.mxu0
  %234 = vmatprep.mubr.bf16.mxu0 0
  %235 = vmatmul.mubr.bf16.gmra.mxu0 %v89
  %v236 = vpop.f32.mrf.mxu0
  %v237 = vadd.f32 0.0, %v236
  %v238 = vpop.f32.mrf.mxu0
  %v239 = vpop.f32.mrf.mxu0
  %v240 = vadd.f32 0.0, %v239
  %v241 = vpop.f32.mrf.mxu0
  %242 = vdwg.mxu0
  %v243 = vld [vmem:[%s2] sm:$0x1]
  %v245 = vlaneseq
  %v246 = vshrl.u32 %v245, 7
  %v247 = vsub.s32 0, %v246
  %v248 = vrot.slane %v243, %v247
  %v250 = vmul.f32 %v181, %v248
  %v251 = vmul.f32 %v184, %v248
  %v252 = vmul.f32 %v189, %v248
  %v253 = vmul.f32 %v192, %v248
  %v254 = vmul.f32 %v197, %v248
  %v255 = vmul.f32 %v200, %v248
  %v256 = vmul.f32 %v205, %v248
  %v257 = vmul.f32 %v208, %v248
  %v258 = vmul.f32 %v213, %v248
  %v259 = vmul.f32 %v216, %v248
  %v260 = vmul.f32 %v221, %v248
  %v261 = vmul.f32 %v224, %v248
  %v262 = vmul.f32 %v229, %v248
  %v263 = vmul.f32 %v232, %v248
  %v264 = vmul.f32 %v237, %v248
  %v265 = vmul.f32 %v240, %v248
  %v266 = vld [vmem:[%s3] sm:$0x1]
  %v268 = vlaneseq
  %v269 = vshrl.u32 %v268, 7
  %v270 = vsub.s32 0, %v269
  %v271 = vrot.slane %v266, %v270
  %v273 = vadd.f32 %v250, %v271
  %v274 = vadd.f32 %v251, %v271
  %v275 = vadd.f32 %v252, %v271
  %v276 = vadd.f32 %v253, %v271
  %v277 = vadd.f32 %v254, %v271
  %v278 = vadd.f32 %v255, %v271
  %v279 = vadd.f32 %v256, %v271
  %v280 = vadd.f32 %v257, %v271
  %v281 = vadd.f32 %v258, %v271
  %v282 = vadd.f32 %v259, %v271
  %v283 = vadd.f32 %v260, %v271
  %v284 = vadd.f32 %v261, %v271
  %v285 = vadd.f32 %v262, %v271
  %v286 = vadd.f32 %v263, %v271
  %v287 = vadd.f32 %v264, %v271
  %v288 = vadd.f32 %v265, %v271
  %289 = vst [vmem:[%s4] sm:$0xff] %v273
  %290 = vst [vmem:[%s4 + $0x8] sm:$0xff] %v274
  %291 = vst [vmem:[%s4 + $0x10] sm:$0xff] %v275
  %292 = vst [vmem:[%s4 + $0x18] sm:$0xff] %v276
  %293 = vst [vmem:[%s4 + $0x20] sm:$0xff] %v277
  %294 = vst [vmem:[%s4 + $0x28] sm:$0xff] %v278
  %295 = vst [vmem:[%s4 + $0x30] sm:$0xff] %v279
  %296 = vst [vmem:[%s4 + $0x38] sm:$0xff] %v280
  %297 = vst [vmem:[%s4 + $0x40] sm:$0xff] %v281
  %298 = vst [vmem:[%s4 + $0x48] sm:$0xff] %v282
  %299 = vst [vmem:[%s4 + $0x50] sm:$0xff] %v283
  %300 = vst [vmem:[%s4 + $0x58] sm:$0xff] %v284
  %301 = vst [vmem:[%s4 + $0x60] sm:$0xff] %v285
  %302 = vst [vmem:[%s4 + $0x68] sm:$0xff] %v286
  %303 = vst [vmem:[%s4 + $0x70] sm:$0xff] %v287
  %304 = vst [vmem:[%s4 + $0x78] sm:$0xff] %v288
  // Predicated region
  $region18: #{ssl_encoder_forward.9} parent=0 // pred_check
    _
  $region19: #{ssl_encoder_forward.9} parent=0 // pred_check_branch
    %306 = sbr.rel (0) target = $region21
  $region20: #{ssl_encoder_forward.9} parent=0 // pred_region
    _
  $region21: #{ssl_encoder_forward.9} parent=0 // pred_fallthru
    _
  // Predicated region
  $region22: #{ssl_encoder_forward.9} parent=0 // pred_check
    _
  $region23: #{ssl_encoder_forward.9} parent=0 // pred_check_branch
    %308 = sbr.rel (0) target = $region25
  $region24: #{ssl_encoder_forward.9} parent=0 // pred_region
    _
  $region25: #{ssl_encoder_forward.9} parent=0 // pred_fallthru
    _

// kernel: ssl_encoder_forward.11
$region0: #{ssl_encoder_forward.11}
  #allocation0 [shape = 'u32[]', space=smem, size = 0x4, offset = 0x4, fixed_abs, tag = 'smem constant byte address 0x4 - core index']
  #allocation1 [shape = 'u32[144,128]{1,0:T(1,128)}', space=vmem, size = 0x12000, scoped, tag = 'internal scratch']
  %s0 = inlined_call_operand.vmem [shape: bf16[2,64,1152], index: 0, kind: input, shape index: {}]
  %s1 = inlined_call_operand.vmem [shape: bf16[1152,128], index: 1, kind: input, shape index: {}]
  %s2 = inlined_call_operand.vmem [shape: f32[1,128], index: 2, kind: input, shape index: {}]
  %s3 = inlined_call_operand.vmem [shape: f32[1,128], index: 3, kind: input, shape index: {}]
  %s4 = inlined_call_operand.vmem [shape: f32[2,64,128], index: 4, kind: input, shape index: {}]
  %s5 = inlined_call_operand.vmem [shape: f32[2,8,128], index: 5, kind: output, shape index: {}]
  %s6 = sld [smem:[#allocation0]]
  $region61: #{ssl_encoder_forward.11} parent=0
    _
  %s8 = ssub.s32 1, %s6
  %s9 = scalar_select 0, %s8, %s6
  loop: start=0, step=1, limit=4
  $region2: #{ssl_encoder_forward.11} parent=0 // loop_pre_header
    _
  $region3: #{ssl_encoder_forward.11} parent=0 // loop_header
    %s11 = sphi 0, %s15
    %p12 = scmp.ge.s32.totalorder %s11, 4
    %s18 = sphi 0, %s30
    %s19 = sphi 0, %s26
    %s20 = sphi 0, %s18
    %s21 = sphi 0, %s19
    %s22 = sphi 0, %s20
    %s23 = sphi 0, %s21
    %s35 = sphi 0, %s37
    %s38 = sphi 0, %s35
    %s39 = sphi 0, %s38
    %s55 = sphi 0, %s39
    %s59 = sphi 0, %s59
    %s61 = sphi 0, %s59
    %s62 = sphi 0, %s61
    %s76 = sphi 0, %s62
    %s80 = sphi 0, %s80
    %s82 = sphi 0, %s80
    %s83 = sphi 0, %s82
    %s97 = sphi 0, %s83
    %s101 = sphi 0, %s101
    %s103 = sphi 0, %s101
    %s104 = sphi 0, %s103
    %s118 = sphi 0, %s104
    %s126 = sphi 0, %s128
    %s129 = sphi 0, %s126
    %s130 = sphi 0, %s129
    %s146 = sphi 0, %s130
    %s152 = sphi 0, %s154
    %s155 = sphi 0, %s152
    %s156 = sphi 0, %s155
    %s172 = sphi 0, %s156
  $region4: #{ssl_encoder_forward.11} parent=0 // loop_header_branch
    %14 = sbr.rel (%p12) target = $region8
  $region5: #{ssl_encoder_forward.11} parent=0 // loop_body
    %s16 = ssub.s32 %s11, 1
    %s17 = ssub.s32 %s11, 2
    %s24 = sadd.s32 1, %s19
    %p25 = scmp.ge.s32.totalorder %s24, 1
    %s26 = scalar_select %p25, 0, %s24
    %s27 = sadd.s32 1, %s18
    %s28 = scalar_select %p25, %s27, %s18
    %p29 = scmp.ge.s32.totalorder %s28, 2
    %s30 = scalar_select %p29, 0, %s28
    %s31 = ssub.s32 %s18, %s30
    %s32 = ssub.s32 %s19, %s26
    %s33 = sor.u32 %s31, %s32
    %p34 = scmp.eq.s32.totalorder %s33, 0
    %s36 = sadd.s32 %s35, 1
    %s37 = scalar_select %p34, %s35, %s36
    %p40 = pneg %p34
    %p41 = scmp.eq.s32.totalorder %s11, 1
    %p42 = por %p40, %p41
    %p43 = scmp.ne.s32.totalorder %s35, %s38
    %p44 = scmp.eq.s32.totalorder %s11, 0
    %p45 = por %p43, %p44
    %p46 = scmp.ne.s32.totalorder %s35, %s38
    %p47 = scmp.eq.s32.totalorder %s16, 1
    %p48 = por %p46, %p47
    %p49 = scmp.ne.s32.totalorder %s38, %s39
    %p50 = scmp.eq.s32.totalorder %s16, 0
    %p51 = por %p49, %p50
    %p52 = scmp.ne.s32.totalorder %s38, %s39
    %p53 = scmp.eq.s32.totalorder %s17, 1
    %p54 = por %p52, %p53
    %p56 = scmp.ne.s32.totalorder %s39, %s55
    %p57 = scmp.eq.s32.totalorder %s17, 0
    %p58 = por %p56, %p57
    %s60 = sadd.s32 %s59, 1
    %p63 = scmp.eq.s32.totalorder %s11, 1
    %p64 = scmp.ne.s32.totalorder %s59, %s61
    %p65 = scmp.eq.s32.totalorder %s11, 0
    %p66 = por %p64, %p65
    %p67 = scmp.ne.s32.totalorder %s59, %s61
    %p68 = scmp.eq.s32.totalorder %s16, 1
    %p69 = por %p67, %p68
    %p70 = scmp.ne.s32.totalorder %s61, %s62
    %p71 = scmp.eq.s32.totalorder %s16, 0
    %p72 = por %p70, %p71
    %p73 = scmp.ne.s32.totalorder %s61, %s62
    %p74 = scmp.eq.s32.totalorder %s17, 1
    %p75 = por %p73, %p74
    %p77 = scmp.ne.s32.totalorder %s62, %s76
    %p78 = scmp.eq.s32.totalorder %s17, 0
    %p79 = por %p77, %p78
    %s81 = sadd.s32 %s80, 1
    %p84 = scmp.eq.s32.totalorder %s11, 1
    %p85 = scmp.ne.s32.totalorder %s80, %s82
    %p86 = scmp.eq.s32.totalorder %s11, 0
    %p87 = por %p85, %p86
    %p88 = scmp.ne.s32.totalorder %s80, %s82
    %p89 = scmp.eq.s32.totalorder %s16, 1
    %p90 = por %p88, %p89
    %p91 = scmp.ne.s32.totalorder %s82, %s83
    %p92 = scmp.eq.s32.totalorder %s16, 0
    %p93 = por %p91, %p92
    %p94 = scmp.ne.s32.totalorder %s82, %s83
    %p95 = scmp.eq.s32.totalorder %s17, 1
    %p96 = por %p94, %p95
    %p98 = scmp.ne.s32.totalorder %s83, %s97
    %p99 = scmp.eq.s32.totalorder %s17, 0
    %p100 = por %p98, %p99
    %s102 = sadd.s32 %s101, 1
    %p105 = scmp.eq.s32.totalorder %s11, 1
    %p106 = scmp.ne.s32.totalorder %s101, %s103
    %p107 = scmp.eq.s32.totalorder %s11, 0
    %p108 = por %p106, %p107
    %p109 = scmp.ne.s32.totalorder %s101, %s103
    %p110 = scmp.eq.s32.totalorder %s16, 1
    %p111 = por %p109, %p110
    %p112 = scmp.ne.s32.totalorder %s103, %s104
    %p113 = scmp.eq.s32.totalorder %s16, 0
    %p114 = por %p112, %p113
    %p115 = scmp.ne.s32.totalorder %s103, %s104
    %p116 = scmp.eq.s32.totalorder %s17, 1
    %p117 = por %p115, %p116
    %p119 = scmp.ne.s32.totalorder %s104, %s118
    %p120 = scmp.eq.s32.totalorder %s17, 0
    %p121 = por %p119, %p120
    %s122 = ssub.s32 %s18, %s30
    %s123 = ssub.s32 %s19, %s26
    %s124 = sor.u32 %s122, %s123
    %p125 = scmp.eq.s32.totalorder %s124, 0
    %s127 = sadd.s32 %s126, 1
    %s128 = scalar_select %p125, %s126, %s127
    %p131 = pneg %p125
    %p132 = scmp.eq.s32.totalorder %s11, 1
    %p133 = por %p131, %p132
    %p134 = scmp.ne.s32.totalorder %s126, %s129
    %p135 = scmp.eq.s32.totalorder %s11, 0
    %p136 = por %p134, %p135
    %p137 = scmp.ne.s32.totalorder %s126, %s129
    %p138 = scmp.eq.s32.totalorder %s16, 1
    %p139 = por %p137, %p138
    %p140 = scmp.ne.s32.totalorder %s129, %s130
    %p141 = scmp.eq.s32.totalorder %s16, 0
    %p142 = por %p140, %p141
    %p143 = scmp.ne.s32.totalorder %s129, %s130
    %p144 = scmp.eq.s32.totalorder %s17, 1
    %p145 = por %p143, %p144
    %p147 = scmp.ne.s32.totalorder %s130, %s146
    %p148 = scmp.eq.s32.totalorder %s17, 0
    %p149 = por %p147, %p148
    %s150 = ssub.s32 %s18, %s30
    %p151 = scmp.eq.s32.totalorder %s150, 0
    %s153 = sadd.s32 %s152, 1
    %s154 = scalar_select %p151, %s152, %s153
    %p157 = pneg %p151
    %p158 = scmp.eq.s32.totalorder %s11, 1
    %p159 = por %p157, %p158
    %p160 = scmp.ne.s32.totalorder %s152, %s155
    %p161 = scmp.eq.s32.totalorder %s11, 0
    %p162 = por %p160, %p161
    %p163 = scmp.ne.s32.totalorder %s152, %s155
    %p164 = scmp.eq.s32.totalorder %s16, 1
    %p165 = por %p163, %p164
    %p166 = scmp.ne.s32.totalorder %s155, %s156
    %p167 = scmp.eq.s32.totalorder %s16, 0
    %p168 = por %p166, %p167
    %p169 = scmp.ne.s32.totalorder %s155, %s156
    %p170 = scmp.eq.s32.totalorder %s17, 1
    %p171 = por %p169, %p170
    %p173 = scmp.ne.s32.totalorder %s156, %s172
    %p174 = scmp.eq.s32.totalorder %s17, 0
    %p175 = por %p173, %p174
    %p176 = scmp.le.s32.totalorder 1, %s11
    %p177 = scmp.lt.s32.totalorder %s11, 3
    %p178 = pnand %p176, %p177
    %p179 = pneg %p178
    // Predicated region
    $region9: #{ssl_encoder_forward.11} parent=5 // pred_check
      _
    $region10: #{ssl_encoder_forward.11} parent=5 // pred_check_branch
      %181 = sbr.rel (%p178) target = $region12
    $region11: #{ssl_encoder_forward.11} parent=5 // pred_region
      %s182 = ssub.s32 %s11, 1
      // Predicated region
      $region13: #{ssl_encoder_forward.11} parent=11 // pred_check
        %p183 = pneg %p72
      $region14: #{ssl_encoder_forward.11} parent=11 // pred_check_branch
        %185 = sbr.rel (%p183) target = $region16
      $region15: #{ssl_encoder_forward.11} parent=11 // pred_region
        _
      $region16: #{ssl_encoder_forward.11} parent=11 // pred_fallthru
        _
      // Predicated region
      $region17: #{ssl_encoder_forward.11} parent=11 // pred_check
        %p186 = pneg %p93
      $region18: #{ssl_encoder_forward.11} parent=11 // pred_check_branch
        %188 = sbr.rel (%p186) target = $region20
      $region19: #{ssl_encoder_forward.11} parent=11 // pred_region
        _
      $region20: #{ssl_encoder_forward.11} parent=11 // pred_fallthru
        _
      // Predicated region
      $region21: #{ssl_encoder_forward.11} parent=11 // pred_check
        %p189 = pneg %p114
      $region22: #{ssl_encoder_forward.11} parent=11 // pred_check_branch
        %191 = sbr.rel (%p189) target = $region24
      $region23: #{ssl_encoder_forward.11} parent=11 // pred_region
        _
      $region24: #{ssl_encoder_forward.11} parent=11 // pred_fallthru
        _
    $region12: #{ssl_encoder_forward.11} parent=5 // pred_fallthru
      _
    %p192 = scmp.lt.s32.totalorder %s11, 2
    // Predicated region
    $region25: #{ssl_encoder_forward.11} parent=5 // pred_check
      %p193 = pneg %p192
    $region26: #{ssl_encoder_forward.11} parent=5 // pred_check_branch
      %195 = sbr.rel (%p193) target = $region28
    $region27: #{ssl_encoder_forward.11} parent=5 // pred_region
      // Predicated region
      $region29: #{ssl_encoder_forward.11} parent=27 // pred_check
        %p196 = pneg %p45
      $region30: #{ssl_encoder_forward.11} parent=27 // pred_check_branch
        %198 = sbr.rel (%p196) target = $region32
      $region31: #{ssl_encoder_forward.11} parent=27 // pred_region
        %s199 = smul.u32 8, %s19
        %p200 = scmp.lt.s32.totalorder %s18, 1
        %s201 = scalar_select %p200, %s18, 1
        %p202 = scmp.lt.s32.totalorder %s199, 7
        %s203 = scalar_select %p202, %s199, 7
        %s204 = smul.addr %s203, 9
        %s205 = smul.addr %s201, 72
        %s206 = sadd.s32 %s204, %s205
        %s207 = smul.addr %s206, 4
        %s208 = scalar_lea.vmem %s0, %s207
        %s209 = smul.u32 8, %s19
      $region32: #{ssl_encoder_forward.11} parent=27 // pred_fallthru
        _
      // Predicated region
      $region33: #{ssl_encoder_forward.11} parent=27 // pred_check
        %p210 = pneg %p136
      $region34: #{ssl_encoder_forward.11} parent=27 // pred_check_branch
        %212 = sbr.rel (%p210) target = $region36
      $region35: #{ssl_encoder_forward.11} parent=27 // pred_region
        %s213 = smul.u32 8, %s19
        %p214 = scmp.lt.s32.totalorder %s18, 1
        %s215 = scalar_select %p214, %s18, 1
        %p216 = scmp.lt.s32.totalorder %s213, 7
        %s217 = scalar_select %p216, %s213, 7
        %s218 = smul.addr %s215, 8
        %s219 = sadd.s32 %s217, %s218
        %s220 = smul.addr %s219, 8
        %s221 = scalar_lea.vmem %s4, %s220
        %s222 = smul.u32 8, %s19
      $region36: #{ssl_encoder_forward.11} parent=27 // pred_fallthru
        _
    $region28: #{ssl_encoder_forward.11} parent=5 // pred_fallthru
      _
    %p223 = scmp.le.s32.totalorder 1, %s11
    %p224 = scmp.lt.s32.totalorder %s11, 3
    %p225 = pnand %p223, %p224
    %p226 = pneg %p225
    // Predicated region
    $region37: #{ssl_encoder_forward.11} parent=5 // pred_check
      _
    $region38: #{ssl_encoder_forward.11} parent=5 // pred_check_branch
      %228 = sbr.rel (%p225) target = $region40
    $region39: #{ssl_encoder_forward.11} parent=5 // pred_region
      %s229 = ssub.s32 %s11, 1
      %s230 = smul.u32 8, %s21
      %p231 = scmp.lt.s32.totalorder %s20, 1
      %s232 = scalar_select %p231, %s20, 1
      %p233 = scmp.lt.s32.totalorder %s230, 7
      %s234 = scalar_select %p233, %s230, 7
      %s235 = smul.addr %s234, 9
      %s236 = smul.addr %s232, 72
      %s237 = sadd.s32 %s235, %s236
      %s238 = smul.addr %s237, 4
      %s239 = scalar_lea.vmem %s0, %s238
      %p240 = pneg %p51
      %p241 = pneg %p48
      %p242 = pneg %p72
      %p243 = pneg %p69
      %p244 = pneg %p93
      %p245 = pneg %p90
      %p246 = pneg %p114
      %p247 = pneg %p111
      %s248 = smul.u32 8, %s21
      %p249 = scmp.lt.s32.totalorder %s20, 1
      %s250 = scalar_select %p249, %s20, 1
      %p251 = scmp.lt.s32.totalorder %s248, 7
      %s252 = scalar_select %p251, %s248, 7
      %s253 = smul.addr %s250, 8
      %s254 = sadd.s32 %s252, %s253
      %s255 = smul.addr %s254, 8
      %s256 = scalar_lea.vmem %s4, %s255
      %p257 = pneg %p142
      %p258 = pneg %p139
      %p259 = pneg %p168
      %p260 = pneg %p165
      %p261 = scmp.lt.s32.totalorder %s20, 1
      %s262 = scalar_select %p261, %s20, 1
      %s263 = smul.addr %s262, 8
      %s264 = scalar_lea.vmem %s5, %s263
      %s265 = smul.u32 8, %s21
      %p266 = scmp.lt.s32.totalorder %s20, 1
      %s267 = scalar_select %p266, %s20, 1
      %p268 = scmp.lt.s32.totalorder %s265, 7
      %s269 = scalar_select %p268, %s265, 7
      %s270 = smul.addr %s269, 9
      %s271 = smul.addr %s267, 72
      %s272 = sadd.s32 %s270, %s271
      %s273 = smul.addr %s272, 4
      %s274 = scalar_lea.vmem %s0, %s273
      %s275 = smul.u32 8, %s21
      %s276 = smul.u32 8, %s21
      %p277 = scmp.lt.s32.totalorder %s20, 1
      %s278 = scalar_select %p277, %s20, 1
      %p279 = scmp.lt.s32.totalorder %s276, 7
      %s280 = scalar_select %p279, %s276, 7
      %s281 = smul.addr %s278, 8
      %s282 = sadd.s32 %s280, %s281
      %s283 = smul.addr %s282, 8
      %s284 = scalar_lea.vmem %s4, %s283
      %s285 = smul.u32 8, %s21
      %p286 = scmp.lt.s32.totalorder %s20, 1
      %s287 = scalar_select %p286, %s20, 1
      %s288 = smul.addr %s287, 8
      %s289 = scalar_lea.vmem %s5, %s288
      %p291 = scmp.eq.s32.totalorder %s21, 0
      // Predicated region
      $region41: #{ssl_encoder_forward.11} parent=39 // pred_check
        %p292 = pneg %p291
      $region42: #{ssl_encoder_forward.11} parent=39 // pred_check_branch
        %294 = sbr.rel (%p292) target = $region44
      $region43: #{ssl_encoder_forward.11} parent=39 // pred_region
        %295 = vst [vmem:[%s289] sm:$0xff] 0.0
      $region44: #{ssl_encoder_forward.11} parent=39 // pred_fallthru
        _
      %v296 = vld [vmem:[%s274] sm:$0xff]
      %v297 = vld [vmem:[%s274 + $0x8] sm:$0xff]
      %v298 = vld [vmem:[%s274 + $0x10] sm:$0xff]
      %v299 = vld [vmem:[%s274 + $0x18] sm:$0xff]
      %v300 = vld [vmem:[%s274 + $0x20] sm:$0xf]
      %v301 = vld [vmem:[%s274 + $0x24] sm:$0xff]
      %v302 = vld [vmem:[%s274 + $0x2c] sm:$0xff]
      %v303 = vld [vmem:[%s274 + $0x34] sm:$0xff]
      %v304 = vld [vmem:[%s274 + $0x3c] sm:$0xff]
      %v305 = vld [vmem:[%s274 + $0x44] sm:$0xf]
      %v306 = vld [vmem:[%s274 + $0x48] sm:$0xff]
      %v307 = vld [vmem:[%s274 + $0x50] sm:$0xff]
      %v308 = vld [vmem:[%s274 + $0x58] sm:$0xff]
      %v309 = vld [vmem:[%s274 + $0x60] sm:$0xff]
      %v310 = vld [vmem:[%s274 + $0x68] sm:$0xf]
      %v311 = vld [vmem:[%s274 + $0x6c] sm:$0xff]
      %v312 = vld [vmem:[%s274 + $0x74] sm:$0xff]
      %v313 = vld [vmem:[%s274 + $0x7c] sm:$0xff]
      %v314 = vld [vmem:[%s274 + $0x84] sm:$0xff]
      %v315 = vld [vmem:[%s274 + $0x8c] sm:$0xf]
      %v316 = vld [vmem:[%s274 + $0x90] sm:$0xff]
      %v317 = vld [vmem:[%s274 + $0x98] sm:$0xff]
      %v318 = vld [vmem:[%s274 + $0xa0] sm:$0xff]
      %v319 = vld [vmem:[%s274 + $0xa8] sm:$0xff]
      %v320 = vld [vmem:[%s274 + $0xb0] sm:$0xf]
      %v321 = vld [vmem:[%s274 + $0xb4] sm:$0xff]
      %v322 = vld [vmem:[%s274 + $0xbc] sm:$0xff]
      %v323 = vld [vmem:[%s274 + $0xc4] sm:$0xff]
      %v324 = vld [vmem:[%s274 + $0xcc] sm:$0xff]
      %v325 = vld [vmem:[%s274 + $0xd4] sm:$0xf]
      %v326 = vld [vmem:[%s274 + $0xd8] sm:$0xff]
      %v327 = vld [vmem:[%s274 + $0xe0] sm:$0xff]
      %v328 = vld [vmem:[%s274 + $0xe8] sm:$0xff]
      %v329 = vld [vmem:[%s274 + $0xf0] sm:$0xff]
      %v330 = vld [vmem:[%s274 + $0xf8] sm:$0xf]
      %v331 = vld [vmem:[%s274 + $0xfc] sm:$0xff]
      %v332 = vld [vmem:[%s274 + $0x104] sm:$0xff]
      %v333 = vld [vmem:[%s274 + $0x10c] sm:$0xff]
      %v334 = vld [vmem:[%s274 + $0x114] sm:$0xff]
      %v335 = vld [vmem:[%s274 + $0x11c] sm:$0xf]
      %v336 = vld [vmem:[%s1] sm:$0xf]
      %v337 = vld [vmem:[%s1 + $0x4] sm:$0xf]
      %v338 = vld [vmem:[%s1 + $0x8] sm:$0xf]
      %v339 = vld [vmem:[%s1 + $0xc] sm:$0xf]
      %v340 = vld [vmem:[%s1 + $0x10] sm:$0xf]
      %v341 = vld [vmem:[%s1 + $0x14] sm:$0xf]
      %v342 = vld [vmem:[%s1 + $0x18] sm:$0xf]
      %v343 = vld [vmem:[%s1 + $0x1c] sm:$0xf]
      %v344 = vld [vmem:[%s1 + $0x20] sm:$0xf]
      %v345 = vld [vmem:[%s1 + $0x24] sm:$0xf]
      %v346 = vld [vmem:[%s1 + $0x28] sm:$0xf]
      %v347 = vld [vmem:[%s1 + $0x2c] sm:$0xf]
      %v348 = vld [vmem:[%s1 + $0x30] sm:$0xf]
      %v349 = vld [vmem:[%s1 + $0x34] sm:$0xf]
      %v350 = vld [vmem:[%s1 + $0x38] sm:$0xf]
      %v351 = vld [vmem:[%s1 + $0x3c] sm:$0xf]
      %v352 = vld [vmem:[%s1 + $0x40] sm:$0xf]
      %v353 = vld [vmem:[%s1 + $0x44] sm:$0xf]
      %v354 = vld [vmem:[%s1 + $0x48] sm:$0xf]
      %v355 = vld [vmem:[%s1 + $0x4c] sm:$0xf]
      %v356 = vld [vmem:[%s1 + $0x50] sm:$0xf]
      %v357 = vld [vmem:[%s1 + $0x54] sm:$0xf]
      %v358 = vld [vmem:[%s1 + $0x58] sm:$0xf]
      %v359 = vld [vmem:[%s1 + $0x5c] sm:$0xf]
      %v360 = vld [vmem:[%s1 + $0x60] sm:$0xf]
      %v361 = vld [vmem:[%s1 + $0x64] sm:$0xf]
      %v362 = vld [vmem:[%s1 + $0x68] sm:$0xf]
      %v363 = vld [vmem:[%s1 + $0x6c] sm:$0xf]
      %v364 = vld [vmem:[%s1 + $0x70] sm:$0xf]
      %v365 = vld [vmem:[%s1 + $0x74] sm:$0xf]
      %v366 = vld [vmem:[%s1 + $0x78] sm:$0xf]
      %v367 = vld [vmem:[%s1 + $0x7c] sm:$0xf]
      %v368 = vld [vmem:[%s1 + $0x80] sm:$0xf]
      %v369 = vld [vmem:[%s1 + $0x84] sm:$0xf]
      %v370 = vld [vmem:[%s1 + $0x88] sm:$0xf]
      %v371 = vld [vmem:[%s1 + $0x8c] sm:$0xf]
      %v372 = vld [vmem:[%s1 + $0x90] sm:$0xf]
      %v373 = vld [vmem:[%s1 + $0x94] sm:$0xf]
      %v374 = vld [vmem:[%s1 + $0x98] sm:$0xf]
      %v375 = vld [vmem:[%s1 + $0x9c] sm:$0xf]
      %v376 = vld [vmem:[%s1 + $0xa0] sm:$0xf]
      %v377 = vld [vmem:[%s1 + $0xa4] sm:$0xf]
      %v378 = vld [vmem:[%s1 + $0xa8] sm:$0xf]
      %v379 = vld [vmem:[%s1 + $0xac] sm:$0xf]
      %v380 = vld [vmem:[%s1 + $0xb0] sm:$0xf]
      %v381 = vld [vmem:[%s1 + $0xb4] sm:$0xf]
      %v382 = vld [vmem:[%s1 + $0xb8] sm:$0xf]
      %v383 = vld [vmem:[%s1 + $0xbc] sm:$0xf]
      %v384 = vld [vmem:[%s1 + $0xc0] sm:$0xf]
      %v385 = vld [vmem:[%s1 + $0xc4] sm:$0xf]
      %v386 = vld [vmem:[%s1 + $0xc8] sm:$0xf]
      %v387 = vld [vmem:[%s1 + $0xcc] sm:$0xf]
      %v388 = vld [vmem:[%s1 + $0xd0] sm:$0xf]
      %v389 = vld [vmem:[%s1 + $0xd4] sm:$0xf]
      %v390 = vld [vmem:[%s1 + $0xd8] sm:$0xf]
      %v391 = vld [vmem:[%s1 + $0xdc] sm:$0xf]
      %v392 = vld [vmem:[%s1 + $0xe0] sm:$0xf]
      %v393 = vld [vmem:[%s1 + $0xe4] sm:$0xf]
      %v394 = vld [vmem:[%s1 + $0xe8] sm:$0xf]
      %v395 = vld [vmem:[%s1 + $0xec] sm:$0xf]
      %v396 = vld [vmem:[%s1 + $0xf0] sm:$0xf]
      %v397 = vld [vmem:[%s1 + $0xf4] sm:$0xf]
      %v398 = vld [vmem:[%s1 + $0xf8] sm:$0xf]
      %v399 = vld [vmem:[%s1 + $0xfc] sm:$0xf]
      %v400 = vld [vmem:[%s1 + $0x100] sm:$0xf]
      %v401 = vld [vmem:[%s1 + $0x104] sm:$0xf]
      %v402 = vld [vmem:[%s1 + $0x108] sm:$0xf]
      %v403 = vld [vmem:[%s1 + $0x10c] sm:$0xf]
      %v404 = vld [vmem:[%s1 + $0x110] sm:$0xf]
      %v405 = vld [vmem:[%s1 + $0x114] sm:$0xf]
      %v406 = vld [vmem:[%s1 + $0x118] sm:$0xf]
      %v407 = vld [vmem:[%s1 + $0x11c] sm:$0xf]
      %v408 = vld [vmem:[%s1 + $0x120] sm:$0xf]
      %v409 = vld [vmem:[%s1 + $0x124] sm:$0xf]
      %v410 = vld [vmem:[%s1 + $0x128] sm:$0xf]
      %v411 = vld [vmem:[%s1 + $0x12c] sm:$0xf]
      %v412 = vld [vmem:[%s1 + $0x130] sm:$0xf]
      %v413 = vld [vmem:[%s1 + $0x134] sm:$0xf]
      %v414 = vld [vmem:[%s1 + $0x138] sm:$0xf]
      %v415 = vld [vmem:[%s1 + $0x13c] sm:$0xf]
      %v416 = vld [vmem:[%s1 + $0x140] sm:$0xf]
      %v417 = vld [vmem:[%s1 + $0x144] sm:$0xf]
      %v418 = vld [vmem:[%s1 + $0x148] sm:$0xf]
      %v419 = vld [vmem:[%s1 + $0x14c] sm:$0xf]
      %v420 = vld [vmem:[%s1 + $0x150] sm:$0xf]
      %v421 = vld [vmem:[%s1 + $0x154] sm:$0xf]
      %v422 = vld [vmem:[%s1 + $0x158] sm:$0xf]
      %v423 = vld [vmem:[%s1 + $0x15c] sm:$0xf]
      %v424 = vld [vmem:[%s1 + $0x160] sm:$0xf]
      %v425 = vld [vmem:[%s1 + $0x164] sm:$0xf]
      %v426 = vld [vmem:[%s1 + $0x168] sm:$0xf]
      %v427 = vld [vmem:[%s1 + $0x16c] sm:$0xf]
      %v428 = vld [vmem:[%s1 + $0x170] sm:$0xf]
      %v429 = vld [vmem:[%s1 + $0x174] sm:$0xf]
      %v430 = vld [vmem:[%s1 + $0x178] sm:$0xf]
      %v431 = vld [vmem:[%s1 + $0x17c] sm:$0xf]
      %v432 = vld [vmem:[%s1 + $0x180] sm:$0xf]
      %v433 = vld [vmem:[%s1 + $0x184] sm:$0xf]
      %v434 = vld [vmem:[%s1 + $0x188] sm:$0xf]
      %v435 = vld [vmem:[%s1 + $0x18c] sm:$0xf]
      %v436 = vld [vmem:[%s1 + $0x190] sm:$0xf]
      %v437 = vld [vmem:[%s1 + $0x194] sm:$0xf]
      %v438 = vld [vmem:[%s1 + $0x198] sm:$0xf]
      %v439 = vld [vmem:[%s1 + $0x19c] sm:$0xf]
      %v440 = vld [vmem:[%s1 + $0x1a0] sm:$0xf]
      %v441 = vld [vmem:[%s1 + $0x1a4] sm:$0xf]
      %v442 = vld [vmem:[%s1 + $0x1a8] sm:$0xf]
      %v443 = vld [vmem:[%s1 + $0x1ac] sm:$0xf]
      %v444 = vld [vmem:[%s1 + $0x1b0] sm:$0xf]
      %v445 = vld [vmem:[%s1 + $0x1b4] sm:$0xf]
      %v446 = vld [vmem:[%s1 + $0x1b8] sm:$0xf]
      %v447 = vld [vmem:[%s1 + $0x1bc] sm:$0xf]
      %v448 = vld [vmem:[%s1 + $0x1c0] sm:$0xf]
      %v449 = vld [vmem:[%s1 + $0x1c4] sm:$0xf]
      %v450 = vld [vmem:[%s1 + $0x1c8] sm:$0xf]
      %v451 = vld [vmem:[%s1 + $0x1cc] sm:$0xf]
      %v452 = vld [vmem:[%s1 + $0x1d0] sm:$0xf]
      %v453 = vld [vmem:[%s1 + $0x1d4] sm:$0xf]
      %v454 = vld [vmem:[%s1 + $0x1d8] sm:$0xf]
      %v455 = vld [vmem:[%s1 + $0x1dc] sm:$0xf]
      %v456 = vld [vmem:[%s1 + $0x1e0] sm:$0xf]
      %v457 = vld [vmem:[%s1 + $0x1e4] sm:$0xf]
      %v458 = vld [vmem:[%s1 + $0x1e8] sm:$0xf]
      %v459 = vld [vmem:[%s1 + $0x1ec] sm:$0xf]
      %v460 = vld [vmem:[%s1 + $0x1f0] sm:$0xf]
      %v461 = vld [vmem:[%s1 + $0x1f4] sm:$0xf]
      %v462 = vld [vmem:[%s1 + $0x1f8] sm:$0xf]
      %v463 = vld [vmem:[%s1 + $0x1fc] sm:$0xf]
      %v464 = vld [vmem:[%s1 + $0x200] sm:$0xf]
      %v465 = vld [vmem:[%s1 + $0x204] sm:$0xf]
      %v466 = vld [vmem:[%s1 + $0x208] sm:$0xf]
      %v467 = vld [vmem:[%s1 + $0x20c] sm:$0xf]
      %v468 = vld [vmem:[%s1 + $0x210] sm:$0xf]
      %v469 = vld [vmem:[%s1 + $0x214] sm:$0xf]
      %v470 = vld [vmem:[%s1 + $0x218] sm:$0xf]
      %v471 = vld [vmem:[%s1 + $0x21c] sm:$0xf]
      %v472 = vld [vmem:[%s1 + $0x220] sm:$0xf]
      %v473 = vld [vmem:[%s1 + $0x224] sm:$0xf]
      %v474 = vld [vmem:[%s1 + $0x228] sm:$0xf]
      %v475 = vld [vmem:[%s1 + $0x22c] sm:$0xf]
      %v476 = vld [vmem:[%s1 + $0x230] sm:$0xf]
      %v477 = vld [vmem:[%s1 + $0x234] sm:$0xf]
      %v478 = vld [vmem:[%s1 + $0x238] sm:$0xf]
      %v479 = vld [vmem:[%s1 + $0x23c] sm:$0xf]
      %v520 = vunpack.c.l.b16 %v296
      %v521 = vunpack.c.h.b16 %v296
      %v522 = vunpack.c.l.b16 %v297
      %v523 = vunpack.c.h.b16 %v297
      %v524 = vunpack.c.l.b16 %v298
      %v525 = vunpack.c.h.b16 %v298
      %v526 = vunpack.c.l.b16 %v299
      %v527 = vunpack.c.h.b16 %v299
      %v528 = vunpack.c.l.b16 %v300
      %v529 = vunpack.c.l.b16 %v301
      %v530 = vunpack.c.h.b16 %v301
      %v531 = vunpack.c.l.b16 %v302
      %v532 = vunpack.c.h.b16 %v302
      %v533 = vunpack.c.l.b16 %v303
      %v534 = vunpack.c.h.b16 %v303
      %v535 = vunpack.c.l.b16 %v304
      %v536 = vunpack.c.h.b16 %v304
      %v537 = vunpack.c.l.b16 %v305
      %v538 = vunpack.c.l.b16 %v306
      %v539 = vunpack.c.h.b16 %v306
      %v540 = vunpack.c.l.b16 %v307
      %v541 = vunpack.c.h.b16 %v307
      %v542 = vunpack.c.l.b16 %v308
      %v543 = vunpack.c.h.b16 %v308
      %v544 = vunpack.c.l.b16 %v309
      %v545 = vunpack.c.h.b16 %v309
      %v546 = vunpack.c.l.b16 %v310
      %v547 = vunpack.c.l.b16 %v311
      %v548 = vunpack.c.h.b16 %v311
      %v549 = vunpack.c.l.b16 %v312
      %v550 = vunpack.c.h.b16 %v312
      %v551 = vunpack.c.l.b16 %v313
      %v552 = vunpack.c.h.b16 %v313
      %v553 = vunpack.c.l.b16 %v314
      %v554 = vunpack.c.h.b16 %v314
      %v555 = vunpack.c.l.b16 %v315
      %v556 = vunpack.c.l.b16 %v316
      %v557 = vunpack.c.h.b16 %v316
      %v558 = vunpack.c.l.b16 %v317
      %v559 = vunpack.c.h.b16 %v317
      %v560 = vunpack.c.l.b16 %v318
      %v561 = vunpack.c.h.b16 %v318
      %v562 = vunpack.c.l.b16 %v319
      %v563 = vunpack.c.h.b16 %v319
      %v564 = vunpack.c.l.b16 %v320
      %v565 = vunpack.c.l.b16 %v321
      %v566 = vunpack.c.h.b16 %v321
      %v567 = vunpack.c.l.b16 %v322
      %v568 = vunpack.c.h.b16 %v322
      %v569 = vunpack.c.l.b16 %v323
      %v570 = vunpack.c.h.b16 %v323
      %v571 = vunpack.c.l.b16 %v324
      %v572 = vunpack.c.h.b16 %v324
      %v573 = vunpack.c.l.b16 %v325
      %v574 = vunpack.c.l.b16 %v326
      %v575 = vunpack.c.h.b16 %v326
      %v576 = vunpack.c.l.b16 %v327
      %v577 = vunpack.c.h.b16 %v327
      %v578 = vunpack.c.l.b16 %v328
      %v579 = vunpack.c.h.b16 %v328
      %v580 = vunpack.c.l.b16 %v329
      %v581 = vunpack.c.h.b16 %v329
      %v582 = vunpack.c.l.b16 %v330
      %v583 = vunpack.c.l.b16 %v331
      %v584 = vunpack.c.h.b16 %v331
      %v585 = vunpack.c.l.b16 %v332
      %v586 = vunpack.c.h.b16 %v332
      %v587 = vunpack.c.l.b16 %v333
      %v588 = vunpack.c.h.b16 %v333
      %v589 = vunpack.c.l.b16 %v334
      %v590 = vunpack.c.h.b16 %v334
      %v591 = vunpack.c.l.b16 %v335
      %v592 = vpack.c.b16 %v529, %v520
      %v593 = vpack.c.b16 %v530, %v521
      %v594 = vpack.c.b16 %v531, %v522
      %v595 = vpack.c.b16 %v532, %v523
      %v596 = vpack.c.b16 %v533, %v524
      %v597 = vpack.c.b16 %v534, %v525
      %v598 = vpack.c.b16 %v535, %v526
      %v599 = vpack.c.b16 %v536, %v527
      %v600 = vpack.c.b16 %v537, %v528
      %v601 = vpack.c.b16 %v547, %v538
      %v602 = vpack.c.b16 %v548, %v539
      %v603 = vpack.c.b16 %v549, %v540
      %v604 = vpack.c.b16 %v550, %v541
      %v605 = vpack.c.b16 %v551, %v542
      %v606 = vpack.c.b16 %v552, %v543
      %v607 = vpack.c.b16 %v553, %v544
      %v608 = vpack.c.b16 %v554, %v545
      %v609 = vpack.c.b16 %v555, %v546
      %v610 = vpack.c.b16 %v565, %v556
      %v611 = vpack.c.b16 %v566, %v557
      %v612 = vpack.c.b16 %v567, %v558
      %v613 = vpack.c.b16 %v568, %v559
      %v614 = vpack.c.b16 %v569, %v560
      %v615 = vpack.c.b16 %v570, %v561
      %v616 = vpack.c.b16 %v571, %v562
      %v617 = vpack.c.b16 %v572, %v563
      %v618 = vpack.c.b16 %v573, %v564
      %v619 = vpack.c.b16 %v583, %v574
      %v620 = vpack.c.b16 %v584, %v575
      %v621 = vpack.c.b16 %v585, %v576
      %v622 = vpack.c.b16 %v586, %v577
      %v623 = vpack.c.b16 %v587, %v578
      %v624 = vpack.c.b16 %v588, %v579
      %v625 = vpack.c.b16 %v589, %v580
      %v626 = vpack.c.b16 %v590, %v581
      %v627 = vpack.c.b16 %v591, %v582
      %v808 = vunpack.c.l.b16 %v336
      %v809 = vunpack.c.l.b16 %v337
      %v810 = vunpack.c.l.b16 %v338
      %v811 = vunpack.c.l.b16 %v339
      %v812 = vunpack.c.l.b16 %v340
      %v813 = vunpack.c.l.b16 %v341
      %v814 = vunpack.c.l.b16 %v342
      %v815 = vunpack.c.l.b16 %v343
      %v816 = vunpack.c.l.b16 %v344
      %v817 = vunpack.c.l.b16 %v345
      %v818 = vunpack.c.l.b16 %v346
      %v819 = vunpack.c.l.b16 %v347
      %v820 = vunpack.c.l.b16 %v348
      %v821 = vunpack.c.l.b16 %v349
      %v822 = vunpack.c.l.b16 %v350
      %v823 = vunpack.c.l.b16 %v351
      %v824 = vunpack.c.l.b16 %v352
      %v825 = vunpack.c.l.b16 %v353
      %v826 = vunpack.c.l.b16 %v354
      %v827 = vunpack.c.l.b16 %v355
      %v828 = vunpack.c.l.b16 %v356
      %v829 = vunpack.c.l.b16 %v357
      %v830 = vunpack.c.l.b16 %v358
      %v831 = vunpack.c.l.b16 %v359
      %v832 = vunpack.c.l.b16 %v360
      %v833 = vunpack.c.l.b16 %v361
      %v834 = vunpack.c.l.b16 %v362
      %v835 = vunpack.c.l.b16 %v363
      %v836 = vunpack.c.l.b16 %v364
      %v837 = vunpack.c.l.b16 %v365
      %v838 = vunpack.c.l.b16 %v366
      %v839 = vunpack.c.l.b16 %v367
      %v840 = vunpack.c.l.b16 %v368
      %v841 = vunpack.c.l.b16 %v369
      %v842 = vunpack.c.l.b16 %v370
      %v843 = vunpack.c.l.b16 %v371
      %v844 = vunpack.c.l.b16 %v372
      %v845 = vunpack.c.l.b16 %v373
      %v846 = vunpack.c.l.b16 %v374
      %v847 = vunpack.c.l.b16 %v375
      %v848 = vunpack.c.l.b16 %v376
      %v849 = vunpack.c.l.b16 %v377
      %v850 = vunpack.c.l.b16 %v378
      %v851 = vunpack.c.l.b16 %v379
      %v852 = vunpack.c.l.b16 %v380
      %v853 = vunpack.c.l.b16 %v381
      %v854 = vunpack.c.l.b16 %v382
      %v855 = vunpack.c.l.b16 %v383
      %v856 = vunpack.c.l.b16 %v384
      %v857 = vunpack.c.l.b16 %v385
      %v858 = vunpack.c.l.b16 %v386
      %v859 = vunpack.c.l.b16 %v387
      %v860 = vunpack.c.l.b16 %v388
      %v861 = vunpack.c.l.b16 %v389
      %v862 = vunpack.c.l.b16 %v390
      %v863 = vunpack.c.l.b16 %v391
      %v864 = vunpack.c.l.b16 %v392
      %v865 = vunpack.c.l.b16 %v393
      %v866 = vunpack.c.l.b16 %v394
      %v867 = vunpack.c.l.b16 %v395
      %v868 = vunpack.c.l.b16 %v396
      %v869 = vunpack.c.l.b16 %v397
      %v870 = vunpack.c.l.b16 %v398
      %v871 = vunpack.c.l.b16 %v399
      %v872 = vunpack.c.l.b16 %v400
      %v873 = vunpack.c.l.b16 %v401
      %v874 = vunpack.c.l.b16 %v402
      %v875 = vunpack.c.l.b16 %v403
      %v876 = vunpack.c.l.b16 %v404
      %v877 = vunpack.c.l.b16 %v405
      %v878 = vunpack.c.l.b16 %v406
      %v879 = vunpack.c.l.b16 %v407
      %v880 = vunpack.c.l.b16 %v408
      %v881 = vunpack.c.l.b16 %v409
      %v882 = vunpack.c.l.b16 %v410
      %v883 = vunpack.c.l.b16 %v411
      %v884 = vunpack.c.l.b16 %v412
      %v885 = vunpack.c.l.b16 %v413
      %v886 = vunpack.c.l.b16 %v414
      %v887 = vunpack.c.l.b16 %v415
      %v888 = vunpack.c.l.b16 %v416
      %v889 = vunpack.c.l.b16 %v417
      %v890 = vunpack.c.l.b16 %v418
      %v891 = vunpack.c.l.b16 %v419
      %v892 = vunpack.c.l.b16 %v420
      %v893 = vunpack.c.l.b16 %v421
      %v894 = vunpack.c.l.b16 %v422
      %v895 = vunpack.c.l.b16 %v423
      %v896 = vunpack.c.l.b16 %v424
      %v897 = vunpack.c.l.b16 %v425
      %v898 = vunpack.c.l.b16 %v426
      %v899 = vunpack.c.l.b16 %v427
      %v900 = vunpack.c.l.b16 %v428
      %v901 = vunpack.c.l.b16 %v429
      %v902 = vunpack.c.l.b16 %v430
      %v903 = vunpack.c.l.b16 %v431
      %v904 = vunpack.c.l.b16 %v432
      %v905 = vunpack.c.l.b16 %v433
      %v906 = vunpack.c.l.b16 %v434
      %v907 = vunpack.c.l.b16 %v435
      %v908 = vunpack.c.l.b16 %v436
      %v909 = vunpack.c.l.b16 %v437
      %v910 = vunpack.c.l.b16 %v438
      %v911 = vunpack.c.l.b16 %v439
      %v912 = vunpack.c.l.b16 %v440
      %v913 = vunpack.c.l.b16 %v441
      %v914 = vunpack.c.l.b16 %v442
      %v915 = vunpack.c.l.b16 %v443
      %v916 = vunpack.c.l.b16 %v444
      %v917 = vunpack.c.l.b16 %v445
      %v918 = vunpack.c.l.b16 %v446
      %v919 = vunpack.c.l.b16 %v447
      %v920 = vunpack.c.l.b16 %v448
      %v921 = vunpack.c.l.b16 %v449
      %v922 = vunpack.c.l.b16 %v450
      %v923 = vunpack.c.l.b16 %v451
      %v924 = vunpack.c.l.b16 %v452
      %v925 = vunpack.c.l.b16 %v453
      %v926 = vunpack.c.l.b16 %v454
      %v927 = vunpack.c.l.b16 %v455
      %v928 = vunpack.c.l.b16 %v456
      %v929 = vunpack.c.l.b16 %v457
      %v930 = vunpack.c.l.b16 %v458
      %v931 = vunpack.c.l.b16 %v459
      %v932 = vunpack.c.l.b16 %v460
      %v933 = vunpack.c.l.b16 %v461
      %v934 = vunpack.c.l.b16 %v462
      %v935 = vunpack.c.l.b16 %v463
      %v936 = vunpack.c.l.b16 %v464
      %v937 = vunpack.c.l.b16 %v465
      %v938 = vunpack.c.l.b16 %v466
      %v939 = vunpack.c.l.b16 %v467
      %v940 = vunpack.c.l.b16 %v468
      %v941 = vunpack.c.l.b16 %v469
      %v942 = vunpack.c.l.b16 %v470
      %v943 = vunpack.c.l.b16 %v471
      %v944 = vunpack.c.l.b16 %v472
      %v945 = vunpack.c.l.b16 %v473
      %v946 = vunpack.c.l.b16 %v474
      %v947 = vunpack.c.l.b16 %v475
      %v948 = vunpack.c.l.b16 %v476
      %v949 = vunpack.c.l.b16 %v477
      %v950 = vunpack.c.l.b16 %v478
      %v951 = vunpack.c.l.b16 %v479
      %v952 = vpack.c.b16 %v809, %v808
      %v953 = vpack.c.b16 %v811, %v810
      %v954 = vpack.c.b16 %v813, %v812
      %v955 = vpack.c.b16 %v815, %v814
      %v956 = vpack.c.b16 %v817, %v816
      %v957 = vpack.c.b16 %v819, %v818
      %v958 = vpack.c.b16 %v821, %v820
      %v959 = vpack.c.b16 %v823, %v822
      %v960 = vpack.c.b16 %v825, %v824
      %v961 = vpack.c.b16 %v827, %v826
      %v962 = vpack.c.b16 %v829, %v828
      %v963 = vpack.c.b16 %v831, %v830
      %v964 = vpack.c.b16 %v833, %v832
      %v965 = vpack.c.b16 %v835, %v834
      %v966 = vpack.c.b16 %v837, %v836
      %v967 = vpack.c.b16 %v839, %v838
      %v968 = vpack.c.b16 %v841, %v840
      %v969 = vpack.c.b16 %v843, %v842
      %v970 = vpack.c.b16 %v845, %v844
      %v971 = vpack.c.b16 %v847, %v846
      %v972 = vpack.c.b16 %v849, %v848
      %v973 = vpack.c.b16 %v851, %v850
      %v974 = vpack.c.b16 %v853, %v852
      %v975 = vpack.c.b16 %v855, %v854
      %v976 = vpack.c.b16 %v857, %v856
      %v977 = vpack.c.b16 %v859, %v858
      %v978 = vpack.c.b16 %v861, %v860
      %v979 = vpack.c.b16 %v863, %v862
      %v980 = vpack.c.b16 %v865, %v864
      %v981 = vpack.c.b16 %v867, %v866
      %v982 = vpack.c.b16 %v869, %v868
      %v983 = vpack.c.b16 %v871, %v870
      %v984 = vpack.c.b16 %v873, %v872
      %v985 = vpack.c.b16 %v875, %v874
      %v986 = vpack.c.b16 %v877, %v876
      %v987 = vpack.c.b16 %v879, %v878
      %v988 = vpack.c.b16 %v881, %v880
      %v989 = vpack.c.b16 %v883, %v882
      %v990 = vpack.c.b16 %v885, %v884
      %v991 = vpack.c.b16 %v887, %v886
      %v992 = vpack.c.b16 %v889, %v888
      %v993 = vpack.c.b16 %v891, %v890
      %v994 = vpack.c.b16 %v893, %v892
      %v995 = vpack.c.b16 %v895, %v894
      %v996 = vpack.c.b16 %v897, %v896
      %v997 = vpack.c.b16 %v899, %v898
      %v998 = vpack.c.b16 %v901, %v900
      %v999 = vpack.c.b16 %v903, %v902
      %v1000 = vpack.c.b16 %v905, %v904
      %v1001 = vpack.c.b16 %v907, %v906
      %v1002 = vpack.c.b16 %v909, %v908
      %v1003 = vpack.c.b16 %v911, %v910
      %v1004 = vpack.c.b16 %v913, %v912
      %v1005 = vpack.c.b16 %v915, %v914
      %v1006 = vpack.c.b16 %v917, %v916
      %v1007 = vpack.c.b16 %v919, %v918
      %v1008 = vpack.c.b16 %v921, %v920
      %v1009 = vpack.c.b16 %v923, %v922
      %v1010 = vpack.c.b16 %v925, %v924
      %v1011 = vpack.c.b16 %v927, %v926
      %v1012 = vpack.c.b16 %v929, %v928
      %v1013 = vpack.c.b16 %v931, %v930
      %v1014 = vpack.c.b16 %v933, %v932
      %v1015 = vpack.c.b16 %v935, %v934
      %v1016 = vpack.c.b16 %v937, %v936
      %v1017 = vpack.c.b16 %v939, %v938
      %v1018 = vpack.c.b16 %v941, %v940
      %v1019 = vpack.c.b16 %v943, %v942
      %v1020 = vpack.c.b16 %v945, %v944
      %v1021 = vpack.c.b16 %v947, %v946
      %v1022 = vpack.c.b16 %v949, %v948
      %v1023 = vpack.c.b16 %v951, %v950
      %1096 = vmatprep.subr.bf16.mxu0 0
      %1097 = vmatpush1.bf16.msra.mxu0 %v959
      %1098 = vmatprep.subr.bf16.mxu0 0
      %1099 = vmatpush1.bf16.msra.mxu0 %v958
      %1100 = vmatprep.subr.bf16.mxu0 0
      %1101 = vmatpush1.bf16.msra.mxu0 %v957
      %1102 = vmatprep.subr.bf16.mxu0 0
      %1103 = vmatpush1.bf16.msra.mxu0 %v956
      %1104 = vmatprep.subr.bf16.mxu0 0
      %1105 = vmatpush1.bf16.msra.mxu0 %v955
      %1106 = vmatprep.subr.bf16.mxu0 0
      %1107 = vmatpush1.bf16.msra.mxu0 %v954
      %1108 = vmatprep.subr.bf16.mxu0 0
      %1109 = vmatpush1.bf16.msra.mxu0 %v953
      %1110 = vmatprep.subr.bf16.mxu0 0
      %1111 = vmatpush1.bf16.msra.mxu0 %v952
      %1112 = vmatprep.subr.bf16.mxu0 0
      %1113 = vmatpush2.bf16.msra.mxu0 %v967
      %1114 = vmatprep.subr.bf16.mxu0 0
      %1115 = vmatpush2.bf16.msra.mxu0 %v966
      %1116 = vmatprep.subr.bf16.mxu0 0
      %1117 = vmatpush2.bf16.msra.mxu0 %v965
      %1118 = vmatprep.subr.bf16.mxu0 0
      %1119 = vmatpush2.bf16.msra.mxu0 %v964
      %1120 = vmatprep.subr.bf16.mxu0 0
      %1121 = vmatpush2.bf16.msra.mxu0 %v963
      %1122 = vmatprep.subr.bf16.mxu0 0
      %1123 = vmatpush2.bf16.msra.mxu0 %v962
      %1124 = vmatprep.subr.bf16.mxu0 0
      %1125 = vmatpush2.bf16.msra.mxu0 %v961
      %1126 = vmatprep.subr.bf16.mxu0 0
      %1127 = vmatpush2.bf16.msra.mxu0 %v960
      %1128 = vmatprep.mubr.bf16.mxu0 %v593
      %1129 = vmatmul.mubr.bf16.gmra.mxu0 %v592
      %v1130 = vpop.f32.mrf.mxu0
      %v1131 = vadd.f32 0.0, %v1130
      %v1132 = vpop.f32.mrf.mxu0
      %v1133 = vpop.f32.mrf.mxu0
      %v1134 = vadd.f32 0.0, %v1133
      %v1135 = vpop.f32.mrf.mxu0
      %1136 = vmatprep.mubr.bf16.mxu0 %v602
      %1137 = vmatmul.mubr.bf16.gmra.mxu0 %v601
      %v1138 = vpop.f32.mrf.mxu0
      %v1139 = vadd.f32 0.0, %v1138
      %v1140 = vpop.f32.mrf.mxu0
      %v1141 = vpop.f32.mrf.mxu0
      %v1142 = vadd.f32 0.0, %v1141
      %v1143 = vpop.f32.mrf.mxu0
      %1144 = vmatprep.mubr.bf16.mxu0 %v611
      %1145 = vmatmul.mubr.bf16.gmra.mxu0 %v610
      %v1146 = vpop.f32.mrf.mxu0
      %v1147 = vadd.f32 0.0, %v1146
      %v1148 = vpop.f32.mrf.mxu0
      %v1149 = vpop.f32.mrf.mxu0
      %v1150 = vadd.f32 0.0, %v1149
      %v1151 = vpop.f32.mrf.mxu0
      %1152 = vmatprep.mubr.bf16.mxu0 %v620
      %1153 = vmatmul.mubr.bf16.gmra.mxu0 %v619
      %v1154 = vpop.f32.mrf.mxu0
      %v1155 = vadd.f32 0.0, %v1154
      %v1156 = vpop.f32.mrf.mxu0
      %v1157 = vpop.f32.mrf.mxu0
      %v1158 = vadd.f32 0.0, %v1157
      %v1159 = vpop.f32.mrf.mxu0
      %1160 = vdwg.mxu0
      %1161 = vmatprep.subr.bf16.mxu0 0
      %1162 = vmatpush1.bf16.msra.mxu0 %v975
      %1163 = vmatprep.subr.bf16.mxu0 0
      %1164 = vmatpush1.bf16.msra.mxu0 %v974
      %1165 = vmatprep.subr.bf16.mxu0 0
      %1166 = vmatpush1.bf16.msra.mxu0 %v973
      %1167 = vmatprep.subr.bf16.mxu0 0
      %1168 = vmatpush1.bf16.msra.mxu0 %v972
      %1169 = vmatprep.subr.bf16.mxu0 0
      %1170 = vmatpush1.bf16.msra.mxu0 %v971
      %1171 = vmatprep.subr.bf16.mxu0 0
      %1172 = vmatpush1.bf16.msra.mxu0 %v970
      %1173 = vmatprep.subr.bf16.mxu0 0
      %1174 = vmatpush1.bf16.msra.mxu0 %v969
      %1175 = vmatprep.subr.bf16.mxu0 0
      %1176 = vmatpush1.bf16.msra.mxu0 %v968
      %1177 = vmatprep.subr.bf16.mxu0 0
      %1178 = vmatpush2.bf16.msra.mxu0 %v983
      %1179 = vmatprep.subr.bf16.mxu0 0
      %1180 = vmatpush2.bf16.msra.mxu0 %v982
      %1181 = vmatprep.subr.bf16.mxu0 0
      %1182 = vmatpush2.bf16.msra.mxu0 %v981
      %1183 = vmatprep.subr.bf16.mxu0 0
      %1184 = vmatpush2.bf16.msra.mxu0 %v980
      %1185 = vmatprep.subr.bf16.mxu0 0
      %1186 = vmatpush2.bf16.msra.mxu0 %v979
      %1187 = vmatprep.subr.bf16.mxu0 0
      %1188 = vmatpush2.bf16.msra.mxu0 %v978
      %1189 = vmatprep.subr.bf16.mxu0 0
      %1190 = vmatpush2.bf16.msra.mxu0 %v977
      %1191 = vmatprep.subr.bf16.mxu0 0
      %1192 = vmatpush2.bf16.msra.mxu0 %v976
      %1193 = vmatprep.mubr.bf16.mxu0 %v595
      %1194 = vmatmul.mubr.bf16.gmra.mxu0 %v594
      %v1195 = vpop.f32.mrf.mxu0
      %v1196 = vadd.f32 %v1131, %v1195
      %v1197 = vpop.f32.mrf.mxu0
      %v1198 = vpop.f32.mrf.mxu0
      %v1199 = vadd.f32 %v1134, %v1198
      %v1200 = vpop.f32.mrf.mxu0
      %1201 = vmatprep.mubr.bf16.mxu0 %v604
      %1202 = vmatmul.mubr.bf16.gmra.mxu0 %v603
      %v1203 = vpop.f32.mrf.mxu0
      %v1204 = vadd.f32 %v1139, %v1203
      %v1205 = vpop.f32.mrf.mxu0
      %v1206 = vpop.f32.mrf.mxu0
      %v1207 = vadd.f32 %v1142, %v1206
      %v1208 = vpop.f32.mrf.mxu0
      %1209 = vmatprep.mubr.bf16.mxu0 %v613
      %1210 = vmatmul.mubr.bf16.gmra.mxu0 %v612
      %v1211 = vpop.f32.mrf.mxu0
      %v1212 = vadd.f32 %v1147, %v1211
      %v1213 = vpop.f32.mrf.mxu0
      %v1214 = vpop.f32.mrf.mxu0
      %v1215 = vadd.f32 %v1150, %v1214
      %v1216 = vpop.f32.mrf.mxu0
      %1217 = vmatprep.mubr.bf16.mxu0 %v622
      %1218 = vmatmul.mubr.bf16.gmra.mxu0 %v621
      %v1219 = vpop.f32.mrf.mxu0
      %v1220 = vadd.f32 %v1155, %v1219
      %v1221 = vpop.f32.mrf.mxu0
      %v1222 = vpop.f32.mrf.mxu0
      %v1223 = vadd.f32 %v1158, %v1222
      %v1224 = vpop.f32.mrf.mxu0
      %1225 = vdwg.mxu0
      %1226 = vmatprep.subr.bf16.mxu0 0
      %1227 = vmatpush1.bf16.msra.mxu0 %v991
      %1228 = vmatprep.subr.bf16.mxu0 0
      %1229 = vmatpush1.bf16.msra.mxu0 %v990
      %1230 = vmatprep.subr.bf16.mxu0 0
      %1231 = vmatpush1.bf16.msra.mxu0 %v989
      %1232 = vmatprep.subr.bf16.mxu0 0
      %1233 = vmatpush1.bf16.msra.mxu0 %v988
      %1234 = vmatprep.subr.bf16.mxu0 0
      %1235 = vmatpush1.bf16.msra.mxu0 %v987
      %1236 = vmatprep.subr.bf16.mxu0 0
      %1237 = vmatpush1.bf16.msra.mxu0 %v986
      %1238 = vmatprep.subr.bf16.mxu0 0
      %1239 = vmatpush1.bf16.msra.mxu0 %v985
      %1240 = vmatprep.subr.bf16.mxu0 0
      %1241 = vmatpush1.bf16.msra.mxu0 %v984
      %1242 = vmatprep.subr.bf16.mxu0 0
      %1243 = vmatpush2.bf16.msra.mxu0 %v999
      %1244 = vmatprep.subr.bf16.mxu0 0
      %1245 = vmatpush2.bf16.msra.mxu0 %v998
      %1246 = vmatprep.subr.bf16.mxu0 0
      %1247 = vmatpush2.bf16.msra.mxu0 %v997
      %1248 = vmatprep.subr.bf16.mxu0 0
      %1249 = vmatpush2.bf16.msra.mxu0 %v996
      %1250 = vmatprep.subr.bf16.mxu0 0
      %1251 = vmatpush2.bf16.msra.mxu0 %v995
      %1252 = vmatprep.subr.bf16.mxu0 0
      %1253 = vmatpush2.bf16.msra.mxu0 %v994
      %1254 = vmatprep.subr.bf16.mxu0 0
      %1255 = vmatpush2.bf16.msra.mxu0 %v993
      %1256 = vmatprep.subr.bf16.mxu0 0
      %1257 = vmatpush2.bf16.msra.mxu0 %v992
      %1258 = vmatprep.mubr.bf16.mxu0 %v597
      %1259 = vmatmul.mubr.bf16.gmra.mxu0 %v596
      %v1260 = vpop.f32.mrf.mxu0
      %v1261 = vadd.f32 %v1196, %v1260
      %v1262 = vpop.f32.mrf.mxu0
      %v1263 = vpop.f32.mrf.mxu0
      %v1264 = vadd.f32 %v1199, %v1263
      %v1265 = vpop.f32.mrf.mxu0
      %1266 = vmatprep.mubr.bf16.mxu0 %v606
      %1267 = vmatmul.mubr.bf16.gmra.mxu0 %v605
      %v1268 = vpop.f32.mrf.mxu0
      %v1269 = vadd.f32 %v1204, %v1268
      %v1270 = vpop.f32.mrf.mxu0
      %v1271 = vpop.f32.mrf.mxu0
      %v1272 = vadd.f32 %v1207, %v1271
      %v1273 = vpop.f32.mrf.mxu0
      %1274 = vmatprep.mubr.bf16.mxu0 %v615
      %1275 = vmatmul.mubr.bf16.gmra.mxu0 %v614
      %v1276 = vpop.f32.mrf.mxu0
      %v1277 = vadd.f32 %v1212, %v1276
      %v1278 = vpop.f32.mrf.mxu0
      %v1279 = vpop.f32.mrf.mxu0
      %v1280 = vadd.f32 %v1215, %v1279
      %v1281 = vpop.f32.mrf.mxu0
      %1282 = vmatprep.mubr.bf16.mxu0 %v624
      %1283 = vmatmul.mubr.bf16.gmra.mxu0 %v623
      %v1284 = vpop.f32.mrf.mxu0
      %v1285 = vadd.f32 %v1220, %v1284
      %v1286 = vpop.f32.mrf.mxu0
      %v1287 = vpop.f32.mrf.mxu0
      %v1288 = vadd.f32 %v1223, %v1287
      %v1289 = vpop.f32.mrf.mxu0
      %1290 = vdwg.mxu0
      %1291 = vmatprep.subr.bf16.mxu0 0
      %1292 = vmatpush1.bf16.msra.mxu0 %v1007
      %1293 = vmatprep.subr.bf16.mxu0 0
      %1294 = vmatpush1.bf16.msra.mxu0 %v1006
      %1295 = vmatprep.subr.bf16.mxu0 0
      %1296 = vmatpush1.bf16.msra.mxu0 %v1005
      %1297 = vmatprep.subr.bf16.mxu0 0
      %1298 = vmatpush1.bf16.msra.mxu0 %v1004
      %1299 = vmatprep.subr.bf16.mxu0 0
      %1300 = vmatpush1.bf16.msra.mxu0 %v1003
      %1301 = vmatprep.subr.bf16.mxu0 0
      %1302 = vmatpush1.bf16.msra.mxu0 %v1002
      %1303 = vmatprep.subr.bf16.mxu0 0
      %1304 = vmatpush1.bf16.msra.mxu0 %v1001
      %1305 = vmatprep.subr.bf16.mxu0 0
      %1306 = vmatpush1.bf16.msra.mxu0 %v1000
      %1307 = vmatprep.subr.bf16.mxu0 0
      %1308 = vmatpush2.bf16.msra.mxu0 %v1015
      %1309 = vmatprep.subr.bf16.mxu0 0
      %1310 = vmatpush2.bf16.msra.mxu0 %v1014
      %1311 = vmatprep.subr.bf16.mxu0 0
      %1312 = vmatpush2.bf16.msra.mxu0 %v1013
      %1313 = vmatprep.subr.bf16.mxu0 0
      %1314 = vmatpush2.bf16.msra.mxu0 %v1012
      %1315 = vmatprep.subr.bf16.mxu0 0
      %1316 = vmatpush2.bf16.msra.mxu0 %v1011
      %1317 = vmatprep.subr.bf16.mxu0 0
      %1318 = vmatpush2.bf16.msra.mxu0 %v1010
      %1319 = vmatprep.subr.bf16.mxu0 0
      %1320 = vmatpush2.bf16.msra.mxu0 %v1009
      %1321 = vmatprep.subr.bf16.mxu0 0
      %1322 = vmatpush2.bf16.msra.mxu0 %v1008
      %1323 = vmatprep.mubr.bf16.mxu0 %v599
      %1324 = vmatmul.mubr.bf16.gmra.mxu0 %v598
      %v1325 = vpop.f32.mrf.mxu0
      %v1326 = vadd.f32 %v1261, %v1325
      %v1327 = vpop.f32.mrf.mxu0
      %v1328 = vpop.f32.mrf.mxu0
      %v1329 = vadd.f32 %v1264, %v1328
      %v1330 = vpop.f32.mrf.mxu0
      %1331 = vmatprep.mubr.bf16.mxu0 %v608
      %1332 = vmatmul.mubr.bf16.gmra.mxu0 %v607
      %v1333 = vpop.f32.mrf.mxu0
      %v1334 = vadd.f32 %v1269, %v1333
      %v1335 = vpop.f32.mrf.mxu0
      %v1336 = vpop.f32.mrf.mxu0
      %v1337 = vadd.f32 %v1272, %v1336
      %v1338 = vpop.f32.mrf.mxu0
      %1339 = vmatprep.mubr.bf16.mxu0 %v617
      %1340 = vmatmul.mubr.bf16.gmra.mxu0 %v616
      %v1341 = vpop.f32.mrf.mxu0
      %v1342 = vadd.f32 %v1277, %v1341
      %v1343 = vpop.f32.mrf.mxu0
      %v1344 = vpop.f32.mrf.mxu0
      %v1345 = vadd.f32 %v1280, %v1344
      %v1346 = vpop.f32.mrf.mxu0
      %1347 = vmatprep.mubr.bf16.mxu0 %v626
      %1348 = vmatmul.mubr.bf16.gmra.mxu0 %v625
      %v1349 = vpop.f32.mrf.mxu0
      %v1350 = vadd.f32 %v1285, %v1349
      %v1351 = vpop.f32.mrf.mxu0
      %v1352 = vpop.f32.mrf.mxu0
      %v1353 = vadd.f32 %v1288, %v1352
      %v1354 = vpop.f32.mrf.mxu0
      %1355 = vdwg.mxu0
      %1356 = vmatprep.subr.bf16.mxu0 0
      %1357 = vmatpush1.bf16.msra.mxu0 %v1023
      %1358 = vmatprep.subr.bf16.mxu0 0
      %1359 = vmatpush1.bf16.msra.mxu0 %v1022
      %1360 = vmatprep.subr.bf16.mxu0 0
      %1361 = vmatpush1.bf16.msra.mxu0 %v1021
      %1362 = vmatprep.subr.bf16.mxu0 0
      %1363 = vmatpush1.bf16.msra.mxu0 %v1020
      %1364 = vmatprep.subr.bf16.mxu0 0
      %1365 = vmatpush1.bf16.msra.mxu0 %v1019
      %1366 = vmatprep.subr.bf16.mxu0 0
      %1367 = vmatpush1.bf16.msra.mxu0 %v1018
      %1368 = vmatprep.subr.bf16.mxu0 0
      %1369 = vmatpush1.bf16.msra.mxu0 %v1017
      %1370 = vmatprep.subr.bf16.mxu0 0
      %1371 = vmatpush1.bf16.msra.mxu0 %v1016
      %1372 = vmatprep.subr.bf16.mxu0 0
      %1373 = vmatpush2.bf16.msra.mxu0 0
      %1374 = vmatprep.subr.bf16.mxu0 0
      %1375 = vmatpush2.bf16.msra.mxu0 0
      %1376 = vmatprep.subr.bf16.mxu0 0
      %1377 = vmatpush2.bf16.msra.mxu0 0
      %1378 = vmatprep.subr.bf16.mxu0 0
      %1379 = vmatpush2.bf16.msra.mxu0 0
      %1380 = vmatprep.subr.bf16.mxu0 0
      %1381 = vmatpush2.bf16.msra.mxu0 0
      %1382 = vmatprep.subr.bf16.mxu0 0
      %1383 = vmatpush2.bf16.msra.mxu0 0
      %1384 = vmatprep.subr.bf16.mxu0 0
      %1385 = vmatpush2.bf16.msra.mxu0 0
      %1386 = vmatprep.subr.bf16.mxu0 0
      %1387 = vmatpush2.bf16.msra.mxu0 0
      %1388 = vmatprep.mubr.bf16.mxu0 0
      %1389 = vmatmul.mubr.bf16.gmra.mxu0 %v600
      %v1390 = vpop.f32.mrf.mxu0
      %v1391 = vadd.f32 %v1326, %v1390
      %v1392 = vpop.f32.mrf.mxu0
      %v1393 = vpop.f32.mrf.mxu0
      %v1394 = vadd.f32 %v1329, %v1393
      %v1395 = vpop.f32.mrf.mxu0
      %1396 = vmatprep.mubr.bf16.mxu0 0
      %1397 = vmatmul.mubr.bf16.gmra.mxu0 %v609
      %v1398 = vpop.f32.mrf.mxu0
      %v1399 = vadd.f32 %v1334, %v1398
      %v1400 = vpop.f32.mrf.mxu0
      %v1401 = vpop.f32.mrf.mxu0
      %v1402 = vadd.f32 %v1337, %v1401
      %v1403 = vpop.f32.mrf.mxu0
      %1404 = vmatprep.mubr.bf16.mxu0 0
      %1405 = vmatmul.mubr.bf16.gmra.mxu0 %v618
      %v1406 = vpop.f32.mrf.mxu0
      %v1407 = vadd.f32 %v1342, %v1406
      %v1408 = vpop.f32.mrf.mxu0
      %v1409 = vpop.f32.mrf.mxu0
      %v1410 = vadd.f32 %v1345, %v1409
      %v1411 = vpop.f32.mrf.mxu0
      %1412 = vmatprep.mubr.bf16.mxu0 0
      %1413 = vmatmul.mubr.bf16.gmra.mxu0 %v627
      %v1414 = vpop.f32.mrf.mxu0
      %v1415 = vadd.f32 %v1350, %v1414
      %v1416 = vpop.f32.mrf.mxu0
      %v1417 = vpop.f32.mrf.mxu0
      %v1418 = vadd.f32 %v1353, %v1417
      %v1419 = vpop.f32.mrf.mxu0
      %1420 = vdwg.mxu0
      %v1421 = vld [vmem:[%s2] sm:$0x1]
      %v1423 = vlaneseq
      %v1424 = vshrl.u32 %v1423, 7
      %v1425 = vsub.s32 0, %v1424
      %v1426 = vrot.slane %v1421, %v1425
      %v1428 = vmul.f32 %v1391, %v1426
      %v1429 = vmul.f32 %v1394, %v1426
      %v1430 = vmul.f32 %v1399, %v1426
      %v1431 = vmul.f32 %v1402, %v1426
      %v1432 = vmul.f32 %v1407, %v1426
      %v1433 = vmul.f32 %v1410, %v1426
      %v1434 = vmul.f32 %v1415, %v1426
      %v1435 = vmul.f32 %v1418, %v1426
      %v1436 = vld [vmem:[%s3] sm:$0x1]
      %v1438 = vlaneseq
      %v1439 = vshrl.u32 %v1438, 7
      %v1440 = vsub.s32 0, %v1439
      %v1441 = vrot.slane %v1436, %v1440
      %v1443 = vadd.f32 %v1428, %v1441
      %v1444 = vadd.f32 %v1429, %v1441
      %v1445 = vadd.f32 %v1430, %v1441
      %v1446 = vadd.f32 %v1431, %v1441
      %v1447 = vadd.f32 %v1432, %v1441
      %v1448 = vadd.f32 %v1433, %v1441
      %v1449 = vadd.f32 %v1434, %v1441
      %v1450 = vadd.f32 %v1435, %v1441
      %v1451 = vld [vmem:[%s284] sm:$0xff]
      %v1452 = vld [vmem:[%s284 + $0x8] sm:$0xff]
      %v1453 = vld [vmem:[%s284 + $0x10] sm:$0xff]
      %v1454 = vld [vmem:[%s284 + $0x18] sm:$0xff]
      %v1455 = vld [vmem:[%s284 + $0x20] sm:$0xff]
      %v1456 = vld [vmem:[%s284 + $0x28] sm:$0xff]
      %v1457 = vld [vmem:[%s284 + $0x30] sm:$0xff]
      %v1458 = vld [vmem:[%s284 + $0x38] sm:$0xff]
      %v1459 = vadd.f32 %v1443, %v1451
      %v1460 = vadd.f32 %v1444, %v1452
      %v1461 = vadd.f32 %v1445, %v1453
      %v1462 = vadd.f32 %v1446, %v1454
      %v1463 = vadd.f32 %v1447, %v1455
      %v1464 = vadd.f32 %v1448, %v1456
      %v1465 = vadd.f32 %v1449, %v1457
      %v1466 = vadd.f32 %v1450, %v1458
      %v1467 = vmax.f32 %v1459, 0.0
      %v1468 = vmax.f32 %v1460, 0.0
      %v1469 = vmax.f32 %v1461, 0.0
      %v1470 = vmax.f32 %v1462, 0.0
      %v1471 = vmax.f32 %v1463, 0.0
      %v1472 = vmax.f32 %v1464, 0.0
      %v1473 = vmax.f32 %v1465, 0.0
      %v1474 = vmax.f32 %v1466, 0.0
      %v1475 = vadd.f32 %v1467, %v1468
      %v1476 = vadd.f32 %v1475, %v1469
      %v1477 = vadd.f32 %v1476, %v1470
      %v1478 = vadd.f32 %v1477, %v1471
      %v1479 = vadd.f32 %v1478, %v1472
      %v1480 = vadd.f32 %v1479, %v1473
      %v1481 = vadd.f32 %v1480, %v1474
      %v1482 = vrot.slane %v1481, 4
      %v1483 = vadd.f32 %v1481, %v1482
      %v1484 = vrot.slane %v1483, 2
      %v1485 = vadd.f32 %v1483, %v1484
      %v1486 = vrot.slane %v1485, 1
      %v1487 = vadd.f32 %v1485, %v1486
      %v1488 = vld [vmem:[%s289] sm:$0xff]
      %v1489 = vadd.f32 %v1488, %v1487
      %1490 = vst [vmem:[%s289] sm:$0xff] %v1489
      // Predicated region
      $region45: #{ssl_encoder_forward.11} parent=39 // pred_check
        %p1491 = pneg %p291
      $region46: #{ssl_encoder_forward.11} parent=39 // pred_check_branch
        %1493 = sbr.rel (%p1491) target = $region48
      $region47: #{ssl_encoder_forward.11} parent=39 // pred_region
        %v1494 = vld [vmem:[%s289] sm:$0xff]
        %v1495 = vmul.f32 %v1494, 0.015625
        %1496 = vst [vmem:[%s289] sm:$0xff] %v1495
      $region48: #{ssl_encoder_forward.11} parent=39 // pred_fallthru
        _
      %p1497 = scmp.lt.s32.totalorder %s20, 1
      %s1498 = scalar_select %p1497, %s20, 1
      %s1499 = smul.addr %s1498, 8
      %s1500 = scalar_lea.vmem %s5, %s1499
      // Predicated region
      $region49: #{ssl_encoder_forward.11} parent=39 // pred_check
        %p1501 = pneg %p165
      $region50: #{ssl_encoder_forward.11} parent=39 // pred_check_branch
        %1503 = sbr.rel (%p1501) target = $region52
      $region51: #{ssl_encoder_forward.11} parent=39 // pred_region
        _
      $region52: #{ssl_encoder_forward.11} parent=39 // pred_fallthru
        _
    $region40: #{ssl_encoder_forward.11} parent=5 // pred_fallthru
      _
    %p1504 = scmp.le.s32.totalorder 2, %s11
    // Predicated region
    $region53: #{ssl_encoder_forward.11} parent=5 // pred_check
      %p1505 = pneg %p1504
    $region54: #{ssl_encoder_forward.11} parent=5 // pred_check_branch
      %1507 = sbr.rel (%p1505) target = $region56
    $region55: #{ssl_encoder_forward.11} parent=5 // pred_region
      %s1508 = ssub.s32 %s11, 2
      // Predicated region
      $region57: #{ssl_encoder_forward.11} parent=55 // pred_check
        %p1509 = pneg %p171
      $region58: #{ssl_encoder_forward.11} parent=55 // pred_check_branch
        %1511 = sbr.rel (%p1509) target = $region60
      $region59: #{ssl_encoder_forward.11} parent=55 // pred_region
        %p1512 = scmp.lt.s32.totalorder %s22, 1
        %s1513 = scalar_select %p1512, %s22, 1
        %s1514 = smul.addr %s1513, 8
        %s1515 = scalar_lea.vmem %s5, %s1514
      $region60: #{ssl_encoder_forward.11} parent=55 // pred_fallthru
        _
    $region56: #{ssl_encoder_forward.11} parent=5 // pred_fallthru
      _
  $region6: #{ssl_encoder_forward.11} parent=0 // loop_footer
    %s15 = sadd.s32 1, %s11
  $region7: #{ssl_encoder_forward.11} parent=0 // loop_footer_branch
    %10 = sbr.rel target = $region3
  $region8: #{ssl_encoder_forward.11} parent=0 // loop_exit
    _

</llo_original>
